<compile_context>
chip_gen: v7x
topology: tpu7x:2x2x1
jax: 0.10.0
libtpu: 0.0.40
codegen_flags: <defaults>
</compile_context>

<pallas_src>
import functools

import jax
import jax.numpy as jnp
from jax import lax
from jax.experimental import pallas as pl
from jax.experimental.pallas import tpu as pltpu


# ----------------------------------------------------------------------------
# Fused ContraVAE kernel
# ----------------------------------------------------------------------------
def _contra_vae_kernel(
    # inputs
    pooled_ref, mask_enc_ref, eps_ref, dec_emb_ref, dec_ids_ref,
    w_e2h_ref, w_fe_ref, w_h2l_ref, w_l2e_ref, w_mulv_ref, w_z2e_ref,
    w_head_ref,
    # outputs
    feats_ref, kl_ref, loss_ref,
    # scratch
    hidden_sc, m_sc, l_sc, tgt_sc,
    *, mlp_num, pad_token_id):
  v = pl.program_id(1)
  bt, S = mask_enc_ref.shape
  E = pooled_ref.shape[1]
  latent_dim = eps_ref.shape[1]
  t_v = w_head_ref.shape[1]
  tm = bt * S

  # ---------------- row-tile init: VAE core + hidden states ----------------
  @pl.when(v == 0)
  def _init():
    pooled = pooled_ref[...]                                         # (bt,E) bf16

    # projection(): emb2hid -> mlp_num x (Linear+ReLU).  The torch module
    # reuses the SAME feature_extractor weights every iteration, so one w_fe.
    # bf16 operands everywhere, f32 accumulation (single-pass MXU).
    h = jnp.dot(pooled, w_e2h_ref[...], preferred_element_type=jnp.float32)
    for _ in range(mlp_num):
      h = jnp.maximum(
          jnp.dot(h.astype(jnp.bfloat16), w_fe_ref[...],
                  preferred_element_type=jnp.float32), 0.0)
    feats = jnp.dot(h.astype(jnp.bfloat16), w_h2l_ref[...],
                    preferred_element_type=jnp.float32)
    feats_ref[...] = feats                                           # (bt, L)

    # lat2emb
    pooled2 = jnp.dot(feats.astype(jnp.bfloat16), w_l2e_ref[...],
                      preferred_element_type=jnp.float32)            # (bt, E)

    # connect(): encoder.linear fused (E, 2L) -> chunk(mean, logvar),
    # reparameterize (nsamples=1), KL per example.
    mulv = jnp.dot(pooled2.astype(jnp.bfloat16), w_mulv_ref[...],
                   preferred_element_type=jnp.float32)               # (bt, 2L)
    mean = mulv[:, :latent_dim]
    logvar = mulv[:, latent_dim:]
    z = mean + eps_ref[...] * jnp.exp(0.5 * logvar)                  # (bt, L)
    kl_ref[...] = 0.5 * jnp.sum(
        mean * mean + jnp.exp(logvar) - logvar - 1.0, axis=1, keepdims=True)

    # Decoder stand-in hidden states: token embeds + masked feats_embeds
    # (pooled2 broadcast over S, masked by encoder attention mask) + latent
    # injection.  No (B,S,E) HBM round trip of the combined hidden.
    z_emb = jnp.dot(z.astype(jnp.bfloat16), w_z2e_ref[...],
                    preferred_element_type=jnp.float32)              # (bt, E)
    hidden = (dec_emb_ref[...].astype(jnp.float32)
              + pooled2[:, None, :] * mask_enc_ref[...][:, :, None]
              + z_emb[:, None, :])                                   # (bt,S,E)
    hidden_sc[...] = hidden.reshape(tm, E).astype(jnp.bfloat16)

    # online-logsumexp state (2-D, (tm,1))
    m_sc[...] = jnp.full(m_sc.shape, -jnp.inf, dtype=jnp.float32)
    l_sc[...] = jnp.zeros(l_sc.shape, dtype=jnp.float32)
    tgt_sc[...] = jnp.zeros(tgt_sc.shape, dtype=jnp.float32)

  # ---------------- per vocab tile: streamed LM head ------------------------
  # One big (tm, E) x (E, tV) bf16 matmul, f32 accumulation on the MXU.
  logits = jnp.dot(hidden_sc[...], w_head_ref[...],
                   preferred_element_type=jnp.float32)               # (tm, tV)

  # Target-logit pick: shift the SMALL label tensor by v*tV instead of the
  # big iota, keep everything 2-D.
  lab = dec_ids_ref[...] - v * t_v                                   # (tm, 1)
  col = lax.broadcasted_iota(jnp.int32, (tm, t_v), 1)
  tgt_sc[...] += jnp.sum(jnp.where(col == lab, logits, 0.0),
                         axis=-1, keepdims=True)                     # (tm, 1)

  tile_max = jnp.max(logits, axis=-1, keepdims=True)                 # (tm, 1)
  m_new = jnp.maximum(m_sc[...], tile_max)
  l_sc[...] = (l_sc[...] * jnp.exp(m_sc[...] - m_new)
               + jnp.sum(jnp.exp(logits - m_new), axis=-1, keepdims=True))
  m_sc[...] = m_new

  # ---------------- finalize: masked CE, per-sentence sum -------------------
  @pl.when(v == pl.num_programs(1) - 1)
  def _finalize():
    lse = m_sc[...] + jnp.log(l_sc[...])                             # (tm, 1)
    dec_mask = (dec_ids_ref[...] != pad_token_id).astype(jnp.float32)
    ce = (lse - tgt_sc[...]) * dec_mask                              # (tm, 1)
    loss_ref[...] = jnp.sum(ce.reshape(bt, S), axis=1, keepdims=True)  # (bt,1)


def contra_vae_pallas(pooled, mask_enc, eps, dec_emb, dec_ids_flat,
                      w_e2h, w_fe, w_h2l, w_l2e, w_mulv, w_z2e, w_head,
                      *, mlp_num, pad_token_id, batch_tile, vocab_tile):
  B, E = pooled.shape
  S = mask_enc.shape[1]
  L = w_h2l.shape[1]
  V = w_head.shape[1]
  assert B % batch_tile == 0, "B must be a multiple of batch_tile"
  assert V % vocab_tile == 0, "V must be a multiple of vocab_tile"
  grid = (B // batch_tile, V // vocab_tile)
  tm = batch_tile * S

  kernel = functools.partial(_contra_vae_kernel,
                             mlp_num=mlp_num, pad_token_id=pad_token_id)

  def const2d(shape):
    # Constant-index (never re-DMAed) resident weight tile.
    return pl.BlockSpec(shape, lambda r, v: (0, 0))

  # Advisory cost so XLA overlaps wrapper-side gathers with this kernel.
  cost = pl.CostEstimate(
      flops=2 * B * S * E * V,
      transcendentals=B * S * V,
      bytes_accessed=(B // batch_tile) * E * V * 2    # w_head restream (bf16)
                     + B * S * E * 2                  # dec_emb (bf16)
                     + B * (E * 2 + (S + L + 3) * 4), # small per-row I/O
  )

  return pl.pallas_call(
      kernel,
      out_shape=(
          jax.ShapeDtypeStruct((B, L), jnp.float32),   # feats
          jax.ShapeDtypeStruct((B, 1), jnp.float32),   # KL per example
          jax.ShapeDtypeStruct((B, 1), jnp.float32),   # rec loss per sentence
      ),
      grid=grid,
      in_specs=[
          pl.BlockSpec((batch_tile, E), lambda r, v: (r, 0)),        # pooled
          pl.BlockSpec((batch_tile, S), lambda r, v: (r, 0)),        # enc mask
          pl.BlockSpec((batch_tile, L), lambda r, v: (r, 0)),        # eps
          pl.BlockSpec((batch_tile, S, E), lambda r, v: (r, 0, 0)),  # dec_emb
          pl.BlockSpec((tm, 1), lambda r, v: (r, 0)),                # dec ids
          const2d(w_e2h.shape), const2d(w_fe.shape), const2d(w_h2l.shape),
          const2d(w_l2e.shape), const2d(w_mulv.shape), const2d(w_z2e.shape),
          # LM-head weight streamed over vocab tiles (bf16).
          pl.BlockSpec((E, vocab_tile), lambda r, v: (0, v)),
      ],
      out_specs=(
          pl.BlockSpec((batch_tile, L), lambda r, v: (r, 0)),
          pl.BlockSpec((batch_tile, 1), lambda r, v: (r, 0)),
          pl.BlockSpec((batch_tile, 1), lambda r, v: (r, 0)),
      ),
      scratch_shapes=[
          pltpu.VMEM((tm, E), jnp.bfloat16),   # hidden (row tile, bf16)
          pltpu.VMEM((tm, 1), jnp.float32),    # running max
          pltpu.VMEM((tm, 1), jnp.float32),    # running sum
          pltpu.VMEM((tm, 1), jnp.float32),    # target logit acc
      ],
      compiler_params=pltpu.CompilerParams(
          # row-tile axis parallel (2 TCs on v7x), vocab reduction last.
          dimension_semantics=("parallel", "arbitrary"),
          # 48 MiB fits v7x's 64 MiB physical VMEM with headroom; on
          # v5e/v6e this can be raised to ~96-100 MiB with bigger tiles.
          vmem_limit_bytes=48 * 1024 * 1024,
      ),
      cost_estimate=cost,
  )(pooled, mask_enc, eps, dec_emb, dec_ids_flat,
    w_e2h, w_fe, w_h2l, w_l2e, w_mulv, w_z2e, w_head)


# ----------------------------------------------------------------------------
# Forward wrapper (glue in plain JAX)
# ----------------------------------------------------------------------------
def contra_vae_forward(encode_inputs, decode_inputs, params, *,
                       pad_token_id=0, mlp_num=2, length_weighted_loss=True,
                       batch_tile=32, vocab_tile=1024):
  attention_mask = (encode_inputs > 0).astype(jnp.float32)           # (B, S)

  # TODO(synk): real module calls an external BERT encoder; stand-in is
  #             masked mean-pooled token embeddings + tanh.
  tok = params['emb_enc'][encode_inputs]                             # (B, S, E)
  denom = jnp.maximum(jnp.sum(attention_mask, axis=1, keepdims=True), 1.0)
  pooled_hidden_fea = jnp.tanh(
      jnp.sum(tok * attention_mask[:, :, None], axis=1) / denom)

  # TODO(synk): real decoder is an external GPT-2; stand-in = token embedding
  #             gather (here) + latent-conditioned LM head + masked CE (kernel).
  #             No next-token label shift, matching labels=decode_inputs in
  #             the reference call.  The gather could move in-kernel
  #             (scalar-prefetch ids + pl.ANY table + per-row async copies) to
  #             drop this (B,S,E) HBM round trip.
  dec_emb = params['emb_dec'][decode_inputs].astype(jnp.bfloat16)    # (B, S, E)
  dec_ids_flat = decode_inputs.astype(jnp.int32).reshape(-1, 1)      # (B*S, 1)

  bf16 = lambda w: w.astype(jnp.bfloat16)
  feats, kl, loss_rec = contra_vae_pallas(
      pooled_hidden_fea.astype(jnp.bfloat16), attention_mask, params['eps'],
      dec_emb, dec_ids_flat,
      bf16(params['w_e2h']), bf16(params['w_fe']), bf16(params['w_h2l']),
      bf16(params['w_l2e']), bf16(params['w_mulv']), bf16(params['w_z2e']),
      bf16(params['w_head']),
      mlp_num=mlp_num, pad_token_id=pad_token_id,
      batch_tile=batch_tile, vocab_tile=vocab_tile)

  loss_rec = loss_rec[:, 0]                                          # (B,)
  loss_kl = kl[:, 0]                                                 # (B,)

  if length_weighted_loss:
    sent_length = jnp.sum((decode_inputs != pad_token_id).astype(jnp.float32),
                          axis=1)
    loss_rec = loss_rec / jnp.maximum(sent_length, 1.0)   # guard all-pad rows

  return loss_rec.mean(), loss_kl.mean(), feats


# ----------------------------------------------------------------------------
if __name__ == "__main__":
  # Lane-friendly shapes; tm = BATCH_TILE*S = 256 (full MXU rows), grid (2, 2)
  # with an even row-tile count for v7x's two TensorCores.
  B, S, E, H, L, V = 64, 8, 128, 128, 128, 2048
  MLP_NUM = 2
  PAD = 0
  BATCH_TILE = 32     # tm = 256
  VOCAB_TILE = 1024   # >= 2 KiB bf16 DMA runs per row of w_head

  key = jax.random.PRNGKey(0)
  ks = jax.random.split(key, 12)

  encode_inputs = jax.random.randint(ks[0], (B, S), 1, V, dtype=jnp.int32)
  encode_inputs = encode_inputs.at[:, -1].set(PAD)      # some padding
  decode_inputs = jax.random.randint(ks[1], (B, S), 1, V, dtype=jnp.int32)
  decode_inputs = decode_inputs.at[:, -2:].set(PAD)     # some padding

  def w(k, shape, scale=0.1):
    return scale * jax.random.normal(k, shape, jnp.float32)

  params = dict(
      emb_enc=w(ks[2], (V, E)),        # encoder token embedding (stand-in)
      w_e2h=w(ks[3], (E, H)),          # emb2hid (bias=False)
      w_fe=w(ks[4], (H, H)),           # feature_extractor Linear (bias=False)
      w_h2l=w(ks[5], (H, L)),          # hid2lat (bias=False)
      w_l2e=w(ks[6], (L, E)),          # lat2emb (bias=False)
      w_mulv=w(ks[7], (E, 2 * L)),     # encoder.linear (mean|logvar fused)
      emb_dec=w(ks[8], (V, E)),        # decoder token embedding (stand-in)
      w_z2e=w(ks[9], (L, E)),          # decoder latent injection (stand-in)
      w_head=w(ks[10], (E, V)),        # decoder LM head (stand-in)
      eps=jax.random.normal(ks[11], (B, L), jnp.float32),  # reparam noise
  )

  loss_rec_mean, loss_kl_mean, feats = contra_vae_forward(
      encode_inputs, decode_inputs, params,
      pad_token_id=PAD, mlp_num=MLP_NUM, length_weighted_loss=True,
      batch_tile=BATCH_TILE, vocab_tile=VOCAB_TILE)

  jax.block_until_ready((loss_rec_mean, loss_kl_mean, feats))
  assert feats.shape == (B, L)
  assert bool(jnp.isfinite(loss_rec_mean)) and bool(jnp.isfinite(loss_kl_mean))
  print("KERNEL_OK")
</pallas_src>

<mosaic_0001>
module attributes {stable_mosaic.version = 11 : i64} {
  func.func @_contra_vae_kernel(%arg0: i32, %arg1: i32, %arg2: memref<32x128xbf16, #tpu.memory_space<vmem>>, %arg3: memref<32x8xf32, #tpu.memory_space<vmem>>, %arg4: memref<32x128xf32, #tpu.memory_space<vmem>>, %arg5: memref<32x8x128xbf16, #tpu.memory_space<vmem>>, %arg6: memref<256x1xi32, #tpu.memory_space<vmem>>, %arg7: memref<128x128xbf16, #tpu.memory_space<vmem>>, %arg8: memref<128x128xbf16, #tpu.memory_space<vmem>>, %arg9: memref<128x128xbf16, #tpu.memory_space<vmem>>, %arg10: memref<128x128xbf16, #tpu.memory_space<vmem>>, %arg11: memref<128x256xbf16, #tpu.memory_space<vmem>>, %arg12: memref<128x128xbf16, #tpu.memory_space<vmem>>, %arg13: memref<128x1024xbf16, #tpu.memory_space<vmem>>, %arg14: memref<32x128xf32, #tpu.memory_space<vmem>>, %arg15: memref<32x1xf32, #tpu.memory_space<vmem>>, %arg16: memref<32x1xf32, #tpu.memory_space<vmem>>, %arg17: memref<256x128xbf16, #tpu.memory_space<vmem>>, %arg18: memref<256x1xf32, #tpu.memory_space<vmem>>, %arg19: memref<256x1xf32, #tpu.memory_space<vmem>>, %arg20: memref<256x1xf32, #tpu.memory_space<vmem>>) attributes {dimension_semantics = [#tpu.dimension_semantics<parallel>, #tpu.dimension_semantics<arbitrary>], iteration_bounds = array<i64: 2, 2>, scalar_prefetch = 0 : i64, scratch_operands = 4 : i64, tpu.core_type = #tpu.core_type<tc>, window_params = [{transform_indices = @transform_0, window_bounds = array<i64: 32, 128>}, {transform_indices = @transform_1, window_bounds = array<i64: 32, 8>}, {transform_indices = @transform_2, window_bounds = array<i64: 32, 128>}, {transform_indices = @transform_3, window_bounds = array<i64: 32, 8, 128>}, {transform_indices = @transform_4, window_bounds = array<i64: 256, 1>}, {pipeline_mode = #tpu.pipeline_mode<synchronous>, transform_indices = @transform_5, window_bounds = array<i64: 128, 128>}, {pipeline_mode = #tpu.pipeline_mode<synchronous>, transform_indices = @transform_6, window_bounds = array<i64: 128, 128>}, {pipeline_mode = #tpu.pipeline_mode<synchronous>, transform_indices = @transform_7, window_bounds = array<i64: 128, 128>}, {pipeline_mode = #tpu.pipeline_mode<synchronous>, transform_indices = @transform_8, window_bounds = array<i64: 128, 128>}, {pipeline_mode = #tpu.pipeline_mode<synchronous>, transform_indices = @transform_9, window_bounds = array<i64: 128, 256>}, {pipeline_mode = #tpu.pipeline_mode<synchronous>, transform_indices = @transform_10, window_bounds = array<i64: 128, 128>}, {transform_indices = @transform_11, window_bounds = array<i64: 128, 1024>}, {transform_indices = @transform_12, window_bounds = array<i64: 32, 128>}, {transform_indices = @transform_13, window_bounds = array<i64: 32, 1>}, {transform_indices = @transform_14, window_bounds = array<i64: 32, 1>}]} {
    %c0_i32 = arith.constant 0 : i32
    %0 = arith.cmpi eq, %arg1, %c0_i32 : i32
    %1 = arith.extui %0 : i1 to i32
    %c0_i32_0 = arith.constant 0 : i32
    %2 = arith.cmpi ne, %1, %c0_i32_0 : i32
    scf.if %2 {
      %c0_25 = arith.constant 0 : index
      %c0_26 = arith.constant 0 : index
      %40 = vector.load %arg2[%c0_25, %c0_26] : memref<32x128xbf16, #tpu.memory_space<vmem>>, vector<32x128xbf16>
      %c0_27 = arith.constant 0 : index
      %c0_28 = arith.constant 0 : index
      %41 = vector.load %arg7[%c0_27, %c0_28] : memref<128x128xbf16, #tpu.memory_space<vmem>>, vector<128x128xbf16>
      %cst_29 = arith.constant dense<0.000000e+00> : vector<32x128xf32>
      %42 = tpu.matmul %40, %41, %cst_29 {dimension_numbers = #tpu.dot_dimension_numbers<[1], [0], [0], [1], [0, 0, 1, 1], [], []>} : vector<32x128xbf16>, vector<128x128xbf16>, vector<32x128xf32> -> vector<32x128xf32>
      %43 = arith.truncf %42 : vector<32x128xf32> to vector<32x128xbf16>
      %c0_30 = arith.constant 0 : index
      %c0_31 = arith.constant 0 : index
      %44 = vector.load %arg8[%c0_30, %c0_31] : memref<128x128xbf16, #tpu.memory_space<vmem>>, vector<128x128xbf16>
      %cst_32 = arith.constant dense<0.000000e+00> : vector<32x128xf32>
      %45 = tpu.matmul %43, %44, %cst_32 {dimension_numbers = #tpu.dot_dimension_numbers<[1], [0], [0], [1], [0, 0, 1, 1], [], []>} : vector<32x128xbf16>, vector<128x128xbf16>, vector<32x128xf32> -> vector<32x128xf32>
      %cst_33 = arith.constant 0.000000e+00 : f32
      %46 = vector.broadcast %cst_33 : f32 to vector<32x128xf32>
      %47 = arith.maximumf %45, %46 : vector<32x128xf32>
      %48 = arith.truncf %47 : vector<32x128xf32> to vector<32x128xbf16>
      %c0_34 = arith.constant 0 : index
      %c0_35 = arith.constant 0 : index
      %49 = vector.load %arg8[%c0_34, %c0_35] : memref<128x128xbf16, #tpu.memory_space<vmem>>, vector<128x128xbf16>
      %cst_36 = arith.constant dense<0.000000e+00> : vector<32x128xf32>
      %50 = tpu.matmul %48, %49, %cst_36 {dimension_numbers = #tpu.dot_dimension_numbers<[1], [0], [0], [1], [0, 0, 1, 1], [], []>} : vector<32x128xbf16>, vector<128x128xbf16>, vector<32x128xf32> -> vector<32x128xf32>
      %cst_37 = arith.constant 0.000000e+00 : f32
      %51 = vector.broadcast %cst_37 : f32 to vector<32x128xf32>
      %52 = arith.maximumf %50, %51 : vector<32x128xf32>
      %53 = arith.truncf %52 : vector<32x128xf32> to vector<32x128xbf16>
      %c0_38 = arith.constant 0 : index
      %c0_39 = arith.constant 0 : index
      %54 = vector.load %arg9[%c0_38, %c0_39] : memref<128x128xbf16, #tpu.memory_space<vmem>>, vector<128x128xbf16>
      %cst_40 = arith.constant dense<0.000000e+00> : vector<32x128xf32>
      %55 = tpu.matmul %53, %54, %cst_40 {dimension_numbers = #tpu.dot_dimension_numbers<[1], [0], [0], [1], [0, 0, 1, 1], [], []>} : vector<32x128xbf16>, vector<128x128xbf16>, vector<32x128xf32> -> vector<32x128xf32>
      %c0_41 = arith.constant 0 : index
      %c0_42 = arith.constant 0 : index
      %56 = vector.load %arg14[%c0_41, %c0_42] : memref<32x128xf32, #tpu.memory_space<vmem>>, vector<32x128xf32>
      tpu.vector_store %arg14[%c0_41, %c0_42], %55 {strides = array<i32>} : memref<32x128xf32, #tpu.memory_space<vmem>>, vector<32x128xf32>,
      %57 = arith.truncf %55 : vector<32x128xf32> to vector<32x128xbf16>
      %c0_43 = arith.constant 0 : index
      %c0_44 = arith.constant 0 : index
      %58 = vector.load %arg10[%c0_43, %c0_44] : memref<128x128xbf16, #tpu.memory_space<vmem>>, vector<128x128xbf16>
      %cst_45 = arith.constant dense<0.000000e+00> : vector<32x128xf32>
      %59 = tpu.matmul %57, %58, %cst_45 {dimension_numbers = #tpu.dot_dimension_numbers<[1], [0], [0], [1], [0, 0, 1, 1], [], []>} : vector<32x128xbf16>, vector<128x128xbf16>, vector<32x128xf32> -> vector<32x128xf32>
      %60 = arith.truncf %59 : vector<32x128xf32> to vector<32x128xbf16>
      %c0_46 = arith.constant 0 : index
      %c0_47 = arith.constant 0 : index
      %61 = vector.load %arg11[%c0_46, %c0_47] : memref<128x256xbf16, #tpu.memory_space<vmem>>, vector<128x256xbf16>
      %cst_48 = arith.constant dense<0.000000e+00> : vector<32x256xf32>
      %62 = tpu.matmul %60, %61, %cst_48 {dimension_numbers = #tpu.dot_dimension_numbers<[1], [0], [0], [1], [0, 0, 1, 1], [], []>} : vector<32x128xbf16>, vector<128x256xbf16>, vector<32x256xf32> -> vector<32x256xf32>
      %63 = vector.extract_strided_slice %62 {offsets = [0, 0], sizes = [32, 128], strides = [1, 1]} : vector<32x256xf32> to vector<32x128xf32>
      %64 = vector.extract_strided_slice %62 {offsets = [0, 128], sizes = [32, 128], strides = [1, 1]} : vector<32x256xf32> to vector<32x128xf32>
      %c0_49 = arith.constant 0 : index
      %c0_50 = arith.constant 0 : index
      %65 = vector.load %arg4[%c0_49, %c0_50] : memref<32x128xf32, #tpu.memory_space<vmem>>, vector<32x128xf32>
      %cst_51 = arith.constant 5.000000e-01 : f32
      %66 = vector.broadcast %cst_51 : f32 to vector<32x128xf32>
      %67 = arith.mulf %66, %64 : vector<32x128xf32>
      %68 = math.exp %67 : vector<32x128xf32>
      %69 = arith.mulf %65, %68 : vector<32x128xf32>
      %70 = arith.addf %63, %69 : vector<32x128xf32>
      %71 = arith.mulf %63, %63 : vector<32x128xf32>
      %72 = math.exp %64 : vector<32x128xf32>
      %73 = arith.addf %71, %72 : vector<32x128xf32>
      %74 = arith.subf %73, %64 : vector<32x128xf32>
      %cst_52 = arith.constant 1.000000e+00 : f32
      %75 = vector.broadcast %cst_52 : f32 to vector<32x128xf32>
      %76 = arith.subf %74, %75 : vector<32x128xf32>
      %cst_53 = arith.constant dense<0.000000e+00> : vector<32xf32>
      %77 = vector.multi_reduction <add>, %76, %cst_53 [1] : vector<32x128xf32> to vector<32xf32>
      %78 = vector.shape_cast %77 : vector<32xf32> to vector<32x1xf32>
      %cst_54 = arith.constant 5.000000e-01 : f32
      %79 = vector.broadcast %cst_54 : f32 to vector<32x1xf32>
      %80 = arith.mulf %79, %78 : vector<32x1xf32>
      %c0_55 = arith.constant 0 : index
      %c0_56 = arith.constant 0 : index
      %81 = vector.load %arg15[%c0_55, %c0_56] : memref<32x1xf32, #tpu.memory_space<vmem>>, vector<32x1xf32>
      tpu.vector_store %arg15[%c0_55, %c0_56], %80 {strides = array<i32>} : memref<32x1xf32, #tpu.memory_space<vmem>>, vector<32x1xf32>,
      %82 = arith.truncf %70 : vector<32x128xf32> to vector<32x128xbf16>
      %c0_57 = arith.constant 0 : index
      %c0_58 = arith.constant 0 : index
      %83 = vector.load %arg12[%c0_57, %c0_58] : memref<128x128xbf16, #tpu.memory_space<vmem>>, vector<128x128xbf16>
      %cst_59 = arith.constant dense<0.000000e+00> : vector<32x128xf32>
      %84 = tpu.matmul %82, %83, %cst_59 {dimension_numbers = #tpu.dot_dimension_numbers<[1], [0], [0], [1], [0, 0, 1, 1], [], []>} : vector<32x128xbf16>, vector<128x128xbf16>, vector<32x128xf32> -> vector<32x128xf32>
      %c0_60 = arith.constant 0 : index
      %c0_61 = arith.constant 0 : index
      %c0_62 = arith.constant 0 : index
      %85 = vector.load %arg5[%c0_60, %c0_61, %c0_62] : memref<32x8x128xbf16, #tpu.memory_space<vmem>>, vector<32x8x128xbf16>
      %86 = arith.extf %85 : vector<32x8x128xbf16> to vector<32x8x128xf32>
      %87 = vector.shape_cast %59 : vector<32x128xf32> to vector<32x1x128xf32>
      %c0_63 = arith.constant 0 : index
      %c0_64 = arith.constant 0 : index
      %88 = vector.load %arg3[%c0_63, %c0_64] : memref<32x8xf32, #tpu.memory_space<vmem>>, vector<32x8xf32>
      %89 = vector.shape_cast %88 : vector<32x8xf32> to vector<32x8x1xf32>
      %90 = vector.broadcast %87 : vector<32x1x128xf32> to vector<32x8x128xf32>
      %91 = vector.broadcast %89 : vector<32x8x1xf32> to vector<32x8x128xf32>
      %92 = arith.mulf %90, %91 : vector<32x8x128xf32>
      %93 = arith.addf %86, %92 : vector<32x8x128xf32>
      %94 = vector.shape_cast %84 : vector<32x128xf32> to vector<32x1x128xf32>
      %95 = vector.broadcast %94 : vector<32x1x128xf32> to vector<32x8x128xf32>
      %96 = arith.addf %93, %95 : vector<32x8x128xf32>
      %97 = vector.shape_cast %96 : vector<32x8x128xf32> to vector<256x128xf32>
      %98 = arith.truncf %97 : vector<256x128xf32> to vector<256x128xbf16>
      %c0_65 = arith.constant 0 : index
      %c0_66 = arith.constant 0 : index
      %99 = vector.load %arg17[%c0_65, %c0_66] : memref<256x128xbf16, #tpu.memory_space<vmem>>, vector<256x128xbf16>
      tpu.vector_store %arg17[%c0_65, %c0_66], %98 {strides = array<i32>} : memref<256x128xbf16, #tpu.memory_space<vmem>>, vector<256x128xbf16>,
      %cst_67 = arith.constant 0xFF800000 : f32
      %100 = vector.broadcast %cst_67 : f32 to vector<256x1xf32>
      %c0_68 = arith.constant 0 : index
      %c0_69 = arith.constant 0 : index
      %101 = vector.load %arg18[%c0_68, %c0_69] : memref<256x1xf32, #tpu.memory_space<vmem>>, vector<256x1xf32>
      tpu.vector_store %arg18[%c0_68, %c0_69], %100 {strides = array<i32>} : memref<256x1xf32, #tpu.memory_space<vmem>>, vector<256x1xf32>,
      %cst_70 = arith.constant 0.000000e+00 : f32
      %102 = vector.broadcast %cst_70 : f32 to vector<256x1xf32>
      %c0_71 = arith.constant 0 : index
      %c0_72 = arith.constant 0 : index
      %103 = vector.load %arg19[%c0_71, %c0_72] : memref<256x1xf32, #tpu.memory_space<vmem>>, vector<256x1xf32>
      tpu.vector_store %arg19[%c0_71, %c0_72], %102 {strides = array<i32>} : memref<256x1xf32, #tpu.memory_space<vmem>>, vector<256x1xf32>,
      %cst_73 = arith.constant 0.000000e+00 : f32
      %104 = vector.broadcast %cst_73 : f32 to vector<256x1xf32>
      %c0_74 = arith.constant 0 : index
      %c0_75 = arith.constant 0 : index
      %105 = vector.load %arg20[%c0_74, %c0_75] : memref<256x1xf32, #tpu.memory_space<vmem>>, vector<256x1xf32>
      tpu.vector_store %arg20[%c0_74, %c0_75], %104 {strides = array<i32>} : memref<256x1xf32, #tpu.memory_space<vmem>>, vector<256x1xf32>,
    } else {
    }
    %c0 = arith.constant 0 : index
    %c0_1 = arith.constant 0 : index
    %3 = vector.load %arg17[%c0, %c0_1] : memref<256x128xbf16, #tpu.memory_space<vmem>>, vector<256x128xbf16>
    %c0_2 = arith.constant 0 : index
    %c0_3 = arith.constant 0 : index
    %4 = vector.load %arg13[%c0_2, %c0_3] : memref<128x1024xbf16, #tpu.memory_space<vmem>>, vector<128x1024xbf16>
    %cst = arith.constant dense<0.000000e+00> : vector<256x1024xf32>
    %5 = tpu.matmul %3, %4, %cst {dimension_numbers = #tpu.dot_dimension_numbers<[1], [0], [0], [1], [0, 0, 1, 1], [], []>} : vector<256x128xbf16>, vector<128x1024xbf16>, vector<256x1024xf32> -> vector<256x1024xf32>
    %c0_4 = arith.constant 0 : index
    %c0_5 = arith.constant 0 : index
    %6 = vector.load %arg6[%c0_4, %c0_5] : memref<256x1xi32, #tpu.memory_space<vmem>>, vector<256x1xi32>
    %c1024_i32 = arith.constant 1024 : i32
    %7 = arith.muli %arg1, %c1024_i32 : i32
    %8 = vector.broadcast %7 : i32 to vector<256x1xi32>
    %9 = arith.subi %6, %8 : vector<256x1xi32>
    %10 = tpu.iota {dimensions = array<i32: 1>} : vector<256x1024xi32>
    %c0_6 = arith.constant 0 : index
    %c0_7 = arith.constant 0 : index
    %11 = vector.load %arg20[%c0_6, %c0_7] : memref<256x1xf32, #tpu.memory_space<vmem>>, vector<256x1xf32>
    %12 = vector.broadcast %9 : vector<256x1xi32> to vector<256x1024xi32>
    %13 = arith.cmpi eq, %10, %12 : vector<256x1024xi32>
    %cst_8 = arith.constant 0.000000e+00 : f32
    %14 = vector.broadcast %cst_8 : f32 to vector<256x1024xf32>
    %15 = arith.select %13, %5, %14 : vector<256x1024xi1>, vector<256x1024xf32>
    %cst_9 = arith.constant dense<0.000000e+00> : vector<256xf32>
    %16 = vector.multi_reduction <add>, %15, %cst_9 [1] : vector<256x1024xf32> to vector<256xf32>
    %17 = vector.shape_cast %16 : vector<256xf32> to vector<256x1xf32>
    %18 = arith.addf %11, %17 : vector<256x1xf32>
    %c0_10 = arith.constant 0 : index
    %c0_11 = arith.constant 0 : index
    %19 = vector.load %arg20[%c0_10, %c0_11] : memref<256x1xf32, #tpu.memory_space<vmem>>, vector<256x1xf32>
    tpu.vector_store %arg20[%c0_10, %c0_11], %18 {strides = array<i32>} : memref<256x1xf32, #tpu.memory_space<vmem>>, vector<256x1xf32>,
    %cst_12 = arith.constant dense<0xFF800000> : vector<256xf32>
    %20 = vector.multi_reduction <maximumf>, %5, %cst_12 [1] : vector<256x1024xf32> to vector<256xf32>
    %21 = vector.shape_cast %20 : vector<256xf32> to vector<256x1xf32>
    %c0_13 = arith.constant 0 : index
    %c0_14 = arith.constant 0 : index
    %22 = vector.load %arg18[%c0_13, %c0_14] : memref<256x1xf32, #tpu.memory_space<vmem>>, vector<256x1xf32>
    %23 = arith.maximumf %22, %21 : vector<256x1xf32>
    %c0_15 = arith.constant 0 : index
    %c0_16 = arith.constant 0 : index
    %24 = vector.load %arg19[%c0_15, %c0_16] : memref<256x1xf32, #tpu.memory_space<vmem>>, vector<256x1xf32>
    %c0_17 = arith.constant 0 : index
    %c0_18 = arith.constant 0 : index
    %25 = vector.load %arg18[%c0_17, %c0_18] : memref<256x1xf32, #tpu.memory_space<vmem>>, vector<256x1xf32>
    %26 = arith.subf %25, %23 : vector<256x1xf32>
    %27 = math.exp %26 : vector<256x1xf32>
    %28 = arith.mulf %24, %27 : vector<256x1xf32>
    %29 = vector.broadcast %23 : vector<256x1xf32> to vector<256x1024xf32>
    %30 = arith.subf %5, %29 : vector<256x1024xf32>
    %31 = math.exp %30 : vector<256x1024xf32>
    %cst_19 = arith.constant dense<0.000000e+00> : vector<256xf32>
    %32 = vector.multi_reduction <add>, %31, %cst_19 [1] : vector<256x1024xf32> to vector<256xf32>
    %33 = vector.shape_cast %32 : vector<256xf32> to vector<256x1xf32>
    %34 = arith.addf %28, %33 : vector<256x1xf32>
    %c0_20 = arith.constant 0 : index
    %c0_21 = arith.constant 0 : index
    %35 = vector.load %arg19[%c0_20, %c0_21] : memref<256x1xf32, #tpu.memory_space<vmem>>, vector<256x1xf32>
    tpu.vector_store %arg19[%c0_20, %c0_21], %34 {strides = array<i32>} : memref<256x1xf32, #tpu.memory_space<vmem>>, vector<256x1xf32>,
    %c0_22 = arith.constant 0 : index
    %c0_23 = arith.constant 0 : index
    %36 = vector.load %arg18[%c0_22, %c0_23] : memref<256x1xf32, #tpu.memory_space<vmem>>, vector<256x1xf32>
    tpu.vector_store %arg18[%c0_22, %c0_23], %23 {strides = array<i32>} : memref<256x1xf32, #tpu.memory_space<vmem>>, vector<256x1xf32>,
    %c1_i32 = arith.constant 1 : i32
    %37 = arith.cmpi eq, %arg1, %c1_i32 : i32
    %38 = arith.extui %37 : i1 to i32
    %c0_i32_24 = arith.constant 0 : i32
    %39 = arith.cmpi ne, %38, %c0_i32_24 : i32
    scf.if %39 {
      %c0_25 = arith.constant 0 : index
      %c0_26 = arith.constant 0 : index
      %40 = vector.load %arg18[%c0_25, %c0_26] : memref<256x1xf32, #tpu.memory_space<vmem>>, vector<256x1xf32>
      %c0_27 = arith.constant 0 : index
      %c0_28 = arith.constant 0 : index
      %41 = vector.load %arg19[%c0_27, %c0_28] : memref<256x1xf32, #tpu.memory_space<vmem>>, vector<256x1xf32>
      %42 = math.log %41 : vector<256x1xf32>
      %43 = arith.addf %40, %42 : vector<256x1xf32>
      %c0_29 = arith.constant 0 : index
      %c0_30 = arith.constant 0 : index
      %44 = vector.load %arg6[%c0_29, %c0_30] : memref<256x1xi32, #tpu.memory_space<vmem>>, vector<256x1xi32>
      %c0_i32_31 = arith.constant 0 : i32
      %45 = vector.broadcast %c0_i32_31 : i32 to vector<256x1xi32>
      %46 = arith.cmpi ne, %44, %45 : vector<256x1xi32>
      %47 = arith.extui %46 : vector<256x1xi1> to vector<256x1xi32>
      %48 = arith.sitofp %47 : vector<256x1xi32> to vector<256x1xf32>
      %c0_32 = arith.constant 0 : index
      %c0_33 = arith.constant 0 : index
      %49 = vector.load %arg20[%c0_32, %c0_33] : memref<256x1xf32, #tpu.memory_space<vmem>>, vector<256x1xf32>
      %50 = arith.subf %43, %49 : vector<256x1xf32>
      %51 = arith.mulf %50, %48 : vector<256x1xf32>
      %52 = vector.shape_cast %51 : vector<256x1xf32> to vector<32x8xf32>
      %cst_34 = arith.constant dense<0.000000e+00> : vector<32xf32>
      %53 = vector.multi_reduction <add>, %52, %cst_34 [1] : vector<32x8xf32> to vector<32xf32>
      %54 = vector.shape_cast %53 : vector<32xf32> to vector<32x1xf32>
      %c0_35 = arith.constant 0 : index
      %c0_36 = arith.constant 0 : index
      %55 = vector.load %arg16[%c0_35, %c0_36] : memref<32x1xf32, #tpu.memory_space<vmem>>, vector<32x1xf32>
      tpu.vector_store %arg16[%c0_35, %c0_36], %54 {strides = array<i32>} : memref<32x1xf32, #tpu.memory_space<vmem>>, vector<32x1xf32>,
    } else {
    }
    return
  }
  func.func @transform_0(%arg0: i32, %arg1: i32) -> (i32, i32) {
    %c0_i32 = arith.constant 0 : i32
    %c0_i32_0 = arith.constant 0 : i32
    return %arg0, %c0_i32 : i32, i32
  }
  func.func @transform_1(%arg0: i32, %arg1: i32) -> (i32, i32) {
    %c0_i32 = arith.constant 0 : i32
    %c0_i32_0 = arith.constant 0 : i32
    return %arg0, %c0_i32 : i32, i32
  }
  func.func @transform_2(%arg0: i32, %arg1: i32) -> (i32, i32) {
    %c0_i32 = arith.constant 0 : i32
    %c0_i32_0 = arith.constant 0 : i32
    return %arg0, %c0_i32 : i32, i32
  }
  func.func @transform_3(%arg0: i32, %arg1: i32) -> (i32, i32, i32) {
    %c0_i32 = arith.constant 0 : i32
    %c0_i32_0 = arith.constant 0 : i32
    %c0_i32_1 = arith.constant 0 : i32
    return %arg0, %c0_i32, %c0_i32_0 : i32, i32, i32
  }
  func.func @transform_4(%arg0: i32, %arg1: i32) -> (i32, i32) {
    %c0_i32 = arith.constant 0 : i32
    %c0_i32_0 = arith.constant 0 : i32
    return %arg0, %c0_i32 : i32, i32
  }
  func.func @transform_5(%arg0: i32, %arg1: i32) -> (i32, i32) {
    %c0_i32 = arith.constant 0 : i32
    %c0_i32_0 = arith.constant 0 : i32
    %c0_i32_1 = arith.constant 0 : i32
    return %c0_i32, %c0_i32_0 : i32, i32
  }
  func.func @transform_6(%arg0: i32, %arg1: i32) -> (i32, i32) {
    %c0_i32 = arith.constant 0 : i32
    %c0_i32_0 = arith.constant 0 : i32
    %c0_i32_1 = arith.constant 0 : i32
    return %c0_i32, %c0_i32_0 : i32, i32
  }
  func.func @transform_7(%arg0: i32, %arg1: i32) -> (i32, i32) {
    %c0_i32 = arith.constant 0 : i32
    %c0_i32_0 = arith.constant 0 : i32
    %c0_i32_1 = arith.constant 0 : i32
    return %c0_i32, %c0_i32_0 : i32, i32
  }
  func.func @transform_8(%arg0: i32, %arg1: i32) -> (i32, i32) {
    %c0_i32 = arith.constant 0 : i32
    %c0_i32_0 = arith.constant 0 : i32
    %c0_i32_1 = arith.constant 0 : i32
    return %c0_i32, %c0_i32_0 : i32, i32
  }
  func.func @transform_9(%arg0: i32, %arg1: i32) -> (i32, i32) {
    %c0_i32 = arith.constant 0 : i32
    %c0_i32_0 = arith.constant 0 : i32
    %c0_i32_1 = arith.constant 0 : i32
    return %c0_i32, %c0_i32_0 : i32, i32
  }
  func.func @transform_10(%arg0: i32, %arg1: i32) -> (i32, i32) {
    %c0_i32 = arith.constant 0 : i32
    %c0_i32_0 = arith.constant 0 : i32
    %c0_i32_1 = arith.constant 0 : i32
    return %c0_i32, %c0_i32_0 : i32, i32
  }
  func.func @transform_11(%arg0: i32, %arg1: i32) -> (i32, i32) {
    %c0_i32 = arith.constant 0 : i32
    %c0_i32_0 = arith.constant 0 : i32
    return %c0_i32, %arg1 : i32, i32
  }
  func.func @transform_12(%arg0: i32, %arg1: i32) -> (i32, i32) {
    %c0_i32 = arith.constant 0 : i32
    %c0_i32_0 = arith.constant 0 : i32
    return %arg0, %c0_i32 : i32, i32
  }
  func.func @transform_13(%arg0: i32, %arg1: i32) -> (i32, i32) {
    %c0_i32 = arith.constant 0 : i32
    %c0_i32_0 = arith.constant 0 : i32
    return %arg0, %c0_i32 : i32, i32
  }
  func.func @transform_14(%arg0: i32, %arg1: i32) -> (i32, i32) {
    %c0_i32 = arith.constant 0 : i32
    %c0_i32_0 = arith.constant 0 : i32
    return %arg0, %c0_i32 : i32, i32
  }
}

</mosaic_0001>

<llo_original>
// kernel: tpu_custom_call.1
$region0: #{tpu_custom_call.1}
  #allocation0 [shape = 'u32[]', space=smem, size = 0x4, offset = 0x4, fixed_abs, tag = 'smem constant byte address 0x4 - core index']
  #allocation1 [shape = 'u32[144,128]{1,0:T(1,128)}', space=vmem, size = 0x12000, scoped, tag = 'internal scratch']
  #allocation2 [shape = 'bf16[256,128]{1,0:T(16,128)(2,1)}', space=vmem, size = 0x10000, scoped, tag = 'scratch operand']
  #allocation3 [shape = 'f32[256,1]{1,0:T(8,128)}', space=vmem, size = 0x20000, scoped, tag = 'scratch operand']
  #allocation4 [shape = 'f32[256,1]{1,0:T(8,128)}', space=vmem, size = 0x20000, scoped, tag = 'scratch operand']
  #allocation5 [shape = 'f32[256,1]{1,0:T(8,128)}', space=vmem, size = 0x20000, scoped, tag = 'scratch operand']
  %s0 = inlined_call_operand.hbm [shape: bf16[64,128], index: 0, kind: input, shape index: {}]
  %s1 = inlined_call_operand.vmem [shape: f32[64,8], index: 1, kind: input, shape index: {}]
  %s2 = inlined_call_operand.vmem [shape: f32[64,128], index: 2, kind: input, shape index: {}]
  %s3 = inlined_call_operand.vmem [shape: bf16[64,8,128], index: 3, kind: input, shape index: {}]
  %s4 = inlined_call_operand.vmem [shape: s32[512,1], index: 4, kind: input, shape index: {}]
  %s5 = inlined_call_operand.vmem [shape: bf16[128,128], index: 5, kind: input, shape index: {}]
  %s6 = inlined_call_operand.vmem [shape: bf16[128,128], index: 6, kind: input, shape index: {}]
  %s7 = inlined_call_operand.hbm [shape: bf16[128,128], index: 7, kind: input, shape index: {}]
  %s8 = inlined_call_operand.hbm [shape: bf16[128,128], index: 8, kind: input, shape index: {}]
  %s9 = inlined_call_operand.vmem [shape: bf16[128,256], index: 9, kind: input, shape index: {}]
  %s10 = inlined_call_operand.hbm [shape: bf16[128,128], index: 10, kind: input, shape index: {}]
  %s11 = inlined_call_operand.hbm [shape: bf16[128,2048], index: 11, kind: input, shape index: {}]
  %s12 = inlined_call_operand.hbm [shape: f32[64,128], index: 12, kind: output, shape index: {0}]
  %s13 = inlined_call_operand.vmem [shape: f32[64,1], index: 13, kind: output, shape index: {1}]
  %s14 = inlined_call_operand.vmem [shape: f32[64,1], index: 14, kind: output, shape index: {2}]
  %15 = xla_tuple %s12, %s13, %s14
  %s16 = sld [smem:[#allocation0]]
  $region125: #{tpu_custom_call.1} parent=0
    _
  %s18 = ssub.s32 1, %s16
  %s19 = scalar_select 0, %s18, %s16
  $region1: #{tpu_custom_call.1} parent=0
    #allocation6 [shape = 'u8[16384]{0}', space=vmem, size = 0x4000, scoped, tag = 'input window, operand 0']
    #allocation7 [shape = 's32[2]{0}', space=sflag, size = 0x8, scoped, tag = 'scoped memory for tpu_custom_call.1']
    #allocation8 [shape = 's32[2]{0}', space=sflag, size = 0x8, scoped, tag = 'scoped memory for tpu_custom_call.1']
    #allocation9 [shape = 'u8[32768]{0}', space=vmem, size = 0x8000, scoped, tag = 'input window, operand 7, single buffered']
    #allocation10 [shape = 's32[1]{0}', space=sflag, size = 0x4, scoped, tag = 'scoped memory for tpu_custom_call.1']
    #allocation11 [shape = 'u8[32768]{0}', space=vmem, size = 0x8000, scoped, tag = 'input window, operand 8, single buffered']
    #allocation12 [shape = 'u8[32768]{0}', space=vmem, size = 0x8000, scoped, tag = 'input window, operand 10, single buffered']
    #allocation13 [shape = 's32[1]{0}', space=sflag, size = 0x4, scoped, tag = 'scoped memory for tpu_custom_call.1']
    #allocation14 [shape = 'u8[524288]{0}', space=vmem, size = 0x80000, scoped, tag = 'input window, operand 11']
    #allocation15 [shape = 'u8[32768]{0}', space=vmem, size = 0x8000, scoped, tag = 'output window, operand 0']
    %20 = vsyncpa [#allocation7], 0
    %s21 = scalar_lea.sflag [#allocation7], 1
    %22 = vsyncpa %s21, 0
    %23 = vsyncpa [#allocation10], 0
    %24 = vsyncpa [#allocation13], 0
    %25 = vsyncpa [#allocation8], 0
    %s26 = scalar_lea.sflag [#allocation8], 1
    %27 = vsyncpa %s26, 0
    loop: start=0, step=1, limit=6
    $region2: #{tpu_custom_call.1} parent=1 // loop_pre_header
      _
    $region3: #{tpu_custom_call.1} parent=1 // loop_header
      %s29 = sphi 0, %s33
      %p30 = scmp.ge.s32.totalorder %s29, 6
      %s36 = sphi 0, %s48
      %s37 = sphi 0, %s44
      %s38 = sphi 0, %s36
      %s39 = sphi 0, %s37
      %s40 = sphi 0, %s38
      %s41 = sphi 0, %s39
      %s51 = sphi 0, %s53
      %s54 = sphi 0, %s51
      %s55 = sphi 0, %s54
      %s71 = sphi 0, %s55
      %s77 = sphi 0, %s79
      %s80 = sphi 0, %s77
      %s81 = sphi 0, %s80
      %s97 = sphi 0, %s81
      %s103 = sphi 0, %s105
      %s106 = sphi 0, %s103
      %s107 = sphi 0, %s106
      %s123 = sphi 0, %s107
      %s129 = sphi 0, %s131
      %s132 = sphi 0, %s129
      %s133 = sphi 0, %s132
      %s149 = sphi 0, %s133
      %s155 = sphi 0, %s157
      %s158 = sphi 0, %s155
      %s159 = sphi 0, %s158
      %s175 = sphi 0, %s159
      %s179 = sphi 0, %s179
      %s181 = sphi 0, %s179
      %s182 = sphi 0, %s181
      %s196 = sphi 0, %s182
      %s200 = sphi 0, %s200
      %s202 = sphi 0, %s200
      %s203 = sphi 0, %s202
      %s217 = sphi 0, %s203
      %s221 = sphi 0, %s221
      %s223 = sphi 0, %s221
      %s224 = sphi 0, %s223
      %s238 = sphi 0, %s224
      %s242 = sphi 0, %s242
      %s244 = sphi 0, %s242
      %s245 = sphi 0, %s244
      %s259 = sphi 0, %s245
      %s263 = sphi 0, %s263
      %s265 = sphi 0, %s263
      %s266 = sphi 0, %s265
      %s280 = sphi 0, %s266
      %s284 = sphi 0, %s284
      %s286 = sphi 0, %s284
      %s287 = sphi 0, %s286
      %s301 = sphi 0, %s287
      %s307 = sphi 0, %s309
      %s310 = sphi 0, %s307
      %s311 = sphi 0, %s310
      %s327 = sphi 0, %s311
      %s333 = sphi 0, %s335
      %s336 = sphi 0, %s333
      %s337 = sphi 0, %s336
      %s353 = sphi 0, %s337
      %s359 = sphi 0, %s361
      %s362 = sphi 0, %s359
      %s363 = sphi 0, %s362
      %s379 = sphi 0, %s363
      %s385 = sphi 0, %s387
      %s388 = sphi 0, %s385
      %s389 = sphi 0, %s388
      %s405 = sphi 0, %s389
    $region4: #{tpu_custom_call.1} parent=1 // loop_header_branch
      %32 = sbr.rel (%p30) target = $region8
    $region5: #{tpu_custom_call.1} parent=1 // loop_body
      %s34 = ssub.s32 %s29, 1
      %s35 = ssub.s32 %s29, 2
      %s42 = sadd.s32 1, %s37
      %p43 = scmp.ge.s32.totalorder %s42, 2
      %s44 = scalar_select %p43, 0, %s42
      %s45 = sadd.s32 1, %s36
      %s46 = scalar_select %p43, %s45, %s36
      %p47 = scmp.ge.s32.totalorder %s46, 2
      %s48 = scalar_select %p47, 0, %s46
      %s49 = ssub.s32 %s36, %s48
      %p50 = scmp.eq.s32.totalorder %s49, 0
      %s52 = sadd.s32 %s51, 1
      %s53 = scalar_select %p50, %s51, %s52
      %p56 = pneg %p50
      %p57 = scmp.eq.s32.totalorder %s29, 3
      %p58 = por %p56, %p57
      %p59 = scmp.ne.s32.totalorder %s51, %s54
      %p60 = scmp.eq.s32.totalorder %s29, 0
      %p61 = por %p59, %p60
      %p62 = scmp.ne.s32.totalorder %s51, %s54
      %p63 = scmp.eq.s32.totalorder %s34, 3
      %p64 = por %p62, %p63
      %p65 = scmp.ne.s32.totalorder %s54, %s55
      %p66 = scmp.eq.s32.totalorder %s34, 0
      %p67 = por %p65, %p66
      %p68 = scmp.ne.s32.totalorder %s54, %s55
      %p69 = scmp.eq.s32.totalorder %s35, 3
      %p70 = por %p68, %p69
      %p72 = scmp.ne.s32.totalorder %s55, %s71
      %p73 = scmp.eq.s32.totalorder %s35, 0
      %p74 = por %p72, %p73
      %s75 = ssub.s32 %s36, %s48
      %p76 = scmp.eq.s32.totalorder %s75, 0
      %s78 = sadd.s32 %s77, 1
      %s79 = scalar_select %p76, %s77, %s78
      %p82 = pneg %p76
      %p83 = scmp.eq.s32.totalorder %s29, 3
      %p84 = por %p82, %p83
      %p85 = scmp.ne.s32.totalorder %s77, %s80
      %p86 = scmp.eq.s32.totalorder %s29, 0
      %p87 = por %p85, %p86
      %p88 = scmp.ne.s32.totalorder %s77, %s80
      %p89 = scmp.eq.s32.totalorder %s34, 3
      %p90 = por %p88, %p89
      %p91 = scmp.ne.s32.totalorder %s80, %s81
      %p92 = scmp.eq.s32.totalorder %s34, 0
      %p93 = por %p91, %p92
      %p94 = scmp.ne.s32.totalorder %s80, %s81
      %p95 = scmp.eq.s32.totalorder %s35, 3
      %p96 = por %p94, %p95
      %p98 = scmp.ne.s32.totalorder %s81, %s97
      %p99 = scmp.eq.s32.totalorder %s35, 0
      %p100 = por %p98, %p99
      %s101 = ssub.s32 %s36, %s48
      %p102 = scmp.eq.s32.totalorder %s101, 0
      %s104 = sadd.s32 %s103, 1
      %s105 = scalar_select %p102, %s103, %s104
      %p108 = pneg %p102
      %p109 = scmp.eq.s32.totalorder %s29, 3
      %p110 = por %p108, %p109
      %p111 = scmp.ne.s32.totalorder %s103, %s106
      %p112 = scmp.eq.s32.totalorder %s29, 0
      %p113 = por %p111, %p112
      %p114 = scmp.ne.s32.totalorder %s103, %s106
      %p115 = scmp.eq.s32.totalorder %s34, 3
      %p116 = por %p114, %p115
      %p117 = scmp.ne.s32.totalorder %s106, %s107
      %p118 = scmp.eq.s32.totalorder %s34, 0
      %p119 = por %p117, %p118
      %p120 = scmp.ne.s32.totalorder %s106, %s107
      %p121 = scmp.eq.s32.totalorder %s35, 3
      %p122 = por %p120, %p121
      %p124 = scmp.ne.s32.totalorder %s107, %s123
      %p125 = scmp.eq.s32.totalorder %s35, 0
      %p126 = por %p124, %p125
      %s127 = ssub.s32 %s36, %s48
      %p128 = scmp.eq.s32.totalorder %s127, 0
      %s130 = sadd.s32 %s129, 1
      %s131 = scalar_select %p128, %s129, %s130
      %p134 = pneg %p128
      %p135 = scmp.eq.s32.totalorder %s29, 3
      %p136 = por %p134, %p135
      %p137 = scmp.ne.s32.totalorder %s129, %s132
      %p138 = scmp.eq.s32.totalorder %s29, 0
      %p139 = por %p137, %p138
      %p140 = scmp.ne.s32.totalorder %s129, %s132
      %p141 = scmp.eq.s32.totalorder %s34, 3
      %p142 = por %p140, %p141
      %p143 = scmp.ne.s32.totalorder %s132, %s133
      %p144 = scmp.eq.s32.totalorder %s34, 0
      %p145 = por %p143, %p144
      %p146 = scmp.ne.s32.totalorder %s132, %s133
      %p147 = scmp.eq.s32.totalorder %s35, 3
      %p148 = por %p146, %p147
      %p150 = scmp.ne.s32.totalorder %s133, %s149
      %p151 = scmp.eq.s32.totalorder %s35, 0
      %p152 = por %p150, %p151
      %s153 = ssub.s32 %s36, %s48
      %p154 = scmp.eq.s32.totalorder %s153, 0
      %s156 = sadd.s32 %s155, 1
      %s157 = scalar_select %p154, %s155, %s156
      %p160 = pneg %p154
      %p161 = scmp.eq.s32.totalorder %s29, 3
      %p162 = por %p160, %p161
      %p163 = scmp.ne.s32.totalorder %s155, %s158
      %p164 = scmp.eq.s32.totalorder %s29, 0
      %p165 = por %p163, %p164
      %p166 = scmp.ne.s32.totalorder %s155, %s158
      %p167 = scmp.eq.s32.totalorder %s34, 3
      %p168 = por %p166, %p167
      %p169 = scmp.ne.s32.totalorder %s158, %s159
      %p170 = scmp.eq.s32.totalorder %s34, 0
      %p171 = por %p169, %p170
      %p172 = scmp.ne.s32.totalorder %s158, %s159
      %p173 = scmp.eq.s32.totalorder %s35, 3
      %p174 = por %p172, %p173
      %p176 = scmp.ne.s32.totalorder %s159, %s175
      %p177 = scmp.eq.s32.totalorder %s35, 0
      %p178 = por %p176, %p177
      %s180 = sadd.s32 %s179, 1
      %p183 = scmp.eq.s32.totalorder %s29, 3
      %p184 = scmp.ne.s32.totalorder %s179, %s181
      %p185 = scmp.eq.s32.totalorder %s29, 0
      %p186 = por %p184, %p185
      %p187 = scmp.ne.s32.totalorder %s179, %s181
      %p188 = scmp.eq.s32.totalorder %s34, 3
      %p189 = por %p187, %p188
      %p190 = scmp.ne.s32.totalorder %s181, %s182
      %p191 = scmp.eq.s32.totalorder %s34, 0
      %p192 = por %p190, %p191
      %p193 = scmp.ne.s32.totalorder %s181, %s182
      %p194 = scmp.eq.s32.totalorder %s35, 3
      %p195 = por %p193, %p194
      %p197 = scmp.ne.s32.totalorder %s182, %s196
      %p198 = scmp.eq.s32.totalorder %s35, 0
      %p199 = por %p197, %p198
      %s201 = sadd.s32 %s200, 1
      %p204 = scmp.eq.s32.totalorder %s29, 3
      %p205 = scmp.ne.s32.totalorder %s200, %s202
      %p206 = scmp.eq.s32.totalorder %s29, 0
      %p207 = por %p205, %p206
      %p208 = scmp.ne.s32.totalorder %s200, %s202
      %p209 = scmp.eq.s32.totalorder %s34, 3
      %p210 = por %p208, %p209
      %p211 = scmp.ne.s32.totalorder %s202, %s203
      %p212 = scmp.eq.s32.totalorder %s34, 0
      %p213 = por %p211, %p212
      %p214 = scmp.ne.s32.totalorder %s202, %s203
      %p215 = scmp.eq.s32.totalorder %s35, 3
      %p216 = por %p214, %p215
      %p218 = scmp.ne.s32.totalorder %s203, %s217
      %p219 = scmp.eq.s32.totalorder %s35, 0
      %p220 = por %p218, %p219
      %s222 = sadd.s32 %s221, 1
      %p225 = scmp.eq.s32.totalorder %s29, 3
      %p226 = scmp.ne.s32.totalorder %s221, %s223
      %p227 = scmp.eq.s32.totalorder %s29, 0
      %p228 = por %p226, %p227
      %p229 = scmp.ne.s32.totalorder %s221, %s223
      %p230 = scmp.eq.s32.totalorder %s34, 3
      %p231 = por %p229, %p230
      %p232 = scmp.ne.s32.totalorder %s223, %s224
      %p233 = scmp.eq.s32.totalorder %s34, 0
      %p234 = por %p232, %p233
      %p235 = scmp.ne.s32.totalorder %s223, %s224
      %p236 = scmp.eq.s32.totalorder %s35, 3
      %p237 = por %p235, %p236
      %p239 = scmp.ne.s32.totalorder %s224, %s238
      %p240 = scmp.eq.s32.totalorder %s35, 0
      %p241 = por %p239, %p240
      %s243 = sadd.s32 %s242, 1
      %p246 = scmp.eq.s32.totalorder %s29, 3
      %p247 = scmp.ne.s32.totalorder %s242, %s244
      %p248 = scmp.eq.s32.totalorder %s29, 0
      %p249 = por %p247, %p248
      %p250 = scmp.ne.s32.totalorder %s242, %s244
      %p251 = scmp.eq.s32.totalorder %s34, 3
      %p252 = por %p250, %p251
      %p253 = scmp.ne.s32.totalorder %s244, %s245
      %p254 = scmp.eq.s32.totalorder %s34, 0
      %p255 = por %p253, %p254
      %p256 = scmp.ne.s32.totalorder %s244, %s245
      %p257 = scmp.eq.s32.totalorder %s35, 3
      %p258 = por %p256, %p257
      %p260 = scmp.ne.s32.totalorder %s245, %s259
      %p261 = scmp.eq.s32.totalorder %s35, 0
      %p262 = por %p260, %p261
      %s264 = sadd.s32 %s263, 1
      %p267 = scmp.eq.s32.totalorder %s29, 3
      %p268 = scmp.ne.s32.totalorder %s263, %s265
      %p269 = scmp.eq.s32.totalorder %s29, 0
      %p270 = por %p268, %p269
      %p271 = scmp.ne.s32.totalorder %s263, %s265
      %p272 = scmp.eq.s32.totalorder %s34, 3
      %p273 = por %p271, %p272
      %p274 = scmp.ne.s32.totalorder %s265, %s266
      %p275 = scmp.eq.s32.totalorder %s34, 0
      %p276 = por %p274, %p275
      %p277 = scmp.ne.s32.totalorder %s265, %s266
      %p278 = scmp.eq.s32.totalorder %s35, 3
      %p279 = por %p277, %p278
      %p281 = scmp.ne.s32.totalorder %s266, %s280
      %p282 = scmp.eq.s32.totalorder %s35, 0
      %p283 = por %p281, %p282
      %s285 = sadd.s32 %s284, 1
      %p288 = scmp.eq.s32.totalorder %s29, 3
      %p289 = scmp.ne.s32.totalorder %s284, %s286
      %p290 = scmp.eq.s32.totalorder %s29, 0
      %p291 = por %p289, %p290
      %p292 = scmp.ne.s32.totalorder %s284, %s286
      %p293 = scmp.eq.s32.totalorder %s34, 3
      %p294 = por %p292, %p293
      %p295 = scmp.ne.s32.totalorder %s286, %s287
      %p296 = scmp.eq.s32.totalorder %s34, 0
      %p297 = por %p295, %p296
      %p298 = scmp.ne.s32.totalorder %s286, %s287
      %p299 = scmp.eq.s32.totalorder %s35, 3
      %p300 = por %p298, %p299
      %p302 = scmp.ne.s32.totalorder %s287, %s301
      %p303 = scmp.eq.s32.totalorder %s35, 0
      %p304 = por %p302, %p303
      %s305 = ssub.s32 %s37, %s44
      %p306 = scmp.eq.s32.totalorder %s305, 0
      %s308 = sadd.s32 %s307, 1
      %s309 = scalar_select %p306, %s307, %s308
      %p312 = pneg %p306
      %p313 = scmp.eq.s32.totalorder %s29, 3
      %p314 = por %p312, %p313
      %p315 = scmp.ne.s32.totalorder %s307, %s310
      %p316 = scmp.eq.s32.totalorder %s29, 0
      %p317 = por %p315, %p316
      %p318 = scmp.ne.s32.totalorder %s307, %s310
      %p319 = scmp.eq.s32.totalorder %s34, 3
      %p320 = por %p318, %p319
      %p321 = scmp.ne.s32.totalorder %s310, %s311
      %p322 = scmp.eq.s32.totalorder %s34, 0
      %p323 = por %p321, %p322
      %p324 = scmp.ne.s32.totalorder %s310, %s311
      %p325 = scmp.eq.s32.totalorder %s35, 3
      %p326 = por %p324, %p325
      %p328 = scmp.ne.s32.totalorder %s311, %s327
      %p329 = scmp.eq.s32.totalorder %s35, 0
      %p330 = por %p328, %p329
      %s331 = ssub.s32 %s36, %s48
      %p332 = scmp.eq.s32.totalorder %s331, 0
      %s334 = sadd.s32 %s333, 1
      %s335 = scalar_select %p332, %s333, %s334
      %p338 = pneg %p332
      %p339 = scmp.eq.s32.totalorder %s29, 3
      %p340 = por %p338, %p339
      %p341 = scmp.ne.s32.totalorder %s333, %s336
      %p342 = scmp.eq.s32.totalorder %s29, 0
      %p343 = por %p341, %p342
      %p344 = scmp.ne.s32.totalorder %s333, %s336
      %p345 = scmp.eq.s32.totalorder %s34, 3
      %p346 = por %p344, %p345
      %p347 = scmp.ne.s32.totalorder %s336, %s337
      %p348 = scmp.eq.s32.totalorder %s34, 0
      %p349 = por %p347, %p348
      %p350 = scmp.ne.s32.totalorder %s336, %s337
      %p351 = scmp.eq.s32.totalorder %s35, 3
      %p352 = por %p350, %p351
      %p354 = scmp.ne.s32.totalorder %s337, %s353
      %p355 = scmp.eq.s32.totalorder %s35, 0
      %p356 = por %p354, %p355
      %s357 = ssub.s32 %s36, %s48
      %p358 = scmp.eq.s32.totalorder %s357, 0
      %s360 = sadd.s32 %s359, 1
      %s361 = scalar_select %p358, %s359, %s360
      %p364 = pneg %p358
      %p365 = scmp.eq.s32.totalorder %s29, 3
      %p366 = por %p364, %p365
      %p367 = scmp.ne.s32.totalorder %s359, %s362
      %p368 = scmp.eq.s32.totalorder %s29, 0
      %p369 = por %p367, %p368
      %p370 = scmp.ne.s32.totalorder %s359, %s362
      %p371 = scmp.eq.s32.totalorder %s34, 3
      %p372 = por %p370, %p371
      %p373 = scmp.ne.s32.totalorder %s362, %s363
      %p374 = scmp.eq.s32.totalorder %s34, 0
      %p375 = por %p373, %p374
      %p376 = scmp.ne.s32.totalorder %s362, %s363
      %p377 = scmp.eq.s32.totalorder %s35, 3
      %p378 = por %p376, %p377
      %p380 = scmp.ne.s32.totalorder %s363, %s379
      %p381 = scmp.eq.s32.totalorder %s35, 0
      %p382 = por %p380, %p381
      %s383 = ssub.s32 %s36, %s48
      %p384 = scmp.eq.s32.totalorder %s383, 0
      %s386 = sadd.s32 %s385, 1
      %s387 = scalar_select %p384, %s385, %s386
      %p390 = pneg %p384
      %p391 = scmp.eq.s32.totalorder %s29, 3
      %p392 = por %p390, %p391
      %p393 = scmp.ne.s32.totalorder %s385, %s388
      %p394 = scmp.eq.s32.totalorder %s29, 0
      %p395 = por %p393, %p394
      %p396 = scmp.ne.s32.totalorder %s385, %s388
      %p397 = scmp.eq.s32.totalorder %s34, 3
      %p398 = por %p396, %p397
      %p399 = scmp.ne.s32.totalorder %s388, %s389
      %p400 = scmp.eq.s32.totalorder %s34, 0
      %p401 = por %p399, %p400
      %p402 = scmp.ne.s32.totalorder %s388, %s389
      %p403 = scmp.eq.s32.totalorder %s35, 3
      %p404 = por %p402, %p403
      %p406 = scmp.ne.s32.totalorder %s389, %s405
      %p407 = scmp.eq.s32.totalorder %s35, 0
      %p408 = por %p406, %p407
      %p409 = scmp.le.s32.totalorder 1, %s29
      %p410 = scmp.lt.s32.totalorder %s29, 5
      %p411 = pnand %p409, %p410
      %p412 = pneg %p411
      // Predicated region
      $region9: #{tpu_custom_call.1} parent=5 // pred_check
        _
      $region10: #{tpu_custom_call.1} parent=5 // pred_check_branch
        %414 = sbr.rel (%p411) target = $region12
      $region11: #{tpu_custom_call.1} parent=5 // pred_region
        %s415 = ssub.s32 %s29, 1
        // Predicated region
        $region13: #{tpu_custom_call.1} parent=11 // pred_check
          %p416 = pneg %p192
        $region14: #{tpu_custom_call.1} parent=11 // pred_check_branch
          %418 = sbr.rel (%p416) target = $region16
        $region15: #{tpu_custom_call.1} parent=11 // pred_region
          _
        $region16: #{tpu_custom_call.1} parent=11 // pred_fallthru
          _
        // Predicated region
        $region17: #{tpu_custom_call.1} parent=11 // pred_check
          %p419 = pneg %p213
        $region18: #{tpu_custom_call.1} parent=11 // pred_check_branch
          %421 = sbr.rel (%p419) target = $region20
        $region19: #{tpu_custom_call.1} parent=11 // pred_region
          _
        $region20: #{tpu_custom_call.1} parent=11 // pred_fallthru
          _
        // Predicated region
        $region21: #{tpu_custom_call.1} parent=11 // pred_check
          %p422 = pneg %p234
        $region22: #{tpu_custom_call.1} parent=11 // pred_check_branch
          %424 = sbr.rel (%p422) target = $region24
        $region23: #{tpu_custom_call.1} parent=11 // pred_region
          %s426 = ssub.s32 1024, 1024
          %427 = vsyncadd [#allocation10], %s426
          %s428 = sshll.u32 [#allocation9], 4
          %s429 = int_to_ptr.vmem [resolvable:$true] %s428
          %434 = dma.hbm_to_vmem [thread:$0]  %s7, 1024, %s429, [#allocation10], 64, 64, 4
        $region24: #{tpu_custom_call.1} parent=11 // pred_fallthru
          _
        // Predicated region
        $region25: #{tpu_custom_call.1} parent=11 // pred_check
          %p435 = pneg %p255
        $region26: #{tpu_custom_call.1} parent=11 // pred_check_branch
          %437 = sbr.rel (%p435) target = $region28
        $region27: #{tpu_custom_call.1} parent=11 // pred_region
          %s439 = ssub.s32 1024, 1024
          %440 = vsyncadd [#allocation10], %s439
          %s441 = sshll.u32 [#allocation11], 4
          %s442 = int_to_ptr.vmem [resolvable:$true] %s441
          %447 = dma.hbm_to_vmem [thread:$0]  %s8, 1024, %s442, [#allocation10], 64, 64, 4
        $region28: #{tpu_custom_call.1} parent=11 // pred_fallthru
          _
        // Predicated region
        $region29: #{tpu_custom_call.1} parent=11 // pred_check
          %p448 = pneg %p276
        $region30: #{tpu_custom_call.1} parent=11 // pred_check_branch
          %450 = sbr.rel (%p448) target = $region32
        $region31: #{tpu_custom_call.1} parent=11 // pred_region
          _
        $region32: #{tpu_custom_call.1} parent=11 // pred_fallthru
          _
        // Predicated region
        $region33: #{tpu_custom_call.1} parent=11 // pred_check
          %p451 = pneg %p297
        $region34: #{tpu_custom_call.1} parent=11 // pred_check_branch
          %453 = sbr.rel (%p451) target = $region36
        $region35: #{tpu_custom_call.1} parent=11 // pred_region
          %s455 = ssub.s32 1024, 1024
          %456 = vsyncadd [#allocation13], %s455
          %s457 = sshll.u32 [#allocation12], 4
          %s458 = int_to_ptr.vmem [resolvable:$true] %s457
          %463 = dma.hbm_to_vmem [thread:$0]  %s10, 1024, %s458, [#allocation13], 64, 64, 4
        $region36: #{tpu_custom_call.1} parent=11 // pred_fallthru
          _
      $region12: #{tpu_custom_call.1} parent=5 // pred_fallthru
        _
      %p464 = scmp.lt.s32.totalorder %s29, 4
      // Predicated region
      $region37: #{tpu_custom_call.1} parent=5 // pred_check
        %p465 = pneg %p464
      $region38: #{tpu_custom_call.1} parent=5 // pred_check_branch
        %467 = sbr.rel (%p465) target = $region40
      $region39: #{tpu_custom_call.1} parent=5 // pred_region
        // Predicated region
        $region41: #{tpu_custom_call.1} parent=39 // pred_check
          %p468 = pneg %p61
        $region42: #{tpu_custom_call.1} parent=39 // pred_check_branch
          %470 = sbr.rel (%p468) target = $region44
        $region43: #{tpu_custom_call.1} parent=39 // pred_region
          %s471 = sand.u32 %s29, 1
          %s472 = scalar_lea.sflag [#allocation7], %s471
          %s473 = sand.u32 %s51, 1
          %s474 = smul.addr %s473, 16
          %s475 = scalar_lea.vmem [#allocation6], %s474
          %s476 = smul.u32 4, %s36
          %s478 = ssub.s32 256, 256
          %479 = vsyncadd %s472, %s478
          %s480 = smul.addr %s476, 64
          %s481 = scalar_lea.hbm %s0, %s480
          %s482 = sshll.u32 %s475, 4
          %s483 = int_to_ptr.vmem [resolvable:$true] %s482
          %488 = dma.hbm_to_vmem [thread:$0]  %s481, 256, %s483, %s472, 64, 64, 4
        $region44: #{tpu_custom_call.1} parent=39 // pred_fallthru
          _
        // Predicated region
        $region45: #{tpu_custom_call.1} parent=39 // pred_check
          %p489 = pneg %p87
        $region46: #{tpu_custom_call.1} parent=39 // pred_check_branch
          %491 = sbr.rel (%p489) target = $region48
        $region47: #{tpu_custom_call.1} parent=39 // pred_region
          %s492 = smul.u32 4, %s36
          %p493 = scmp.lt.s32.totalorder %s492, 7
          %s494 = scalar_select %p493, %s492, 7
          %s495 = smul.addr %s494, 8
          %s496 = scalar_lea.vmem %s1, %s495
          %s497 = smul.u32 4, %s36
        $region48: #{tpu_custom_call.1} parent=39 // pred_fallthru
          _
        // Predicated region
        $region49: #{tpu_custom_call.1} parent=39 // pred_check
          %p498 = pneg %p113
        $region50: #{tpu_custom_call.1} parent=39 // pred_check_branch
          %500 = sbr.rel (%p498) target = $region52
        $region51: #{tpu_custom_call.1} parent=39 // pred_region
          %s501 = smul.u32 4, %s36
          %p502 = scmp.lt.s32.totalorder %s501, 7
          %s503 = scalar_select %p502, %s501, 7
          %s504 = smul.addr %s503, 8
          %s505 = scalar_lea.vmem %s2, %s504
          %s506 = smul.u32 4, %s36
        $region52: #{tpu_custom_call.1} parent=39 // pred_fallthru
          _
        // Predicated region
        $region53: #{tpu_custom_call.1} parent=39 // pred_check
          %p507 = pneg %p139
        $region54: #{tpu_custom_call.1} parent=39 // pred_check_branch
          %509 = sbr.rel (%p507) target = $region56
        $region55: #{tpu_custom_call.1} parent=39 // pred_region
          %s510 = smul.u32 32, %s36
          %p511 = scmp.lt.s32.totalorder %s510, 63
          %s512 = scalar_select %p511, %s510, 63
          %s513 = smul.addr %s512, 4
          %s514 = scalar_lea.vmem %s3, %s513
          %s515 = smul.u32 32, %s36
        $region56: #{tpu_custom_call.1} parent=39 // pred_fallthru
          _
        // Predicated region
        $region57: #{tpu_custom_call.1} parent=39 // pred_check
          %p516 = pneg %p165
        $region58: #{tpu_custom_call.1} parent=39 // pred_check_branch
          %518 = sbr.rel (%p516) target = $region60
        $region59: #{tpu_custom_call.1} parent=39 // pred_region
          %s519 = smul.u32 32, %s36
          %p520 = scmp.lt.s32.totalorder %s519, 63
          %s521 = scalar_select %p520, %s519, 63
          %s522 = smul.addr %s521, 8
          %s523 = scalar_lea.vmem %s4, %s522
          %s524 = smul.u32 32, %s36
        $region60: #{tpu_custom_call.1} parent=39 // pred_fallthru
          _
        // Predicated region
        $region61: #{tpu_custom_call.1} parent=39 // pred_check
          %p525 = pneg %p317
        $region62: #{tpu_custom_call.1} parent=39 // pred_check_branch
          %527 = sbr.rel (%p525) target = $region64
        $region63: #{tpu_custom_call.1} parent=39 // pred_region
          %s528 = sand.u32 %s29, 1
          %s529 = scalar_lea.sflag [#allocation7], %s528
          %s530 = sand.u32 %s307, 1
          %s531 = smul.addr %s530, 512
          %s532 = scalar_lea.vmem [#allocation14], %s531
          %s533 = smul.u32 8, %s37
          %s535 = ssub.s32 8192, 8192
          %536 = vsyncadd %s529, %s535
          %s537 = smul.addr %s533, 64
          %s538 = scalar_lea.hbm %s11, %s537
          %s539 = sshll.u32 %s532, 4
          %s540 = int_to_ptr.vmem [resolvable:$true] %s539
          %545 = dma.hbm_to_vmem [thread:$0]  %s538, 8192, %s540, %s529, 1024, 512, 32
        $region64: #{tpu_custom_call.1} parent=39 // pred_fallthru
          _
      $region40: #{tpu_custom_call.1} parent=5 // pred_fallthru
        _
      %p546 = scmp.le.s32.totalorder 1, %s29
      %p547 = scmp.lt.s32.totalorder %s29, 5
      %p548 = pnand %p546, %p547
      %p549 = pneg %p548
      // Predicated region
      $region65: #{tpu_custom_call.1} parent=5 // pred_check
        _
      $region66: #{tpu_custom_call.1} parent=5 // pred_check_branch
        %551 = sbr.rel (%p548) target = $region68
      $region67: #{tpu_custom_call.1} parent=5 // pred_region
        %s552 = ssub.s32 %s29, 1
        %s553 = sand.u32 %s34, 1
        %s554 = scalar_lea.sflag [#allocation7], %s553
        %s555 = sand.u32 %s54, 1
        %s556 = smul.addr %s555, 16
        %s557 = scalar_lea.vmem [#allocation6], %s556
        // Predicated region
        $region69: #{tpu_custom_call.1} parent=67 // pred_check
          %p558 = pneg %p67
        $region70: #{tpu_custom_call.1} parent=67 // pred_check_branch
          %560 = sbr.rel (%p558) target = $region72
        $region71: #{tpu_custom_call.1} parent=67 // pred_region
          %561 = dma.done %s554, 256
        $region72: #{tpu_custom_call.1} parent=67 // pred_fallthru
          _
        // Predicated region
        $region73: #{tpu_custom_call.1} parent=67 // pred_check
          %p562 = pneg %p234
        $region74: #{tpu_custom_call.1} parent=67 // pred_check_branch
          %564 = sbr.rel (%p562) target = $region76
        $region75: #{tpu_custom_call.1} parent=67 // pred_region
          %565 = dma.done [#allocation10], 1024
        $region76: #{tpu_custom_call.1} parent=67 // pred_fallthru
          _
        // Predicated region
        $region77: #{tpu_custom_call.1} parent=67 // pred_check
          %p566 = pneg %p255
        $region78: #{tpu_custom_call.1} parent=67 // pred_check_branch
          %568 = sbr.rel (%p566) target = $region80
        $region79: #{tpu_custom_call.1} parent=67 // pred_region
          %569 = dma.done [#allocation10], 1024
        $region80: #{tpu_custom_call.1} parent=67 // pred_fallthru
          _
        // Predicated region
        $region81: #{tpu_custom_call.1} parent=67 // pred_check
          %p570 = pneg %p297
        $region82: #{tpu_custom_call.1} parent=67 // pred_check_branch
          %572 = sbr.rel (%p570) target = $region84
        $region83: #{tpu_custom_call.1} parent=67 // pred_region
          %573 = dma.done [#allocation13], 1024
        $region84: #{tpu_custom_call.1} parent=67 // pred_fallthru
          _
        %s574 = sand.u32 %s34, 1
        %s575 = scalar_lea.sflag [#allocation7], %s574
        %s576 = sand.u32 %s310, 1
        %s577 = smul.addr %s576, 512
        %s578 = scalar_lea.vmem [#allocation14], %s577
        // Predicated region
        $region85: #{tpu_custom_call.1} parent=67 // pred_check
          %p579 = pneg %p323
        $region86: #{tpu_custom_call.1} parent=67 // pred_check_branch
          %581 = sbr.rel (%p579) target = $region88
        $region87: #{tpu_custom_call.1} parent=67 // pred_region
          %582 = dma.done %s575, 8192
        $region88: #{tpu_custom_call.1} parent=67 // pred_fallthru
          _
        %s583 = sand.u32 %s34, 1
        %s584 = scalar_lea.sflag [#allocation7], %s583
        %s585 = sand.u32 %s54, 1
        %s586 = smul.addr %s585, 16
        %s587 = scalar_lea.vmem [#allocation6], %s586
        %p588 = pneg %p67
        %p589 = pneg %p64
        %s590 = smul.u32 4, %s38
        %p591 = scmp.lt.s32.totalorder %s590, 7
        %s592 = scalar_select %p591, %s590, 7
        %s593 = smul.addr %s592, 8
        %s594 = scalar_lea.vmem %s1, %s593
        %p595 = pneg %p93
        %p596 = pneg %p90
        %s597 = smul.u32 4, %s38
        %p598 = scmp.lt.s32.totalorder %s597, 7
        %s599 = scalar_select %p598, %s597, 7
        %s600 = smul.addr %s599, 8
        %s601 = scalar_lea.vmem %s2, %s600
        %p602 = pneg %p119
        %p603 = pneg %p116
        %s604 = smul.u32 32, %s38
        %p605 = scmp.lt.s32.totalorder %s604, 63
        %s606 = scalar_select %p605, %s604, 63
        %s607 = smul.addr %s606, 4
        %s608 = scalar_lea.vmem %s3, %s607
        %p609 = pneg %p145
        %p610 = pneg %p142
        %s611 = smul.u32 32, %s38
        %p612 = scmp.lt.s32.totalorder %s611, 63
        %s613 = scalar_select %p612, %s611, 63
        %s614 = smul.addr %s613, 8
        %s615 = scalar_lea.vmem %s4, %s614
        %p616 = pneg %p171
        %p617 = pneg %p168
        %p618 = pneg %p192
        %p619 = pneg %p189
        %p620 = pneg %p213
        %p621 = pneg %p210
        %p622 = pneg %p234
        %p623 = pneg %p231
        %p624 = pneg %p255
        %p625 = pneg %p252
        %p626 = pneg %p276
        %p627 = pneg %p273
        %p628 = pneg %p297
        %p629 = pneg %p294
        %s630 = sand.u32 %s34, 1
        %s631 = scalar_lea.sflag [#allocation7], %s630
        %s632 = sand.u32 %s310, 1
        %s633 = smul.addr %s632, 512
        %s634 = scalar_lea.vmem [#allocation14], %s633
        %p635 = pneg %p323
        %p636 = pneg %p320
        %p637 = pneg %p349
        %p638 = pneg %p346
        %s639 = sand.u32 %s336, 1
        %s640 = scalar_lea.sflag [#allocation8], %s639
        %s641 = sand.u32 %s336, 1
        %s642 = smul.addr %s641, 32
        %s643 = scalar_lea.vmem [#allocation15], %s642
        %p644 = pneg %p375
        %p645 = pneg %p372
        %s646 = smul.u32 4, %s38
        %p647 = scmp.lt.s32.totalorder %s646, 7
        %s648 = scalar_select %p647, %s646, 7
        %s649 = smul.addr %s648, 8
        %s650 = scalar_lea.vmem %s13, %s649
        %p651 = pneg %p401
        %p652 = pneg %p398
        %s653 = smul.u32 4, %s38
        %p654 = scmp.lt.s32.totalorder %s653, 7
        %s655 = scalar_select %p654, %s653, 7
        %s656 = smul.addr %s655, 8
        %s657 = scalar_lea.vmem %s14, %s656
        %s658 = smul.u32 4, %s38
        %s659 = smul.u32 4, %s38
        %p660 = scmp.lt.s32.totalorder %s659, 7
        %s661 = scalar_select %p660, %s659, 7
        %s662 = smul.addr %s661, 8
        %s663 = scalar_lea.vmem %s1, %s662
        %s664 = smul.u32 4, %s38
        %s665 = smul.u32 4, %s38
        %p666 = scmp.lt.s32.totalorder %s665, 7
        %s667 = scalar_select %p666, %s665, 7
        %s668 = smul.addr %s667, 8
        %s669 = scalar_lea.vmem %s2, %s668
        %s670 = smul.u32 4, %s38
        %s671 = smul.u32 32, %s38
        %p672 = scmp.lt.s32.totalorder %s671, 63
        %s673 = scalar_select %p672, %s671, 63
        %s674 = smul.addr %s673, 4
        %s675 = scalar_lea.vmem %s3, %s674
        %s676 = smul.u32 32, %s38
        %s677 = smul.u32 32, %s38
        %p678 = scmp.lt.s32.totalorder %s677, 63
        %s679 = scalar_select %p678, %s677, 63
        %s680 = smul.addr %s679, 8
        %s681 = scalar_lea.vmem %s4, %s680
        %s682 = smul.u32 32, %s38
        %s683 = smul.u32 8, %s39
        %s684 = smul.u32 4, %s38
        %s685 = smul.u32 4, %s38
        %p686 = scmp.lt.s32.totalorder %s685, 7
        %s687 = scalar_select %p686, %s685, 7
        %s688 = smul.addr %s687, 8
        %s689 = scalar_lea.vmem %s13, %s688
        %s690 = smul.u32 4, %s38
        %s691 = smul.u32 4, %s38
        %p692 = scmp.lt.s32.totalorder %s691, 7
        %s693 = scalar_select %p692, %s691, 7
        %s694 = smul.addr %s693, 8
        %s695 = scalar_lea.vmem %s14, %s694
        %s696 = smul.u32 4, %s38
        %p698 = scmp.eq.s32.totalorder %s39, 0
        // Predicated region
        $region89: #{tpu_custom_call.1} parent=67 // pred_check
          %p699 = pneg %p698
        $region90: #{tpu_custom_call.1} parent=67 // pred_check_branch
          %701 = sbr.rel (%p699) target = $region92
        $region91: #{tpu_custom_call.1} parent=67 // pred_region
          %v702 = vld [vmem:[%s557] sm:$0xf]
          %v703 = vld [vmem:[%s557 + $0x4] sm:$0xf]
          %v704 = vld [vmem:[%s557 + $0x8] sm:$0xf]
          %v705 = vld [vmem:[%s557 + $0xc] sm:$0xf]
          %v706 = vld [vmem:[%s5] sm:$0xf]
          %v707 = vld [vmem:[%s5 + $0x4] sm:$0xf]
          %v708 = vld [vmem:[%s5 + $0x8] sm:$0xf]
          %v709 = vld [vmem:[%s5 + $0xc] sm:$0xf]
          %v710 = vld [vmem:[%s5 + $0x10] sm:$0xf]
          %v711 = vld [vmem:[%s5 + $0x14] sm:$0xf]
          %v712 = vld [vmem:[%s5 + $0x18] sm:$0xf]
          %v713 = vld [vmem:[%s5 + $0x1c] sm:$0xf]
          %v714 = vld [vmem:[%s5 + $0x20] sm:$0xf]
          %v715 = vld [vmem:[%s5 + $0x24] sm:$0xf]
          %v716 = vld [vmem:[%s5 + $0x28] sm:$0xf]
          %v717 = vld [vmem:[%s5 + $0x2c] sm:$0xf]
          %v718 = vld [vmem:[%s5 + $0x30] sm:$0xf]
          %v719 = vld [vmem:[%s5 + $0x34] sm:$0xf]
          %v720 = vld [vmem:[%s5 + $0x38] sm:$0xf]
          %v721 = vld [vmem:[%s5 + $0x3c] sm:$0xf]
          %v726 = vunpack.c.l.b16 %v702
          %v727 = vunpack.c.l.b16 %v703
          %v728 = vunpack.c.l.b16 %v704
          %v729 = vunpack.c.l.b16 %v705
          %v730 = vpack.c.b16 %v727, %v726
          %v731 = vpack.c.b16 %v729, %v728
          %v750 = vunpack.c.l.b16 %v706
          %v751 = vunpack.c.l.b16 %v707
          %v752 = vunpack.c.l.b16 %v708
          %v753 = vunpack.c.l.b16 %v709
          %v754 = vunpack.c.l.b16 %v710
          %v755 = vunpack.c.l.b16 %v711
          %v756 = vunpack.c.l.b16 %v712
          %v757 = vunpack.c.l.b16 %v713
          %v758 = vunpack.c.l.b16 %v714
          %v759 = vunpack.c.l.b16 %v715
          %v760 = vunpack.c.l.b16 %v716
          %v761 = vunpack.c.l.b16 %v717
          %v762 = vunpack.c.l.b16 %v718
          %v763 = vunpack.c.l.b16 %v719
          %v764 = vunpack.c.l.b16 %v720
          %v765 = vunpack.c.l.b16 %v721
          %v766 = vpack.c.b16 %v751, %v750
          %v767 = vpack.c.b16 %v753, %v752
          %v768 = vpack.c.b16 %v755, %v754
          %v769 = vpack.c.b16 %v757, %v756
          %v770 = vpack.c.b16 %v759, %v758
          %v771 = vpack.c.b16 %v761, %v760
          %v772 = vpack.c.b16 %v763, %v762
          %v773 = vpack.c.b16 %v765, %v764
          %782 = vmatprep.subr.bf16.mxu0 0
          %783 = vmatpush1.bf16.msra.mxu0 %v766
          %784 = vmatprep.subr.bf16.mxu0 0
          %785 = vmatpush1.bf16.msra.mxu0 %v767
          %786 = vmatprep.subr.bf16.mxu0 0
          %787 = vmatpush1.bf16.msra.mxu0 %v768
          %788 = vmatprep.subr.bf16.mxu0 0
          %789 = vmatpush1.bf16.msra.mxu0 %v769
          %790 = vmatprep.subr.bf16.mxu0 0
          %791 = vmatpush1.bf16.msra.mxu0 %v770
          %792 = vmatprep.subr.bf16.mxu0 0
          %793 = vmatpush1.bf16.msra.mxu0 %v771
          %794 = vmatprep.subr.bf16.mxu0 0
          %795 = vmatpush1.bf16.msra.mxu0 %v772
          %796 = vmatprep.subr.bf16.mxu0 0
          %797 = vmatpush1.bf16.msra.mxu0 %v773
          %798 = vmatprep.subr.bf16.mxu0 0
          %799 = vmatpush1.bf16.msra.mxu0 0
          %800 = vmatprep.subr.bf16.mxu0 0
          %801 = vmatpush1.bf16.msra.mxu0 0
          %802 = vmatprep.subr.bf16.mxu0 0
          %803 = vmatpush1.bf16.msra.mxu0 0
          %804 = vmatprep.subr.bf16.mxu0 0
          %805 = vmatpush1.bf16.msra.mxu0 0
          %806 = vmatprep.subr.bf16.mxu0 0
          %807 = vmatpush1.bf16.msra.mxu0 0
          %808 = vmatprep.subr.bf16.mxu0 0
          %809 = vmatpush1.bf16.msra.mxu0 0
          %810 = vmatprep.subr.bf16.mxu0 0
          %811 = vmatpush1.bf16.msra.mxu0 0
          %812 = vmatprep.subr.bf16.mxu0 0
          %813 = vmatpush1.bf16.msra.mxu0 0
          %814 = vmatprep.mubr.bf16.mxu0 0
          %815 = vmatmul.mubr.bf16.gmra.mrb[0].mxu0 %v730
          %v816 = vpop.f32.mrb[0].mxu0
          %v817 = vadd.f32 0.0, %v816
          %v818 = vpop.f32.mrb[0].mxu0
          %v819 = vpop.f32.mrb[0].mxu0
          %v820 = vadd.f32 0.0, %v819
          %v821 = vpop.f32.mrb[0].mxu0
          %822 = vmatprep.mubr.bf16.mxu0 0
          %823 = vmatmul.mubr.bf16.gmra.mrb[0].mxu0 %v731
          %v824 = vpop.f32.mrb[0].mxu0
          %v825 = vadd.f32 0.0, %v824
          %v826 = vpop.f32.mrb[0].mxu0
          %v827 = vpop.f32.mrb[0].mxu0
          %v828 = vadd.f32 0.0, %v827
          %v829 = vpop.f32.mrb[0].mxu0
          %830 = vdwg.mxu0
          %v831 = vpack.c.bf16 %v820, %v817
          %v832 = vpack.c.bf16 %v828, %v825
          %v833 = vld [vmem:[%s6] sm:$0xf]
          %v834 = vld [vmem:[%s6 + $0x4] sm:$0xf]
          %v835 = vld [vmem:[%s6 + $0x8] sm:$0xf]
          %v836 = vld [vmem:[%s6 + $0xc] sm:$0xf]
          %v837 = vld [vmem:[%s6 + $0x10] sm:$0xf]
          %v838 = vld [vmem:[%s6 + $0x14] sm:$0xf]
          %v839 = vld [vmem:[%s6 + $0x18] sm:$0xf]
          %v840 = vld [vmem:[%s6 + $0x1c] sm:$0xf]
          %v841 = vld [vmem:[%s6 + $0x20] sm:$0xf]
          %v842 = vld [vmem:[%s6 + $0x24] sm:$0xf]
          %v843 = vld [vmem:[%s6 + $0x28] sm:$0xf]
          %v844 = vld [vmem:[%s6 + $0x2c] sm:$0xf]
          %v845 = vld [vmem:[%s6 + $0x30] sm:$0xf]
          %v846 = vld [vmem:[%s6 + $0x34] sm:$0xf]
          %v847 = vld [vmem:[%s6 + $0x38] sm:$0xf]
          %v848 = vld [vmem:[%s6 + $0x3c] sm:$0xf]
          %v865 = vunpack.c.l.b16 %v833
          %v866 = vunpack.c.l.b16 %v834
          %v867 = vunpack.c.l.b16 %v835
          %v868 = vunpack.c.l.b16 %v836
          %v869 = vunpack.c.l.b16 %v837
          %v870 = vunpack.c.l.b16 %v838
          %v871 = vunpack.c.l.b16 %v839
          %v872 = vunpack.c.l.b16 %v840
          %v873 = vunpack.c.l.b16 %v841
          %v874 = vunpack.c.l.b16 %v842
          %v875 = vunpack.c.l.b16 %v843
          %v876 = vunpack.c.l.b16 %v844
          %v877 = vunpack.c.l.b16 %v845
          %v878 = vunpack.c.l.b16 %v846
          %v879 = vunpack.c.l.b16 %v847
          %v880 = vunpack.c.l.b16 %v848
          %v881 = vpack.c.b16 %v866, %v865
          %v882 = vpack.c.b16 %v868, %v867
          %v883 = vpack.c.b16 %v870, %v869
          %v884 = vpack.c.b16 %v872, %v871
          %v885 = vpack.c.b16 %v874, %v873
          %v886 = vpack.c.b16 %v876, %v875
          %v887 = vpack.c.b16 %v878, %v877
          %v888 = vpack.c.b16 %v880, %v879
          %897 = vmatprep.subr.bf16.mxu0 0
          %898 = vmatpush1.bf16.msra.mxu0 %v881
          %899 = vmatprep.subr.bf16.mxu0 0
          %900 = vmatpush1.bf16.msra.mxu0 %v882
          %901 = vmatprep.subr.bf16.mxu0 0
          %902 = vmatpush1.bf16.msra.mxu0 %v883
          %903 = vmatprep.subr.bf16.mxu0 0
          %904 = vmatpush1.bf16.msra.mxu0 %v884
          %905 = vmatprep.subr.bf16.mxu0 0
          %906 = vmatpush1.bf16.msra.mxu0 %v885
          %907 = vmatprep.subr.bf16.mxu0 0
          %908 = vmatpush1.bf16.msra.mxu0 %v886
          %909 = vmatprep.subr.bf16.mxu0 0
          %910 = vmatpush1.bf16.msra.mxu0 %v887
          %911 = vmatprep.subr.bf16.mxu0 0
          %912 = vmatpush1.bf16.msra.mxu0 %v888
          %913 = vmatprep.subr.bf16.mxu0 0
          %914 = vmatpush1.bf16.msra.mxu0 0
          %915 = vmatprep.subr.bf16.mxu0 0
          %916 = vmatpush1.bf16.msra.mxu0 0
          %917 = vmatprep.subr.bf16.mxu0 0
          %918 = vmatpush1.bf16.msra.mxu0 0
          %919 = vmatprep.subr.bf16.mxu0 0
          %920 = vmatpush1.bf16.msra.mxu0 0
          %921 = vmatprep.subr.bf16.mxu0 0
          %922 = vmatpush1.bf16.msra.mxu0 0
          %923 = vmatprep.subr.bf16.mxu0 0
          %924 = vmatpush1.bf16.msra.mxu0 0
          %925 = vmatprep.subr.bf16.mxu0 0
          %926 = vmatpush1.bf16.msra.mxu0 0
          %927 = vmatprep.subr.bf16.mxu0 0
          %928 = vmatpush1.bf16.msra.mxu0 0
          %929 = vmatprep.mubr.bf16.mxu0 0
          %930 = vmatmul.mubr.bf16.gmra.mrb[0].mxu0 %v831
          %v931 = vpop.f32.mrb[0].mxu0
          %v932 = vadd.f32 0.0, %v931
          %v933 = vpop.f32.mrb[0].mxu0
          %v934 = vpop.f32.mrb[0].mxu0
          %v935 = vadd.f32 0.0, %v934
          %v936 = vpop.f32.mrb[0].mxu0
          %937 = vmatprep.mubr.bf16.mxu0 0
          %938 = vmatmul.mubr.bf16.gmra.mrb[0].mxu0 %v832
          %v939 = vpop.f32.mrb[0].mxu0
          %v940 = vadd.f32 0.0, %v939
          %v941 = vpop.f32.mrb[0].mxu0
          %v942 = vpop.f32.mrb[0].mxu0
          %v943 = vadd.f32 0.0, %v942
          %v944 = vpop.f32.mrb[0].mxu0
          %945 = vdwg.mxu0
          %v946 = vmax.f32 %v932, 0.0
          %v947 = vmax.f32 %v935, 0.0
          %v948 = vmax.f32 %v940, 0.0
          %v949 = vmax.f32 %v943, 0.0
          %v950 = vpack.c.bf16 %v947, %v946
          %v951 = vpack.c.bf16 %v949, %v948
          %952 = vmatprep.subr.bf16.mxu0 0
          %953 = vmatpush1.bf16.msra.mxu0 %v881
          %954 = vmatprep.subr.bf16.mxu0 0
          %955 = vmatpush1.bf16.msra.mxu0 %v882
          %956 = vmatprep.subr.bf16.mxu0 0
          %957 = vmatpush1.bf16.msra.mxu0 %v883
          %958 = vmatprep.subr.bf16.mxu0 0
          %959 = vmatpush1.bf16.msra.mxu0 %v884
          %960 = vmatprep.subr.bf16.mxu0 0
          %961 = vmatpush1.bf16.msra.mxu0 %v885
          %962 = vmatprep.subr.bf16.mxu0 0
          %963 = vmatpush1.bf16.msra.mxu0 %v886
          %964 = vmatprep.subr.bf16.mxu0 0
          %965 = vmatpush1.bf16.msra.mxu0 %v887
          %966 = vmatprep.subr.bf16.mxu0 0
          %967 = vmatpush1.bf16.msra.mxu0 %v888
          %968 = vmatprep.subr.bf16.mxu0 0
          %969 = vmatpush1.bf16.msra.mxu0 0
          %970 = vmatprep.subr.bf16.mxu0 0
          %971 = vmatpush1.bf16.msra.mxu0 0
          %972 = vmatprep.subr.bf16.mxu0 0
          %973 = vmatpush1.bf16.msra.mxu0 0
          %974 = vmatprep.subr.bf16.mxu0 0
          %975 = vmatpush1.bf16.msra.mxu0 0
          %976 = vmatprep.subr.bf16.mxu0 0
          %977 = vmatpush1.bf16.msra.mxu0 0
          %978 = vmatprep.subr.bf16.mxu0 0
          %979 = vmatpush1.bf16.msra.mxu0 0
          %980 = vmatprep.subr.bf16.mxu0 0
          %981 = vmatpush1.bf16.msra.mxu0 0
          %982 = vmatprep.subr.bf16.mxu0 0
          %983 = vmatpush1.bf16.msra.mxu0 0
          %984 = vmatprep.mubr.bf16.mxu0 0
          %985 = vmatmul.mubr.bf16.gmra.mrb[0].mxu0 %v950
          %v986 = vpop.f32.mrb[0].mxu0
          %v987 = vadd.f32 0.0, %v986
          %v988 = vpop.f32.mrb[0].mxu0
          %v989 = vpop.f32.mrb[0].mxu0
          %v990 = vadd.f32 0.0, %v989
          %v991 = vpop.f32.mrb[0].mxu0
          %992 = vmatprep.mubr.bf16.mxu0 0
          %993 = vmatmul.mubr.bf16.gmra.mrb[0].mxu0 %v951
          %v994 = vpop.f32.mrb[0].mxu0
          %v995 = vadd.f32 0.0, %v994
          %v996 = vpop.f32.mrb[0].mxu0
          %v997 = vpop.f32.mrb[0].mxu0
          %v998 = vadd.f32 0.0, %v997
          %v999 = vpop.f32.mrb[0].mxu0
          %1000 = vdwg.mxu0
          %v1001 = vmax.f32 %v987, 0.0
          %v1002 = vmax.f32 %v990, 0.0
          %v1003 = vmax.f32 %v995, 0.0
          %v1004 = vmax.f32 %v998, 0.0
          %v1005 = vpack.c.bf16 %v1002, %v1001
          %v1006 = vpack.c.bf16 %v1004, %v1003
          %v1007 = vld [vmem:[#allocation9] sm:$0xf]
          %v1008 = vld [vmem:[#allocation9 + $0x4] sm:$0xf]
          %v1009 = vld [vmem:[#allocation9 + $0x8] sm:$0xf]
          %v1010 = vld [vmem:[#allocation9 + $0xc] sm:$0xf]
          %v1011 = vld [vmem:[#allocation9 + $0x10] sm:$0xf]
          %v1012 = vld [vmem:[#allocation9 + $0x14] sm:$0xf]
          %v1013 = vld [vmem:[#allocation9 + $0x18] sm:$0xf]
          %v1014 = vld [vmem:[#allocation9 + $0x1c] sm:$0xf]
          %v1015 = vld [vmem:[#allocation9 + $0x20] sm:$0xf]
          %v1016 = vld [vmem:[#allocation9 + $0x24] sm:$0xf]
          %v1017 = vld [vmem:[#allocation9 + $0x28] sm:$0xf]
          %v1018 = vld [vmem:[#allocation9 + $0x2c] sm:$0xf]
          %v1019 = vld [vmem:[#allocation9 + $0x30] sm:$0xf]
          %v1020 = vld [vmem:[#allocation9 + $0x34] sm:$0xf]
          %v1021 = vld [vmem:[#allocation9 + $0x38] sm:$0xf]
          %v1022 = vld [vmem:[#allocation9 + $0x3c] sm:$0xf]
          %v1039 = vunpack.c.l.b16 %v1007
          %v1040 = vunpack.c.l.b16 %v1008
          %v1041 = vunpack.c.l.b16 %v1009
          %v1042 = vunpack.c.l.b16 %v1010
          %v1043 = vunpack.c.l.b16 %v1011
          %v1044 = vunpack.c.l.b16 %v1012
          %v1045 = vunpack.c.l.b16 %v1013
          %v1046 = vunpack.c.l.b16 %v1014
          %v1047 = vunpack.c.l.b16 %v1015
          %v1048 = vunpack.c.l.b16 %v1016
          %v1049 = vunpack.c.l.b16 %v1017
          %v1050 = vunpack.c.l.b16 %v1018
          %v1051 = vunpack.c.l.b16 %v1019
          %v1052 = vunpack.c.l.b16 %v1020
          %v1053 = vunpack.c.l.b16 %v1021
          %v1054 = vunpack.c.l.b16 %v1022
          %v1055 = vpack.c.b16 %v1040, %v1039
          %v1056 = vpack.c.b16 %v1042, %v1041
          %v1057 = vpack.c.b16 %v1044, %v1043
          %v1058 = vpack.c.b16 %v1046, %v1045
          %v1059 = vpack.c.b16 %v1048, %v1047
          %v1060 = vpack.c.b16 %v1050, %v1049
          %v1061 = vpack.c.b16 %v1052, %v1051
          %v1062 = vpack.c.b16 %v1054, %v1053
          %1071 = vmatprep.subr.bf16.mxu0 0
          %1072 = vmatpush1.bf16.msra.mxu0 %v1055
          %1073 = vmatprep.subr.bf16.mxu0 0
          %1074 = vmatpush1.bf16.msra.mxu0 %v1056
          %1075 = vmatprep.subr.bf16.mxu0 0
          %1076 = vmatpush1.bf16.msra.mxu0 %v1057
          %1077 = vmatprep.subr.bf16.mxu0 0
          %1078 = vmatpush1.bf16.msra.mxu0 %v1058
          %1079 = vmatprep.subr.bf16.mxu0 0
          %1080 = vmatpush1.bf16.msra.mxu0 %v1059
          %1081 = vmatprep.subr.bf16.mxu0 0
          %1082 = vmatpush1.bf16.msra.mxu0 %v1060
          %1083 = vmatprep.subr.bf16.mxu0 0
          %1084 = vmatpush1.bf16.msra.mxu0 %v1061
          %1085 = vmatprep.subr.bf16.mxu0 0
          %1086 = vmatpush1.bf16.msra.mxu0 %v1062
          %1087 = vmatprep.subr.bf16.mxu0 0
          %1088 = vmatpush1.bf16.msra.mxu0 0
          %1089 = vmatprep.subr.bf16.mxu0 0
          %1090 = vmatpush1.bf16.msra.mxu0 0
          %1091 = vmatprep.subr.bf16.mxu0 0
          %1092 = vmatpush1.bf16.msra.mxu0 0
          %1093 = vmatprep.subr.bf16.mxu0 0
          %1094 = vmatpush1.bf16.msra.mxu0 0
          %1095 = vmatprep.subr.bf16.mxu0 0
          %1096 = vmatpush1.bf16.msra.mxu0 0
          %1097 = vmatprep.subr.bf16.mxu0 0
          %1098 = vmatpush1.bf16.msra.mxu0 0
          %1099 = vmatprep.subr.bf16.mxu0 0
          %1100 = vmatpush1.bf16.msra.mxu0 0
          %1101 = vmatprep.subr.bf16.mxu0 0
          %1102 = vmatpush1.bf16.msra.mxu0 0
          %1103 = vmatprep.mubr.bf16.mxu0 0
          %1104 = vmatmul.mubr.bf16.gmra.mrb[0].mxu0 %v1005
          %v1105 = vpop.f32.mrb[0].mxu0
          %v1106 = vadd.f32 0.0, %v1105
          %v1107 = vpop.f32.mrb[0].mxu0
          %v1108 = vpop.f32.mrb[0].mxu0
          %v1109 = vadd.f32 0.0, %v1108
          %v1110 = vpop.f32.mrb[0].mxu0
          %1111 = vmatprep.mubr.bf16.mxu0 0
          %1112 = vmatmul.mubr.bf16.gmra.mrb[0].mxu0 %v1006
          %v1113 = vpop.f32.mrb[0].mxu0
          %v1114 = vadd.f32 0.0, %v1113
          %v1115 = vpop.f32.mrb[0].mxu0
          %v1116 = vpop.f32.mrb[0].mxu0
          %v1117 = vadd.f32 0.0, %v1116
          %v1118 = vpop.f32.mrb[0].mxu0
          %1119 = vdwg.mxu0
          %1120 = vst [vmem:[%s643] sm:$0xff] %v1106
          %1121 = vst [vmem:[%s643 + $0x8] sm:$0xff] %v1109
          %1122 = vst [vmem:[%s643 + $0x10] sm:$0xff] %v1114
          %1123 = vst [vmem:[%s643 + $0x18] sm:$0xff] %v1117
          %v1124 = vpack.c.bf16 %v1109, %v1106
          %v1125 = vpack.c.bf16 %v1117, %v1114
          %v1126 = vld [vmem:[#allocation11] sm:$0xf]
          %v1127 = vld [vmem:[#allocation11 + $0x4] sm:$0xf]
          %v1128 = vld [vmem:[#allocation11 + $0x8] sm:$0xf]
          %v1129 = vld [vmem:[#allocation11 + $0xc] sm:$0xf]
          %v1130 = vld [vmem:[#allocation11 + $0x10] sm:$0xf]
          %v1131 = vld [vmem:[#allocation11 + $0x14] sm:$0xf]
          %v1132 = vld [vmem:[#allocation11 + $0x18] sm:$0xf]
          %v1133 = vld [vmem:[#allocation11 + $0x1c] sm:$0xf]
          %v1134 = vld [vmem:[#allocation11 + $0x20] sm:$0xf]
          %v1135 = vld [vmem:[#allocation11 + $0x24] sm:$0xf]
          %v1136 = vld [vmem:[#allocation11 + $0x28] sm:$0xf]
          %v1137 = vld [vmem:[#allocation11 + $0x2c] sm:$0xf]
          %v1138 = vld [vmem:[#allocation11 + $0x30] sm:$0xf]
          %v1139 = vld [vmem:[#allocation11 + $0x34] sm:$0xf]
          %v1140 = vld [vmem:[#allocation11 + $0x38] sm:$0xf]
          %v1141 = vld [vmem:[#allocation11 + $0x3c] sm:$0xf]
          %v1158 = vunpack.c.l.b16 %v1126
          %v1159 = vunpack.c.l.b16 %v1127
          %v1160 = vunpack.c.l.b16 %v1128
          %v1161 = vunpack.c.l.b16 %v1129
          %v1162 = vunpack.c.l.b16 %v1130
          %v1163 = vunpack.c.l.b16 %v1131
          %v1164 = vunpack.c.l.b16 %v1132
          %v1165 = vunpack.c.l.b16 %v1133
          %v1166 = vunpack.c.l.b16 %v1134
          %v1167 = vunpack.c.l.b16 %v1135
          %v1168 = vunpack.c.l.b16 %v1136
          %v1169 = vunpack.c.l.b16 %v1137
          %v1170 = vunpack.c.l.b16 %v1138
          %v1171 = vunpack.c.l.b16 %v1139
          %v1172 = vunpack.c.l.b16 %v1140
          %v1173 = vunpack.c.l.b16 %v1141
          %v1174 = vpack.c.b16 %v1159, %v1158
          %v1175 = vpack.c.b16 %v1161, %v1160
          %v1176 = vpack.c.b16 %v1163, %v1162
          %v1177 = vpack.c.b16 %v1165, %v1164
          %v1178 = vpack.c.b16 %v1167, %v1166
          %v1179 = vpack.c.b16 %v1169, %v1168
          %v1180 = vpack.c.b16 %v1171, %v1170
          %v1181 = vpack.c.b16 %v1173, %v1172
          %1190 = vmatprep.subr.bf16.mxu0 0
          %1191 = vmatpush1.bf16.msra.mxu0 %v1174
          %1192 = vmatprep.subr.bf16.mxu0 0
          %1193 = vmatpush1.bf16.msra.mxu0 %v1175
          %1194 = vmatprep.subr.bf16.mxu0 0
          %1195 = vmatpush1.bf16.msra.mxu0 %v1176
          %1196 = vmatprep.subr.bf16.mxu0 0
          %1197 = vmatpush1.bf16.msra.mxu0 %v1177
          %1198 = vmatprep.subr.bf16.mxu0 0
          %1199 = vmatpush1.bf16.msra.mxu0 %v1178
          %1200 = vmatprep.subr.bf16.mxu0 0
          %1201 = vmatpush1.bf16.msra.mxu0 %v1179
          %1202 = vmatprep.subr.bf16.mxu0 0
          %1203 = vmatpush1.bf16.msra.mxu0 %v1180
          %1204 = vmatprep.subr.bf16.mxu0 0
          %1205 = vmatpush1.bf16.msra.mxu0 %v1181
          %1206 = vmatprep.subr.bf16.mxu0 0
          %1207 = vmatpush1.bf16.msra.mxu0 0
          %1208 = vmatprep.subr.bf16.mxu0 0
          %1209 = vmatpush1.bf16.msra.mxu0 0
          %1210 = vmatprep.subr.bf16.mxu0 0
          %1211 = vmatpush1.bf16.msra.mxu0 0
          %1212 = vmatprep.subr.bf16.mxu0 0
          %1213 = vmatpush1.bf16.msra.mxu0 0
          %1214 = vmatprep.subr.bf16.mxu0 0
          %1215 = vmatpush1.bf16.msra.mxu0 0
          %1216 = vmatprep.subr.bf16.mxu0 0
          %1217 = vmatpush1.bf16.msra.mxu0 0
          %1218 = vmatprep.subr.bf16.mxu0 0
          %1219 = vmatpush1.bf16.msra.mxu0 0
          %1220 = vmatprep.subr.bf16.mxu0 0
          %1221 = vmatpush1.bf16.msra.mxu0 0
          %1222 = vmatprep.mubr.bf16.mxu0 0
          %1223 = vmatmul.mubr.bf16.gmra.mrb[0].mxu0 %v1124
          %v1224 = vpop.f32.mrb[0].mxu0
          %v1225 = vadd.f32 0.0, %v1224
          %v1226 = vpop.f32.mrb[0].mxu0
          %v1227 = vpop.f32.mrb[0].mxu0
          %v1228 = vadd.f32 0.0, %v1227
          %v1229 = vpop.f32.mrb[0].mxu0
          %1230 = vmatprep.mubr.bf16.mxu0 0
          %1231 = vmatmul.mubr.bf16.gmra.mrb[0].mxu0 %v1125
          %v1232 = vpop.f32.mrb[0].mxu0
          %v1233 = vadd.f32 0.0, %v1232
          %v1234 = vpop.f32.mrb[0].mxu0
          %v1235 = vpop.f32.mrb[0].mxu0
          %v1236 = vadd.f32 0.0, %v1235
          %v1237 = vpop.f32.mrb[0].mxu0
          %1238 = vdwg.mxu0
          %v1239 = vpack.c.bf16 %v1228, %v1225
          %v1240 = vpack.c.bf16 %v1236, %v1233
          %v1241 = vld [vmem:[%s9] sm:$0xff]
          %v1242 = vld [vmem:[%s9 + $0x8] sm:$0xff]
          %v1243 = vld [vmem:[%s9 + $0x10] sm:$0xff]
          %v1244 = vld [vmem:[%s9 + $0x18] sm:$0xff]
          %v1245 = vld [vmem:[%s9 + $0x20] sm:$0xff]
          %v1246 = vld [vmem:[%s9 + $0x28] sm:$0xff]
          %v1247 = vld [vmem:[%s9 + $0x30] sm:$0xff]
          %v1248 = vld [vmem:[%s9 + $0x38] sm:$0xff]
          %v1249 = vld [vmem:[%s9 + $0x40] sm:$0xff]
          %v1250 = vld [vmem:[%s9 + $0x48] sm:$0xff]
          %v1251 = vld [vmem:[%s9 + $0x50] sm:$0xff]
          %v1252 = vld [vmem:[%s9 + $0x58] sm:$0xff]
          %v1253 = vld [vmem:[%s9 + $0x60] sm:$0xff]
          %v1254 = vld [vmem:[%s9 + $0x68] sm:$0xff]
          %v1255 = vld [vmem:[%s9 + $0x70] sm:$0xff]
          %v1256 = vld [vmem:[%s9 + $0x78] sm:$0xff]
          %v1273 = vunpack.c.l.b16 %v1241
          %v1274 = vunpack.c.h.b16 %v1241
          %v1275 = vunpack.c.l.b16 %v1242
          %v1276 = vunpack.c.h.b16 %v1242
          %v1277 = vunpack.c.l.b16 %v1243
          %v1278 = vunpack.c.h.b16 %v1243
          %v1279 = vunpack.c.l.b16 %v1244
          %v1280 = vunpack.c.h.b16 %v1244
          %v1281 = vunpack.c.l.b16 %v1245
          %v1282 = vunpack.c.h.b16 %v1245
          %v1283 = vunpack.c.l.b16 %v1246
          %v1284 = vunpack.c.h.b16 %v1246
          %v1285 = vunpack.c.l.b16 %v1247
          %v1286 = vunpack.c.h.b16 %v1247
          %v1287 = vunpack.c.l.b16 %v1248
          %v1288 = vunpack.c.h.b16 %v1248
          %v1289 = vunpack.c.l.b16 %v1249
          %v1290 = vunpack.c.h.b16 %v1249
          %v1291 = vunpack.c.l.b16 %v1250
          %v1292 = vunpack.c.h.b16 %v1250
          %v1293 = vunpack.c.l.b16 %v1251
          %v1294 = vunpack.c.h.b16 %v1251
          %v1295 = vunpack.c.l.b16 %v1252
          %v1296 = vunpack.c.h.b16 %v1252
          %v1297 = vunpack.c.l.b16 %v1253
          %v1298 = vunpack.c.h.b16 %v1253
          %v1299 = vunpack.c.l.b16 %v1254
          %v1300 = vunpack.c.h.b16 %v1254
          %v1301 = vunpack.c.l.b16 %v1255
          %v1302 = vunpack.c.h.b16 %v1255
          %v1303 = vunpack.c.l.b16 %v1256
          %v1304 = vunpack.c.h.b16 %v1256
          %v1305 = vpack.c.b16 %v1275, %v1273
          %v1306 = vpack.c.b16 %v1276, %v1274
          %v1307 = vpack.c.b16 %v1279, %v1277
          %v1308 = vpack.c.b16 %v1280, %v1278
          %v1309 = vpack.c.b16 %v1283, %v1281
          %v1310 = vpack.c.b16 %v1284, %v1282
          %v1311 = vpack.c.b16 %v1287, %v1285
          %v1312 = vpack.c.b16 %v1288, %v1286
          %v1313 = vpack.c.b16 %v1291, %v1289
          %v1314 = vpack.c.b16 %v1292, %v1290
          %v1315 = vpack.c.b16 %v1295, %v1293
          %v1316 = vpack.c.b16 %v1296, %v1294
          %v1317 = vpack.c.b16 %v1299, %v1297
          %v1318 = vpack.c.b16 %v1300, %v1298
          %v1319 = vpack.c.b16 %v1303, %v1301
          %v1320 = vpack.c.b16 %v1304, %v1302
          %1337 = vmatprep.subr.bf16.mxu0 %v1306
          %1338 = vmatpush1.bf16.msra.mxu0 %v1305
          %1339 = vmatprep.subr.bf16.mxu0 %v1308
          %1340 = vmatpush1.bf16.msra.mxu0 %v1307
          %1341 = vmatprep.subr.bf16.mxu0 %v1310
          %1342 = vmatpush1.bf16.msra.mxu0 %v1309
          %1343 = vmatprep.subr.bf16.mxu0 %v1312
          %1344 = vmatpush1.bf16.msra.mxu0 %v1311
          %1345 = vmatprep.subr.bf16.mxu0 %v1314
          %1346 = vmatpush1.bf16.msra.mxu0 %v1313
          %1347 = vmatprep.subr.bf16.mxu0 %v1316
          %1348 = vmatpush1.bf16.msra.mxu0 %v1315
          %1349 = vmatprep.subr.bf16.mxu0 %v1318
          %1350 = vmatpush1.bf16.msra.mxu0 %v1317
          %1351 = vmatprep.subr.bf16.mxu0 %v1320
          %1352 = vmatpush1.bf16.msra.mxu0 %v1319
          %1353 = vmatprep.subr.bf16.mxu0 0
          %1354 = vmatpush1.bf16.msra.mxu0 0
          %1355 = vmatprep.subr.bf16.mxu0 0
          %1356 = vmatpush1.bf16.msra.mxu0 0
          %1357 = vmatprep.subr.bf16.mxu0 0
          %1358 = vmatpush1.bf16.msra.mxu0 0
          %1359 = vmatprep.subr.bf16.mxu0 0
          %1360 = vmatpush1.bf16.msra.mxu0 0
          %1361 = vmatprep.subr.bf16.mxu0 0
          %1362 = vmatpush1.bf16.msra.mxu0 0
          %1363 = vmatprep.subr.bf16.mxu0 0
          %1364 = vmatpush1.bf16.msra.mxu0 0
          %1365 = vmatprep.subr.bf16.mxu0 0
          %1366 = vmatpush1.bf16.msra.mxu0 0
          %1367 = vmatprep.subr.bf16.mxu0 0
          %1368 = vmatpush1.bf16.msra.mxu0 0
          %1369 = vmatprep.mubr.bf16.mxu0 0
          %1370 = vmatmul.mubr.bf16.gmra.mrb[0].mxu0 %v1239
          %v1371 = vpop.f32.mrb[0].mxu0
          %v1372 = vadd.f32 0.0, %v1371
          %v1373 = vpop.f32.mrb[0].mxu0
          %v1374 = vadd.f32 0.0, %v1373
          %v1375 = vpop.f32.mrb[0].mxu0
          %v1376 = vadd.f32 0.0, %v1375
          %v1377 = vpop.f32.mrb[0].mxu0
          %v1378 = vadd.f32 0.0, %v1377
          %1379 = vmatprep.mubr.bf16.mxu0 0
          %1380 = vmatmul.mubr.bf16.gmra.mrb[0].mxu0 %v1240
          %v1381 = vpop.f32.mrb[0].mxu0
          %v1382 = vadd.f32 0.0, %v1381
          %v1383 = vpop.f32.mrb[0].mxu0
          %v1384 = vadd.f32 0.0, %v1383
          %v1385 = vpop.f32.mrb[0].mxu0
          %v1386 = vadd.f32 0.0, %v1385
          %v1387 = vpop.f32.mrb[0].mxu0
          %v1388 = vadd.f32 0.0, %v1387
          %1389 = vdwg.mxu0
          %v1390 = vld [vmem:[%s669] sm:$0xff]
          %v1391 = vld [vmem:[%s669 + $0x8] sm:$0xff]
          %v1392 = vld [vmem:[%s669 + $0x10] sm:$0xff]
          %v1393 = vld [vmem:[%s669 + $0x18] sm:$0xff]
          %v1394 = vmul.f32 %v1374, 0.5
          %v1395 = vmul.f32 %v1378, 0.5
          %v1396 = vmul.f32 %v1384, 0.5
          %v1397 = vmul.f32 %v1388, 0.5
          %v1398 = vmul.f32 %v1394, 1.442695
          %v1399 = vpow.pop %v1398
          %v1400 = vmul.f32 %v1395, 1.442695
          %v1401 = vpow.pop %v1400
          %v1402 = vmul.f32 %v1396, 1.442695
          %v1403 = vpow.pop %v1402
          %v1404 = vmul.f32 %v1397, 1.442695
          %v1405 = vpow.pop %v1404
          %v1406 = vmul.f32 %v1390, %v1399
          %v1407 = vmul.f32 %v1391, %v1401
          %v1408 = vmul.f32 %v1392, %v1403
          %v1409 = vmul.f32 %v1393, %v1405
          %v1410 = vadd.f32 %v1372, %v1406
          %v1411 = vadd.f32 %v1376, %v1407
          %v1412 = vadd.f32 %v1382, %v1408
          %v1413 = vadd.f32 %v1386, %v1409
          %v1414 = vmul.f32 %v1372, %v1372
          %v1415 = vmul.f32 %v1376, %v1376
          %v1416 = vmul.f32 %v1382, %v1382
          %v1417 = vmul.f32 %v1386, %v1386
          %v1418 = vmul.f32 %v1374, 1.442695
          %v1419 = vpow.pop %v1418
          %v1420 = vmul.f32 %v1378, 1.442695
          %v1421 = vpow.pop %v1420
          %v1422 = vmul.f32 %v1384, 1.442695
          %v1423 = vpow.pop %v1422
          %v1424 = vmul.f32 %v1388, 1.442695
          %v1425 = vpow.pop %v1424
          %v1426 = vadd.f32 %v1414, %v1419
          %v1427 = vadd.f32 %v1415, %v1421
          %v1428 = vadd.f32 %v1416, %v1423
          %v1429 = vadd.f32 %v1417, %v1425
          %v1430 = vsub.f32 %v1426, %v1374
          %v1431 = vsub.f32 %v1427, %v1378
          %v1432 = vsub.f32 %v1428, %v1384
          %v1433 = vsub.f32 %v1429, %v1388
          %v1434 = vsub.f32 %v1430, 1.0
          %v1435 = vsub.f32 %v1431, 1.0
          %v1436 = vsub.f32 %v1432, 1.0
          %v1437 = vsub.f32 %v1433, 1.0
          %1438 = vadd.xlane.f32.xlu0 %v1434
          %v1439 = vpop.xlane.xlu0 %1438
          %1440 = vadd.xlane.f32.xlu0 %v1435
          %v1441 = vpop.xlane.xlu0 %1440
          %1442 = vadd.xlane.f32.xlu0 %v1436
          %v1443 = vpop.xlane.xlu0 %1442
          %1444 = vadd.xlane.f32.xlu0 %v1437
          %v1445 = vpop.xlane.xlu0 %1444
          %v1446 = vmul.f32 %v1439, 0.5
          %v1447 = vmul.f32 %v1441, 0.5
          %v1448 = vmul.f32 %v1443, 0.5
          %v1449 = vmul.f32 %v1445, 0.5
          %vm1450 = vcmask 7168
          %1451 = vst.msk [vmem:[%s689] sm:$0xff] %vm1450, %v1446
          %1452 = vst.msk [vmem:[%s689 + $0x8] sm:$0xff] %vm1450, %v1447
          %1453 = vst.msk [vmem:[%s689 + $0x10] sm:$0xff] %vm1450, %v1448
          %1454 = vst.msk [vmem:[%s689 + $0x18] sm:$0xff] %vm1450, %v1449
          %v1455 = vpack.c.bf16 %v1411, %v1410
          %v1456 = vpack.c.bf16 %v1413, %v1412
          %v1457 = vld [vmem:[#allocation12] sm:$0xf]
          %v1458 = vld [vmem:[#allocation12 + $0x4] sm:$0xf]
          %v1459 = vld [vmem:[#allocation12 + $0x8] sm:$0xf]
          %v1460 = vld [vmem:[#allocation12 + $0xc] sm:$0xf]
          %v1461 = vld [vmem:[#allocation12 + $0x10] sm:$0xf]
          %v1462 = vld [vmem:[#allocation12 + $0x14] sm:$0xf]
          %v1463 = vld [vmem:[#allocation12 + $0x18] sm:$0xf]
          %v1464 = vld [vmem:[#allocation12 + $0x1c] sm:$0xf]
          %v1465 = vld [vmem:[#allocation12 + $0x20] sm:$0xf]
          %v1466 = vld [vmem:[#allocation12 + $0x24] sm:$0xf]
          %v1467 = vld [vmem:[#allocation12 + $0x28] sm:$0xf]
          %v1468 = vld [vmem:[#allocation12 + $0x2c] sm:$0xf]
          %v1469 = vld [vmem:[#allocation12 + $0x30] sm:$0xf]
          %v1470 = vld [vmem:[#allocation12 + $0x34] sm:$0xf]
          %v1471 = vld [vmem:[#allocation12 + $0x38] sm:$0xf]
          %v1472 = vld [vmem:[#allocation12 + $0x3c] sm:$0xf]
          %v1489 = vunpack.c.l.b16 %v1457
          %v1490 = vunpack.c.l.b16 %v1458
          %v1491 = vunpack.c.l.b16 %v1459
          %v1492 = vunpack.c.l.b16 %v1460
          %v1493 = vunpack.c.l.b16 %v1461
          %v1494 = vunpack.c.l.b16 %v1462
          %v1495 = vunpack.c.l.b16 %v1463
          %v1496 = vunpack.c.l.b16 %v1464
          %v1497 = vunpack.c.l.b16 %v1465
          %v1498 = vunpack.c.l.b16 %v1466
          %v1499 = vunpack.c.l.b16 %v1467
          %v1500 = vunpack.c.l.b16 %v1468
          %v1501 = vunpack.c.l.b16 %v1469
          %v1502 = vunpack.c.l.b16 %v1470
          %v1503 = vunpack.c.l.b16 %v1471
          %v1504 = vunpack.c.l.b16 %v1472
          %v1505 = vpack.c.b16 %v1490, %v1489
          %v1506 = vpack.c.b16 %v1492, %v1491
          %v1507 = vpack.c.b16 %v1494, %v1493
          %v1508 = vpack.c.b16 %v1496, %v1495
          %v1509 = vpack.c.b16 %v1498, %v1497
          %v1510 = vpack.c.b16 %v1500, %v1499
          %v1511 = vpack.c.b16 %v1502, %v1501
          %v1512 = vpack.c.b16 %v1504, %v1503
          %1521 = vmatprep.subr.bf16.mxu0 0
          %1522 = vmatpush1.bf16.msra.mxu0 %v1505
          %1523 = vmatprep.subr.bf16.mxu0 0
          %1524 = vmatpush1.bf16.msra.mxu0 %v1506
          %1525 = vmatprep.subr.bf16.mxu0 0
          %1526 = vmatpush1.bf16.msra.mxu0 %v1507
          %1527 = vmatprep.subr.bf16.mxu0 0
          %1528 = vmatpush1.bf16.msra.mxu0 %v1508
          %1529 = vmatprep.subr.bf16.mxu0 0
          %1530 = vmatpush1.bf16.msra.mxu0 %v1509
          %1531 = vmatprep.subr.bf16.mxu0 0
          %1532 = vmatpush1.bf16.msra.mxu0 %v1510
          %1533 = vmatprep.subr.bf16.mxu0 0
          %1534 = vmatpush1.bf16.msra.mxu0 %v1511
          %1535 = vmatprep.subr.bf16.mxu0 0
          %1536 = vmatpush1.bf16.msra.mxu0 %v1512
          %1537 = vmatprep.subr.bf16.mxu0 0
          %1538 = vmatpush1.bf16.msra.mxu0 0
          %1539 = vmatprep.subr.bf16.mxu0 0
          %1540 = vmatpush1.bf16.msra.mxu0 0
          %1541 = vmatprep.subr.bf16.mxu0 0
          %1542 = vmatpush1.bf16.msra.mxu0 0
          %1543 = vmatprep.subr.bf16.mxu0 0
          %1544 = vmatpush1.bf16.msra.mxu0 0
          %1545 = vmatprep.subr.bf16.mxu0 0
          %1546 = vmatpush1.bf16.msra.mxu0 0
          %1547 = vmatprep.subr.bf16.mxu0 0
          %1548 = vmatpush1.bf16.msra.mxu0 0
          %1549 = vmatprep.subr.bf16.mxu0 0
          %1550 = vmatpush1.bf16.msra.mxu0 0
          %1551 = vmatprep.subr.bf16.mxu0 0
          %1552 = vmatpush1.bf16.msra.mxu0 0
          %1553 = vmatprep.mubr.bf16.mxu0 0
          %1554 = vmatmul.mubr.bf16.gmra.mrb[0].mxu0 %v1455
          %v1555 = vpop.f32.mrb[0].mxu0
          %v1556 = vadd.f32 0.0, %v1555
          %v1557 = vpop.f32.mrb[0].mxu0
          %v1558 = vpop.f32.mrb[0].mxu0
          %v1559 = vadd.f32 0.0, %v1558
          %v1560 = vpop.f32.mrb[0].mxu0
          %1561 = vmatprep.mubr.bf16.mxu0 0
          %1562 = vmatmul.mubr.bf16.gmra.mrb[0].mxu0 %v1456
          %v1563 = vpop.f32.mrb[0].mxu0
          %v1564 = vadd.f32 0.0, %v1563
          %v1565 = vpop.f32.mrb[0].mxu0
          %v1566 = vpop.f32.mrb[0].mxu0
          %v1567 = vadd.f32 0.0, %v1566
          %v1568 = vpop.f32.mrb[0].mxu0
          %1569 = vdwg.mxu0
          %v1570 = vld [vmem:[%s675] sm:$0xf]
          %v1571 = vld [vmem:[%s675 + $0x4] sm:$0xf]
          %v1572 = vld [vmem:[%s675 + $0x8] sm:$0xf]
          %v1573 = vld [vmem:[%s675 + $0xc] sm:$0xf]
          %v1574 = vld [vmem:[%s675 + $0x10] sm:$0xf]
          %v1575 = vld [vmem:[%s675 + $0x14] sm:$0xf]
          %v1576 = vld [vmem:[%s675 + $0x18] sm:$0xf]
          %v1577 = vld [vmem:[%s675 + $0x1c] sm:$0xf]
          %v1578 = vld [vmem:[%s675 + $0x20] sm:$0xf]
          %v1579 = vld [vmem:[%s675 + $0x24] sm:$0xf]
          %v1580 = vld [vmem:[%s675 + $0x28] sm:$0xf]
          %v1581 = vld [vmem:[%s675 + $0x2c] sm:$0xf]
          %v1582 = vld [vmem:[%s675 + $0x30] sm:$0xf]
          %v1583 = vld [vmem:[%s675 + $0x34] sm:$0xf]
          %v1584 = vld [vmem:[%s675 + $0x38] sm:$0xf]
          %v1585 = vld [vmem:[%s675 + $0x3c] sm:$0xf]
          %v1586 = vld [vmem:[%s675 + $0x40] sm:$0xf]
          %v1587 = vld [vmem:[%s675 + $0x44] sm:$0xf]
          %v1588 = vld [vmem:[%s675 + $0x48] sm:$0xf]
          %v1589 = vld [vmem:[%s675 + $0x4c] sm:$0xf]
          %v1590 = vld [vmem:[%s675 + $0x50] sm:$0xf]
          %v1591 = vld [vmem:[%s675 + $0x54] sm:$0xf]
          %v1592 = vld [vmem:[%s675 + $0x58] sm:$0xf]
          %v1593 = vld [vmem:[%s675 + $0x5c] sm:$0xf]
          %v1594 = vld [vmem:[%s675 + $0x60] sm:$0xf]
          %v1595 = vld [vmem:[%s675 + $0x64] sm:$0xf]
          %v1596 = vld [vmem:[%s675 + $0x68] sm:$0xf]
          %v1597 = vld [vmem:[%s675 + $0x6c] sm:$0xf]
          %v1598 = vld [vmem:[%s675 + $0x70] sm:$0xf]
          %v1599 = vld [vmem:[%s675 + $0x74] sm:$0xf]
          %v1600 = vld [vmem:[%s675 + $0x78] sm:$0xf]
          %v1601 = vld [vmem:[%s675 + $0x7c] sm:$0xf]
          %v1602 = vunpack.c.l.bf16 %v1570
          %v1603 = vunpack.c.l.bf16 %v1571
          %v1604 = vunpack.c.l.bf16 %v1572
          %v1605 = vunpack.c.l.bf16 %v1573
          %v1606 = vunpack.c.l.bf16 %v1574
          %v1607 = vunpack.c.l.bf16 %v1575
          %v1608 = vunpack.c.l.bf16 %v1576
          %v1609 = vunpack.c.l.bf16 %v1577
          %v1610 = vunpack.c.l.bf16 %v1578
          %v1611 = vunpack.c.l.bf16 %v1579
          %v1612 = vunpack.c.l.bf16 %v1580
          %v1613 = vunpack.c.l.bf16 %v1581
          %v1614 = vunpack.c.l.bf16 %v1582
          %v1615 = vunpack.c.l.bf16 %v1583
          %v1616 = vunpack.c.l.bf16 %v1584
          %v1617 = vunpack.c.l.bf16 %v1585
          %v1618 = vunpack.c.l.bf16 %v1586
          %v1619 = vunpack.c.l.bf16 %v1587
          %v1620 = vunpack.c.l.bf16 %v1588
          %v1621 = vunpack.c.l.bf16 %v1589
          %v1622 = vunpack.c.l.bf16 %v1590
          %v1623 = vunpack.c.l.bf16 %v1591
          %v1624 = vunpack.c.l.bf16 %v1592
          %v1625 = vunpack.c.l.bf16 %v1593
          %v1626 = vunpack.c.l.bf16 %v1594
          %v1627 = vunpack.c.l.bf16 %v1595
          %v1628 = vunpack.c.l.bf16 %v1596
          %v1629 = vunpack.c.l.bf16 %v1597
          %v1630 = vunpack.c.l.bf16 %v1598
          %v1631 = vunpack.c.l.bf16 %v1599
          %v1632 = vunpack.c.l.bf16 %v1600
          %v1633 = vunpack.c.l.bf16 %v1601
          %v1638 = vcombine.high %v1225, %v1225
          %v1640 = vunpack.c.l.s4 1966171168
          %v1641 = vunpack.c.0.s8 %v1640
          %v1642 = vlaneseq
          %v1643 = vshrl.u32 %v1642, 7
          %v1644 = vsub.s32 %v1641, %v1643
          %v1645 = vrot.slane %v1225, %v1644
          %v1647 = vunpack.c.l.s4 1966171168
          %v1648 = vunpack.c.0.s8 %v1647
          %v1649 = vlaneseq
          %v1650 = vshrl.u32 %v1649, 7
          %v1651 = vsub.s32 %v1648, %v1650
          %v1652 = vrot.slane %v1638, %v1651
          %v1653 = vcombine.high %v1645, %v1645
          %v1654 = vcombine.high %v1652, %v1652
          %v1656 = vunpack.c.l.s4 1966171168
          %v1657 = vunpack.c.0.s8 %v1656
          %v1658 = vlaneseq
          %v1659 = vshrl.u32 %v1658, 7
          %v1660 = vsub.s32 %v1657, %v1659
          %v1661 = vrot.slane %v1645, %v1660
          %v1663 = vunpack.c.l.s4 1966171168
          %v1664 = vunpack.c.0.s8 %v1663
          %v1665 = vlaneseq
          %v1666 = vshrl.u32 %v1665, 7
          %v1667 = vsub.s32 %v1664, %v1666
          %v1668 = vrot.slane %v1652, %v1667
          %v1670 = vunpack.c.l.s4 1966171168
          %v1671 = vunpack.c.0.s8 %v1670
          %v1672 = vlaneseq
          %v1673 = vshrl.u32 %v1672, 7
          %v1674 = vsub.s32 %v1671, %v1673
          %v1675 = vrot.slane %v1653, %v1674
          %v1677 = vunpack.c.l.s4 1966171168
          %v1678 = vunpack.c.0.s8 %v1677
          %v1679 = vlaneseq
          %v1680 = vshrl.u32 %v1679, 7
          %v1681 = vsub.s32 %v1678, %v1680
          %v1682 = vrot.slane %v1654, %v1681
          %v1683 = vcombine.high %v1661, %v1661
          %v1684 = vcombine.high %v1668, %v1668
          %v1685 = vcombine.high %v1675, %v1675
          %v1686 = vcombine.high %v1682, %v1682
          %v1687 = vcombine.high %v1228, %v1228
          %v1689 = vunpack.c.l.s4 1966171168
          %v1690 = vunpack.c.0.s8 %v1689
          %v1691 = vlaneseq
          %v1692 = vshrl.u32 %v1691, 7
          %v1693 = vsub.s32 %v1690, %v1692
          %v1694 = vrot.slane %v1228, %v1693
          %v1696 = vunpack.c.l.s4 1966171168
          %v1697 = vunpack.c.0.s8 %v1696
          %v1698 = vlaneseq
          %v1699 = vshrl.u32 %v1698, 7
          %v1700 = vsub.s32 %v1697, %v1699
          %v1701 = vrot.slane %v1687, %v1700
          %v1702 = vcombine.high %v1694, %v1694
          %v1703 = vcombine.high %v1701, %v1701
          %v1705 = vunpack.c.l.s4 1966171168
          %v1706 = vunpack.c.0.s8 %v1705
          %v1707 = vlaneseq
          %v1708 = vshrl.u32 %v1707, 7
          %v1709 = vsub.s32 %v1706, %v1708
          %v1710 = vrot.slane %v1694, %v1709
          %v1712 = vunpack.c.l.s4 1966171168
          %v1713 = vunpack.c.0.s8 %v1712
          %v1714 = vlaneseq
          %v1715 = vshrl.u32 %v1714, 7
          %v1716 = vsub.s32 %v1713, %v1715
          %v1717 = vrot.slane %v1701, %v1716
          %v1719 = vunpack.c.l.s4 1966171168
          %v1720 = vunpack.c.0.s8 %v1719
          %v1721 = vlaneseq
          %v1722 = vshrl.u32 %v1721, 7
          %v1723 = vsub.s32 %v1720, %v1722
          %v1724 = vrot.slane %v1702, %v1723
          %v1726 = vunpack.c.l.s4 1966171168
          %v1727 = vunpack.c.0.s8 %v1726
          %v1728 = vlaneseq
          %v1729 = vshrl.u32 %v1728, 7
          %v1730 = vsub.s32 %v1727, %v1729
          %v1731 = vrot.slane %v1703, %v1730
          %v1732 = vcombine.high %v1710, %v1710
          %v1733 = vcombine.high %v1717, %v1717
          %v1734 = vcombine.high %v1724, %v1724
          %v1735 = vcombine.high %v1731, %v1731
          %v1736 = vcombine.high %v1233, %v1233
          %v1738 = vunpack.c.l.s4 1966171168
          %v1739 = vunpack.c.0.s8 %v1738
          %v1740 = vlaneseq
          %v1741 = vshrl.u32 %v1740, 7
          %v1742 = vsub.s32 %v1739, %v1741
          %v1743 = vrot.slane %v1233, %v1742
          %v1745 = vunpack.c.l.s4 1966171168
          %v1746 = vunpack.c.0.s8 %v1745
          %v1747 = vlaneseq
          %v1748 = vshrl.u32 %v1747, 7
          %v1749 = vsub.s32 %v1746, %v1748
          %v1750 = vrot.slane %v1736, %v1749
          %v1751 = vcombine.high %v1743, %v1743
          %v1752 = vcombine.high %v1750, %v1750
          %v1754 = vunpack.c.l.s4 1966171168
          %v1755 = vunpack.c.0.s8 %v1754
          %v1756 = vlaneseq
          %v1757 = vshrl.u32 %v1756, 7
          %v1758 = vsub.s32 %v1755, %v1757
          %v1759 = vrot.slane %v1743, %v1758
          %v1761 = vunpack.c.l.s4 1966171168
          %v1762 = vunpack.c.0.s8 %v1761
          %v1763 = vlaneseq
          %v1764 = vshrl.u32 %v1763, 7
          %v1765 = vsub.s32 %v1762, %v1764
          %v1766 = vrot.slane %v1750, %v1765
          %v1768 = vunpack.c.l.s4 1966171168
          %v1769 = vunpack.c.0.s8 %v1768
          %v1770 = vlaneseq
          %v1771 = vshrl.u32 %v1770, 7
          %v1772 = vsub.s32 %v1769, %v1771
          %v1773 = vrot.slane %v1751, %v1772
          %v1775 = vunpack.c.l.s4 1966171168
          %v1776 = vunpack.c.0.s8 %v1775
          %v1777 = vlaneseq
          %v1778 = vshrl.u32 %v1777, 7
          %v1779 = vsub.s32 %v1776, %v1778
          %v1780 = vrot.slane %v1752, %v1779
          %v1781 = vcombine.high %v1759, %v1759
          %v1782 = vcombine.high %v1766, %v1766
          %v1783 = vcombine.high %v1773, %v1773
          %v1784 = vcombine.high %v1780, %v1780
          %v1785 = vcombine.high %v1236, %v1236
          %v1787 = vunpack.c.l.s4 1966171168
          %v1788 = vunpack.c.0.s8 %v1787
          %v1789 = vlaneseq
          %v1790 = vshrl.u32 %v1789, 7
          %v1791 = vsub.s32 %v1788, %v1790
          %v1792 = vrot.slane %v1236, %v1791
          %v1794 = vunpack.c.l.s4 1966171168
          %v1795 = vunpack.c.0.s8 %v1794
          %v1796 = vlaneseq
          %v1797 = vshrl.u32 %v1796, 7
          %v1798 = vsub.s32 %v1795, %v1797
          %v1799 = vrot.slane %v1785, %v1798
          %v1800 = vcombine.high %v1792, %v1792
          %v1801 = vcombine.high %v1799, %v1799
          %v1803 = vunpack.c.l.s4 1966171168
          %v1804 = vunpack.c.0.s8 %v1803
          %v1805 = vlaneseq
          %v1806 = vshrl.u32 %v1805, 7
          %v1807 = vsub.s32 %v1804, %v1806
          %v1808 = vrot.slane %v1792, %v1807
          %v1810 = vunpack.c.l.s4 1966171168
          %v1811 = vunpack.c.0.s8 %v1810
          %v1812 = vlaneseq
          %v1813 = vshrl.u32 %v1812, 7
          %v1814 = vsub.s32 %v1811, %v1813
          %v1815 = vrot.slane %v1799, %v1814
          %v1817 = vunpack.c.l.s4 1966171168
          %v1818 = vunpack.c.0.s8 %v1817
          %v1819 = vlaneseq
          %v1820 = vshrl.u32 %v1819, 7
          %v1821 = vsub.s32 %v1818, %v1820
          %v1822 = vrot.slane %v1800, %v1821
          %v1824 = vunpack.c.l.s4 1966171168
          %v1825 = vunpack.c.0.s8 %v1824
          %v1826 = vlaneseq
          %v1827 = vshrl.u32 %v1826, 7
          %v1828 = vsub.s32 %v1825, %v1827
          %v1829 = vrot.slane %v1801, %v1828
          %v1830 = vcombine.high %v1808, %v1808
          %v1831 = vcombine.high %v1815, %v1815
          %v1832 = vcombine.high %v1822, %v1822
          %v1833 = vcombine.high %v1829, %v1829
          %v1834 = vld [vmem:[%s663] sm:$0xff]
          %v1835 = vld [vmem:[%s663 + $0x8] sm:$0xff]
          %v1836 = vld [vmem:[%s663 + $0x10] sm:$0xff]
          %v1837 = vld [vmem:[%s663 + $0x18] sm:$0xff]
          %v1838 = vlaneseq
          %v1839 = vshrl.u32 %v1838, 7
          %v1840 = vsub.s32 0, %v1839
          %v1841 = vrot.slane %v1834, %v1840
          %1843 = vbcast.lane.b32.xlu0 %v1841, 256
          %v1844 = vpop.permute.xlu0 %1843
          %v1845 = vlaneseq
          %v1846 = vshrl.u32 %v1845, 7
          %v1847 = vsub.s32 1, %v1846
          %v1848 = vrot.slane %v1834, %v1847
          %1850 = vbcast.lane.b32.xlu0 %v1848, 256
          %v1851 = vpop.permute.xlu0 %1850
          %v1852 = vlaneseq
          %v1853 = vshrl.u32 %v1852, 7
          %v1854 = vsub.s32 2, %v1853
          %v1855 = vrot.slane %v1834, %v1854
          %1857 = vbcast.lane.b32.xlu0 %v1855, 256
          %v1858 = vpop.permute.xlu0 %1857
          %v1859 = vlaneseq
          %v1860 = vshrl.u32 %v1859, 7
          %v1861 = vsub.s32 3, %v1860
          %v1862 = vrot.slane %v1834, %v1861
          %1864 = vbcast.lane.b32.xlu0 %v1862, 256
          %v1865 = vpop.permute.xlu0 %1864
          %v1866 = vlaneseq
          %v1867 = vshrl.u32 %v1866, 7
          %v1868 = vsub.s32 4, %v1867
          %v1869 = vrot.slane %v1834, %v1868
          %1871 = vbcast.lane.b32.xlu0 %v1869, 256
          %v1872 = vpop.permute.xlu0 %1871
          %v1873 = vlaneseq
          %v1874 = vshrl.u32 %v1873, 7
          %v1875 = vsub.s32 5, %v1874
          %v1876 = vrot.slane %v1834, %v1875
          %1878 = vbcast.lane.b32.xlu0 %v1876, 256
          %v1879 = vpop.permute.xlu0 %1878
          %v1880 = vlaneseq
          %v1881 = vshrl.u32 %v1880, 7
          %v1882 = vsub.s32 6, %v1881
          %v1883 = vrot.slane %v1834, %v1882
          %1885 = vbcast.lane.b32.xlu0 %v1883, 256
          %v1886 = vpop.permute.xlu0 %1885
          %v1887 = vlaneseq
          %v1888 = vshrl.u32 %v1887, 7
          %v1889 = vsub.s32 7, %v1888
          %v1890 = vrot.slane %v1834, %v1889
          %1892 = vbcast.lane.b32.xlu0 %v1890, 256
          %v1893 = vpop.permute.xlu0 %1892
          %v1894 = vlaneseq
          %v1895 = vshrl.u32 %v1894, 7
          %v1896 = vsub.s32 0, %v1895
          %v1897 = vrot.slane %v1835, %v1896
          %1899 = vbcast.lane.b32.xlu0 %v1897, 256
          %v1900 = vpop.permute.xlu0 %1899
          %v1901 = vlaneseq
          %v1902 = vshrl.u32 %v1901, 7
          %v1903 = vsub.s32 1, %v1902
          %v1904 = vrot.slane %v1835, %v1903
          %1906 = vbcast.lane.b32.xlu0 %v1904, 256
          %v1907 = vpop.permute.xlu0 %1906
          %v1908 = vlaneseq
          %v1909 = vshrl.u32 %v1908, 7
          %v1910 = vsub.s32 2, %v1909
          %v1911 = vrot.slane %v1835, %v1910
          %1913 = vbcast.lane.b32.xlu0 %v1911, 256
          %v1914 = vpop.permute.xlu0 %1913
          %v1915 = vlaneseq
          %v1916 = vshrl.u32 %v1915, 7
          %v1917 = vsub.s32 3, %v1916
          %v1918 = vrot.slane %v1835, %v1917
          %1920 = vbcast.lane.b32.xlu0 %v1918, 256
          %v1921 = vpop.permute.xlu0 %1920
          %v1922 = vlaneseq
          %v1923 = vshrl.u32 %v1922, 7
          %v1924 = vsub.s32 4, %v1923
          %v1925 = vrot.slane %v1835, %v1924
          %1927 = vbcast.lane.b32.xlu0 %v1925, 256
          %v1928 = vpop.permute.xlu0 %1927
          %v1929 = vlaneseq
          %v1930 = vshrl.u32 %v1929, 7
          %v1931 = vsub.s32 5, %v1930
          %v1932 = vrot.slane %v1835, %v1931
          %1934 = vbcast.lane.b32.xlu0 %v1932, 256
          %v1935 = vpop.permute.xlu0 %1934
          %v1936 = vlaneseq
          %v1937 = vshrl.u32 %v1936, 7
          %v1938 = vsub.s32 6, %v1937
          %v1939 = vrot.slane %v1835, %v1938
          %1941 = vbcast.lane.b32.xlu0 %v1939, 256
          %v1942 = vpop.permute.xlu0 %1941
          %v1943 = vlaneseq
          %v1944 = vshrl.u32 %v1943, 7
          %v1945 = vsub.s32 7, %v1944
          %v1946 = vrot.slane %v1835, %v1945
          %1948 = vbcast.lane.b32.xlu0 %v1946, 256
          %v1949 = vpop.permute.xlu0 %1948
          %v1950 = vlaneseq
          %v1951 = vshrl.u32 %v1950, 7
          %v1952 = vsub.s32 0, %v1951
          %v1953 = vrot.slane %v1836, %v1952
          %1955 = vbcast.lane.b32.xlu0 %v1953, 256
          %v1956 = vpop.permute.xlu0 %1955
          %v1957 = vlaneseq
          %v1958 = vshrl.u32 %v1957, 7
          %v1959 = vsub.s32 1, %v1958
          %v1960 = vrot.slane %v1836, %v1959
          %1962 = vbcast.lane.b32.xlu0 %v1960, 256
          %v1963 = vpop.permute.xlu0 %1962
          %v1964 = vlaneseq
          %v1965 = vshrl.u32 %v1964, 7
          %v1966 = vsub.s32 2, %v1965
          %v1967 = vrot.slane %v1836, %v1966
          %1969 = vbcast.lane.b32.xlu0 %v1967, 256
          %v1970 = vpop.permute.xlu0 %1969
          %v1971 = vlaneseq
          %v1972 = vshrl.u32 %v1971, 7
          %v1973 = vsub.s32 3, %v1972
          %v1974 = vrot.slane %v1836, %v1973
          %1976 = vbcast.lane.b32.xlu0 %v1974, 256
          %v1977 = vpop.permute.xlu0 %1976
          %v1978 = vlaneseq
          %v1979 = vshrl.u32 %v1978, 7
          %v1980 = vsub.s32 4, %v1979
          %v1981 = vrot.slane %v1836, %v1980
          %1983 = vbcast.lane.b32.xlu0 %v1981, 256
          %v1984 = vpop.permute.xlu0 %1983
          %v1985 = vlaneseq
          %v1986 = vshrl.u32 %v1985, 7
          %v1987 = vsub.s32 5, %v1986
          %v1988 = vrot.slane %v1836, %v1987
          %1990 = vbcast.lane.b32.xlu0 %v1988, 256
          %v1991 = vpop.permute.xlu0 %1990
          %v1992 = vlaneseq
          %v1993 = vshrl.u32 %v1992, 7
          %v1994 = vsub.s32 6, %v1993
          %v1995 = vrot.slane %v1836, %v1994
          %1997 = vbcast.lane.b32.xlu0 %v1995, 256
          %v1998 = vpop.permute.xlu0 %1997
          %v1999 = vlaneseq
          %v2000 = vshrl.u32 %v1999, 7
          %v2001 = vsub.s32 7, %v2000
          %v2002 = vrot.slane %v1836, %v2001
          %2004 = vbcast.lane.b32.xlu0 %v2002, 256
          %v2005 = vpop.permute.xlu0 %2004
          %v2006 = vlaneseq
          %v2007 = vshrl.u32 %v2006, 7
          %v2008 = vsub.s32 0, %v2007
          %v2009 = vrot.slane %v1837, %v2008
          %2011 = vbcast.lane.b32.xlu0 %v2009, 256
          %v2012 = vpop.permute.xlu0 %2011
          %v2013 = vlaneseq
          %v2014 = vshrl.u32 %v2013, 7
          %v2015 = vsub.s32 1, %v2014
          %v2016 = vrot.slane %v1837, %v2015
          %2018 = vbcast.lane.b32.xlu0 %v2016, 256
          %v2019 = vpop.permute.xlu0 %2018
          %v2020 = vlaneseq
          %v2021 = vshrl.u32 %v2020, 7
          %v2022 = vsub.s32 2, %v2021
          %v2023 = vrot.slane %v1837, %v2022
          %2025 = vbcast.lane.b32.xlu0 %v2023, 256
          %v2026 = vpop.permute.xlu0 %2025
          %v2027 = vlaneseq
          %v2028 = vshrl.u32 %v2027, 7
          %v2029 = vsub.s32 3, %v2028
          %v2030 = vrot.slane %v1837, %v2029
          %2032 = vbcast.lane.b32.xlu0 %v2030, 256
          %v2033 = vpop.permute.xlu0 %2032
          %v2034 = vlaneseq
          %v2035 = vshrl.u32 %v2034, 7
          %v2036 = vsub.s32 4, %v2035
          %v2037 = vrot.slane %v1837, %v2036
          %2039 = vbcast.lane.b32.xlu0 %v2037, 256
          %v2040 = vpop.permute.xlu0 %2039
          %v2041 = vlaneseq
          %v2042 = vshrl.u32 %v2041, 7
          %v2043 = vsub.s32 5, %v2042
          %v2044 = vrot.slane %v1837, %v2043
          %2046 = vbcast.lane.b32.xlu0 %v2044, 256
          %v2047 = vpop.permute.xlu0 %2046
          %v2048 = vlaneseq
          %v2049 = vshrl.u32 %v2048, 7
          %v2050 = vsub.s32 6, %v2049
          %v2051 = vrot.slane %v1837, %v2050
          %2053 = vbcast.lane.b32.xlu0 %v2051, 256
          %v2054 = vpop.permute.xlu0 %2053
          %v2055 = vlaneseq
          %v2056 = vshrl.u32 %v2055, 7
          %v2057 = vsub.s32 7, %v2056
          %v2058 = vrot.slane %v1837, %v2057
          %2060 = vbcast.lane.b32.xlu0 %v2058, 256
          %v2061 = vpop.permute.xlu0 %2060
          %v2062 = vlaneseq
          %v2063 = vshrl.u32 %v2062, 7
          %v2064 = vsub.s32 0, %v2063
          %v2065 = vrot.slane %v1661, %v2064
          %v2066 = vlaneseq
          %v2067 = vshrl.u32 %v2066, 7
          %v2068 = vsub.s32 0, %v2067
          %v2069 = vrot.slane %v1675, %v2068
          %v2070 = vlaneseq
          %v2071 = vshrl.u32 %v2070, 7
          %v2072 = vsub.s32 0, %v2071
          %v2073 = vrot.slane %v1683, %v2072
          %v2074 = vlaneseq
          %v2075 = vshrl.u32 %v2074, 7
          %v2076 = vsub.s32 0, %v2075
          %v2077 = vrot.slane %v1685, %v2076
          %v2078 = vlaneseq
          %v2079 = vshrl.u32 %v2078, 7
          %v2080 = vsub.s32 0, %v2079
          %v2081 = vrot.slane %v1668, %v2080
          %v2082 = vlaneseq
          %v2083 = vshrl.u32 %v2082, 7
          %v2084 = vsub.s32 0, %v2083
          %v2085 = vrot.slane %v1682, %v2084
          %v2086 = vlaneseq
          %v2087 = vshrl.u32 %v2086, 7
          %v2088 = vsub.s32 0, %v2087
          %v2089 = vrot.slane %v1684, %v2088
          %v2090 = vlaneseq
          %v2091 = vshrl.u32 %v2090, 7
          %v2092 = vsub.s32 0, %v2091
          %v2093 = vrot.slane %v1686, %v2092
          %v2094 = vlaneseq
          %v2095 = vshrl.u32 %v2094, 7
          %v2096 = vsub.s32 0, %v2095
          %v2097 = vrot.slane %v1710, %v2096
          %v2098 = vlaneseq
          %v2099 = vshrl.u32 %v2098, 7
          %v2100 = vsub.s32 0, %v2099
          %v2101 = vrot.slane %v1724, %v2100
          %v2102 = vlaneseq
          %v2103 = vshrl.u32 %v2102, 7
          %v2104 = vsub.s32 0, %v2103
          %v2105 = vrot.slane %v1732, %v2104
          %v2106 = vlaneseq
          %v2107 = vshrl.u32 %v2106, 7
          %v2108 = vsub.s32 0, %v2107
          %v2109 = vrot.slane %v1734, %v2108
          %v2110 = vlaneseq
          %v2111 = vshrl.u32 %v2110, 7
          %v2112 = vsub.s32 0, %v2111
          %v2113 = vrot.slane %v1717, %v2112
          %v2114 = vlaneseq
          %v2115 = vshrl.u32 %v2114, 7
          %v2116 = vsub.s32 0, %v2115
          %v2117 = vrot.slane %v1731, %v2116
          %v2118 = vlaneseq
          %v2119 = vshrl.u32 %v2118, 7
          %v2120 = vsub.s32 0, %v2119
          %v2121 = vrot.slane %v1733, %v2120
          %v2122 = vlaneseq
          %v2123 = vshrl.u32 %v2122, 7
          %v2124 = vsub.s32 0, %v2123
          %v2125 = vrot.slane %v1735, %v2124
          %v2126 = vlaneseq
          %v2127 = vshrl.u32 %v2126, 7
          %v2128 = vsub.s32 0, %v2127
          %v2129 = vrot.slane %v1759, %v2128
          %v2130 = vlaneseq
          %v2131 = vshrl.u32 %v2130, 7
          %v2132 = vsub.s32 0, %v2131
          %v2133 = vrot.slane %v1773, %v2132
          %v2134 = vlaneseq
          %v2135 = vshrl.u32 %v2134, 7
          %v2136 = vsub.s32 0, %v2135
          %v2137 = vrot.slane %v1781, %v2136
          %v2138 = vlaneseq
          %v2139 = vshrl.u32 %v2138, 7
          %v2140 = vsub.s32 0, %v2139
          %v2141 = vrot.slane %v1783, %v2140
          %v2142 = vlaneseq
          %v2143 = vshrl.u32 %v2142, 7
          %v2144 = vsub.s32 0, %v2143
          %v2145 = vrot.slane %v1766, %v2144
          %v2146 = vlaneseq
          %v2147 = vshrl.u32 %v2146, 7
          %v2148 = vsub.s32 0, %v2147
          %v2149 = vrot.slane %v1780, %v2148
          %v2150 = vlaneseq
          %v2151 = vshrl.u32 %v2150, 7
          %v2152 = vsub.s32 0, %v2151
          %v2153 = vrot.slane %v1782, %v2152
          %v2154 = vlaneseq
          %v2155 = vshrl.u32 %v2154, 7
          %v2156 = vsub.s32 0, %v2155
          %v2157 = vrot.slane %v1784, %v2156
          %v2158 = vlaneseq
          %v2159 = vshrl.u32 %v2158, 7
          %v2160 = vsub.s32 0, %v2159
          %v2161 = vrot.slane %v1808, %v2160
          %v2162 = vlaneseq
          %v2163 = vshrl.u32 %v2162, 7
          %v2164 = vsub.s32 0, %v2163
          %v2165 = vrot.slane %v1822, %v2164
          %v2166 = vlaneseq
          %v2167 = vshrl.u32 %v2166, 7
          %v2168 = vsub.s32 0, %v2167
          %v2169 = vrot.slane %v1830, %v2168
          %v2170 = vlaneseq
          %v2171 = vshrl.u32 %v2170, 7
          %v2172 = vsub.s32 0, %v2171
          %v2173 = vrot.slane %v1832, %v2172
          %v2174 = vlaneseq
          %v2175 = vshrl.u32 %v2174, 7
          %v2176 = vsub.s32 0, %v2175
          %v2177 = vrot.slane %v1815, %v2176
          %v2178 = vlaneseq
          %v2179 = vshrl.u32 %v2178, 7
          %v2180 = vsub.s32 0, %v2179
          %v2181 = vrot.slane %v1829, %v2180
          %v2182 = vlaneseq
          %v2183 = vshrl.u32 %v2182, 7
          %v2184 = vsub.s32 0, %v2183
          %v2185 = vrot.slane %v1831, %v2184
          %v2186 = vlaneseq
          %v2187 = vshrl.u32 %v2186, 7
          %v2188 = vsub.s32 0, %v2187
          %v2189 = vrot.slane %v1833, %v2188
          %v2222 = vmul.f32 %v2065, %v1844
          %v2223 = vmul.f32 %v2069, %v1851
          %v2224 = vmul.f32 %v2073, %v1858
          %v2225 = vmul.f32 %v2077, %v1865
          %v2226 = vmul.f32 %v2081, %v1872
          %v2227 = vmul.f32 %v2085, %v1879
          %v2228 = vmul.f32 %v2089, %v1886
          %v2229 = vmul.f32 %v2093, %v1893
          %v2230 = vmul.f32 %v2097, %v1900
          %v2231 = vmul.f32 %v2101, %v1907
          %v2232 = vmul.f32 %v2105, %v1914
          %v2233 = vmul.f32 %v2109, %v1921
          %v2234 = vmul.f32 %v2113, %v1928
          %v2235 = vmul.f32 %v2117, %v1935
          %v2236 = vmul.f32 %v2121, %v1942
          %v2237 = vmul.f32 %v2125, %v1949
          %v2238 = vmul.f32 %v2129, %v1956
          %v2239 = vmul.f32 %v2133, %v1963
          %v2240 = vmul.f32 %v2137, %v1970
          %v2241 = vmul.f32 %v2141, %v1977
          %v2242 = vmul.f32 %v2145, %v1984
          %v2243 = vmul.f32 %v2149, %v1991
          %v2244 = vmul.f32 %v2153, %v1998
          %v2245 = vmul.f32 %v2157, %v2005
          %v2246 = vmul.f32 %v2161, %v2012
          %v2247 = vmul.f32 %v2165, %v2019
          %v2248 = vmul.f32 %v2169, %v2026
          %v2249 = vmul.f32 %v2173, %v2033
          %v2250 = vmul.f32 %v2177, %v2040
          %v2251 = vmul.f32 %v2181, %v2047
          %v2252 = vmul.f32 %v2185, %v2054
          %v2253 = vmul.f32 %v2189, %v2061
          %v2254 = vadd.f32 %v1602, %v2222
          %v2255 = vadd.f32 %v1603, %v2223
          %v2256 = vadd.f32 %v1604, %v2224
          %v2257 = vadd.f32 %v1605, %v2225
          %v2258 = vadd.f32 %v1606, %v2226
          %v2259 = vadd.f32 %v1607, %v2227
          %v2260 = vadd.f32 %v1608, %v2228
          %v2261 = vadd.f32 %v1609, %v2229
          %v2262 = vadd.f32 %v1610, %v2230
          %v2263 = vadd.f32 %v1611, %v2231
          %v2264 = vadd.f32 %v1612, %v2232
          %v2265 = vadd.f32 %v1613, %v2233
          %v2266 = vadd.f32 %v1614, %v2234
          %v2267 = vadd.f32 %v1615, %v2235
          %v2268 = vadd.f32 %v1616, %v2236
          %v2269 = vadd.f32 %v1617, %v2237
          %v2270 = vadd.f32 %v1618, %v2238
          %v2271 = vadd.f32 %v1619, %v2239
          %v2272 = vadd.f32 %v1620, %v2240
          %v2273 = vadd.f32 %v1621, %v2241
          %v2274 = vadd.f32 %v1622, %v2242
          %v2275 = vadd.f32 %v1623, %v2243
          %v2276 = vadd.f32 %v1624, %v2244
          %v2277 = vadd.f32 %v1625, %v2245
          %v2278 = vadd.f32 %v1626, %v2246
          %v2279 = vadd.f32 %v1627, %v2247
          %v2280 = vadd.f32 %v1628, %v2248
          %v2281 = vadd.f32 %v1629, %v2249
          %v2282 = vadd.f32 %v1630, %v2250
          %v2283 = vadd.f32 %v1631, %v2251
          %v2284 = vadd.f32 %v1632, %v2252
          %v2285 = vadd.f32 %v1633, %v2253
          %v2290 = vcombine.high %v1556, %v1556
          %v2292 = vunpack.c.l.s4 1966171168
          %v2293 = vunpack.c.0.s8 %v2292
          %v2294 = vlaneseq
          %v2295 = vshrl.u32 %v2294, 7
          %v2296 = vsub.s32 %v2293, %v2295
          %v2297 = vrot.slane %v1556, %v2296
          %v2299 = vunpack.c.l.s4 1966171168
          %v2300 = vunpack.c.0.s8 %v2299
          %v2301 = vlaneseq
          %v2302 = vshrl.u32 %v2301, 7
          %v2303 = vsub.s32 %v2300, %v2302
          %v2304 = vrot.slane %v2290, %v2303
          %v2305 = vcombine.high %v2297, %v2297
          %v2306 = vcombine.high %v2304, %v2304
          %v2308 = vunpack.c.l.s4 1966171168
          %v2309 = vunpack.c.0.s8 %v2308
          %v2310 = vlaneseq
          %v2311 = vshrl.u32 %v2310, 7
          %v2312 = vsub.s32 %v2309, %v2311
          %v2313 = vrot.slane %v2297, %v2312
          %v2315 = vunpack.c.l.s4 1966171168
          %v2316 = vunpack.c.0.s8 %v2315
          %v2317 = vlaneseq
          %v2318 = vshrl.u32 %v2317, 7
          %v2319 = vsub.s32 %v2316, %v2318
          %v2320 = vrot.slane %v2304, %v2319
          %v2322 = vunpack.c.l.s4 1966171168
          %v2323 = vunpack.c.0.s8 %v2322
          %v2324 = vlaneseq
          %v2325 = vshrl.u32 %v2324, 7
          %v2326 = vsub.s32 %v2323, %v2325
          %v2327 = vrot.slane %v2305, %v2326
          %v2329 = vunpack.c.l.s4 1966171168
          %v2330 = vunpack.c.0.s8 %v2329
          %v2331 = vlaneseq
          %v2332 = vshrl.u32 %v2331, 7
          %v2333 = vsub.s32 %v2330, %v2332
          %v2334 = vrot.slane %v2306, %v2333
          %v2335 = vcombine.high %v2313, %v2313
          %v2336 = vcombine.high %v2320, %v2320
          %v2337 = vcombine.high %v2327, %v2327
          %v2338 = vcombine.high %v2334, %v2334
          %v2339 = vcombine.high %v1559, %v1559
          %v2341 = vunpack.c.l.s4 1966171168
          %v2342 = vunpack.c.0.s8 %v2341
          %v2343 = vlaneseq
          %v2344 = vshrl.u32 %v2343, 7
          %v2345 = vsub.s32 %v2342, %v2344
          %v2346 = vrot.slane %v1559, %v2345
          %v2348 = vunpack.c.l.s4 1966171168
          %v2349 = vunpack.c.0.s8 %v2348
          %v2350 = vlaneseq
          %v2351 = vshrl.u32 %v2350, 7
          %v2352 = vsub.s32 %v2349, %v2351
          %v2353 = vrot.slane %v2339, %v2352
          %v2354 = vcombine.high %v2346, %v2346
          %v2355 = vcombine.high %v2353, %v2353
          %v2357 = vunpack.c.l.s4 1966171168
          %v2358 = vunpack.c.0.s8 %v2357
          %v2359 = vlaneseq
          %v2360 = vshrl.u32 %v2359, 7
          %v2361 = vsub.s32 %v2358, %v2360
          %v2362 = vrot.slane %v2346, %v2361
          %v2364 = vunpack.c.l.s4 1966171168
          %v2365 = vunpack.c.0.s8 %v2364
          %v2366 = vlaneseq
          %v2367 = vshrl.u32 %v2366, 7
          %v2368 = vsub.s32 %v2365, %v2367
          %v2369 = vrot.slane %v2353, %v2368
          %v2371 = vunpack.c.l.s4 1966171168
          %v2372 = vunpack.c.0.s8 %v2371
          %v2373 = vlaneseq
          %v2374 = vshrl.u32 %v2373, 7
          %v2375 = vsub.s32 %v2372, %v2374
          %v2376 = vrot.slane %v2354, %v2375
          %v2378 = vunpack.c.l.s4 1966171168
          %v2379 = vunpack.c.0.s8 %v2378
          %v2380 = vlaneseq
          %v2381 = vshrl.u32 %v2380, 7
          %v2382 = vsub.s32 %v2379, %v2381
          %v2383 = vrot.slane %v2355, %v2382
          %v2384 = vcombine.high %v2362, %v2362
          %v2385 = vcombine.high %v2369, %v2369
          %v2386 = vcombine.high %v2376, %v2376
          %v2387 = vcombine.high %v2383, %v2383
          %v2388 = vcombine.high %v1564, %v1564
          %v2390 = vunpack.c.l.s4 1966171168
          %v2391 = vunpack.c.0.s8 %v2390
          %v2392 = vlaneseq
          %v2393 = vshrl.u32 %v2392, 7
          %v2394 = vsub.s32 %v2391, %v2393
          %v2395 = vrot.slane %v1564, %v2394
          %v2397 = vunpack.c.l.s4 1966171168
          %v2398 = vunpack.c.0.s8 %v2397
          %v2399 = vlaneseq
          %v2400 = vshrl.u32 %v2399, 7
          %v2401 = vsub.s32 %v2398, %v2400
          %v2402 = vrot.slane %v2388, %v2401
          %v2403 = vcombine.high %v2395, %v2395
          %v2404 = vcombine.high %v2402, %v2402
          %v2406 = vunpack.c.l.s4 1966171168
          %v2407 = vunpack.c.0.s8 %v2406
          %v2408 = vlaneseq
          %v2409 = vshrl.u32 %v2408, 7
          %v2410 = vsub.s32 %v2407, %v2409
          %v2411 = vrot.slane %v2395, %v2410
          %v2413 = vunpack.c.l.s4 1966171168
          %v2414 = vunpack.c.0.s8 %v2413
          %v2415 = vlaneseq
          %v2416 = vshrl.u32 %v2415, 7
          %v2417 = vsub.s32 %v2414, %v2416
          %v2418 = vrot.slane %v2402, %v2417
          %v2420 = vunpack.c.l.s4 1966171168
          %v2421 = vunpack.c.0.s8 %v2420
          %v2422 = vlaneseq
          %v2423 = vshrl.u32 %v2422, 7
          %v2424 = vsub.s32 %v2421, %v2423
          %v2425 = vrot.slane %v2403, %v2424
          %v2427 = vunpack.c.l.s4 1966171168
          %v2428 = vunpack.c.0.s8 %v2427
          %v2429 = vlaneseq
          %v2430 = vshrl.u32 %v2429, 7
          %v2431 = vsub.s32 %v2428, %v2430
          %v2432 = vrot.slane %v2404, %v2431
          %v2433 = vcombine.high %v2411, %v2411
          %v2434 = vcombine.high %v2418, %v2418
          %v2435 = vcombine.high %v2425, %v2425
          %v2436 = vcombine.high %v2432, %v2432
          %v2437 = vcombine.high %v1567, %v1567
          %v2439 = vunpack.c.l.s4 1966171168
          %v2440 = vunpack.c.0.s8 %v2439
          %v2441 = vlaneseq
          %v2442 = vshrl.u32 %v2441, 7
          %v2443 = vsub.s32 %v2440, %v2442
          %v2444 = vrot.slane %v1567, %v2443
          %v2446 = vunpack.c.l.s4 1966171168
          %v2447 = vunpack.c.0.s8 %v2446
          %v2448 = vlaneseq
          %v2449 = vshrl.u32 %v2448, 7
          %v2450 = vsub.s32 %v2447, %v2449
          %v2451 = vrot.slane %v2437, %v2450
          %v2452 = vcombine.high %v2444, %v2444
          %v2453 = vcombine.high %v2451, %v2451
          %v2455 = vunpack.c.l.s4 1966171168
          %v2456 = vunpack.c.0.s8 %v2455
          %v2457 = vlaneseq
          %v2458 = vshrl.u32 %v2457, 7
          %v2459 = vsub.s32 %v2456, %v2458
          %v2460 = vrot.slane %v2444, %v2459
          %v2462 = vunpack.c.l.s4 1966171168
          %v2463 = vunpack.c.0.s8 %v2462
          %v2464 = vlaneseq
          %v2465 = vshrl.u32 %v2464, 7
          %v2466 = vsub.s32 %v2463, %v2465
          %v2467 = vrot.slane %v2451, %v2466
          %v2469 = vunpack.c.l.s4 1966171168
          %v2470 = vunpack.c.0.s8 %v2469
          %v2471 = vlaneseq
          %v2472 = vshrl.u32 %v2471, 7
          %v2473 = vsub.s32 %v2470, %v2472
          %v2474 = vrot.slane %v2452, %v2473
          %v2476 = vunpack.c.l.s4 1966171168
          %v2477 = vunpack.c.0.s8 %v2476
          %v2478 = vlaneseq
          %v2479 = vshrl.u32 %v2478, 7
          %v2480 = vsub.s32 %v2477, %v2479
          %v2481 = vrot.slane %v2453, %v2480
          %v2482 = vcombine.high %v2460, %v2460
          %v2483 = vcombine.high %v2467, %v2467
          %v2484 = vcombine.high %v2474, %v2474
          %v2485 = vcombine.high %v2481, %v2481
          %v2486 = vlaneseq
          %v2487 = vshrl.u32 %v2486, 7
          %v2488 = vsub.s32 0, %v2487
          %v2489 = vrot.slane %v2313, %v2488
          %v2490 = vlaneseq
          %v2491 = vshrl.u32 %v2490, 7
          %v2492 = vsub.s32 0, %v2491
          %v2493 = vrot.slane %v2327, %v2492
          %v2494 = vlaneseq
          %v2495 = vshrl.u32 %v2494, 7
          %v2496 = vsub.s32 0, %v2495
          %v2497 = vrot.slane %v2335, %v2496
          %v2498 = vlaneseq
          %v2499 = vshrl.u32 %v2498, 7
          %v2500 = vsub.s32 0, %v2499
          %v2501 = vrot.slane %v2337, %v2500
          %v2502 = vlaneseq
          %v2503 = vshrl.u32 %v2502, 7
          %v2504 = vsub.s32 0, %v2503
          %v2505 = vrot.slane %v2320, %v2504
          %v2506 = vlaneseq
          %v2507 = vshrl.u32 %v2506, 7
          %v2508 = vsub.s32 0, %v2507
          %v2509 = vrot.slane %v2334, %v2508
          %v2510 = vlaneseq
          %v2511 = vshrl.u32 %v2510, 7
          %v2512 = vsub.s32 0, %v2511
          %v2513 = vrot.slane %v2336, %v2512
          %v2514 = vlaneseq
          %v2515 = vshrl.u32 %v2514, 7
          %v2516 = vsub.s32 0, %v2515
          %v2517 = vrot.slane %v2338, %v2516
          %v2518 = vlaneseq
          %v2519 = vshrl.u32 %v2518, 7
          %v2520 = vsub.s32 0, %v2519
          %v2521 = vrot.slane %v2362, %v2520
          %v2522 = vlaneseq
          %v2523 = vshrl.u32 %v2522, 7
          %v2524 = vsub.s32 0, %v2523
          %v2525 = vrot.slane %v2376, %v2524
          %v2526 = vlaneseq
          %v2527 = vshrl.u32 %v2526, 7
          %v2528 = vsub.s32 0, %v2527
          %v2529 = vrot.slane %v2384, %v2528
          %v2530 = vlaneseq
          %v2531 = vshrl.u32 %v2530, 7
          %v2532 = vsub.s32 0, %v2531
          %v2533 = vrot.slane %v2386, %v2532
          %v2534 = vlaneseq
          %v2535 = vshrl.u32 %v2534, 7
          %v2536 = vsub.s32 0, %v2535
          %v2537 = vrot.slane %v2369, %v2536
          %v2538 = vlaneseq
          %v2539 = vshrl.u32 %v2538, 7
          %v2540 = vsub.s32 0, %v2539
          %v2541 = vrot.slane %v2383, %v2540
          %v2542 = vlaneseq
          %v2543 = vshrl.u32 %v2542, 7
          %v2544 = vsub.s32 0, %v2543
          %v2545 = vrot.slane %v2385, %v2544
          %v2546 = vlaneseq
          %v2547 = vshrl.u32 %v2546, 7
          %v2548 = vsub.s32 0, %v2547
          %v2549 = vrot.slane %v2387, %v2548
          %v2550 = vlaneseq
          %v2551 = vshrl.u32 %v2550, 7
          %v2552 = vsub.s32 0, %v2551
          %v2553 = vrot.slane %v2411, %v2552
          %v2554 = vlaneseq
          %v2555 = vshrl.u32 %v2554, 7
          %v2556 = vsub.s32 0, %v2555
          %v2557 = vrot.slane %v2425, %v2556
          %v2558 = vlaneseq
          %v2559 = vshrl.u32 %v2558, 7
          %v2560 = vsub.s32 0, %v2559
          %v2561 = vrot.slane %v2433, %v2560
          %v2562 = vlaneseq
          %v2563 = vshrl.u32 %v2562, 7
          %v2564 = vsub.s32 0, %v2563
          %v2565 = vrot.slane %v2435, %v2564
          %v2566 = vlaneseq
          %v2567 = vshrl.u32 %v2566, 7
          %v2568 = vsub.s32 0, %v2567
          %v2569 = vrot.slane %v2418, %v2568
          %v2570 = vlaneseq
          %v2571 = vshrl.u32 %v2570, 7
          %v2572 = vsub.s32 0, %v2571
          %v2573 = vrot.slane %v2432, %v2572
          %v2574 = vlaneseq
          %v2575 = vshrl.u32 %v2574, 7
          %v2576 = vsub.s32 0, %v2575
          %v2577 = vrot.slane %v2434, %v2576
          %v2578 = vlaneseq
          %v2579 = vshrl.u32 %v2578, 7
          %v2580 = vsub.s32 0, %v2579
          %v2581 = vrot.slane %v2436, %v2580
          %v2582 = vlaneseq
          %v2583 = vshrl.u32 %v2582, 7
          %v2584 = vsub.s32 0, %v2583
          %v2585 = vrot.slane %v2460, %v2584
          %v2586 = vlaneseq
          %v2587 = vshrl.u32 %v2586, 7
          %v2588 = vsub.s32 0, %v2587
          %v2589 = vrot.slane %v2474, %v2588
          %v2590 = vlaneseq
          %v2591 = vshrl.u32 %v2590, 7
          %v2592 = vsub.s32 0, %v2591
          %v2593 = vrot.slane %v2482, %v2592
          %v2594 = vlaneseq
          %v2595 = vshrl.u32 %v2594, 7
          %v2596 = vsub.s32 0, %v2595
          %v2597 = vrot.slane %v2484, %v2596
          %v2598 = vlaneseq
          %v2599 = vshrl.u32 %v2598, 7
          %v2600 = vsub.s32 0, %v2599
          %v2601 = vrot.slane %v2467, %v2600
          %v2602 = vlaneseq
          %v2603 = vshrl.u32 %v2602, 7
          %v2604 = vsub.s32 0, %v2603
          %v2605 = vrot.slane %v2481, %v2604
          %v2606 = vlaneseq
          %v2607 = vshrl.u32 %v2606, 7
          %v2608 = vsub.s32 0, %v2607
          %v2609 = vrot.slane %v2483, %v2608
          %v2610 = vlaneseq
          %v2611 = vshrl.u32 %v2610, 7
          %v2612 = vsub.s32 0, %v2611
          %v2613 = vrot.slane %v2485, %v2612
          %v2646 = vadd.f32 %v2254, %v2489
          %v2647 = vadd.f32 %v2255, %v2493
          %v2648 = vadd.f32 %v2256, %v2497
          %v2649 = vadd.f32 %v2257, %v2501
          %v2650 = vadd.f32 %v2258, %v2505
          %v2651 = vadd.f32 %v2259, %v2509
          %v2652 = vadd.f32 %v2260, %v2513
          %v2653 = vadd.f32 %v2261, %v2517
          %v2654 = vadd.f32 %v2262, %v2521
          %v2655 = vadd.f32 %v2263, %v2525
          %v2656 = vadd.f32 %v2264, %v2529
          %v2657 = vadd.f32 %v2265, %v2533
          %v2658 = vadd.f32 %v2266, %v2537
          %v2659 = vadd.f32 %v2267, %v2541
          %v2660 = vadd.f32 %v2268, %v2545
          %v2661 = vadd.f32 %v2269, %v2549
          %v2662 = vadd.f32 %v2270, %v2553
          %v2663 = vadd.f32 %v2271, %v2557
          %v2664 = vadd.f32 %v2272, %v2561
          %v2665 = vadd.f32 %v2273, %v2565
          %v2666 = vadd.f32 %v2274, %v2569
          %v2667 = vadd.f32 %v2275, %v2573
          %v2668 = vadd.f32 %v2276, %v2577
          %v2669 = vadd.f32 %v2277, %v2581
          %v2670 = vadd.f32 %v2278, %v2585
          %v2671 = vadd.f32 %v2279, %v2589
          %v2672 = vadd.f32 %v2280, %v2593
          %v2673 = vadd.f32 %v2281, %v2597
          %v2674 = vadd.f32 %v2282, %v2601
          %v2675 = vadd.f32 %v2283, %v2605
          %v2676 = vadd.f32 %v2284, %v2609
          %v2677 = vadd.f32 %v2285, %v2613
          %v2678 = vpack.c.bf16 %v2647, %v2646
          %v2679 = vpack.c.bf16 %v2649, %v2648
          %v2680 = vpack.c.bf16 %v2651, %v2650
          %v2681 = vpack.c.bf16 %v2653, %v2652
          %v2682 = vpack.c.bf16 %v2655, %v2654
          %v2683 = vpack.c.bf16 %v2657, %v2656
          %v2684 = vpack.c.bf16 %v2659, %v2658
          %v2685 = vpack.c.bf16 %v2661, %v2660
          %v2686 = vpack.c.bf16 %v2663, %v2662
          %v2687 = vpack.c.bf16 %v2665, %v2664
          %v2688 = vpack.c.bf16 %v2667, %v2666
          %v2689 = vpack.c.bf16 %v2669, %v2668
          %v2690 = vpack.c.bf16 %v2671, %v2670
          %v2691 = vpack.c.bf16 %v2673, %v2672
          %v2692 = vpack.c.bf16 %v2675, %v2674
          %v2693 = vpack.c.bf16 %v2677, %v2676
          %2694 = vst [vmem:[#allocation2] sm:$0xff] %v2678
          %2695 = vst [vmem:[#allocation2 + $0x8] sm:$0xff] %v2679
          %2696 = vst [vmem:[#allocation2 + $0x10] sm:$0xff] %v2680
          %2697 = vst [vmem:[#allocation2 + $0x18] sm:$0xff] %v2681
          %2698 = vst [vmem:[#allocation2 + $0x20] sm:$0xff] %v2682
          %2699 = vst [vmem:[#allocation2 + $0x28] sm:$0xff] %v2683
          %2700 = vst [vmem:[#allocation2 + $0x30] sm:$0xff] %v2684
          %2701 = vst [vmem:[#allocation2 + $0x38] sm:$0xff] %v2685
          %2702 = vst [vmem:[#allocation2 + $0x40] sm:$0xff] %v2686
          %2703 = vst [vmem:[#allocation2 + $0x48] sm:$0xff] %v2687
          %2704 = vst [vmem:[#allocation2 + $0x50] sm:$0xff] %v2688
          %2705 = vst [vmem:[#allocation2 + $0x58] sm:$0xff] %v2689
          %2706 = vst [vmem:[#allocation2 + $0x60] sm:$0xff] %v2690
          %2707 = vst [vmem:[#allocation2 + $0x68] sm:$0xff] %v2691
          %2708 = vst [vmem:[#allocation2 + $0x70] sm:$0xff] %v2692
          %2709 = vst [vmem:[#allocation2 + $0x78] sm:$0xff] %v2693
          %2710 = vst.msk [vmem:[#allocation3] sm:$0xff] %vm1450, -inf
          %2711 = vst.msk [vmem:[#allocation3 + $0x8] sm:$0xff] %vm1450, -inf
          %2712 = vst.msk [vmem:[#allocation3 + $0x10] sm:$0xff] %vm1450, -inf
          %2713 = vst.msk [vmem:[#allocation3 + $0x18] sm:$0xff] %vm1450, -inf
          %2714 = vst.msk [vmem:[#allocation3 + $0x20] sm:$0xff] %vm1450, -inf
          %2715 = vst.msk [vmem:[#allocation3 + $0x28] sm:$0xff] %vm1450, -inf
          %2716 = vst.msk [vmem:[#allocation3 + $0x30] sm:$0xff] %vm1450, -inf
          %2717 = vst.msk [vmem:[#allocation3 + $0x38] sm:$0xff] %vm1450, -inf
          %2718 = vst.msk [vmem:[#allocation3 + $0x40] sm:$0xff] %vm1450, -inf
          %2719 = vst.msk [vmem:[#allocation3 + $0x48] sm:$0xff] %vm1450, -inf
          %2720 = vst.msk [vmem:[#allocation3 + $0x50] sm:$0xff] %vm1450, -inf
          %2721 = vst.msk [vmem:[#allocation3 + $0x58] sm:$0xff] %vm1450, -inf
          %2722 = vst.msk [vmem:[#allocation3 + $0x60] sm:$0xff] %vm1450, -inf
          %2723 = vst.msk [vmem:[#allocation3 + $0x68] sm:$0xff] %vm1450, -inf
          %2724 = vst.msk [vmem:[#allocation3 + $0x70] sm:$0xff] %vm1450, -inf
          %2725 = vst.msk [vmem:[#allocation3 + $0x78] sm:$0xff] %vm1450, -inf
          %2726 = vst.msk [vmem:[#allocation3 + $0x80] sm:$0xff] %vm1450, -inf
          %2727 = vst.msk [vmem:[#allocation3 + $0x88] sm:$0xff] %vm1450, -inf
          %2728 = vst.msk [vmem:[#allocation3 + $0x90] sm:$0xff] %vm1450, -inf
          %2729 = vst.msk [vmem:[#allocation3 + $0x98] sm:$0xff] %vm1450, -inf
          %2730 = vst.msk [vmem:[#allocation3 + $0xa0] sm:$0xff] %vm1450, -inf
          %2731 = vst.msk [vmem:[#allocation3 + $0xa8] sm:$0xff] %vm1450, -inf
          %2732 = vst.msk [vmem:[#allocation3 + $0xb0] sm:$0xff] %vm1450, -inf
          %2733 = vst.msk [vmem:[#allocation3 + $0xb8] sm:$0xff] %vm1450, -inf
          %2734 = vst.msk [vmem:[#allocation3 + $0xc0] sm:$0xff] %vm1450, -inf
          %2735 = vst.msk [vmem:[#allocation3 + $0xc8] sm:$0xff] %vm1450, -inf
          %2736 = vst.msk [vmem:[#allocation3 + $0xd0] sm:$0xff] %vm1450, -inf
          %2737 = vst.msk [vmem:[#allocation3 + $0xd8] sm:$0xff] %vm1450, -inf
          %2738 = vst.msk [vmem:[#allocation3 + $0xe0] sm:$0xff] %vm1450, -inf
          %2739 = vst.msk [vmem:[#allocation3 + $0xe8] sm:$0xff] %vm1450, -inf
          %2740 = vst.msk [vmem:[#allocation3 + $0xf0] sm:$0xff] %vm1450, -inf
          %2741 = vst.msk [vmem:[#allocation3 + $0xf8] sm:$0xff] %vm1450, -inf
          %2742 = vst.msk [vmem:[#allocation4] sm:$0xff] %vm1450, 0.0
          %2743 = vst.msk [vmem:[#allocation4 + $0x8] sm:$0xff] %vm1450, 0.0
          %2744 = vst.msk [vmem:[#allocation4 + $0x10] sm:$0xff] %vm1450, 0.0
          %2745 = vst.msk [vmem:[#allocation4 + $0x18] sm:$0xff] %vm1450, 0.0
          %2746 = vst.msk [vmem:[#allocation4 + $0x20] sm:$0xff] %vm1450, 0.0
          %2747 = vst.msk [vmem:[#allocation4 + $0x28] sm:$0xff] %vm1450, 0.0
          %2748 = vst.msk [vmem:[#allocation4 + $0x30] sm:$0xff] %vm1450, 0.0
          %2749 = vst.msk [vmem:[#allocation4 + $0x38] sm:$0xff] %vm1450, 0.0
          %2750 = vst.msk [vmem:[#allocation4 + $0x40] sm:$0xff] %vm1450, 0.0
          %2751 = vst.msk [vmem:[#allocation4 + $0x48] sm:$0xff] %vm1450, 0.0
          %2752 = vst.msk [vmem:[#allocation4 + $0x50] sm:$0xff] %vm1450, 0.0
          %2753 = vst.msk [vmem:[#allocation4 + $0x58] sm:$0xff] %vm1450, 0.0
          %2754 = vst.msk [vmem:[#allocation4 + $0x60] sm:$0xff] %vm1450, 0.0
          %2755 = vst.msk [vmem:[#allocation4 + $0x68] sm:$0xff] %vm1450, 0.0
          %2756 = vst.msk [vmem:[#allocation4 + $0x70] sm:$0xff] %vm1450, 0.0
          %2757 = vst.msk [vmem:[#allocation4 + $0x78] sm:$0xff] %vm1450, 0.0
          %2758 = vst.msk [vmem:[#allocation4 + $0x80] sm:$0xff] %vm1450, 0.0
          %2759 = vst.msk [vmem:[#allocation4 + $0x88] sm:$0xff] %vm1450, 0.0
          %2760 = vst.msk [vmem:[#allocation4 + $0x90] sm:$0xff] %vm1450, 0.0
          %2761 = vst.msk [vmem:[#allocation4 + $0x98] sm:$0xff] %vm1450, 0.0
          %2762 = vst.msk [vmem:[#allocation4 + $0xa0] sm:$0xff] %vm1450, 0.0
          %2763 = vst.msk [vmem:[#allocation4 + $0xa8] sm:$0xff] %vm1450, 0.0
          %2764 = vst.msk [vmem:[#allocation4 + $0xb0] sm:$0xff] %vm1450, 0.0
          %2765 = vst.msk [vmem:[#allocation4 + $0xb8] sm:$0xff] %vm1450, 0.0
          %2766 = vst.msk [vmem:[#allocation4 + $0xc0] sm:$0xff] %vm1450, 0.0
          %2767 = vst.msk [vmem:[#allocation4 + $0xc8] sm:$0xff] %vm1450, 0.0
          %2768 = vst.msk [vmem:[#allocation4 + $0xd0] sm:$0xff] %vm1450, 0.0
          %2769 = vst.msk [vmem:[#allocation4 + $0xd8] sm:$0xff] %vm1450, 0.0
          %2770 = vst.msk [vmem:[#allocation4 + $0xe0] sm:$0xff] %vm1450, 0.0
          %2771 = vst.msk [vmem:[#allocation4 + $0xe8] sm:$0xff] %vm1450, 0.0
          %2772 = vst.msk [vmem:[#allocation4 + $0xf0] sm:$0xff] %vm1450, 0.0
          %2773 = vst.msk [vmem:[#allocation4 + $0xf8] sm:$0xff] %vm1450, 0.0
          %2774 = vst.msk [vmem:[#allocation5] sm:$0xff] %vm1450, 0.0
          %2775 = vst.msk [vmem:[#allocation5 + $0x8] sm:$0xff] %vm1450, 0.0
          %2776 = vst.msk [vmem:[#allocation5 + $0x10] sm:$0xff] %vm1450, 0.0
          %2777 = vst.msk [vmem:[#allocation5 + $0x18] sm:$0xff] %vm1450, 0.0
          %2778 = vst.msk [vmem:[#allocation5 + $0x20] sm:$0xff] %vm1450, 0.0
          %2779 = vst.msk [vmem:[#allocation5 + $0x28] sm:$0xff] %vm1450, 0.0
          %2780 = vst.msk [vmem:[#allocation5 + $0x30] sm:$0xff] %vm1450, 0.0
          %2781 = vst.msk [vmem:[#allocation5 + $0x38] sm:$0xff] %vm1450, 0.0
          %2782 = vst.msk [vmem:[#allocation5 + $0x40] sm:$0xff] %vm1450, 0.0
          %2783 = vst.msk [vmem:[#allocation5 + $0x48] sm:$0xff] %vm1450, 0.0
          %2784 = vst.msk [vmem:[#allocation5 + $0x50] sm:$0xff] %vm1450, 0.0
          %2785 = vst.msk [vmem:[#allocation5 + $0x58] sm:$0xff] %vm1450, 0.0
          %2786 = vst.msk [vmem:[#allocation5 + $0x60] sm:$0xff] %vm1450, 0.0
          %2787 = vst.msk [vmem:[#allocation5 + $0x68] sm:$0xff] %vm1450, 0.0
          %2788 = vst.msk [vmem:[#allocation5 + $0x70] sm:$0xff] %vm1450, 0.0
          %2789 = vst.msk [vmem:[#allocation5 + $0x78] sm:$0xff] %vm1450, 0.0
          %2790 = vst.msk [vmem:[#allocation5 + $0x80] sm:$0xff] %vm1450, 0.0
          %2791 = vst.msk [vmem:[#allocation5 + $0x88] sm:$0xff] %vm1450, 0.0
          %2792 = vst.msk [vmem:[#allocation5 + $0x90] sm:$0xff] %vm1450, 0.0
          %2793 = vst.msk [vmem:[#allocation5 + $0x98] sm:$0xff] %vm1450, 0.0
          %2794 = vst.msk [vmem:[#allocation5 + $0xa0] sm:$0xff] %vm1450, 0.0
          %2795 = vst.msk [vmem:[#allocation5 + $0xa8] sm:$0xff] %vm1450, 0.0
          %2796 = vst.msk [vmem:[#allocation5 + $0xb0] sm:$0xff] %vm1450, 0.0
          %2797 = vst.msk [vmem:[#allocation5 + $0xb8] sm:$0xff] %vm1450, 0.0
          %2798 = vst.msk [vmem:[#allocation5 + $0xc0] sm:$0xff] %vm1450, 0.0
          %2799 = vst.msk [vmem:[#allocation5 + $0xc8] sm:$0xff] %vm1450, 0.0
          %2800 = vst.msk [vmem:[#allocation5 + $0xd0] sm:$0xff] %vm1450, 0.0
          %2801 = vst.msk [vmem:[#allocation5 + $0xd8] sm:$0xff] %vm1450, 0.0
          %2802 = vst.msk [vmem:[#allocation5 + $0xe0] sm:$0xff] %vm1450, 0.0
          %2803 = vst.msk [vmem:[#allocation5 + $0xe8] sm:$0xff] %vm1450, 0.0
          %2804 = vst.msk [vmem:[#allocation5 + $0xf0] sm:$0xff] %vm1450, 0.0
          %2805 = vst.msk [vmem:[#allocation5 + $0xf8] sm:$0xff] %vm1450, 0.0
        $region92: #{tpu_custom_call.1} parent=67 // pred_fallthru
          _
        %v2806 = vld [vmem:[#allocation2] sm:$0xff]
        %v2807 = vld [vmem:[#allocation2 + $0x8] sm:$0xff]
        %v2808 = vld [vmem:[#allocation2 + $0x10] sm:$0xff]
        %v2809 = vld [vmem:[#allocation2 + $0x18] sm:$0xff]
        %v2810 = vld [vmem:[#allocation2 + $0x20] sm:$0xff]
        %v2811 = vld [vmem:[#allocation2 + $0x28] sm:$0xff]
        %v2812 = vld [vmem:[#allocation2 + $0x30] sm:$0xff]
        %v2813 = vld [vmem:[#allocation2 + $0x38] sm:$0xff]
        %v2814 = vld [vmem:[#allocation2 + $0x40] sm:$0xff]
        %v2815 = vld [vmem:[#allocation2 + $0x48] sm:$0xff]
        %v2816 = vld [vmem:[#allocation2 + $0x50] sm:$0xff]
        %v2817 = vld [vmem:[#allocation2 + $0x58] sm:$0xff]
        %v2818 = vld [vmem:[#allocation2 + $0x60] sm:$0xff]
        %v2819 = vld [vmem:[#allocation2 + $0x68] sm:$0xff]
        %v2820 = vld [vmem:[#allocation2 + $0x70] sm:$0xff]
        %v2821 = vld [vmem:[#allocation2 + $0x78] sm:$0xff]
        %v2822 = vld [vmem:[%s578] sm:$0xff]
        %v2823 = vld [vmem:[%s578 + $0x8] sm:$0xff]
        %v2824 = vld [vmem:[%s578 + $0x10] sm:$0xff]
        %v2825 = vld [vmem:[%s578 + $0x18] sm:$0xff]
        %v2826 = vld [vmem:[%s578 + $0x20] sm:$0xff]
        %v2827 = vld [vmem:[%s578 + $0x28] sm:$0xff]
        %v2828 = vld [vmem:[%s578 + $0x30] sm:$0xff]
        %v2829 = vld [vmem:[%s578 + $0x38] sm:$0xff]
        %v2830 = vld [vmem:[%s578 + $0x40] sm:$0xff]
        %v2831 = vld [vmem:[%s578 + $0x48] sm:$0xff]
        %v2832 = vld [vmem:[%s578 + $0x50] sm:$0xff]
        %v2833 = vld [vmem:[%s578 + $0x58] sm:$0xff]
        %v2834 = vld [vmem:[%s578 + $0x60] sm:$0xff]
        %v2835 = vld [vmem:[%s578 + $0x68] sm:$0xff]
        %v2836 = vld [vmem:[%s578 + $0x70] sm:$0xff]
        %v2837 = vld [vmem:[%s578 + $0x78] sm:$0xff]
        %v2838 = vld [vmem:[%s578 + $0x80] sm:$0xff]
        %v2839 = vld [vmem:[%s578 + $0x88] sm:$0xff]
        %v2840 = vld [vmem:[%s578 + $0x90] sm:$0xff]
        %v2841 = vld [vmem:[%s578 + $0x98] sm:$0xff]
        %v2842 = vld [vmem:[%s578 + $0xa0] sm:$0xff]
        %v2843 = vld [vmem:[%s578 + $0xa8] sm:$0xff]
        %v2844 = vld [vmem:[%s578 + $0xb0] sm:$0xff]
        %v2845 = vld [vmem:[%s578 + $0xb8] sm:$0xff]
        %v2846 = vld [vmem:[%s578 + $0xc0] sm:$0xff]
        %v2847 = vld [vmem:[%s578 + $0xc8] sm:$0xff]
        %v2848 = vld [vmem:[%s578 + $0xd0] sm:$0xff]
        %v2849 = vld [vmem:[%s578 + $0xd8] sm:$0xff]
        %v2850 = vld [vmem:[%s578 + $0xe0] sm:$0xff]
        %v2851 = vld [vmem:[%s578 + $0xe8] sm:$0xff]
        %v2852 = vld [vmem:[%s578 + $0xf0] sm:$0xff]
        %v2853 = vld [vmem:[%s578 + $0xf8] sm:$0xff]
        %v2854 = vld [vmem:[%s578 + $0x100] sm:$0xff]
        %v2855 = vld [vmem:[%s578 + $0x108] sm:$0xff]
        %v2856 = vld [vmem:[%s578 + $0x110] sm:$0xff]
        %v2857 = vld [vmem:[%s578 + $0x118] sm:$0xff]
        %v2858 = vld [vmem:[%s578 + $0x120] sm:$0xff]
        %v2859 = vld [vmem:[%s578 + $0x128] sm:$0xff]
        %v2860 = vld [vmem:[%s578 + $0x130] sm:$0xff]
        %v2861 = vld [vmem:[%s578 + $0x138] sm:$0xff]
        %v2862 = vld [vmem:[%s578 + $0x140] sm:$0xff]
        %v2863 = vld [vmem:[%s578 + $0x148] sm:$0xff]
        %v2864 = vld [vmem:[%s578 + $0x150] sm:$0xff]
        %v2865 = vld [vmem:[%s578 + $0x158] sm:$0xff]
        %v2866 = vld [vmem:[%s578 + $0x160] sm:$0xff]
        %v2867 = vld [vmem:[%s578 + $0x168] sm:$0xff]
        %v2868 = vld [vmem:[%s578 + $0x170] sm:$0xff]
        %v2869 = vld [vmem:[%s578 + $0x178] sm:$0xff]
        %v2870 = vld [vmem:[%s578 + $0x180] sm:$0xff]
        %v2871 = vld [vmem:[%s578 + $0x188] sm:$0xff]
        %v2872 = vld [vmem:[%s578 + $0x190] sm:$0xff]
        %v2873 = vld [vmem:[%s578 + $0x198] sm:$0xff]
        %v2874 = vld [vmem:[%s578 + $0x1a0] sm:$0xff]
        %v2875 = vld [vmem:[%s578 + $0x1a8] sm:$0xff]
        %v2876 = vld [vmem:[%s578 + $0x1b0] sm:$0xff]
        %v2877 = vld [vmem:[%s578 + $0x1b8] sm:$0xff]
        %v2878 = vld [vmem:[%s578 + $0x1c0] sm:$0xff]
        %v2879 = vld [vmem:[%s578 + $0x1c8] sm:$0xff]
        %v2880 = vld [vmem:[%s578 + $0x1d0] sm:$0xff]
        %v2881 = vld [vmem:[%s578 + $0x1d8] sm:$0xff]
        %v2882 = vld [vmem:[%s578 + $0x1e0] sm:$0xff]
        %v2883 = vld [vmem:[%s578 + $0x1e8] sm:$0xff]
        %v2884 = vld [vmem:[%s578 + $0x1f0] sm:$0xff]
        %v2885 = vld [vmem:[%s578 + $0x1f8] sm:$0xff]
        %v2950 = vunpack.c.l.b16 %v2822
        %v2951 = vunpack.c.h.b16 %v2822
        %v2952 = vunpack.c.l.b16 %v2823
        %v2953 = vunpack.c.h.b16 %v2823
        %v2954 = vunpack.c.l.b16 %v2824
        %v2955 = vunpack.c.h.b16 %v2824
        %v2956 = vunpack.c.l.b16 %v2825
        %v2957 = vunpack.c.h.b16 %v2825
        %v2958 = vunpack.c.l.b16 %v2826
        %v2959 = vunpack.c.h.b16 %v2826
        %v2960 = vunpack.c.l.b16 %v2827
        %v2961 = vunpack.c.h.b16 %v2827
        %v2962 = vunpack.c.l.b16 %v2828
        %v2963 = vunpack.c.h.b16 %v2828
        %v2964 = vunpack.c.l.b16 %v2829
        %v2965 = vunpack.c.h.b16 %v2829
        %v2966 = vunpack.c.l.b16 %v2830
        %v2967 = vunpack.c.h.b16 %v2830
        %v2968 = vunpack.c.l.b16 %v2831
        %v2969 = vunpack.c.h.b16 %v2831
        %v2970 = vunpack.c.l.b16 %v2832
        %v2971 = vunpack.c.h.b16 %v2832
        %v2972 = vunpack.c.l.b16 %v2833
        %v2973 = vunpack.c.h.b16 %v2833
        %v2974 = vunpack.c.l.b16 %v2834
        %v2975 = vunpack.c.h.b16 %v2834
        %v2976 = vunpack.c.l.b16 %v2835
        %v2977 = vunpack.c.h.b16 %v2835
        %v2978 = vunpack.c.l.b16 %v2836
        %v2979 = vunpack.c.h.b16 %v2836
        %v2980 = vunpack.c.l.b16 %v2837
        %v2981 = vunpack.c.h.b16 %v2837
        %v2982 = vunpack.c.l.b16 %v2838
        %v2983 = vunpack.c.h.b16 %v2838
        %v2984 = vunpack.c.l.b16 %v2839
        %v2985 = vunpack.c.h.b16 %v2839
        %v2986 = vunpack.c.l.b16 %v2840
        %v2987 = vunpack.c.h.b16 %v2840
        %v2988 = vunpack.c.l.b16 %v2841
        %v2989 = vunpack.c.h.b16 %v2841
        %v2990 = vunpack.c.l.b16 %v2842
        %v2991 = vunpack.c.h.b16 %v2842
        %v2992 = vunpack.c.l.b16 %v2843
        %v2993 = vunpack.c.h.b16 %v2843
        %v2994 = vunpack.c.l.b16 %v2844
        %v2995 = vunpack.c.h.b16 %v2844
        %v2996 = vunpack.c.l.b16 %v2845
        %v2997 = vunpack.c.h.b16 %v2845
        %v2998 = vunpack.c.l.b16 %v2846
        %v2999 = vunpack.c.h.b16 %v2846
        %v3000 = vunpack.c.l.b16 %v2847
        %v3001 = vunpack.c.h.b16 %v2847
        %v3002 = vunpack.c.l.b16 %v2848
        %v3003 = vunpack.c.h.b16 %v2848
        %v3004 = vunpack.c.l.b16 %v2849
        %v3005 = vunpack.c.h.b16 %v2849
        %v3006 = vunpack.c.l.b16 %v2850
        %v3007 = vunpack.c.h.b16 %v2850
        %v3008 = vunpack.c.l.b16 %v2851
        %v3009 = vunpack.c.h.b16 %v2851
        %v3010 = vunpack.c.l.b16 %v2852
        %v3011 = vunpack.c.h.b16 %v2852
        %v3012 = vunpack.c.l.b16 %v2853
        %v3013 = vunpack.c.h.b16 %v2853
        %v3014 = vunpack.c.l.b16 %v2854
        %v3015 = vunpack.c.h.b16 %v2854
        %v3016 = vunpack.c.l.b16 %v2855
        %v3017 = vunpack.c.h.b16 %v2855
        %v3018 = vunpack.c.l.b16 %v2856
        %v3019 = vunpack.c.h.b16 %v2856
        %v3020 = vunpack.c.l.b16 %v2857
        %v3021 = vunpack.c.h.b16 %v2857
        %v3022 = vunpack.c.l.b16 %v2858
        %v3023 = vunpack.c.h.b16 %v2858
        %v3024 = vunpack.c.l.b16 %v2859
        %v3025 = vunpack.c.h.b16 %v2859
        %v3026 = vunpack.c.l.b16 %v2860
        %v3027 = vunpack.c.h.b16 %v2860
        %v3028 = vunpack.c.l.b16 %v2861
        %v3029 = vunpack.c.h.b16 %v2861
        %v3030 = vunpack.c.l.b16 %v2862
        %v3031 = vunpack.c.h.b16 %v2862
        %v3032 = vunpack.c.l.b16 %v2863
        %v3033 = vunpack.c.h.b16 %v2863
        %v3034 = vunpack.c.l.b16 %v2864
        %v3035 = vunpack.c.h.b16 %v2864
        %v3036 = vunpack.c.l.b16 %v2865
        %v3037 = vunpack.c.h.b16 %v2865
        %v3038 = vunpack.c.l.b16 %v2866
        %v3039 = vunpack.c.h.b16 %v2866
        %v3040 = vunpack.c.l.b16 %v2867
        %v3041 = vunpack.c.h.b16 %v2867
        %v3042 = vunpack.c.l.b16 %v2868
        %v3043 = vunpack.c.h.b16 %v2868
        %v3044 = vunpack.c.l.b16 %v2869
        %v3045 = vunpack.c.h.b16 %v2869
        %v3046 = vunpack.c.l.b16 %v2870
        %v3047 = vunpack.c.h.b16 %v2870
        %v3048 = vunpack.c.l.b16 %v2871
        %v3049 = vunpack.c.h.b16 %v2871
        %v3050 = vunpack.c.l.b16 %v2872
        %v3051 = vunpack.c.h.b16 %v2872
        %v3052 = vunpack.c.l.b16 %v2873
        %v3053 = vunpack.c.h.b16 %v2873
        %v3054 = vunpack.c.l.b16 %v2874
        %v3055 = vunpack.c.h.b16 %v2874
        %v3056 = vunpack.c.l.b16 %v2875
        %v3057 = vunpack.c.h.b16 %v2875
        %v3058 = vunpack.c.l.b16 %v2876
        %v3059 = vunpack.c.h.b16 %v2876
        %v3060 = vunpack.c.l.b16 %v2877
        %v3061 = vunpack.c.h.b16 %v2877
        %v3062 = vunpack.c.l.b16 %v2878
        %v3063 = vunpack.c.h.b16 %v2878
        %v3064 = vunpack.c.l.b16 %v2879
        %v3065 = vunpack.c.h.b16 %v2879
        %v3066 = vunpack.c.l.b16 %v2880
        %v3067 = vunpack.c.h.b16 %v2880
        %v3068 = vunpack.c.l.b16 %v2881
        %v3069 = vunpack.c.h.b16 %v2881
        %v3070 = vunpack.c.l.b16 %v2882
        %v3071 = vunpack.c.h.b16 %v2882
        %v3072 = vunpack.c.l.b16 %v2883
        %v3073 = vunpack.c.h.b16 %v2883
        %v3074 = vunpack.c.l.b16 %v2884
        %v3075 = vunpack.c.h.b16 %v2884
        %v3076 = vunpack.c.l.b16 %v2885
        %v3077 = vunpack.c.h.b16 %v2885
        %v3078 = vpack.c.b16 %v2958, %v2950
        %v3079 = vpack.c.b16 %v2959, %v2951
        %v3080 = vpack.c.b16 %v2960, %v2952
        %v3081 = vpack.c.b16 %v2961, %v2953
        %v3082 = vpack.c.b16 %v2962, %v2954
        %v3083 = vpack.c.b16 %v2963, %v2955
        %v3084 = vpack.c.b16 %v2964, %v2956
        %v3085 = vpack.c.b16 %v2965, %v2957
        %v3086 = vpack.c.b16 %v2974, %v2966
        %v3087 = vpack.c.b16 %v2975, %v2967
        %v3088 = vpack.c.b16 %v2976, %v2968
        %v3089 = vpack.c.b16 %v2977, %v2969
        %v3090 = vpack.c.b16 %v2978, %v2970
        %v3091 = vpack.c.b16 %v2979, %v2971
        %v3092 = vpack.c.b16 %v2980, %v2972
        %v3093 = vpack.c.b16 %v2981, %v2973
        %v3094 = vpack.c.b16 %v2990, %v2982
        %v3095 = vpack.c.b16 %v2991, %v2983
        %v3096 = vpack.c.b16 %v2992, %v2984
        %v3097 = vpack.c.b16 %v2993, %v2985
        %v3098 = vpack.c.b16 %v2994, %v2986
        %v3099 = vpack.c.b16 %v2995, %v2987
        %v3100 = vpack.c.b16 %v2996, %v2988
        %v3101 = vpack.c.b16 %v2997, %v2989
        %v3102 = vpack.c.b16 %v3006, %v2998
        %v3103 = vpack.c.b16 %v3007, %v2999
        %v3104 = vpack.c.b16 %v3008, %v3000
        %v3105 = vpack.c.b16 %v3009, %v3001
        %v3106 = vpack.c.b16 %v3010, %v3002
        %v3107 = vpack.c.b16 %v3011, %v3003
        %v3108 = vpack.c.b16 %v3012, %v3004
        %v3109 = vpack.c.b16 %v3013, %v3005
        %v3110 = vpack.c.b16 %v3022, %v3014
        %v3111 = vpack.c.b16 %v3023, %v3015
        %v3112 = vpack.c.b16 %v3024, %v3016
        %v3113 = vpack.c.b16 %v3025, %v3017
        %v3114 = vpack.c.b16 %v3026, %v3018
        %v3115 = vpack.c.b16 %v3027, %v3019
        %v3116 = vpack.c.b16 %v3028, %v3020
        %v3117 = vpack.c.b16 %v3029, %v3021
        %v3118 = vpack.c.b16 %v3038, %v3030
        %v3119 = vpack.c.b16 %v3039, %v3031
        %v3120 = vpack.c.b16 %v3040, %v3032
        %v3121 = vpack.c.b16 %v3041, %v3033
        %v3122 = vpack.c.b16 %v3042, %v3034
        %v3123 = vpack.c.b16 %v3043, %v3035
        %v3124 = vpack.c.b16 %v3044, %v3036
        %v3125 = vpack.c.b16 %v3045, %v3037
        %v3126 = vpack.c.b16 %v3054, %v3046
        %v3127 = vpack.c.b16 %v3055, %v3047
        %v3128 = vpack.c.b16 %v3056, %v3048
        %v3129 = vpack.c.b16 %v3057, %v3049
        %v3130 = vpack.c.b16 %v3058, %v3050
        %v3131 = vpack.c.b16 %v3059, %v3051
        %v3132 = vpack.c.b16 %v3060, %v3052
        %v3133 = vpack.c.b16 %v3061, %v3053
        %v3134 = vpack.c.b16 %v3070, %v3062
        %v3135 = vpack.c.b16 %v3071, %v3063
        %v3136 = vpack.c.b16 %v3072, %v3064
        %v3137 = vpack.c.b16 %v3073, %v3065
        %v3138 = vpack.c.b16 %v3074, %v3066
        %v3139 = vpack.c.b16 %v3075, %v3067
        %v3140 = vpack.c.b16 %v3076, %v3068
        %v3141 = vpack.c.b16 %v3077, %v3069
        %3206 = vmatprep.subr.bf16.mxu0 %v3079
        %3207 = vmatpush1.bf16.msra.mxu0 %v3078
        %3208 = vmatprep.subr.bf16.mxu0 %v3087
        %3209 = vmatpush1.bf16.msra.mxu0 %v3086
        %3210 = vmatprep.subr.bf16.mxu0 %v3095
        %3211 = vmatpush1.bf16.msra.mxu0 %v3094
        %3212 = vmatprep.subr.bf16.mxu0 %v3103
        %3213 = vmatpush1.bf16.msra.mxu0 %v3102
        %3214 = vmatprep.subr.bf16.mxu0 %v3111
        %3215 = vmatpush1.bf16.msra.mxu0 %v3110
        %3216 = vmatprep.subr.bf16.mxu0 %v3119
        %3217 = vmatpush1.bf16.msra.mxu0 %v3118
        %3218 = vmatprep.subr.bf16.mxu0 %v3127
        %3219 = vmatpush1.bf16.msra.mxu0 %v3126
        %3220 = vmatprep.subr.bf16.mxu0 %v3135
        %3221 = vmatpush1.bf16.msra.mxu0 %v3134
        %3222 = vmatprep.subr.bf16.mxu0 0
        %3223 = vmatpush1.bf16.msra.mxu0 0
        %3224 = vmatprep.subr.bf16.mxu0 0
        %3225 = vmatpush1.bf16.msra.mxu0 0
        %3226 = vmatprep.subr.bf16.mxu0 0
        %3227 = vmatpush1.bf16.msra.mxu0 0
        %3228 = vmatprep.subr.bf16.mxu0 0
        %3229 = vmatpush1.bf16.msra.mxu0 0
        %3230 = vmatprep.subr.bf16.mxu0 0
        %3231 = vmatpush1.bf16.msra.mxu0 0
        %3232 = vmatprep.subr.bf16.mxu0 0
        %3233 = vmatpush1.bf16.msra.mxu0 0
        %3234 = vmatprep.subr.bf16.mxu0 0
        %3235 = vmatpush1.bf16.msra.mxu0 0
        %3236 = vmatprep.subr.bf16.mxu0 0
        %3237 = vmatpush1.bf16.msra.mxu0 0
        %3238 = vmatprep.mubr.bf16.mxu0 0
        %3239 = vmatmul.mubr.bf16.gmra.mrb[0].mxu0 %v2806
        %v3240 = vpop.f32.mrb[0].mxu0
        %v3241 = vadd.f32 0.0, %v3240
        %v3242 = vpop.f32.mrb[0].mxu0
        %v3243 = vadd.f32 0.0, %v3242
        %v3244 = vpop.f32.mrb[0].mxu0
        %v3245 = vadd.f32 0.0, %v3244
        %v3246 = vpop.f32.mrb[0].mxu0
        %v3247 = vadd.f32 0.0, %v3246
        %3248 = vmatprep.mubr.bf16.mxu0 0
        %3249 = vmatmul.mubr.bf16.gmra.mrb[0].mxu0 %v2807
        %v3250 = vpop.f32.mrb[0].mxu0
        %v3251 = vadd.f32 0.0, %v3250
        %v3252 = vpop.f32.mrb[0].mxu0
        %v3253 = vadd.f32 0.0, %v3252
        %v3254 = vpop.f32.mrb[0].mxu0
        %v3255 = vadd.f32 0.0, %v3254
        %v3256 = vpop.f32.mrb[0].mxu0
        %v3257 = vadd.f32 0.0, %v3256
        %3258 = vmatprep.mubr.bf16.mxu0 0
        %3259 = vmatmul.mubr.bf16.gmra.mrb[0].mxu0 %v2808
        %v3260 = vpop.f32.mrb[0].mxu0
        %v3261 = vadd.f32 0.0, %v3260
        %v3262 = vpop.f32.mrb[0].mxu0
        %v3263 = vadd.f32 0.0, %v3262
        %v3264 = vpop.f32.mrb[0].mxu0
        %v3265 = vadd.f32 0.0, %v3264
        %v3266 = vpop.f32.mrb[0].mxu0
        %v3267 = vadd.f32 0.0, %v3266
        %3268 = vmatprep.mubr.bf16.mxu0 0
        %3269 = vmatmul.mubr.bf16.gmra.mrb[0].mxu0 %v2809
        %v3270 = vpop.f32.mrb[0].mxu0
        %v3271 = vadd.f32 0.0, %v3270
        %v3272 = vpop.f32.mrb[0].mxu0
        %v3273 = vadd.f32 0.0, %v3272
        %v3274 = vpop.f32.mrb[0].mxu0
        %v3275 = vadd.f32 0.0, %v3274
        %v3276 = vpop.f32.mrb[0].mxu0
        %v3277 = vadd.f32 0.0, %v3276
        %3278 = vmatprep.mubr.bf16.mxu0 0
        %3279 = vmatmul.mubr.bf16.gmra.mrb[0].mxu0 %v2810
        %v3280 = vpop.f32.mrb[0].mxu0
        %v3281 = vadd.f32 0.0, %v3280
        %v3282 = vpop.f32.mrb[0].mxu0
        %v3283 = vadd.f32 0.0, %v3282
        %v3284 = vpop.f32.mrb[0].mxu0
        %v3285 = vadd.f32 0.0, %v3284
        %v3286 = vpop.f32.mrb[0].mxu0
        %v3287 = vadd.f32 0.0, %v3286
        %3288 = vmatprep.mubr.bf16.mxu0 0
        %3289 = vmatmul.mubr.bf16.gmra.mrb[0].mxu0 %v2811
        %v3290 = vpop.f32.mrb[0].mxu0
        %v3291 = vadd.f32 0.0, %v3290
        %v3292 = vpop.f32.mrb[0].mxu0
        %v3293 = vadd.f32 0.0, %v3292
        %v3294 = vpop.f32.mrb[0].mxu0
        %v3295 = vadd.f32 0.0, %v3294
        %v3296 = vpop.f32.mrb[0].mxu0
        %v3297 = vadd.f32 0.0, %v3296
        %3298 = vmatprep.mubr.bf16.mxu0 0
        %3299 = vmatmul.mubr.bf16.gmra.mrb[0].mxu0 %v2812
        %v3300 = vpop.f32.mrb[0].mxu0
        %v3301 = vadd.f32 0.0, %v3300
        %v3302 = vpop.f32.mrb[0].mxu0
        %v3303 = vadd.f32 0.0, %v3302
        %v3304 = vpop.f32.mrb[0].mxu0
        %v3305 = vadd.f32 0.0, %v3304
        %v3306 = vpop.f32.mrb[0].mxu0
        %v3307 = vadd.f32 0.0, %v3306
        %3308 = vmatprep.mubr.bf16.mxu0 0
        %3309 = vmatmul.mubr.bf16.gmra.mrb[0].mxu0 %v2813
        %v3310 = vpop.f32.mrb[0].mxu0
        %v3311 = vadd.f32 0.0, %v3310
        %v3312 = vpop.f32.mrb[0].mxu0
        %v3313 = vadd.f32 0.0, %v3312
        %v3314 = vpop.f32.mrb[0].mxu0
        %v3315 = vadd.f32 0.0, %v3314
        %v3316 = vpop.f32.mrb[0].mxu0
        %v3317 = vadd.f32 0.0, %v3316
        %3318 = vmatprep.mubr.bf16.mxu0 0
        %3319 = vmatmul.mubr.bf16.gmra.mrb[0].mxu0 %v2814
        %v3320 = vpop.f32.mrb[0].mxu0
        %v3321 = vadd.f32 0.0, %v3320
        %v3322 = vpop.f32.mrb[0].mxu0
        %v3323 = vadd.f32 0.0, %v3322
        %v3324 = vpop.f32.mrb[0].mxu0
        %v3325 = vadd.f32 0.0, %v3324
        %v3326 = vpop.f32.mrb[0].mxu0
        %v3327 = vadd.f32 0.0, %v3326
        %3328 = vmatprep.mubr.bf16.mxu0 0
        %3329 = vmatmul.mubr.bf16.gmra.mrb[0].mxu0 %v2815
        %v3330 = vpop.f32.mrb[0].mxu0
        %v3331 = vadd.f32 0.0, %v3330
        %v3332 = vpop.f32.mrb[0].mxu0
        %v3333 = vadd.f32 0.0, %v3332
        %v3334 = vpop.f32.mrb[0].mxu0
        %v3335 = vadd.f32 0.0, %v3334
        %v3336 = vpop.f32.mrb[0].mxu0
        %v3337 = vadd.f32 0.0, %v3336
        %3338 = vmatprep.mubr.bf16.mxu0 0
        %3339 = vmatmul.mubr.bf16.gmra.mrb[0].mxu0 %v2816
        %v3340 = vpop.f32.mrb[0].mxu0
        %v3341 = vadd.f32 0.0, %v3340
        %v3342 = vpop.f32.mrb[0].mxu0
        %v3343 = vadd.f32 0.0, %v3342
        %v3344 = vpop.f32.mrb[0].mxu0
        %v3345 = vadd.f32 0.0, %v3344
        %v3346 = vpop.f32.mrb[0].mxu0
        %v3347 = vadd.f32 0.0, %v3346
        %3348 = vmatprep.mubr.bf16.mxu0 0
        %3349 = vmatmul.mubr.bf16.gmra.mrb[0].mxu0 %v2817
        %v3350 = vpop.f32.mrb[0].mxu0
        %v3351 = vadd.f32 0.0, %v3350
        %v3352 = vpop.f32.mrb[0].mxu0
        %v3353 = vadd.f32 0.0, %v3352
        %v3354 = vpop.f32.mrb[0].mxu0
        %v3355 = vadd.f32 0.0, %v3354
        %v3356 = vpop.f32.mrb[0].mxu0
        %v3357 = vadd.f32 0.0, %v3356
        %3358 = vmatprep.mubr.bf16.mxu0 0
        %3359 = vmatmul.mubr.bf16.gmra.mrb[0].mxu0 %v2818
        %v3360 = vpop.f32.mrb[0].mxu0
        %v3361 = vadd.f32 0.0, %v3360
        %v3362 = vpop.f32.mrb[0].mxu0
        %v3363 = vadd.f32 0.0, %v3362
        %v3364 = vpop.f32.mrb[0].mxu0
        %v3365 = vadd.f32 0.0, %v3364
        %v3366 = vpop.f32.mrb[0].mxu0
        %v3367 = vadd.f32 0.0, %v3366
        %3368 = vmatprep.mubr.bf16.mxu0 0
        %3369 = vmatmul.mubr.bf16.gmra.mrb[0].mxu0 %v2819
        %v3370 = vpop.f32.mrb[0].mxu0
        %v3371 = vadd.f32 0.0, %v3370
        %v3372 = vpop.f32.mrb[0].mxu0
        %v3373 = vadd.f32 0.0, %v3372
        %v3374 = vpop.f32.mrb[0].mxu0
        %v3375 = vadd.f32 0.0, %v3374
        %v3376 = vpop.f32.mrb[0].mxu0
        %v3377 = vadd.f32 0.0, %v3376
        %3378 = vmatprep.mubr.bf16.mxu0 0
        %3379 = vmatmul.mubr.bf16.gmra.mrb[0].mxu0 %v2820
        %v3380 = vpop.f32.mrb[0].mxu0
        %v3381 = vadd.f32 0.0, %v3380
        %v3382 = vpop.f32.mrb[0].mxu0
        %v3383 = vadd.f32 0.0, %v3382
        %v3384 = vpop.f32.mrb[0].mxu0
        %v3385 = vadd.f32 0.0, %v3384
        %v3386 = vpop.f32.mrb[0].mxu0
        %v3387 = vadd.f32 0.0, %v3386
        %3388 = vmatprep.mubr.bf16.mxu0 0
        %3389 = vmatmul.mubr.bf16.gmra.mrb[0].mxu0 %v2821
        %v3390 = vpop.f32.mrb[0].mxu0
        %v3391 = vadd.f32 0.0, %v3390
        %v3392 = vpop.f32.mrb[0].mxu0
        %v3393 = vadd.f32 0.0, %v3392
        %v3394 = vpop.f32.mrb[0].mxu0
        %v3395 = vadd.f32 0.0, %v3394
        %v3396 = vpop.f32.mrb[0].mxu0
        %v3397 = vadd.f32 0.0, %v3396
        %3398 = vdwg.mxu0
        %3399 = vmatprep.subr.bf16.mxu0 %v3081
        %3400 = vmatpush1.bf16.msra.mxu0 %v3080
        %3401 = vmatprep.subr.bf16.mxu0 %v3089
        %3402 = vmatpush1.bf16.msra.mxu0 %v3088
        %3403 = vmatprep.subr.bf16.mxu0 %v3097
        %3404 = vmatpush1.bf16.msra.mxu0 %v3096
        %3405 = vmatprep.subr.bf16.mxu0 %v3105
        %3406 = vmatpush1.bf16.msra.mxu0 %v3104
        %3407 = vmatprep.subr.bf16.mxu0 %v3113
        %3408 = vmatpush1.bf16.msra.mxu0 %v3112
        %3409 = vmatprep.subr.bf16.mxu0 %v3121
        %3410 = vmatpush1.bf16.msra.mxu0 %v3120
        %3411 = vmatprep.subr.bf16.mxu0 %v3129
        %3412 = vmatpush1.bf16.msra.mxu0 %v3128
        %3413 = vmatprep.subr.bf16.mxu0 %v3137
        %3414 = vmatpush1.bf16.msra.mxu0 %v3136
        %3415 = vmatprep.subr.bf16.mxu0 0
        %3416 = vmatpush1.bf16.msra.mxu0 0
        %3417 = vmatprep.subr.bf16.mxu0 0
        %3418 = vmatpush1.bf16.msra.mxu0 0
        %3419 = vmatprep.subr.bf16.mxu0 0
        %3420 = vmatpush1.bf16.msra.mxu0 0
        %3421 = vmatprep.subr.bf16.mxu0 0
        %3422 = vmatpush1.bf16.msra.mxu0 0
        %3423 = vmatprep.subr.bf16.mxu0 0
        %3424 = vmatpush1.bf16.msra.mxu0 0
        %3425 = vmatprep.subr.bf16.mxu0 0
        %3426 = vmatpush1.bf16.msra.mxu0 0
        %3427 = vmatprep.subr.bf16.mxu0 0
        %3428 = vmatpush1.bf16.msra.mxu0 0
        %3429 = vmatprep.subr.bf16.mxu0 0
        %3430 = vmatpush1.bf16.msra.mxu0 0
        %3431 = vmatprep.mubr.bf16.mxu0 0
        %3432 = vmatmul.mubr.bf16.gmra.mrb[0].mxu0 %v2806
        %v3433 = vpop.f32.mrb[0].mxu0
        %v3434 = vadd.f32 0.0, %v3433
        %v3435 = vpop.f32.mrb[0].mxu0
        %v3436 = vadd.f32 0.0, %v3435
        %v3437 = vpop.f32.mrb[0].mxu0
        %v3438 = vadd.f32 0.0, %v3437
        %v3439 = vpop.f32.mrb[0].mxu0
        %v3440 = vadd.f32 0.0, %v3439
        %3441 = vmatprep.mubr.bf16.mxu0 0
        %3442 = vmatmul.mubr.bf16.gmra.mrb[0].mxu0 %v2807
        %v3443 = vpop.f32.mrb[0].mxu0
        %v3444 = vadd.f32 0.0, %v3443
        %v3445 = vpop.f32.mrb[0].mxu0
        %v3446 = vadd.f32 0.0, %v3445
        %v3447 = vpop.f32.mrb[0].mxu0
        %v3448 = vadd.f32 0.0, %v3447
        %v3449 = vpop.f32.mrb[0].mxu0
        %v3450 = vadd.f32 0.0, %v3449
        %3451 = vmatprep.mubr.bf16.mxu0 0
        %3452 = vmatmul.mubr.bf16.gmra.mrb[0].mxu0 %v2808
        %v3453 = vpop.f32.mrb[0].mxu0
        %v3454 = vadd.f32 0.0, %v3453
        %v3455 = vpop.f32.mrb[0].mxu0
        %v3456 = vadd.f32 0.0, %v3455
        %v3457 = vpop.f32.mrb[0].mxu0
        %v3458 = vadd.f32 0.0, %v3457
        %v3459 = vpop.f32.mrb[0].mxu0
        %v3460 = vadd.f32 0.0, %v3459
        %3461 = vmatprep.mubr.bf16.mxu0 0
        %3462 = vmatmul.mubr.bf16.gmra.mrb[0].mxu0 %v2809
        %v3463 = vpop.f32.mrb[0].mxu0
        %v3464 = vadd.f32 0.0, %v3463
        %v3465 = vpop.f32.mrb[0].mxu0
        %v3466 = vadd.f32 0.0, %v3465
        %v3467 = vpop.f32.mrb[0].mxu0
        %v3468 = vadd.f32 0.0, %v3467
        %v3469 = vpop.f32.mrb[0].mxu0
        %v3470 = vadd.f32 0.0, %v3469
        %3471 = vmatprep.mubr.bf16.mxu0 0
        %3472 = vmatmul.mubr.bf16.gmra.mrb[0].mxu0 %v2810
        %v3473 = vpop.f32.mrb[0].mxu0
        %v3474 = vadd.f32 0.0, %v3473
        %v3475 = vpop.f32.mrb[0].mxu0
        %v3476 = vadd.f32 0.0, %v3475
        %v3477 = vpop.f32.mrb[0].mxu0
        %v3478 = vadd.f32 0.0, %v3477
        %v3479 = vpop.f32.mrb[0].mxu0
        %v3480 = vadd.f32 0.0, %v3479
        %3481 = vmatprep.mubr.bf16.mxu0 0
        %3482 = vmatmul.mubr.bf16.gmra.mrb[0].mxu0 %v2811
        %v3483 = vpop.f32.mrb[0].mxu0
        %v3484 = vadd.f32 0.0, %v3483
        %v3485 = vpop.f32.mrb[0].mxu0
        %v3486 = vadd.f32 0.0, %v3485
        %v3487 = vpop.f32.mrb[0].mxu0
        %v3488 = vadd.f32 0.0, %v3487
        %v3489 = vpop.f32.mrb[0].mxu0
        %v3490 = vadd.f32 0.0, %v3489
        %3491 = vmatprep.mubr.bf16.mxu0 0
        %3492 = vmatmul.mubr.bf16.gmra.mrb[0].mxu0 %v2812
        %v3493 = vpop.f32.mrb[0].mxu0
        %v3494 = vadd.f32 0.0, %v3493
        %v3495 = vpop.f32.mrb[0].mxu0
        %v3496 = vadd.f32 0.0, %v3495
        %v3497 = vpop.f32.mrb[0].mxu0
        %v3498 = vadd.f32 0.0, %v3497
        %v3499 = vpop.f32.mrb[0].mxu0
        %v3500 = vadd.f32 0.0, %v3499
        %3501 = vmatprep.mubr.bf16.mxu0 0
        %3502 = vmatmul.mubr.bf16.gmra.mrb[0].mxu0 %v2813
        %v3503 = vpop.f32.mrb[0].mxu0
        %v3504 = vadd.f32 0.0, %v3503
        %v3505 = vpop.f32.mrb[0].mxu0
        %v3506 = vadd.f32 0.0, %v3505
        %v3507 = vpop.f32.mrb[0].mxu0
        %v3508 = vadd.f32 0.0, %v3507
        %v3509 = vpop.f32.mrb[0].mxu0
        %v3510 = vadd.f32 0.0, %v3509
        %3511 = vmatprep.mubr.bf16.mxu0 0
        %3512 = vmatmul.mubr.bf16.gmra.mrb[0].mxu0 %v2814
        %v3513 = vpop.f32.mrb[0].mxu0
        %v3514 = vadd.f32 0.0, %v3513
        %v3515 = vpop.f32.mrb[0].mxu0
        %v3516 = vadd.f32 0.0, %v3515
        %v3517 = vpop.f32.mrb[0].mxu0
        %v3518 = vadd.f32 0.0, %v3517
        %v3519 = vpop.f32.mrb[0].mxu0
        %v3520 = vadd.f32 0.0, %v3519
        %3521 = vmatprep.mubr.bf16.mxu0 0
        %3522 = vmatmul.mubr.bf16.gmra.mrb[0].mxu0 %v2815
        %v3523 = vpop.f32.mrb[0].mxu0
        %v3524 = vadd.f32 0.0, %v3523
        %v3525 = vpop.f32.mrb[0].mxu0
        %v3526 = vadd.f32 0.0, %v3525
        %v3527 = vpop.f32.mrb[0].mxu0
        %v3528 = vadd.f32 0.0, %v3527
        %v3529 = vpop.f32.mrb[0].mxu0
        %v3530 = vadd.f32 0.0, %v3529
        %3531 = vmatprep.mubr.bf16.mxu0 0
        %3532 = vmatmul.mubr.bf16.gmra.mrb[0].mxu0 %v2816
        %v3533 = vpop.f32.mrb[0].mxu0
        %v3534 = vadd.f32 0.0, %v3533
        %v3535 = vpop.f32.mrb[0].mxu0
        %v3536 = vadd.f32 0.0, %v3535
        %v3537 = vpop.f32.mrb[0].mxu0
        %v3538 = vadd.f32 0.0, %v3537
        %v3539 = vpop.f32.mrb[0].mxu0
        %v3540 = vadd.f32 0.0, %v3539
        %3541 = vmatprep.mubr.bf16.mxu0 0
        %3542 = vmatmul.mubr.bf16.gmra.mrb[0].mxu0 %v2817
        %v3543 = vpop.f32.mrb[0].mxu0
        %v3544 = vadd.f32 0.0, %v3543
        %v3545 = vpop.f32.mrb[0].mxu0
        %v3546 = vadd.f32 0.0, %v3545
        %v3547 = vpop.f32.mrb[0].mxu0
        %v3548 = vadd.f32 0.0, %v3547
        %v3549 = vpop.f32.mrb[0].mxu0
        %v3550 = vadd.f32 0.0, %v3549
        %3551 = vmatprep.mubr.bf16.mxu0 0
        %3552 = vmatmul.mubr.bf16.gmra.mrb[0].mxu0 %v2818
        %v3553 = vpop.f32.mrb[0].mxu0
        %v3554 = vadd.f32 0.0, %v3553
        %v3555 = vpop.f32.mrb[0].mxu0
        %v3556 = vadd.f32 0.0, %v3555
        %v3557 = vpop.f32.mrb[0].mxu0
        %v3558 = vadd.f32 0.0, %v3557
        %v3559 = vpop.f32.mrb[0].mxu0
        %v3560 = vadd.f32 0.0, %v3559
        %3561 = vmatprep.mubr.bf16.mxu0 0
        %3562 = vmatmul.mubr.bf16.gmra.mrb[0].mxu0 %v2819
        %v3563 = vpop.f32.mrb[0].mxu0
        %v3564 = vadd.f32 0.0, %v3563
        %v3565 = vpop.f32.mrb[0].mxu0
        %v3566 = vadd.f32 0.0, %v3565
        %v3567 = vpop.f32.mrb[0].mxu0
        %v3568 = vadd.f32 0.0, %v3567
        %v3569 = vpop.f32.mrb[0].mxu0
        %v3570 = vadd.f32 0.0, %v3569
        %3571 = vmatprep.mubr.bf16.mxu0 0
        %3572 = vmatmul.mubr.bf16.gmra.mrb[0].mxu0 %v2820
        %v3573 = vpop.f32.mrb[0].mxu0
        %v3574 = vadd.f32 0.0, %v3573
        %v3575 = vpop.f32.mrb[0].mxu0
        %v3576 = vadd.f32 0.0, %v3575
        %v3577 = vpop.f32.mrb[0].mxu0
        %v3578 = vadd.f32 0.0, %v3577
        %v3579 = vpop.f32.mrb[0].mxu0
        %v3580 = vadd.f32 0.0, %v3579
        %3581 = vmatprep.mubr.bf16.mxu0 0
        %3582 = vmatmul.mubr.bf16.gmra.mrb[0].mxu0 %v2821
        %v3583 = vpop.f32.mrb[0].mxu0
        %v3584 = vadd.f32 0.0, %v3583
        %v3585 = vpop.f32.mrb[0].mxu0
        %v3586 = vadd.f32 0.0, %v3585
        %v3587 = vpop.f32.mrb[0].mxu0
        %v3588 = vadd.f32 0.0, %v3587
        %v3589 = vpop.f32.mrb[0].mxu0
        %v3590 = vadd.f32 0.0, %v3589
        %3591 = vdwg.mxu0
        %3592 = vmatprep.subr.bf16.mxu0 %v3083
        %3593 = vmatpush1.bf16.msra.mxu0 %v3082
        %3594 = vmatprep.subr.bf16.mxu0 %v3091
        %3595 = vmatpush1.bf16.msra.mxu0 %v3090
        %3596 = vmatprep.subr.bf16.mxu0 %v3099
        %3597 = vmatpush1.bf16.msra.mxu0 %v3098
        %3598 = vmatprep.subr.bf16.mxu0 %v3107
        %3599 = vmatpush1.bf16.msra.mxu0 %v3106
        %3600 = vmatprep.subr.bf16.mxu0 %v3115
        %3601 = vmatpush1.bf16.msra.mxu0 %v3114
        %3602 = vmatprep.subr.bf16.mxu0 %v3123
        %3603 = vmatpush1.bf16.msra.mxu0 %v3122
        %3604 = vmatprep.subr.bf16.mxu0 %v3131
        %3605 = vmatpush1.bf16.msra.mxu0 %v3130
        %3606 = vmatprep.subr.bf16.mxu0 %v3139
        %3607 = vmatpush1.bf16.msra.mxu0 %v3138
        %3608 = vmatprep.subr.bf16.mxu0 0
        %3609 = vmatpush1.bf16.msra.mxu0 0
        %3610 = vmatprep.subr.bf16.mxu0 0
        %3611 = vmatpush1.bf16.msra.mxu0 0
        %3612 = vmatprep.subr.bf16.mxu0 0
        %3613 = vmatpush1.bf16.msra.mxu0 0
        %3614 = vmatprep.subr.bf16.mxu0 0
        %3615 = vmatpush1.bf16.msra.mxu0 0
        %3616 = vmatprep.subr.bf16.mxu0 0
        %3617 = vmatpush1.bf16.msra.mxu0 0
        %3618 = vmatprep.subr.bf16.mxu0 0
        %3619 = vmatpush1.bf16.msra.mxu0 0
        %3620 = vmatprep.subr.bf16.mxu0 0
        %3621 = vmatpush1.bf16.msra.mxu0 0
        %3622 = vmatprep.subr.bf16.mxu0 0
        %3623 = vmatpush1.bf16.msra.mxu0 0
        %3624 = vmatprep.mubr.bf16.mxu0 0
        %3625 = vmatmul.mubr.bf16.gmra.mrb[0].mxu0 %v2806
        %v3626 = vpop.f32.mrb[0].mxu0
        %v3627 = vadd.f32 0.0, %v3626
        %v3628 = vpop.f32.mrb[0].mxu0
        %v3629 = vadd.f32 0.0, %v3628
        %v3630 = vpop.f32.mrb[0].mxu0
        %v3631 = vadd.f32 0.0, %v3630
        %v3632 = vpop.f32.mrb[0].mxu0
        %v3633 = vadd.f32 0.0, %v3632
        %3634 = vmatprep.mubr.bf16.mxu0 0
        %3635 = vmatmul.mubr.bf16.gmra.mrb[0].mxu0 %v2807
        %v3636 = vpop.f32.mrb[0].mxu0
        %v3637 = vadd.f32 0.0, %v3636
        %v3638 = vpop.f32.mrb[0].mxu0
        %v3639 = vadd.f32 0.0, %v3638
        %v3640 = vpop.f32.mrb[0].mxu0
        %v3641 = vadd.f32 0.0, %v3640
        %v3642 = vpop.f32.mrb[0].mxu0
        %v3643 = vadd.f32 0.0, %v3642
        %3644 = vmatprep.mubr.bf16.mxu0 0
        %3645 = vmatmul.mubr.bf16.gmra.mrb[0].mxu0 %v2808
        %v3646 = vpop.f32.mrb[0].mxu0
        %v3647 = vadd.f32 0.0, %v3646
        %v3648 = vpop.f32.mrb[0].mxu0
        %v3649 = vadd.f32 0.0, %v3648
        %v3650 = vpop.f32.mrb[0].mxu0
        %v3651 = vadd.f32 0.0, %v3650
        %v3652 = vpop.f32.mrb[0].mxu0
        %v3653 = vadd.f32 0.0, %v3652
        %3654 = vmatprep.mubr.bf16.mxu0 0
        %3655 = vmatmul.mubr.bf16.gmra.mrb[0].mxu0 %v2809
        %v3656 = vpop.f32.mrb[0].mxu0
        %v3657 = vadd.f32 0.0, %v3656
        %v3658 = vpop.f32.mrb[0].mxu0
        %v3659 = vadd.f32 0.0, %v3658
        %v3660 = vpop.f32.mrb[0].mxu0
        %v3661 = vadd.f32 0.0, %v3660
        %v3662 = vpop.f32.mrb[0].mxu0
        %v3663 = vadd.f32 0.0, %v3662
        %3664 = vmatprep.mubr.bf16.mxu0 0
        %3665 = vmatmul.mubr.bf16.gmra.mrb[0].mxu0 %v2810
        %v3666 = vpop.f32.mrb[0].mxu0
        %v3667 = vadd.f32 0.0, %v3666
        %v3668 = vpop.f32.mrb[0].mxu0
        %v3669 = vadd.f32 0.0, %v3668
        %v3670 = vpop.f32.mrb[0].mxu0
        %v3671 = vadd.f32 0.0, %v3670
        %v3672 = vpop.f32.mrb[0].mxu0
        %v3673 = vadd.f32 0.0, %v3672
        %3674 = vmatprep.mubr.bf16.mxu0 0
        %3675 = vmatmul.mubr.bf16.gmra.mrb[0].mxu0 %v2811
        %v3676 = vpop.f32.mrb[0].mxu0
        %v3677 = vadd.f32 0.0, %v3676
        %v3678 = vpop.f32.mrb[0].mxu0
        %v3679 = vadd.f32 0.0, %v3678
        %v3680 = vpop.f32.mrb[0].mxu0
        %v3681 = vadd.f32 0.0, %v3680
        %v3682 = vpop.f32.mrb[0].mxu0
        %v3683 = vadd.f32 0.0, %v3682
        %3684 = vmatprep.mubr.bf16.mxu0 0
        %3685 = vmatmul.mubr.bf16.gmra.mrb[0].mxu0 %v2812
        %v3686 = vpop.f32.mrb[0].mxu0
        %v3687 = vadd.f32 0.0, %v3686
        %v3688 = vpop.f32.mrb[0].mxu0
        %v3689 = vadd.f32 0.0, %v3688
        %v3690 = vpop.f32.mrb[0].mxu0
        %v3691 = vadd.f32 0.0, %v3690
        %v3692 = vpop.f32.mrb[0].mxu0
        %v3693 = vadd.f32 0.0, %v3692
        %3694 = vmatprep.mubr.bf16.mxu0 0
        %3695 = vmatmul.mubr.bf16.gmra.mrb[0].mxu0 %v2813
        %v3696 = vpop.f32.mrb[0].mxu0
        %v3697 = vadd.f32 0.0, %v3696
        %v3698 = vpop.f32.mrb[0].mxu0
        %v3699 = vadd.f32 0.0, %v3698
        %v3700 = vpop.f32.mrb[0].mxu0
        %v3701 = vadd.f32 0.0, %v3700
        %v3702 = vpop.f32.mrb[0].mxu0
        %v3703 = vadd.f32 0.0, %v3702
        %3704 = vmatprep.mubr.bf16.mxu0 0
        %3705 = vmatmul.mubr.bf16.gmra.mrb[0].mxu0 %v2814
        %v3706 = vpop.f32.mrb[0].mxu0
        %v3707 = vadd.f32 0.0, %v3706
        %v3708 = vpop.f32.mrb[0].mxu0
        %v3709 = vadd.f32 0.0, %v3708
        %v3710 = vpop.f32.mrb[0].mxu0
        %v3711 = vadd.f32 0.0, %v3710
        %v3712 = vpop.f32.mrb[0].mxu0
        %v3713 = vadd.f32 0.0, %v3712
        %3714 = vmatprep.mubr.bf16.mxu0 0
        %3715 = vmatmul.mubr.bf16.gmra.mrb[0].mxu0 %v2815
        %v3716 = vpop.f32.mrb[0].mxu0
        %v3717 = vadd.f32 0.0, %v3716
        %v3718 = vpop.f32.mrb[0].mxu0
        %v3719 = vadd.f32 0.0, %v3718
        %v3720 = vpop.f32.mrb[0].mxu0
        %v3721 = vadd.f32 0.0, %v3720
        %v3722 = vpop.f32.mrb[0].mxu0
        %v3723 = vadd.f32 0.0, %v3722
        %3724 = vmatprep.mubr.bf16.mxu0 0
        %3725 = vmatmul.mubr.bf16.gmra.mrb[0].mxu0 %v2816
        %v3726 = vpop.f32.mrb[0].mxu0
        %v3727 = vadd.f32 0.0, %v3726
        %v3728 = vpop.f32.mrb[0].mxu0
        %v3729 = vadd.f32 0.0, %v3728
        %v3730 = vpop.f32.mrb[0].mxu0
        %v3731 = vadd.f32 0.0, %v3730
        %v3732 = vpop.f32.mrb[0].mxu0
        %v3733 = vadd.f32 0.0, %v3732
        %3734 = vmatprep.mubr.bf16.mxu0 0
        %3735 = vmatmul.mubr.bf16.gmra.mrb[0].mxu0 %v2817
        %v3736 = vpop.f32.mrb[0].mxu0
        %v3737 = vadd.f32 0.0, %v3736
        %v3738 = vpop.f32.mrb[0].mxu0
        %v3739 = vadd.f32 0.0, %v3738
        %v3740 = vpop.f32.mrb[0].mxu0
        %v3741 = vadd.f32 0.0, %v3740
        %v3742 = vpop.f32.mrb[0].mxu0
        %v3743 = vadd.f32 0.0, %v3742
        %3744 = vmatprep.mubr.bf16.mxu0 0
        %3745 = vmatmul.mubr.bf16.gmra.mrb[0].mxu0 %v2818
        %v3746 = vpop.f32.mrb[0].mxu0
        %v3747 = vadd.f32 0.0, %v3746
        %v3748 = vpop.f32.mrb[0].mxu0
        %v3749 = vadd.f32 0.0, %v3748
        %v3750 = vpop.f32.mrb[0].mxu0
        %v3751 = vadd.f32 0.0, %v3750
        %v3752 = vpop.f32.mrb[0].mxu0
        %v3753 = vadd.f32 0.0, %v3752
        %3754 = vmatprep.mubr.bf16.mxu0 0
        %3755 = vmatmul.mubr.bf16.gmra.mrb[0].mxu0 %v2819
        %v3756 = vpop.f32.mrb[0].mxu0
        %v3757 = vadd.f32 0.0, %v3756
        %v3758 = vpop.f32.mrb[0].mxu0
        %v3759 = vadd.f32 0.0, %v3758
        %v3760 = vpop.f32.mrb[0].mxu0
        %v3761 = vadd.f32 0.0, %v3760
        %v3762 = vpop.f32.mrb[0].mxu0
        %v3763 = vadd.f32 0.0, %v3762
        %3764 = vmatprep.mubr.bf16.mxu0 0
        %3765 = vmatmul.mubr.bf16.gmra.mrb[0].mxu0 %v2820
        %v3766 = vpop.f32.mrb[0].mxu0
        %v3767 = vadd.f32 0.0, %v3766
        %v3768 = vpop.f32.mrb[0].mxu0
        %v3769 = vadd.f32 0.0, %v3768
        %v3770 = vpop.f32.mrb[0].mxu0
        %v3771 = vadd.f32 0.0, %v3770
        %v3772 = vpop.f32.mrb[0].mxu0
        %v3773 = vadd.f32 0.0, %v3772
        %3774 = vmatprep.mubr.bf16.mxu0 0
        %3775 = vmatmul.mubr.bf16.gmra.mrb[0].mxu0 %v2821
        %v3776 = vpop.f32.mrb[0].mxu0
        %v3777 = vadd.f32 0.0, %v3776
        %v3778 = vpop.f32.mrb[0].mxu0
        %v3779 = vadd.f32 0.0, %v3778
        %v3780 = vpop.f32.mrb[0].mxu0
        %v3781 = vadd.f32 0.0, %v3780
        %v3782 = vpop.f32.mrb[0].mxu0
        %v3783 = vadd.f32 0.0, %v3782
        %3784 = vdwg.mxu0
        %3785 = vmatprep.subr.bf16.mxu0 %v3085
        %3786 = vmatpush1.bf16.msra.mxu0 %v3084
        %3787 = vmatprep.subr.bf16.mxu0 %v3093
        %3788 = vmatpush1.bf16.msra.mxu0 %v3092
        %3789 = vmatprep.subr.bf16.mxu0 %v3101
        %3790 = vmatpush1.bf16.msra.mxu0 %v3100
        %3791 = vmatprep.subr.bf16.mxu0 %v3109
        %3792 = vmatpush1.bf16.msra.mxu0 %v3108
        %3793 = vmatprep.subr.bf16.mxu0 %v3117
        %3794 = vmatpush1.bf16.msra.mxu0 %v3116
        %3795 = vmatprep.subr.bf16.mxu0 %v3125
        %3796 = vmatpush1.bf16.msra.mxu0 %v3124
        %3797 = vmatprep.subr.bf16.mxu0 %v3133
        %3798 = vmatpush1.bf16.msra.mxu0 %v3132
        %3799 = vmatprep.subr.bf16.mxu0 %v3141
        %3800 = vmatpush1.bf16.msra.mxu0 %v3140
        %3801 = vmatprep.subr.bf16.mxu0 0
        %3802 = vmatpush1.bf16.msra.mxu0 0
        %3803 = vmatprep.subr.bf16.mxu0 0
        %3804 = vmatpush1.bf16.msra.mxu0 0
        %3805 = vmatprep.subr.bf16.mxu0 0
        %3806 = vmatpush1.bf16.msra.mxu0 0
        %3807 = vmatprep.subr.bf16.mxu0 0
        %3808 = vmatpush1.bf16.msra.mxu0 0
        %3809 = vmatprep.subr.bf16.mxu0 0
        %3810 = vmatpush1.bf16.msra.mxu0 0
        %3811 = vmatprep.subr.bf16.mxu0 0
        %3812 = vmatpush1.bf16.msra.mxu0 0
        %3813 = vmatprep.subr.bf16.mxu0 0
        %3814 = vmatpush1.bf16.msra.mxu0 0
        %3815 = vmatprep.subr.bf16.mxu0 0
        %3816 = vmatpush1.bf16.msra.mxu0 0
        %3817 = vmatprep.mubr.bf16.mxu0 0
        %3818 = vmatmul.mubr.bf16.gmra.mrb[0].mxu0 %v2806
        %v3819 = vpop.f32.mrb[0].mxu0
        %v3820 = vadd.f32 0.0, %v3819
        %v3821 = vpop.f32.mrb[0].mxu0
        %v3822 = vadd.f32 0.0, %v3821
        %v3823 = vpop.f32.mrb[0].mxu0
        %v3824 = vadd.f32 0.0, %v3823
        %v3825 = vpop.f32.mrb[0].mxu0
        %v3826 = vadd.f32 0.0, %v3825
        %3827 = vmatprep.mubr.bf16.mxu0 0
        %3828 = vmatmul.mubr.bf16.gmra.mrb[0].mxu0 %v2807
        %v3829 = vpop.f32.mrb[0].mxu0
        %v3830 = vadd.f32 0.0, %v3829
        %v3831 = vpop.f32.mrb[0].mxu0
        %v3832 = vadd.f32 0.0, %v3831
        %v3833 = vpop.f32.mrb[0].mxu0
        %v3834 = vadd.f32 0.0, %v3833
        %v3835 = vpop.f32.mrb[0].mxu0
        %v3836 = vadd.f32 0.0, %v3835
        %3837 = vmatprep.mubr.bf16.mxu0 0
        %3838 = vmatmul.mubr.bf16.gmra.mrb[0].mxu0 %v2808
        %v3839 = vpop.f32.mrb[0].mxu0
        %v3840 = vadd.f32 0.0, %v3839
        %v3841 = vpop.f32.mrb[0].mxu0
        %v3842 = vadd.f32 0.0, %v3841
        %v3843 = vpop.f32.mrb[0].mxu0
        %v3844 = vadd.f32 0.0, %v3843
        %v3845 = vpop.f32.mrb[0].mxu0
        %v3846 = vadd.f32 0.0, %v3845
        %3847 = vmatprep.mubr.bf16.mxu0 0
        %3848 = vmatmul.mubr.bf16.gmra.mrb[0].mxu0 %v2809
        %v3849 = vpop.f32.mrb[0].mxu0
        %v3850 = vadd.f32 0.0, %v3849
        %v3851 = vpop.f32.mrb[0].mxu0
        %v3852 = vadd.f32 0.0, %v3851
        %v3853 = vpop.f32.mrb[0].mxu0
        %v3854 = vadd.f32 0.0, %v3853
        %v3855 = vpop.f32.mrb[0].mxu0
        %v3856 = vadd.f32 0.0, %v3855
        %3857 = vmatprep.mubr.bf16.mxu0 0
        %3858 = vmatmul.mubr.bf16.gmra.mrb[0].mxu0 %v2810
        %v3859 = vpop.f32.mrb[0].mxu0
        %v3860 = vadd.f32 0.0, %v3859
        %v3861 = vpop.f32.mrb[0].mxu0
        %v3862 = vadd.f32 0.0, %v3861
        %v3863 = vpop.f32.mrb[0].mxu0
        %v3864 = vadd.f32 0.0, %v3863
        %v3865 = vpop.f32.mrb[0].mxu0
        %v3866 = vadd.f32 0.0, %v3865
        %3867 = vmatprep.mubr.bf16.mxu0 0
        %3868 = vmatmul.mubr.bf16.gmra.mrb[0].mxu0 %v2811
        %v3869 = vpop.f32.mrb[0].mxu0
        %v3870 = vadd.f32 0.0, %v3869
        %v3871 = vpop.f32.mrb[0].mxu0
        %v3872 = vadd.f32 0.0, %v3871
        %v3873 = vpop.f32.mrb[0].mxu0
        %v3874 = vadd.f32 0.0, %v3873
        %v3875 = vpop.f32.mrb[0].mxu0
        %v3876 = vadd.f32 0.0, %v3875
        %3877 = vmatprep.mubr.bf16.mxu0 0
        %3878 = vmatmul.mubr.bf16.gmra.mrb[0].mxu0 %v2812
        %v3879 = vpop.f32.mrb[0].mxu0
        %v3880 = vadd.f32 0.0, %v3879
        %v3881 = vpop.f32.mrb[0].mxu0
        %v3882 = vadd.f32 0.0, %v3881
        %v3883 = vpop.f32.mrb[0].mxu0
        %v3884 = vadd.f32 0.0, %v3883
        %v3885 = vpop.f32.mrb[0].mxu0
        %v3886 = vadd.f32 0.0, %v3885
        %3887 = vmatprep.mubr.bf16.mxu0 0
        %3888 = vmatmul.mubr.bf16.gmra.mrb[0].mxu0 %v2813
        %v3889 = vpop.f32.mrb[0].mxu0
        %v3890 = vadd.f32 0.0, %v3889
        %v3891 = vpop.f32.mrb[0].mxu0
        %v3892 = vadd.f32 0.0, %v3891
        %v3893 = vpop.f32.mrb[0].mxu0
        %v3894 = vadd.f32 0.0, %v3893
        %v3895 = vpop.f32.mrb[0].mxu0
        %v3896 = vadd.f32 0.0, %v3895
        %3897 = vmatprep.mubr.bf16.mxu0 0
        %3898 = vmatmul.mubr.bf16.gmra.mrb[0].mxu0 %v2814
        %v3899 = vpop.f32.mrb[0].mxu0
        %v3900 = vadd.f32 0.0, %v3899
        %v3901 = vpop.f32.mrb[0].mxu0
        %v3902 = vadd.f32 0.0, %v3901
        %v3903 = vpop.f32.mrb[0].mxu0
        %v3904 = vadd.f32 0.0, %v3903
        %v3905 = vpop.f32.mrb[0].mxu0
        %v3906 = vadd.f32 0.0, %v3905
        %3907 = vmatprep.mubr.bf16.mxu0 0
        %3908 = vmatmul.mubr.bf16.gmra.mrb[0].mxu0 %v2815
        %v3909 = vpop.f32.mrb[0].mxu0
        %v3910 = vadd.f32 0.0, %v3909
        %v3911 = vpop.f32.mrb[0].mxu0
        %v3912 = vadd.f32 0.0, %v3911
        %v3913 = vpop.f32.mrb[0].mxu0
        %v3914 = vadd.f32 0.0, %v3913
        %v3915 = vpop.f32.mrb[0].mxu0
        %v3916 = vadd.f32 0.0, %v3915
        %3917 = vmatprep.mubr.bf16.mxu0 0
        %3918 = vmatmul.mubr.bf16.gmra.mrb[0].mxu0 %v2816
        %v3919 = vpop.f32.mrb[0].mxu0
        %v3920 = vadd.f32 0.0, %v3919
        %v3921 = vpop.f32.mrb[0].mxu0
        %v3922 = vadd.f32 0.0, %v3921
        %v3923 = vpop.f32.mrb[0].mxu0
        %v3924 = vadd.f32 0.0, %v3923
        %v3925 = vpop.f32.mrb[0].mxu0
        %v3926 = vadd.f32 0.0, %v3925
        %3927 = vmatprep.mubr.bf16.mxu0 0
        %3928 = vmatmul.mubr.bf16.gmra.mrb[0].mxu0 %v2817
        %v3929 = vpop.f32.mrb[0].mxu0
        %v3930 = vadd.f32 0.0, %v3929
        %v3931 = vpop.f32.mrb[0].mxu0
        %v3932 = vadd.f32 0.0, %v3931
        %v3933 = vpop.f32.mrb[0].mxu0
        %v3934 = vadd.f32 0.0, %v3933
        %v3935 = vpop.f32.mrb[0].mxu0
        %v3936 = vadd.f32 0.0, %v3935
        %3937 = vmatprep.mubr.bf16.mxu0 0
        %3938 = vmatmul.mubr.bf16.gmra.mrb[0].mxu0 %v2818
        %v3939 = vpop.f32.mrb[0].mxu0
        %v3940 = vadd.f32 0.0, %v3939
        %v3941 = vpop.f32.mrb[0].mxu0
        %v3942 = vadd.f32 0.0, %v3941
        %v3943 = vpop.f32.mrb[0].mxu0
        %v3944 = vadd.f32 0.0, %v3943
        %v3945 = vpop.f32.mrb[0].mxu0
        %v3946 = vadd.f32 0.0, %v3945
        %3947 = vmatprep.mubr.bf16.mxu0 0
        %3948 = vmatmul.mubr.bf16.gmra.mrb[0].mxu0 %v2819
        %v3949 = vpop.f32.mrb[0].mxu0
        %v3950 = vadd.f32 0.0, %v3949
        %v3951 = vpop.f32.mrb[0].mxu0
        %v3952 = vadd.f32 0.0, %v3951
        %v3953 = vpop.f32.mrb[0].mxu0
        %v3954 = vadd.f32 0.0, %v3953
        %v3955 = vpop.f32.mrb[0].mxu0
        %v3956 = vadd.f32 0.0, %v3955
        %3957 = vmatprep.mubr.bf16.mxu0 0
        %3958 = vmatmul.mubr.bf16.gmra.mrb[0].mxu0 %v2820
        %v3959 = vpop.f32.mrb[0].mxu0
        %v3960 = vadd.f32 0.0, %v3959
        %v3961 = vpop.f32.mrb[0].mxu0
        %v3962 = vadd.f32 0.0, %v3961
        %v3963 = vpop.f32.mrb[0].mxu0
        %v3964 = vadd.f32 0.0, %v3963
        %v3965 = vpop.f32.mrb[0].mxu0
        %v3966 = vadd.f32 0.0, %v3965
        %3967 = vmatprep.mubr.bf16.mxu0 0
        %3968 = vmatmul.mubr.bf16.gmra.mrb[0].mxu0 %v2821
        %v3969 = vpop.f32.mrb[0].mxu0
        %v3970 = vadd.f32 0.0, %v3969
        %v3971 = vpop.f32.mrb[0].mxu0
        %v3972 = vadd.f32 0.0, %v3971
        %v3973 = vpop.f32.mrb[0].mxu0
        %v3974 = vadd.f32 0.0, %v3973
        %v3975 = vpop.f32.mrb[0].mxu0
        %v3976 = vadd.f32 0.0, %v3975
        %3977 = vdwg.mxu0
        %v3978 = vld [vmem:[%s681] sm:$0xff]
        %v3979 = vld [vmem:[%s681 + $0x8] sm:$0xff]
        %v3980 = vld [vmem:[%s681 + $0x10] sm:$0xff]
        %v3981 = vld [vmem:[%s681 + $0x18] sm:$0xff]
        %v3982 = vld [vmem:[%s681 + $0x20] sm:$0xff]
        %v3983 = vld [vmem:[%s681 + $0x28] sm:$0xff]
        %v3984 = vld [vmem:[%s681 + $0x30] sm:$0xff]
        %v3985 = vld [vmem:[%s681 + $0x38] sm:$0xff]
        %v3986 = vld [vmem:[%s681 + $0x40] sm:$0xff]
        %v3987 = vld [vmem:[%s681 + $0x48] sm:$0xff]
        %v3988 = vld [vmem:[%s681 + $0x50] sm:$0xff]
        %v3989 = vld [vmem:[%s681 + $0x58] sm:$0xff]
        %v3990 = vld [vmem:[%s681 + $0x60] sm:$0xff]
        %v3991 = vld [vmem:[%s681 + $0x68] sm:$0xff]
        %v3992 = vld [vmem:[%s681 + $0x70] sm:$0xff]
        %v3993 = vld [vmem:[%s681 + $0x78] sm:$0xff]
        %v3994 = vld [vmem:[%s681 + $0x80] sm:$0xff]
        %v3995 = vld [vmem:[%s681 + $0x88] sm:$0xff]
        %v3996 = vld [vmem:[%s681 + $0x90] sm:$0xff]
        %v3997 = vld [vmem:[%s681 + $0x98] sm:$0xff]
        %v3998 = vld [vmem:[%s681 + $0xa0] sm:$0xff]
        %v3999 = vld [vmem:[%s681 + $0xa8] sm:$0xff]
        %v4000 = vld [vmem:[%s681 + $0xb0] sm:$0xff]
        %v4001 = vld [vmem:[%s681 + $0xb8] sm:$0xff]
        %v4002 = vld [vmem:[%s681 + $0xc0] sm:$0xff]
        %v4003 = vld [vmem:[%s681 + $0xc8] sm:$0xff]
        %v4004 = vld [vmem:[%s681 + $0xd0] sm:$0xff]
        %v4005 = vld [vmem:[%s681 + $0xd8] sm:$0xff]
        %v4006 = vld [vmem:[%s681 + $0xe0] sm:$0xff]
        %v4007 = vld [vmem:[%s681 + $0xe8] sm:$0xff]
        %v4008 = vld [vmem:[%s681 + $0xf0] sm:$0xff]
        %v4009 = vld [vmem:[%s681 + $0xf8] sm:$0xff]
        %s4010 = smul.u32 %s39, 1024
        %v4011 = vstv %s4010
        %v4012 = vsub.s32 %v3978, %v4011
        %v4013 = vsub.s32 %v3979, %v4011
        %v4014 = vsub.s32 %v3980, %v4011
        %v4015 = vsub.s32 %v3981, %v4011
        %v4016 = vsub.s32 %v3982, %v4011
        %v4017 = vsub.s32 %v3983, %v4011
        %v4018 = vsub.s32 %v3984, %v4011
        %v4019 = vsub.s32 %v3985, %v4011
        %v4020 = vsub.s32 %v3986, %v4011
        %v4021 = vsub.s32 %v3987, %v4011
        %v4022 = vsub.s32 %v3988, %v4011
        %v4023 = vsub.s32 %v3989, %v4011
        %v4024 = vsub.s32 %v3990, %v4011
        %v4025 = vsub.s32 %v3991, %v4011
        %v4026 = vsub.s32 %v3992, %v4011
        %v4027 = vsub.s32 %v3993, %v4011
        %v4028 = vsub.s32 %v3994, %v4011
        %v4029 = vsub.s32 %v3995, %v4011
        %v4030 = vsub.s32 %v3996, %v4011
        %v4031 = vsub.s32 %v3997, %v4011
        %v4032 = vsub.s32 %v3998, %v4011
        %v4033 = vsub.s32 %v3999, %v4011
        %v4034 = vsub.s32 %v4000, %v4011
        %v4035 = vsub.s32 %v4001, %v4011
        %v4036 = vsub.s32 %v4002, %v4011
        %v4037 = vsub.s32 %v4003, %v4011
        %v4038 = vsub.s32 %v4004, %v4011
        %v4039 = vsub.s32 %v4005, %v4011
        %v4040 = vsub.s32 %v4006, %v4011
        %v4041 = vsub.s32 %v4007, %v4011
        %v4042 = vsub.s32 %v4008, %v4011
        %v4043 = vsub.s32 %v4009, %v4011
        %v4044 = vlaneseq
        %v4045 = vand.u32 %v4044, 127
        %v4046 = vadd.s32 %v4045, 128
        %v4047 = vadd.s32 %v4045, 256
        %v4048 = vadd.s32 %v4045, 384
        %v4049 = vadd.s32 %v4045, 512
        %v4050 = vadd.s32 %v4045, 640
        %v4051 = vadd.s32 %v4045, 768
        %v4052 = vadd.s32 %v4045, 896
        %v4053 = vld [vmem:[#allocation5] sm:$0xff]
        %v4054 = vld [vmem:[#allocation5 + $0x8] sm:$0xff]
        %v4055 = vld [vmem:[#allocation5 + $0x10] sm:$0xff]
        %v4056 = vld [vmem:[#allocation5 + $0x18] sm:$0xff]
        %v4057 = vld [vmem:[#allocation5 + $0x20] sm:$0xff]
        %v4058 = vld [vmem:[#allocation5 + $0x28] sm:$0xff]
        %v4059 = vld [vmem:[#allocation5 + $0x30] sm:$0xff]
        %v4060 = vld [vmem:[#allocation5 + $0x38] sm:$0xff]
        %v4061 = vld [vmem:[#allocation5 + $0x40] sm:$0xff]
        %v4062 = vld [vmem:[#allocation5 + $0x48] sm:$0xff]
        %v4063 = vld [vmem:[#allocation5 + $0x50] sm:$0xff]
        %v4064 = vld [vmem:[#allocation5 + $0x58] sm:$0xff]
        %v4065 = vld [vmem:[#allocation5 + $0x60] sm:$0xff]
        %v4066 = vld [vmem:[#allocation5 + $0x68] sm:$0xff]
        %v4067 = vld [vmem:[#allocation5 + $0x70] sm:$0xff]
        %v4068 = vld [vmem:[#allocation5 + $0x78] sm:$0xff]
        %v4069 = vld [vmem:[#allocation5 + $0x80] sm:$0xff]
        %v4070 = vld [vmem:[#allocation5 + $0x88] sm:$0xff]
        %v4071 = vld [vmem:[#allocation5 + $0x90] sm:$0xff]
        %v4072 = vld [vmem:[#allocation5 + $0x98] sm:$0xff]
        %v4073 = vld [vmem:[#allocation5 + $0xa0] sm:$0xff]
        %v4074 = vld [vmem:[#allocation5 + $0xa8] sm:$0xff]
        %v4075 = vld [vmem:[#allocation5 + $0xb0] sm:$0xff]
        %v4076 = vld [vmem:[#allocation5 + $0xb8] sm:$0xff]
        %v4077 = vld [vmem:[#allocation5 + $0xc0] sm:$0xff]
        %v4078 = vld [vmem:[#allocation5 + $0xc8] sm:$0xff]
        %v4079 = vld [vmem:[#allocation5 + $0xd0] sm:$0xff]
        %v4080 = vld [vmem:[#allocation5 + $0xd8] sm:$0xff]
        %v4081 = vld [vmem:[#allocation5 + $0xe0] sm:$0xff]
        %v4082 = vld [vmem:[#allocation5 + $0xe8] sm:$0xff]
        %v4083 = vld [vmem:[#allocation5 + $0xf0] sm:$0xff]
        %v4084 = vld [vmem:[#allocation5 + $0xf8] sm:$0xff]
        %4085 = vset.pattern.permute.xlu0 0
        %4086 = vperm.xlu0 %4085, %v4012
        %v4087 = vpop.permute.xlu0 %4086
        %4088 = vset.pattern.permute.xlu0 0
        %4089 = vperm.xlu0 %4088, %v4013
        %v4090 = vpop.permute.xlu0 %4089
        %4091 = vset.pattern.permute.xlu0 0
        %4092 = vperm.xlu0 %4091, %v4014
        %v4093 = vpop.permute.xlu0 %4092
        %4094 = vset.pattern.permute.xlu0 0
        %4095 = vperm.xlu0 %4094, %v4015
        %v4096 = vpop.permute.xlu0 %4095
        %4097 = vset.pattern.permute.xlu0 0
        %4098 = vperm.xlu0 %4097, %v4016
        %v4099 = vpop.permute.xlu0 %4098
        %4100 = vset.pattern.permute.xlu0 0
        %4101 = vperm.xlu0 %4100, %v4017
        %v4102 = vpop.permute.xlu0 %4101
        %4103 = vset.pattern.permute.xlu0 0
        %4104 = vperm.xlu0 %4103, %v4018
        %v4105 = vpop.permute.xlu0 %4104
        %4106 = vset.pattern.permute.xlu0 0
        %4107 = vperm.xlu0 %4106, %v4019
        %v4108 = vpop.permute.xlu0 %4107
        %4109 = vset.pattern.permute.xlu0 0
        %4110 = vperm.xlu0 %4109, %v4020
        %v4111 = vpop.permute.xlu0 %4110
        %4112 = vset.pattern.permute.xlu0 0
        %4113 = vperm.xlu0 %4112, %v4021
        %v4114 = vpop.permute.xlu0 %4113
        %4115 = vset.pattern.permute.xlu0 0
        %4116 = vperm.xlu0 %4115, %v4022
        %v4117 = vpop.permute.xlu0 %4116
        %4118 = vset.pattern.permute.xlu0 0
        %4119 = vperm.xlu0 %4118, %v4023
        %v4120 = vpop.permute.xlu0 %4119
        %4121 = vset.pattern.permute.xlu0 0
        %4122 = vperm.xlu0 %4121, %v4024
        %v4123 = vpop.permute.xlu0 %4122
        %4124 = vset.pattern.permute.xlu0 0
        %4125 = vperm.xlu0 %4124, %v4025
        %v4126 = vpop.permute.xlu0 %4125
        %4127 = vset.pattern.permute.xlu0 0
        %4128 = vperm.xlu0 %4127, %v4026
        %v4129 = vpop.permute.xlu0 %4128
        %4130 = vset.pattern.permute.xlu0 0
        %4131 = vperm.xlu0 %4130, %v4027
        %v4132 = vpop.permute.xlu0 %4131
        %4133 = vset.pattern.permute.xlu0 0
        %4134 = vperm.xlu0 %4133, %v4028
        %v4135 = vpop.permute.xlu0 %4134
        %4136 = vset.pattern.permute.xlu0 0
        %4137 = vperm.xlu0 %4136, %v4029
        %v4138 = vpop.permute.xlu0 %4137
        %4139 = vset.pattern.permute.xlu0 0
        %4140 = vperm.xlu0 %4139, %v4030
        %v4141 = vpop.permute.xlu0 %4140
        %4142 = vset.pattern.permute.xlu0 0
        %4143 = vperm.xlu0 %4142, %v4031
        %v4144 = vpop.permute.xlu0 %4143
        %4145 = vset.pattern.permute.xlu0 0
        %4146 = vperm.xlu0 %4145, %v4032
        %v4147 = vpop.permute.xlu0 %4146
        %4148 = vset.pattern.permute.xlu0 0
        %4149 = vperm.xlu0 %4148, %v4033
        %v4150 = vpop.permute.xlu0 %4149
        %4151 = vset.pattern.permute.xlu0 0
        %4152 = vperm.xlu0 %4151, %v4034
        %v4153 = vpop.permute.xlu0 %4152
        %4154 = vset.pattern.permute.xlu0 0
        %4155 = vperm.xlu0 %4154, %v4035
        %v4156 = vpop.permute.xlu0 %4155
        %4157 = vset.pattern.permute.xlu0 0
        %4158 = vperm.xlu0 %4157, %v4036
        %v4159 = vpop.permute.xlu0 %4158
        %4160 = vset.pattern.permute.xlu0 0
        %4161 = vperm.xlu0 %4160, %v4037
        %v4162 = vpop.permute.xlu0 %4161
        %4163 = vset.pattern.permute.xlu0 0
        %4164 = vperm.xlu0 %4163, %v4038
        %v4165 = vpop.permute.xlu0 %4164
        %4166 = vset.pattern.permute.xlu0 0
        %4167 = vperm.xlu0 %4166, %v4039
        %v4168 = vpop.permute.xlu0 %4167
        %4169 = vset.pattern.permute.xlu0 0
        %4170 = vperm.xlu0 %4169, %v4040
        %v4171 = vpop.permute.xlu0 %4170
        %4172 = vset.pattern.permute.xlu0 0
        %4173 = vperm.xlu0 %4172, %v4041
        %v4174 = vpop.permute.xlu0 %4173
        %4175 = vset.pattern.permute.xlu0 0
        %4176 = vperm.xlu0 %4175, %v4042
        %v4177 = vpop.permute.xlu0 %4176
        %4178 = vset.pattern.permute.xlu0 0
        %4179 = vperm.xlu0 %4178, %v4043
        %v4180 = vpop.permute.xlu0 %4179
        %vm4181 = vcmp.eq.s32.totalorder %v4045, %v4087
        %vm4182 = vcmp.eq.s32.totalorder %v4046, %v4087
        %vm4183 = vcmp.eq.s32.totalorder %v4047, %v4087
        %vm4184 = vcmp.eq.s32.totalorder %v4048, %v4087
        %vm4185 = vcmp.eq.s32.totalorder %v4049, %v4087
        %vm4186 = vcmp.eq.s32.totalorder %v4050, %v4087
        %vm4187 = vcmp.eq.s32.totalorder %v4051, %v4087
        %vm4188 = vcmp.eq.s32.totalorder %v4052, %v4087
        %vm4189 = vcmp.eq.s32.totalorder %v4045, %v4090
        %vm4190 = vcmp.eq.s32.totalorder %v4046, %v4090
        %vm4191 = vcmp.eq.s32.totalorder %v4047, %v4090
        %vm4192 = vcmp.eq.s32.totalorder %v4048, %v4090
        %vm4193 = vcmp.eq.s32.totalorder %v4049, %v4090
        %vm4194 = vcmp.eq.s32.totalorder %v4050, %v4090
        %vm4195 = vcmp.eq.s32.totalorder %v4051, %v4090
        %vm4196 = vcmp.eq.s32.totalorder %v4052, %v4090
        %vm4197 = vcmp.eq.s32.totalorder %v4045, %v4093
        %vm4198 = vcmp.eq.s32.totalorder %v4046, %v4093
        %vm4199 = vcmp.eq.s32.totalorder %v4047, %v4093
        %vm4200 = vcmp.eq.s32.totalorder %v4048, %v4093
        %vm4201 = vcmp.eq.s32.totalorder %v4049, %v4093
        %vm4202 = vcmp.eq.s32.totalorder %v4050, %v4093
        %vm4203 = vcmp.eq.s32.totalorder %v4051, %v4093
        %vm4204 = vcmp.eq.s32.totalorder %v4052, %v4093
        %vm4205 = vcmp.eq.s32.totalorder %v4045, %v4096
        %vm4206 = vcmp.eq.s32.totalorder %v4046, %v4096
        %vm4207 = vcmp.eq.s32.totalorder %v4047, %v4096
        %vm4208 = vcmp.eq.s32.totalorder %v4048, %v4096
        %vm4209 = vcmp.eq.s32.totalorder %v4049, %v4096
        %vm4210 = vcmp.eq.s32.totalorder %v4050, %v4096
        %vm4211 = vcmp.eq.s32.totalorder %v4051, %v4096
        %vm4212 = vcmp.eq.s32.totalorder %v4052, %v4096
        %vm4213 = vcmp.eq.s32.totalorder %v4045, %v4099
        %vm4214 = vcmp.eq.s32.totalorder %v4046, %v4099
        %vm4215 = vcmp.eq.s32.totalorder %v4047, %v4099
        %vm4216 = vcmp.eq.s32.totalorder %v4048, %v4099
        %vm4217 = vcmp.eq.s32.totalorder %v4049, %v4099
        %vm4218 = vcmp.eq.s32.totalorder %v4050, %v4099
        %vm4219 = vcmp.eq.s32.totalorder %v4051, %v4099
        %vm4220 = vcmp.eq.s32.totalorder %v4052, %v4099
        %vm4221 = vcmp.eq.s32.totalorder %v4045, %v4102
        %vm4222 = vcmp.eq.s32.totalorder %v4046, %v4102
        %vm4223 = vcmp.eq.s32.totalorder %v4047, %v4102
        %vm4224 = vcmp.eq.s32.totalorder %v4048, %v4102
        %vm4225 = vcmp.eq.s32.totalorder %v4049, %v4102
        %vm4226 = vcmp.eq.s32.totalorder %v4050, %v4102
        %vm4227 = vcmp.eq.s32.totalorder %v4051, %v4102
        %vm4228 = vcmp.eq.s32.totalorder %v4052, %v4102
        %vm4229 = vcmp.eq.s32.totalorder %v4045, %v4105
        %vm4230 = vcmp.eq.s32.totalorder %v4046, %v4105
        %vm4231 = vcmp.eq.s32.totalorder %v4047, %v4105
        %vm4232 = vcmp.eq.s32.totalorder %v4048, %v4105
        %vm4233 = vcmp.eq.s32.totalorder %v4049, %v4105
        %vm4234 = vcmp.eq.s32.totalorder %v4050, %v4105
        %vm4235 = vcmp.eq.s32.totalorder %v4051, %v4105
        %vm4236 = vcmp.eq.s32.totalorder %v4052, %v4105
        %vm4237 = vcmp.eq.s32.totalorder %v4045, %v4108
        %vm4238 = vcmp.eq.s32.totalorder %v4046, %v4108
        %vm4239 = vcmp.eq.s32.totalorder %v4047, %v4108
        %vm4240 = vcmp.eq.s32.totalorder %v4048, %v4108
        %vm4241 = vcmp.eq.s32.totalorder %v4049, %v4108
        %vm4242 = vcmp.eq.s32.totalorder %v4050, %v4108
        %vm4243 = vcmp.eq.s32.totalorder %v4051, %v4108
        %vm4244 = vcmp.eq.s32.totalorder %v4052, %v4108
        %vm4245 = vcmp.eq.s32.totalorder %v4045, %v4111
        %vm4246 = vcmp.eq.s32.totalorder %v4046, %v4111
        %vm4247 = vcmp.eq.s32.totalorder %v4047, %v4111
        %vm4248 = vcmp.eq.s32.totalorder %v4048, %v4111
        %vm4249 = vcmp.eq.s32.totalorder %v4049, %v4111
        %vm4250 = vcmp.eq.s32.totalorder %v4050, %v4111
        %vm4251 = vcmp.eq.s32.totalorder %v4051, %v4111
        %vm4252 = vcmp.eq.s32.totalorder %v4052, %v4111
        %vm4253 = vcmp.eq.s32.totalorder %v4045, %v4114
        %vm4254 = vcmp.eq.s32.totalorder %v4046, %v4114
        %vm4255 = vcmp.eq.s32.totalorder %v4047, %v4114
        %vm4256 = vcmp.eq.s32.totalorder %v4048, %v4114
        %vm4257 = vcmp.eq.s32.totalorder %v4049, %v4114
        %vm4258 = vcmp.eq.s32.totalorder %v4050, %v4114
        %vm4259 = vcmp.eq.s32.totalorder %v4051, %v4114
        %vm4260 = vcmp.eq.s32.totalorder %v4052, %v4114
        %vm4261 = vcmp.eq.s32.totalorder %v4045, %v4117
        %vm4262 = vcmp.eq.s32.totalorder %v4046, %v4117
        %vm4263 = vcmp.eq.s32.totalorder %v4047, %v4117
        %vm4264 = vcmp.eq.s32.totalorder %v4048, %v4117
        %vm4265 = vcmp.eq.s32.totalorder %v4049, %v4117
        %vm4266 = vcmp.eq.s32.totalorder %v4050, %v4117
        %vm4267 = vcmp.eq.s32.totalorder %v4051, %v4117
        %vm4268 = vcmp.eq.s32.totalorder %v4052, %v4117
        %vm4269 = vcmp.eq.s32.totalorder %v4045, %v4120
        %vm4270 = vcmp.eq.s32.totalorder %v4046, %v4120
        %vm4271 = vcmp.eq.s32.totalorder %v4047, %v4120
        %vm4272 = vcmp.eq.s32.totalorder %v4048, %v4120
        %vm4273 = vcmp.eq.s32.totalorder %v4049, %v4120
        %vm4274 = vcmp.eq.s32.totalorder %v4050, %v4120
        %vm4275 = vcmp.eq.s32.totalorder %v4051, %v4120
        %vm4276 = vcmp.eq.s32.totalorder %v4052, %v4120
        %vm4277 = vcmp.eq.s32.totalorder %v4045, %v4123
        %vm4278 = vcmp.eq.s32.totalorder %v4046, %v4123
        %vm4279 = vcmp.eq.s32.totalorder %v4047, %v4123
        %vm4280 = vcmp.eq.s32.totalorder %v4048, %v4123
        %vm4281 = vcmp.eq.s32.totalorder %v4049, %v4123
        %vm4282 = vcmp.eq.s32.totalorder %v4050, %v4123
        %vm4283 = vcmp.eq.s32.totalorder %v4051, %v4123
        %vm4284 = vcmp.eq.s32.totalorder %v4052, %v4123
        %vm4285 = vcmp.eq.s32.totalorder %v4045, %v4126
        %vm4286 = vcmp.eq.s32.totalorder %v4046, %v4126
        %vm4287 = vcmp.eq.s32.totalorder %v4047, %v4126
        %vm4288 = vcmp.eq.s32.totalorder %v4048, %v4126
        %vm4289 = vcmp.eq.s32.totalorder %v4049, %v4126
        %vm4290 = vcmp.eq.s32.totalorder %v4050, %v4126
        %vm4291 = vcmp.eq.s32.totalorder %v4051, %v4126
        %vm4292 = vcmp.eq.s32.totalorder %v4052, %v4126
        %vm4293 = vcmp.eq.s32.totalorder %v4045, %v4129
        %vm4294 = vcmp.eq.s32.totalorder %v4046, %v4129
        %vm4295 = vcmp.eq.s32.totalorder %v4047, %v4129
        %vm4296 = vcmp.eq.s32.totalorder %v4048, %v4129
        %vm4297 = vcmp.eq.s32.totalorder %v4049, %v4129
        %vm4298 = vcmp.eq.s32.totalorder %v4050, %v4129
        %vm4299 = vcmp.eq.s32.totalorder %v4051, %v4129
        %vm4300 = vcmp.eq.s32.totalorder %v4052, %v4129
        %vm4301 = vcmp.eq.s32.totalorder %v4045, %v4132
        %vm4302 = vcmp.eq.s32.totalorder %v4046, %v4132
        %vm4303 = vcmp.eq.s32.totalorder %v4047, %v4132
        %vm4304 = vcmp.eq.s32.totalorder %v4048, %v4132
        %vm4305 = vcmp.eq.s32.totalorder %v4049, %v4132
        %vm4306 = vcmp.eq.s32.totalorder %v4050, %v4132
        %vm4307 = vcmp.eq.s32.totalorder %v4051, %v4132
        %vm4308 = vcmp.eq.s32.totalorder %v4052, %v4132
        %vm4309 = vcmp.eq.s32.totalorder %v4045, %v4135
        %vm4310 = vcmp.eq.s32.totalorder %v4046, %v4135
        %vm4311 = vcmp.eq.s32.totalorder %v4047, %v4135
        %vm4312 = vcmp.eq.s32.totalorder %v4048, %v4135
        %vm4313 = vcmp.eq.s32.totalorder %v4049, %v4135
        %vm4314 = vcmp.eq.s32.totalorder %v4050, %v4135
        %vm4315 = vcmp.eq.s32.totalorder %v4051, %v4135
        %vm4316 = vcmp.eq.s32.totalorder %v4052, %v4135
        %vm4317 = vcmp.eq.s32.totalorder %v4045, %v4138
        %vm4318 = vcmp.eq.s32.totalorder %v4046, %v4138
        %vm4319 = vcmp.eq.s32.totalorder %v4047, %v4138
        %vm4320 = vcmp.eq.s32.totalorder %v4048, %v4138
        %vm4321 = vcmp.eq.s32.totalorder %v4049, %v4138
        %vm4322 = vcmp.eq.s32.totalorder %v4050, %v4138
        %vm4323 = vcmp.eq.s32.totalorder %v4051, %v4138
        %vm4324 = vcmp.eq.s32.totalorder %v4052, %v4138
        %vm4325 = vcmp.eq.s32.totalorder %v4045, %v4141
        %vm4326 = vcmp.eq.s32.totalorder %v4046, %v4141
        %vm4327 = vcmp.eq.s32.totalorder %v4047, %v4141
        %vm4328 = vcmp.eq.s32.totalorder %v4048, %v4141
        %vm4329 = vcmp.eq.s32.totalorder %v4049, %v4141
        %vm4330 = vcmp.eq.s32.totalorder %v4050, %v4141
        %vm4331 = vcmp.eq.s32.totalorder %v4051, %v4141
        %vm4332 = vcmp.eq.s32.totalorder %v4052, %v4141
        %vm4333 = vcmp.eq.s32.totalorder %v4045, %v4144
        %vm4334 = vcmp.eq.s32.totalorder %v4046, %v4144
        %vm4335 = vcmp.eq.s32.totalorder %v4047, %v4144
        %vm4336 = vcmp.eq.s32.totalorder %v4048, %v4144
        %vm4337 = vcmp.eq.s32.totalorder %v4049, %v4144
        %vm4338 = vcmp.eq.s32.totalorder %v4050, %v4144
        %vm4339 = vcmp.eq.s32.totalorder %v4051, %v4144
        %vm4340 = vcmp.eq.s32.totalorder %v4052, %v4144
        %vm4341 = vcmp.eq.s32.totalorder %v4045, %v4147
        %vm4342 = vcmp.eq.s32.totalorder %v4046, %v4147
        %vm4343 = vcmp.eq.s32.totalorder %v4047, %v4147
        %vm4344 = vcmp.eq.s32.totalorder %v4048, %v4147
        %vm4345 = vcmp.eq.s32.totalorder %v4049, %v4147
        %vm4346 = vcmp.eq.s32.totalorder %v4050, %v4147
        %vm4347 = vcmp.eq.s32.totalorder %v4051, %v4147
        %vm4348 = vcmp.eq.s32.totalorder %v4052, %v4147
        %vm4349 = vcmp.eq.s32.totalorder %v4045, %v4150
        %vm4350 = vcmp.eq.s32.totalorder %v4046, %v4150
        %vm4351 = vcmp.eq.s32.totalorder %v4047, %v4150
        %vm4352 = vcmp.eq.s32.totalorder %v4048, %v4150
        %vm4353 = vcmp.eq.s32.totalorder %v4049, %v4150
        %vm4354 = vcmp.eq.s32.totalorder %v4050, %v4150
        %vm4355 = vcmp.eq.s32.totalorder %v4051, %v4150
        %vm4356 = vcmp.eq.s32.totalorder %v4052, %v4150
        %vm4357 = vcmp.eq.s32.totalorder %v4045, %v4153
        %vm4358 = vcmp.eq.s32.totalorder %v4046, %v4153
        %vm4359 = vcmp.eq.s32.totalorder %v4047, %v4153
        %vm4360 = vcmp.eq.s32.totalorder %v4048, %v4153
        %vm4361 = vcmp.eq.s32.totalorder %v4049, %v4153
        %vm4362 = vcmp.eq.s32.totalorder %v4050, %v4153
        %vm4363 = vcmp.eq.s32.totalorder %v4051, %v4153
        %vm4364 = vcmp.eq.s32.totalorder %v4052, %v4153
        %vm4365 = vcmp.eq.s32.totalorder %v4045, %v4156
        %vm4366 = vcmp.eq.s32.totalorder %v4046, %v4156
        %vm4367 = vcmp.eq.s32.totalorder %v4047, %v4156
        %vm4368 = vcmp.eq.s32.totalorder %v4048, %v4156
        %vm4369 = vcmp.eq.s32.totalorder %v4049, %v4156
        %vm4370 = vcmp.eq.s32.totalorder %v4050, %v4156
        %vm4371 = vcmp.eq.s32.totalorder %v4051, %v4156
        %vm4372 = vcmp.eq.s32.totalorder %v4052, %v4156
        %vm4373 = vcmp.eq.s32.totalorder %v4045, %v4159
        %vm4374 = vcmp.eq.s32.totalorder %v4046, %v4159
        %vm4375 = vcmp.eq.s32.totalorder %v4047, %v4159
        %vm4376 = vcmp.eq.s32.totalorder %v4048, %v4159
        %vm4377 = vcmp.eq.s32.totalorder %v4049, %v4159
        %vm4378 = vcmp.eq.s32.totalorder %v4050, %v4159
        %vm4379 = vcmp.eq.s32.totalorder %v4051, %v4159
        %vm4380 = vcmp.eq.s32.totalorder %v4052, %v4159
        %vm4381 = vcmp.eq.s32.totalorder %v4045, %v4162
        %vm4382 = vcmp.eq.s32.totalorder %v4046, %v4162
        %vm4383 = vcmp.eq.s32.totalorder %v4047, %v4162
        %vm4384 = vcmp.eq.s32.totalorder %v4048, %v4162
        %vm4385 = vcmp.eq.s32.totalorder %v4049, %v4162
        %vm4386 = vcmp.eq.s32.totalorder %v4050, %v4162
        %vm4387 = vcmp.eq.s32.totalorder %v4051, %v4162
        %vm4388 = vcmp.eq.s32.totalorder %v4052, %v4162
        %vm4389 = vcmp.eq.s32.totalorder %v4045, %v4165
        %vm4390 = vcmp.eq.s32.totalorder %v4046, %v4165
        %vm4391 = vcmp.eq.s32.totalorder %v4047, %v4165
        %vm4392 = vcmp.eq.s32.totalorder %v4048, %v4165
        %vm4393 = vcmp.eq.s32.totalorder %v4049, %v4165
        %vm4394 = vcmp.eq.s32.totalorder %v4050, %v4165
        %vm4395 = vcmp.eq.s32.totalorder %v4051, %v4165
        %vm4396 = vcmp.eq.s32.totalorder %v4052, %v4165
        %vm4397 = vcmp.eq.s32.totalorder %v4045, %v4168
        %vm4398 = vcmp.eq.s32.totalorder %v4046, %v4168
        %vm4399 = vcmp.eq.s32.totalorder %v4047, %v4168
        %vm4400 = vcmp.eq.s32.totalorder %v4048, %v4168
        %vm4401 = vcmp.eq.s32.totalorder %v4049, %v4168
        %vm4402 = vcmp.eq.s32.totalorder %v4050, %v4168
        %vm4403 = vcmp.eq.s32.totalorder %v4051, %v4168
        %vm4404 = vcmp.eq.s32.totalorder %v4052, %v4168
        %vm4405 = vcmp.eq.s32.totalorder %v4045, %v4171
        %vm4406 = vcmp.eq.s32.totalorder %v4046, %v4171
        %vm4407 = vcmp.eq.s32.totalorder %v4047, %v4171
        %vm4408 = vcmp.eq.s32.totalorder %v4048, %v4171
        %vm4409 = vcmp.eq.s32.totalorder %v4049, %v4171
        %vm4410 = vcmp.eq.s32.totalorder %v4050, %v4171
        %vm4411 = vcmp.eq.s32.totalorder %v4051, %v4171
        %vm4412 = vcmp.eq.s32.totalorder %v4052, %v4171
        %vm4413 = vcmp.eq.s32.totalorder %v4045, %v4174
        %vm4414 = vcmp.eq.s32.totalorder %v4046, %v4174
        %vm4415 = vcmp.eq.s32.totalorder %v4047, %v4174
        %vm4416 = vcmp.eq.s32.totalorder %v4048, %v4174
        %vm4417 = vcmp.eq.s32.totalorder %v4049, %v4174
        %vm4418 = vcmp.eq.s32.totalorder %v4050, %v4174
        %vm4419 = vcmp.eq.s32.totalorder %v4051, %v4174
        %vm4420 = vcmp.eq.s32.totalorder %v4052, %v4174
        %vm4421 = vcmp.eq.s32.totalorder %v4045, %v4177
        %vm4422 = vcmp.eq.s32.totalorder %v4046, %v4177
        %vm4423 = vcmp.eq.s32.totalorder %v4047, %v4177
        %vm4424 = vcmp.eq.s32.totalorder %v4048, %v4177
        %vm4425 = vcmp.eq.s32.totalorder %v4049, %v4177
        %vm4426 = vcmp.eq.s32.totalorder %v4050, %v4177
        %vm4427 = vcmp.eq.s32.totalorder %v4051, %v4177
        %vm4428 = vcmp.eq.s32.totalorder %v4052, %v4177
        %vm4429 = vcmp.eq.s32.totalorder %v4045, %v4180
        %vm4430 = vcmp.eq.s32.totalorder %v4046, %v4180
        %vm4431 = vcmp.eq.s32.totalorder %v4047, %v4180
        %vm4432 = vcmp.eq.s32.totalorder %v4048, %v4180
        %vm4433 = vcmp.eq.s32.totalorder %v4049, %v4180
        %vm4434 = vcmp.eq.s32.totalorder %v4050, %v4180
        %vm4435 = vcmp.eq.s32.totalorder %v4051, %v4180
        %vm4436 = vcmp.eq.s32.totalorder %v4052, %v4180
        %v4437 = vsel %vm4181, %v3241, 0.0
        %v4438 = vsel %vm4182, %v3243, 0.0
        %v4439 = vsel %vm4183, %v3434, 0.0
        %v4440 = vsel %vm4184, %v3436, 0.0
        %v4441 = vsel %vm4185, %v3627, 0.0
        %v4442 = vsel %vm4186, %v3629, 0.0
        %v4443 = vsel %vm4187, %v3820, 0.0
        %v4444 = vsel %vm4188, %v3822, 0.0
        %v4445 = vsel %vm4189, %v3245, 0.0
        %v4446 = vsel %vm4190, %v3247, 0.0
        %v4447 = vsel %vm4191, %v3438, 0.0
        %v4448 = vsel %vm4192, %v3440, 0.0
        %v4449 = vsel %vm4193, %v3631, 0.0
        %v4450 = vsel %vm4194, %v3633, 0.0
        %v4451 = vsel %vm4195, %v3824, 0.0
        %v4452 = vsel %vm4196, %v3826, 0.0
        %v4453 = vsel %vm4197, %v3251, 0.0
        %v4454 = vsel %vm4198, %v3253, 0.0
        %v4455 = vsel %vm4199, %v3444, 0.0
        %v4456 = vsel %vm4200, %v3446, 0.0
        %v4457 = vsel %vm4201, %v3637, 0.0
        %v4458 = vsel %vm4202, %v3639, 0.0
        %v4459 = vsel %vm4203, %v3830, 0.0
        %v4460 = vsel %vm4204, %v3832, 0.0
        %v4461 = vsel %vm4205, %v3255, 0.0
        %v4462 = vsel %vm4206, %v3257, 0.0
        %v4463 = vsel %vm4207, %v3448, 0.0
        %v4464 = vsel %vm4208, %v3450, 0.0
        %v4465 = vsel %vm4209, %v3641, 0.0
        %v4466 = vsel %vm4210, %v3643, 0.0
        %v4467 = vsel %vm4211, %v3834, 0.0
        %v4468 = vsel %vm4212, %v3836, 0.0
        %v4469 = vsel %vm4213, %v3261, 0.0
        %v4470 = vsel %vm4214, %v3263, 0.0
        %v4471 = vsel %vm4215, %v3454, 0.0
        %v4472 = vsel %vm4216, %v3456, 0.0
        %v4473 = vsel %vm4217, %v3647, 0.0
        %v4474 = vsel %vm4218, %v3649, 0.0
        %v4475 = vsel %vm4219, %v3840, 0.0
        %v4476 = vsel %vm4220, %v3842, 0.0
        %v4477 = vsel %vm4221, %v3265, 0.0
        %v4478 = vsel %vm4222, %v3267, 0.0
        %v4479 = vsel %vm4223, %v3458, 0.0
        %v4480 = vsel %vm4224, %v3460, 0.0
        %v4481 = vsel %vm4225, %v3651, 0.0
        %v4482 = vsel %vm4226, %v3653, 0.0
        %v4483 = vsel %vm4227, %v3844, 0.0
        %v4484 = vsel %vm4228, %v3846, 0.0
        %v4485 = vsel %vm4229, %v3271, 0.0
        %v4486 = vsel %vm4230, %v3273, 0.0
        %v4487 = vsel %vm4231, %v3464, 0.0
        %v4488 = vsel %vm4232, %v3466, 0.0
        %v4489 = vsel %vm4233, %v3657, 0.0
        %v4490 = vsel %vm4234, %v3659, 0.0
        %v4491 = vsel %vm4235, %v3850, 0.0
        %v4492 = vsel %vm4236, %v3852, 0.0
        %v4493 = vsel %vm4237, %v3275, 0.0
        %v4494 = vsel %vm4238, %v3277, 0.0
        %v4495 = vsel %vm4239, %v3468, 0.0
        %v4496 = vsel %vm4240, %v3470, 0.0
        %v4497 = vsel %vm4241, %v3661, 0.0
        %v4498 = vsel %vm4242, %v3663, 0.0
        %v4499 = vsel %vm4243, %v3854, 0.0
        %v4500 = vsel %vm4244, %v3856, 0.0
        %v4501 = vsel %vm4245, %v3281, 0.0
        %v4502 = vsel %vm4246, %v3283, 0.0
        %v4503 = vsel %vm4247, %v3474, 0.0
        %v4504 = vsel %vm4248, %v3476, 0.0
        %v4505 = vsel %vm4249, %v3667, 0.0
        %v4506 = vsel %vm4250, %v3669, 0.0
        %v4507 = vsel %vm4251, %v3860, 0.0
        %v4508 = vsel %vm4252, %v3862, 0.0
        %v4509 = vsel %vm4253, %v3285, 0.0
        %v4510 = vsel %vm4254, %v3287, 0.0
        %v4511 = vsel %vm4255, %v3478, 0.0
        %v4512 = vsel %vm4256, %v3480, 0.0
        %v4513 = vsel %vm4257, %v3671, 0.0
        %v4514 = vsel %vm4258, %v3673, 0.0
        %v4515 = vsel %vm4259, %v3864, 0.0
        %v4516 = vsel %vm4260, %v3866, 0.0
        %v4517 = vsel %vm4261, %v3291, 0.0
        %v4518 = vsel %vm4262, %v3293, 0.0
        %v4519 = vsel %vm4263, %v3484, 0.0
        %v4520 = vsel %vm4264, %v3486, 0.0
        %v4521 = vsel %vm4265, %v3677, 0.0
        %v4522 = vsel %vm4266, %v3679, 0.0
        %v4523 = vsel %vm4267, %v3870, 0.0
        %v4524 = vsel %vm4268, %v3872, 0.0
        %v4525 = vsel %vm4269, %v3295, 0.0
        %v4526 = vsel %vm4270, %v3297, 0.0
        %v4527 = vsel %vm4271, %v3488, 0.0
        %v4528 = vsel %vm4272, %v3490, 0.0
        %v4529 = vsel %vm4273, %v3681, 0.0
        %v4530 = vsel %vm4274, %v3683, 0.0
        %v4531 = vsel %vm4275, %v3874, 0.0
        %v4532 = vsel %vm4276, %v3876, 0.0
        %v4533 = vsel %vm4277, %v3301, 0.0
        %v4534 = vsel %vm4278, %v3303, 0.0
        %v4535 = vsel %vm4279, %v3494, 0.0
        %v4536 = vsel %vm4280, %v3496, 0.0
        %v4537 = vsel %vm4281, %v3687, 0.0
        %v4538 = vsel %vm4282, %v3689, 0.0
        %v4539 = vsel %vm4283, %v3880, 0.0
        %v4540 = vsel %vm4284, %v3882, 0.0
        %v4541 = vsel %vm4285, %v3305, 0.0
        %v4542 = vsel %vm4286, %v3307, 0.0
        %v4543 = vsel %vm4287, %v3498, 0.0
        %v4544 = vsel %vm4288, %v3500, 0.0
        %v4545 = vsel %vm4289, %v3691, 0.0
        %v4546 = vsel %vm4290, %v3693, 0.0
        %v4547 = vsel %vm4291, %v3884, 0.0
        %v4548 = vsel %vm4292, %v3886, 0.0
        %v4549 = vsel %vm4293, %v3311, 0.0
        %v4550 = vsel %vm4294, %v3313, 0.0
        %v4551 = vsel %vm4295, %v3504, 0.0
        %v4552 = vsel %vm4296, %v3506, 0.0
        %v4553 = vsel %vm4297, %v3697, 0.0
        %v4554 = vsel %vm4298, %v3699, 0.0
        %v4555 = vsel %vm4299, %v3890, 0.0
        %v4556 = vsel %vm4300, %v3892, 0.0
        %v4557 = vsel %vm4301, %v3315, 0.0
        %v4558 = vsel %vm4302, %v3317, 0.0
        %v4559 = vsel %vm4303, %v3508, 0.0
        %v4560 = vsel %vm4304, %v3510, 0.0
        %v4561 = vsel %vm4305, %v3701, 0.0
        %v4562 = vsel %vm4306, %v3703, 0.0
        %v4563 = vsel %vm4307, %v3894, 0.0
        %v4564 = vsel %vm4308, %v3896, 0.0
        %v4565 = vsel %vm4309, %v3321, 0.0
        %v4566 = vsel %vm4310, %v3323, 0.0
        %v4567 = vsel %vm4311, %v3514, 0.0
        %v4568 = vsel %vm4312, %v3516, 0.0
        %v4569 = vsel %vm4313, %v3707, 0.0
        %v4570 = vsel %vm4314, %v3709, 0.0
        %v4571 = vsel %vm4315, %v3900, 0.0
        %v4572 = vsel %vm4316, %v3902, 0.0
        %v4573 = vsel %vm4317, %v3325, 0.0
        %v4574 = vsel %vm4318, %v3327, 0.0
        %v4575 = vsel %vm4319, %v3518, 0.0
        %v4576 = vsel %vm4320, %v3520, 0.0
        %v4577 = vsel %vm4321, %v3711, 0.0
        %v4578 = vsel %vm4322, %v3713, 0.0
        %v4579 = vsel %vm4323, %v3904, 0.0
        %v4580 = vsel %vm4324, %v3906, 0.0
        %v4581 = vsel %vm4325, %v3331, 0.0
        %v4582 = vsel %vm4326, %v3333, 0.0
        %v4583 = vsel %vm4327, %v3524, 0.0
        %v4584 = vsel %vm4328, %v3526, 0.0
        %v4585 = vsel %vm4329, %v3717, 0.0
        %v4586 = vsel %vm4330, %v3719, 0.0
        %v4587 = vsel %vm4331, %v3910, 0.0
        %v4588 = vsel %vm4332, %v3912, 0.0
        %v4589 = vsel %vm4333, %v3335, 0.0
        %v4590 = vsel %vm4334, %v3337, 0.0
        %v4591 = vsel %vm4335, %v3528, 0.0
        %v4592 = vsel %vm4336, %v3530, 0.0
        %v4593 = vsel %vm4337, %v3721, 0.0
        %v4594 = vsel %vm4338, %v3723, 0.0
        %v4595 = vsel %vm4339, %v3914, 0.0
        %v4596 = vsel %vm4340, %v3916, 0.0
        %v4597 = vsel %vm4341, %v3341, 0.0
        %v4598 = vsel %vm4342, %v3343, 0.0
        %v4599 = vsel %vm4343, %v3534, 0.0
        %v4600 = vsel %vm4344, %v3536, 0.0
        %v4601 = vsel %vm4345, %v3727, 0.0
        %v4602 = vsel %vm4346, %v3729, 0.0
        %v4603 = vsel %vm4347, %v3920, 0.0
        %v4604 = vsel %vm4348, %v3922, 0.0
        %v4605 = vsel %vm4349, %v3345, 0.0
        %v4606 = vsel %vm4350, %v3347, 0.0
        %v4607 = vsel %vm4351, %v3538, 0.0
        %v4608 = vsel %vm4352, %v3540, 0.0
        %v4609 = vsel %vm4353, %v3731, 0.0
        %v4610 = vsel %vm4354, %v3733, 0.0
        %v4611 = vsel %vm4355, %v3924, 0.0
        %v4612 = vsel %vm4356, %v3926, 0.0
        %v4613 = vsel %vm4357, %v3351, 0.0
        %v4614 = vsel %vm4358, %v3353, 0.0
        %v4615 = vsel %vm4359, %v3544, 0.0
        %v4616 = vsel %vm4360, %v3546, 0.0
        %v4617 = vsel %vm4361, %v3737, 0.0
        %v4618 = vsel %vm4362, %v3739, 0.0
        %v4619 = vsel %vm4363, %v3930, 0.0
        %v4620 = vsel %vm4364, %v3932, 0.0
        %v4621 = vsel %vm4365, %v3355, 0.0
        %v4622 = vsel %vm4366, %v3357, 0.0
        %v4623 = vsel %vm4367, %v3548, 0.0
        %v4624 = vsel %vm4368, %v3550, 0.0
        %v4625 = vsel %vm4369, %v3741, 0.0
        %v4626 = vsel %vm4370, %v3743, 0.0
        %v4627 = vsel %vm4371, %v3934, 0.0
        %v4628 = vsel %vm4372, %v3936, 0.0
        %v4629 = vsel %vm4373, %v3361, 0.0
        %v4630 = vsel %vm4374, %v3363, 0.0
        %v4631 = vsel %vm4375, %v3554, 0.0
        %v4632 = vsel %vm4376, %v3556, 0.0
        %v4633 = vsel %vm4377, %v3747, 0.0
        %v4634 = vsel %vm4378, %v3749, 0.0
        %v4635 = vsel %vm4379, %v3940, 0.0
        %v4636 = vsel %vm4380, %v3942, 0.0
        %v4637 = vsel %vm4381, %v3365, 0.0
        %v4638 = vsel %vm4382, %v3367, 0.0
        %v4639 = vsel %vm4383, %v3558, 0.0
        %v4640 = vsel %vm4384, %v3560, 0.0
        %v4641 = vsel %vm4385, %v3751, 0.0
        %v4642 = vsel %vm4386, %v3753, 0.0
        %v4643 = vsel %vm4387, %v3944, 0.0
        %v4644 = vsel %vm4388, %v3946, 0.0
        %v4645 = vsel %vm4389, %v3371, 0.0
        %v4646 = vsel %vm4390, %v3373, 0.0
        %v4647 = vsel %vm4391, %v3564, 0.0
        %v4648 = vsel %vm4392, %v3566, 0.0
        %v4649 = vsel %vm4393, %v3757, 0.0
        %v4650 = vsel %vm4394, %v3759, 0.0
        %v4651 = vsel %vm4395, %v3950, 0.0
        %v4652 = vsel %vm4396, %v3952, 0.0
        %v4653 = vsel %vm4397, %v3375, 0.0
        %v4654 = vsel %vm4398, %v3377, 0.0
        %v4655 = vsel %vm4399, %v3568, 0.0
        %v4656 = vsel %vm4400, %v3570, 0.0
        %v4657 = vsel %vm4401, %v3761, 0.0
        %v4658 = vsel %vm4402, %v3763, 0.0
        %v4659 = vsel %vm4403, %v3954, 0.0
        %v4660 = vsel %vm4404, %v3956, 0.0
        %v4661 = vsel %vm4405, %v3381, 0.0
        %v4662 = vsel %vm4406, %v3383, 0.0
        %v4663 = vsel %vm4407, %v3574, 0.0
        %v4664 = vsel %vm4408, %v3576, 0.0
        %v4665 = vsel %vm4409, %v3767, 0.0
        %v4666 = vsel %vm4410, %v3769, 0.0
        %v4667 = vsel %vm4411, %v3960, 0.0
        %v4668 = vsel %vm4412, %v3962, 0.0
        %v4669 = vsel %vm4413, %v3385, 0.0
        %v4670 = vsel %vm4414, %v3387, 0.0
        %v4671 = vsel %vm4415, %v3578, 0.0
        %v4672 = vsel %vm4416, %v3580, 0.0
        %v4673 = vsel %vm4417, %v3771, 0.0
        %v4674 = vsel %vm4418, %v3773, 0.0
        %v4675 = vsel %vm4419, %v3964, 0.0
        %v4676 = vsel %vm4420, %v3966, 0.0
        %v4677 = vsel %vm4421, %v3391, 0.0
        %v4678 = vsel %vm4422, %v3393, 0.0
        %v4679 = vsel %vm4423, %v3584, 0.0
        %v4680 = vsel %vm4424, %v3586, 0.0
        %v4681 = vsel %vm4425, %v3777, 0.0
        %v4682 = vsel %vm4426, %v3779, 0.0
        %v4683 = vsel %vm4427, %v3970, 0.0
        %v4684 = vsel %vm4428, %v3972, 0.0
        %v4685 = vsel %vm4429, %v3395, 0.0
        %v4686 = vsel %vm4430, %v3397, 0.0
        %v4687 = vsel %vm4431, %v3588, 0.0
        %v4688 = vsel %vm4432, %v3590, 0.0
        %v4689 = vsel %vm4433, %v3781, 0.0
        %v4690 = vsel %vm4434, %v3783, 0.0
        %v4691 = vsel %vm4435, %v3974, 0.0
        %v4692 = vsel %vm4436, %v3976, 0.0
        %v4693 = vadd.f32 %v4437, %v4438
        %v4694 = vadd.f32 %v4693, %v4439
        %v4695 = vadd.f32 %v4694, %v4440
        %v4696 = vadd.f32 %v4695, %v4441
        %v4697 = vadd.f32 %v4696, %v4442
        %v4698 = vadd.f32 %v4697, %v4443
        %v4699 = vadd.f32 %v4698, %v4444
        %4700 = vadd.xlane.f32.xlu0 %v4699
        %v4701 = vpop.xlane.xlu0 %4700
        %v4702 = vadd.f32 %v4445, %v4446
        %v4703 = vadd.f32 %v4702, %v4447
        %v4704 = vadd.f32 %v4703, %v4448
        %v4705 = vadd.f32 %v4704, %v4449
        %v4706 = vadd.f32 %v4705, %v4450
        %v4707 = vadd.f32 %v4706, %v4451
        %v4708 = vadd.f32 %v4707, %v4452
        %4709 = vadd.xlane.f32.xlu0 %v4708
        %v4710 = vpop.xlane.xlu0 %4709
        %v4711 = vadd.f32 %v4453, %v4454
        %v4712 = vadd.f32 %v4711, %v4455
        %v4713 = vadd.f32 %v4712, %v4456
        %v4714 = vadd.f32 %v4713, %v4457
        %v4715 = vadd.f32 %v4714, %v4458
        %v4716 = vadd.f32 %v4715, %v4459
        %v4717 = vadd.f32 %v4716, %v4460
        %4718 = vadd.xlane.f32.xlu0 %v4717
        %v4719 = vpop.xlane.xlu0 %4718
        %v4720 = vadd.f32 %v4461, %v4462
        %v4721 = vadd.f32 %v4720, %v4463
        %v4722 = vadd.f32 %v4721, %v4464
        %v4723 = vadd.f32 %v4722, %v4465
        %v4724 = vadd.f32 %v4723, %v4466
        %v4725 = vadd.f32 %v4724, %v4467
        %v4726 = vadd.f32 %v4725, %v4468
        %4727 = vadd.xlane.f32.xlu0 %v4726
        %v4728 = vpop.xlane.xlu0 %4727
        %v4729 = vadd.f32 %v4469, %v4470
        %v4730 = vadd.f32 %v4729, %v4471
        %v4731 = vadd.f32 %v4730, %v4472
        %v4732 = vadd.f32 %v4731, %v4473
        %v4733 = vadd.f32 %v4732, %v4474
        %v4734 = vadd.f32 %v4733, %v4475
        %v4735 = vadd.f32 %v4734, %v4476
        %4736 = vadd.xlane.f32.xlu0 %v4735
        %v4737 = vpop.xlane.xlu0 %4736
        %v4738 = vadd.f32 %v4477, %v4478
        %v4739 = vadd.f32 %v4738, %v4479
        %v4740 = vadd.f32 %v4739, %v4480
        %v4741 = vadd.f32 %v4740, %v4481
        %v4742 = vadd.f32 %v4741, %v4482
        %v4743 = vadd.f32 %v4742, %v4483
        %v4744 = vadd.f32 %v4743, %v4484
        %4745 = vadd.xlane.f32.xlu0 %v4744
        %v4746 = vpop.xlane.xlu0 %4745
        %v4747 = vadd.f32 %v4485, %v4486
        %v4748 = vadd.f32 %v4747, %v4487
        %v4749 = vadd.f32 %v4748, %v4488
        %v4750 = vadd.f32 %v4749, %v4489
        %v4751 = vadd.f32 %v4750, %v4490
        %v4752 = vadd.f32 %v4751, %v4491
        %v4753 = vadd.f32 %v4752, %v4492
        %4754 = vadd.xlane.f32.xlu0 %v4753
        %v4755 = vpop.xlane.xlu0 %4754
        %v4756 = vadd.f32 %v4493, %v4494
        %v4757 = vadd.f32 %v4756, %v4495
        %v4758 = vadd.f32 %v4757, %v4496
        %v4759 = vadd.f32 %v4758, %v4497
        %v4760 = vadd.f32 %v4759, %v4498
        %v4761 = vadd.f32 %v4760, %v4499
        %v4762 = vadd.f32 %v4761, %v4500
        %4763 = vadd.xlane.f32.xlu0 %v4762
        %v4764 = vpop.xlane.xlu0 %4763
        %v4765 = vadd.f32 %v4501, %v4502
        %v4766 = vadd.f32 %v4765, %v4503
        %v4767 = vadd.f32 %v4766, %v4504
        %v4768 = vadd.f32 %v4767, %v4505
        %v4769 = vadd.f32 %v4768, %v4506
        %v4770 = vadd.f32 %v4769, %v4507
        %v4771 = vadd.f32 %v4770, %v4508
        %4772 = vadd.xlane.f32.xlu0 %v4771
        %v4773 = vpop.xlane.xlu0 %4772
        %v4774 = vadd.f32 %v4509, %v4510
        %v4775 = vadd.f32 %v4774, %v4511
        %v4776 = vadd.f32 %v4775, %v4512
        %v4777 = vadd.f32 %v4776, %v4513
        %v4778 = vadd.f32 %v4777, %v4514
        %v4779 = vadd.f32 %v4778, %v4515
        %v4780 = vadd.f32 %v4779, %v4516
        %4781 = vadd.xlane.f32.xlu0 %v4780
        %v4782 = vpop.xlane.xlu0 %4781
        %v4783 = vadd.f32 %v4517, %v4518
        %v4784 = vadd.f32 %v4783, %v4519
        %v4785 = vadd.f32 %v4784, %v4520
        %v4786 = vadd.f32 %v4785, %v4521
        %v4787 = vadd.f32 %v4786, %v4522
        %v4788 = vadd.f32 %v4787, %v4523
        %v4789 = vadd.f32 %v4788, %v4524
        %4790 = vadd.xlane.f32.xlu0 %v4789
        %v4791 = vpop.xlane.xlu0 %4790
        %v4792 = vadd.f32 %v4525, %v4526
        %v4793 = vadd.f32 %v4792, %v4527
        %v4794 = vadd.f32 %v4793, %v4528
        %v4795 = vadd.f32 %v4794, %v4529
        %v4796 = vadd.f32 %v4795, %v4530
        %v4797 = vadd.f32 %v4796, %v4531
        %v4798 = vadd.f32 %v4797, %v4532
        %4799 = vadd.xlane.f32.xlu0 %v4798
        %v4800 = vpop.xlane.xlu0 %4799
        %v4801 = vadd.f32 %v4533, %v4534
        %v4802 = vadd.f32 %v4801, %v4535
        %v4803 = vadd.f32 %v4802, %v4536
        %v4804 = vadd.f32 %v4803, %v4537
        %v4805 = vadd.f32 %v4804, %v4538
        %v4806 = vadd.f32 %v4805, %v4539
        %v4807 = vadd.f32 %v4806, %v4540
        %4808 = vadd.xlane.f32.xlu0 %v4807
        %v4809 = vpop.xlane.xlu0 %4808
        %v4810 = vadd.f32 %v4541, %v4542
        %v4811 = vadd.f32 %v4810, %v4543
        %v4812 = vadd.f32 %v4811, %v4544
        %v4813 = vadd.f32 %v4812, %v4545
        %v4814 = vadd.f32 %v4813, %v4546
        %v4815 = vadd.f32 %v4814, %v4547
        %v4816 = vadd.f32 %v4815, %v4548
        %4817 = vadd.xlane.f32.xlu0 %v4816
        %v4818 = vpop.xlane.xlu0 %4817
        %v4819 = vadd.f32 %v4549, %v4550
        %v4820 = vadd.f32 %v4819, %v4551
        %v4821 = vadd.f32 %v4820, %v4552
        %v4822 = vadd.f32 %v4821, %v4553
        %v4823 = vadd.f32 %v4822, %v4554
        %v4824 = vadd.f32 %v4823, %v4555
        %v4825 = vadd.f32 %v4824, %v4556
        %4826 = vadd.xlane.f32.xlu0 %v4825
        %v4827 = vpop.xlane.xlu0 %4826
        %v4828 = vadd.f32 %v4557, %v4558
        %v4829 = vadd.f32 %v4828, %v4559
        %v4830 = vadd.f32 %v4829, %v4560
        %v4831 = vadd.f32 %v4830, %v4561
        %v4832 = vadd.f32 %v4831, %v4562
        %v4833 = vadd.f32 %v4832, %v4563
        %v4834 = vadd.f32 %v4833, %v4564
        %4835 = vadd.xlane.f32.xlu0 %v4834
        %v4836 = vpop.xlane.xlu0 %4835
        %v4837 = vadd.f32 %v4565, %v4566
        %v4838 = vadd.f32 %v4837, %v4567
        %v4839 = vadd.f32 %v4838, %v4568
        %v4840 = vadd.f32 %v4839, %v4569
        %v4841 = vadd.f32 %v4840, %v4570
        %v4842 = vadd.f32 %v4841, %v4571
        %v4843 = vadd.f32 %v4842, %v4572
        %4844 = vadd.xlane.f32.xlu0 %v4843
        %v4845 = vpop.xlane.xlu0 %4844
        %v4846 = vadd.f32 %v4573, %v4574
        %v4847 = vadd.f32 %v4846, %v4575
        %v4848 = vadd.f32 %v4847, %v4576
        %v4849 = vadd.f32 %v4848, %v4577
        %v4850 = vadd.f32 %v4849, %v4578
        %v4851 = vadd.f32 %v4850, %v4579
        %v4852 = vadd.f32 %v4851, %v4580
        %4853 = vadd.xlane.f32.xlu0 %v4852
        %v4854 = vpop.xlane.xlu0 %4853
        %v4855 = vadd.f32 %v4581, %v4582
        %v4856 = vadd.f32 %v4855, %v4583
        %v4857 = vadd.f32 %v4856, %v4584
        %v4858 = vadd.f32 %v4857, %v4585
        %v4859 = vadd.f32 %v4858, %v4586
        %v4860 = vadd.f32 %v4859, %v4587
        %v4861 = vadd.f32 %v4860, %v4588
        %4862 = vadd.xlane.f32.xlu0 %v4861
        %v4863 = vpop.xlane.xlu0 %4862
        %v4864 = vadd.f32 %v4589, %v4590
        %v4865 = vadd.f32 %v4864, %v4591
        %v4866 = vadd.f32 %v4865, %v4592
        %v4867 = vadd.f32 %v4866, %v4593
        %v4868 = vadd.f32 %v4867, %v4594
        %v4869 = vadd.f32 %v4868, %v4595
        %v4870 = vadd.f32 %v4869, %v4596
        %4871 = vadd.xlane.f32.xlu0 %v4870
        %v4872 = vpop.xlane.xlu0 %4871
        %v4873 = vadd.f32 %v4597, %v4598
        %v4874 = vadd.f32 %v4873, %v4599
        %v4875 = vadd.f32 %v4874, %v4600
        %v4876 = vadd.f32 %v4875, %v4601
        %v4877 = vadd.f32 %v4876, %v4602
        %v4878 = vadd.f32 %v4877, %v4603
        %v4879 = vadd.f32 %v4878, %v4604
        %4880 = vadd.xlane.f32.xlu0 %v4879
        %v4881 = vpop.xlane.xlu0 %4880
        %v4882 = vadd.f32 %v4605, %v4606
        %v4883 = vadd.f32 %v4882, %v4607
        %v4884 = vadd.f32 %v4883, %v4608
        %v4885 = vadd.f32 %v4884, %v4609
        %v4886 = vadd.f32 %v4885, %v4610
        %v4887 = vadd.f32 %v4886, %v4611
        %v4888 = vadd.f32 %v4887, %v4612
        %4889 = vadd.xlane.f32.xlu0 %v4888
        %v4890 = vpop.xlane.xlu0 %4889
        %v4891 = vadd.f32 %v4613, %v4614
        %v4892 = vadd.f32 %v4891, %v4615
        %v4893 = vadd.f32 %v4892, %v4616
        %v4894 = vadd.f32 %v4893, %v4617
        %v4895 = vadd.f32 %v4894, %v4618
        %v4896 = vadd.f32 %v4895, %v4619
        %v4897 = vadd.f32 %v4896, %v4620
        %4898 = vadd.xlane.f32.xlu0 %v4897
        %v4899 = vpop.xlane.xlu0 %4898
        %v4900 = vadd.f32 %v4621, %v4622
        %v4901 = vadd.f32 %v4900, %v4623
        %v4902 = vadd.f32 %v4901, %v4624
        %v4903 = vadd.f32 %v4902, %v4625
        %v4904 = vadd.f32 %v4903, %v4626
        %v4905 = vadd.f32 %v4904, %v4627
        %v4906 = vadd.f32 %v4905, %v4628
        %4907 = vadd.xlane.f32.xlu0 %v4906
        %v4908 = vpop.xlane.xlu0 %4907
        %v4909 = vadd.f32 %v4629, %v4630
        %v4910 = vadd.f32 %v4909, %v4631
        %v4911 = vadd.f32 %v4910, %v4632
        %v4912 = vadd.f32 %v4911, %v4633
        %v4913 = vadd.f32 %v4912, %v4634
        %v4914 = vadd.f32 %v4913, %v4635
        %v4915 = vadd.f32 %v4914, %v4636
        %4916 = vadd.xlane.f32.xlu0 %v4915
        %v4917 = vpop.xlane.xlu0 %4916
        %v4918 = vadd.f32 %v4637, %v4638
        %v4919 = vadd.f32 %v4918, %v4639
        %v4920 = vadd.f32 %v4919, %v4640
        %v4921 = vadd.f32 %v4920, %v4641
        %v4922 = vadd.f32 %v4921, %v4642
        %v4923 = vadd.f32 %v4922, %v4643
        %v4924 = vadd.f32 %v4923, %v4644
        %4925 = vadd.xlane.f32.xlu0 %v4924
        %v4926 = vpop.xlane.xlu0 %4925
        %v4927 = vadd.f32 %v4645, %v4646
        %v4928 = vadd.f32 %v4927, %v4647
        %v4929 = vadd.f32 %v4928, %v4648
        %v4930 = vadd.f32 %v4929, %v4649
        %v4931 = vadd.f32 %v4930, %v4650
        %v4932 = vadd.f32 %v4931, %v4651
        %v4933 = vadd.f32 %v4932, %v4652
        %4934 = vadd.xlane.f32.xlu0 %v4933
        %v4935 = vpop.xlane.xlu0 %4934
        %v4936 = vadd.f32 %v4653, %v4654
        %v4937 = vadd.f32 %v4936, %v4655
        %v4938 = vadd.f32 %v4937, %v4656
        %v4939 = vadd.f32 %v4938, %v4657
        %v4940 = vadd.f32 %v4939, %v4658
        %v4941 = vadd.f32 %v4940, %v4659
        %v4942 = vadd.f32 %v4941, %v4660
        %4943 = vadd.xlane.f32.xlu0 %v4942
        %v4944 = vpop.xlane.xlu0 %4943
        %v4945 = vadd.f32 %v4661, %v4662
        %v4946 = vadd.f32 %v4945, %v4663
        %v4947 = vadd.f32 %v4946, %v4664
        %v4948 = vadd.f32 %v4947, %v4665
        %v4949 = vadd.f32 %v4948, %v4666
        %v4950 = vadd.f32 %v4949, %v4667
        %v4951 = vadd.f32 %v4950, %v4668
        %4952 = vadd.xlane.f32.xlu0 %v4951
        %v4953 = vpop.xlane.xlu0 %4952
        %v4954 = vadd.f32 %v4669, %v4670
        %v4955 = vadd.f32 %v4954, %v4671
        %v4956 = vadd.f32 %v4955, %v4672
        %v4957 = vadd.f32 %v4956, %v4673
        %v4958 = vadd.f32 %v4957, %v4674
        %v4959 = vadd.f32 %v4958, %v4675
        %v4960 = vadd.f32 %v4959, %v4676
        %4961 = vadd.xlane.f32.xlu0 %v4960
        %v4962 = vpop.xlane.xlu0 %4961
        %v4963 = vadd.f32 %v4677, %v4678
        %v4964 = vadd.f32 %v4963, %v4679
        %v4965 = vadd.f32 %v4964, %v4680
        %v4966 = vadd.f32 %v4965, %v4681
        %v4967 = vadd.f32 %v4966, %v4682
        %v4968 = vadd.f32 %v4967, %v4683
        %v4969 = vadd.f32 %v4968, %v4684
        %4970 = vadd.xlane.f32.xlu0 %v4969
        %v4971 = vpop.xlane.xlu0 %4970
        %v4972 = vadd.f32 %v4685, %v4686
        %v4973 = vadd.f32 %v4972, %v4687
        %v4974 = vadd.f32 %v4973, %v4688
        %v4975 = vadd.f32 %v4974, %v4689
        %v4976 = vadd.f32 %v4975, %v4690
        %v4977 = vadd.f32 %v4976, %v4691
        %v4978 = vadd.f32 %v4977, %v4692
        %4979 = vadd.xlane.f32.xlu0 %v4978
        %v4980 = vpop.xlane.xlu0 %4979
        %v4981 = vadd.f32 %v4053, %v4701
        %v4982 = vadd.f32 %v4054, %v4710
        %v4983 = vadd.f32 %v4055, %v4719
        %v4984 = vadd.f32 %v4056, %v4728
        %v4985 = vadd.f32 %v4057, %v4737
        %v4986 = vadd.f32 %v4058, %v4746
        %v4987 = vadd.f32 %v4059, %v4755
        %v4988 = vadd.f32 %v4060, %v4764
        %v4989 = vadd.f32 %v4061, %v4773
        %v4990 = vadd.f32 %v4062, %v4782
        %v4991 = vadd.f32 %v4063, %v4791
        %v4992 = vadd.f32 %v4064, %v4800
        %v4993 = vadd.f32 %v4065, %v4809
        %v4994 = vadd.f32 %v4066, %v4818
        %v4995 = vadd.f32 %v4067, %v4827
        %v4996 = vadd.f32 %v4068, %v4836
        %v4997 = vadd.f32 %v4069, %v4845
        %v4998 = vadd.f32 %v4070, %v4854
        %v4999 = vadd.f32 %v4071, %v4863
        %v5000 = vadd.f32 %v4072, %v4872
        %v5001 = vadd.f32 %v4073, %v4881
        %v5002 = vadd.f32 %v4074, %v4890
        %v5003 = vadd.f32 %v4075, %v4899
        %v5004 = vadd.f32 %v4076, %v4908
        %v5005 = vadd.f32 %v4077, %v4917
        %v5006 = vadd.f32 %v4078, %v4926
        %v5007 = vadd.f32 %v4079, %v4935
        %v5008 = vadd.f32 %v4080, %v4944
        %v5009 = vadd.f32 %v4081, %v4953
        %v5010 = vadd.f32 %v4082, %v4962
        %v5011 = vadd.f32 %v4083, %v4971
        %v5012 = vadd.f32 %v4084, %v4980
        %vm5013 = vcmask 7168
        %5014 = vst.msk [vmem:[#allocation5] sm:$0xff] %vm5013, %v4981
        %5015 = vst.msk [vmem:[#allocation5 + $0x8] sm:$0xff] %vm5013, %v4982
        %5016 = vst.msk [vmem:[#allocation5 + $0x10] sm:$0xff] %vm5013, %v4983
        %5017 = vst.msk [vmem:[#allocation5 + $0x18] sm:$0xff] %vm5013, %v4984
        %5018 = vst.msk [vmem:[#allocation5 + $0x20] sm:$0xff] %vm5013, %v4985
        %5019 = vst.msk [vmem:[#allocation5 + $0x28] sm:$0xff] %vm5013, %v4986
        %5020 = vst.msk [vmem:[#allocation5 + $0x30] sm:$0xff] %vm5013, %v4987
        %5021 = vst.msk [vmem:[#allocation5 + $0x38] sm:$0xff] %vm5013, %v4988
        %5022 = vst.msk [vmem:[#allocation5 + $0x40] sm:$0xff] %vm5013, %v4989
        %5023 = vst.msk [vmem:[#allocation5 + $0x48] sm:$0xff] %vm5013, %v4990
        %5024 = vst.msk [vmem:[#allocation5 + $0x50] sm:$0xff] %vm5013, %v4991
        %5025 = vst.msk [vmem:[#allocation5 + $0x58] sm:$0xff] %vm5013, %v4992
        %5026 = vst.msk [vmem:[#allocation5 + $0x60] sm:$0xff] %vm5013, %v4993
        %5027 = vst.msk [vmem:[#allocation5 + $0x68] sm:$0xff] %vm5013, %v4994
        %5028 = vst.msk [vmem:[#allocation5 + $0x70] sm:$0xff] %vm5013, %v4995
        %5029 = vst.msk [vmem:[#allocation5 + $0x78] sm:$0xff] %vm5013, %v4996
        %5030 = vst.msk [vmem:[#allocation5 + $0x80] sm:$0xff] %vm5013, %v4997
        %5031 = vst.msk [vmem:[#allocation5 + $0x88] sm:$0xff] %vm5013, %v4998
        %5032 = vst.msk [vmem:[#allocation5 + $0x90] sm:$0xff] %vm5013, %v4999
        %5033 = vst.msk [vmem:[#allocation5 + $0x98] sm:$0xff] %vm5013, %v5000
        %5034 = vst.msk [vmem:[#allocation5 + $0xa0] sm:$0xff] %vm5013, %v5001
        %5035 = vst.msk [vmem:[#allocation5 + $0xa8] sm:$0xff] %vm5013, %v5002
        %5036 = vst.msk [vmem:[#allocation5 + $0xb0] sm:$0xff] %vm5013, %v5003
        %5037 = vst.msk [vmem:[#allocation5 + $0xb8] sm:$0xff] %vm5013, %v5004
        %5038 = vst.msk [vmem:[#allocation5 + $0xc0] sm:$0xff] %vm5013, %v5005
        %5039 = vst.msk [vmem:[#allocation5 + $0xc8] sm:$0xff] %vm5013, %v5006
        %5040 = vst.msk [vmem:[#allocation5 + $0xd0] sm:$0xff] %vm5013, %v5007
        %5041 = vst.msk [vmem:[#allocation5 + $0xd8] sm:$0xff] %vm5013, %v5008
        %5042 = vst.msk [vmem:[#allocation5 + $0xe0] sm:$0xff] %vm5013, %v5009
        %5043 = vst.msk [vmem:[#allocation5 + $0xe8] sm:$0xff] %vm5013, %v5010
        %5044 = vst.msk [vmem:[#allocation5 + $0xf0] sm:$0xff] %vm5013, %v5011
        %5045 = vst.msk [vmem:[#allocation5 + $0xf8] sm:$0xff] %vm5013, %v5012
        %v5046 = vmax.f32 %v3241, %v3243
        %v5047 = vmax.f32 %v5046, %v3434
        %v5048 = vmax.f32 %v5047, %v3436
        %v5049 = vmax.f32 %v5048, %v3627
        %v5050 = vmax.f32 %v5049, %v3629
        %v5051 = vmax.f32 %v5050, %v3820
        %v5052 = vmax.f32 %v5051, %v3822
        %5053 = vmax.xlane.f32.xlu0 %v5052
        %v5054 = vpop.xlane.xlu0 %5053
        %v5055 = vmax.f32 %v3245, %v3247
        %v5056 = vmax.f32 %v5055, %v3438
        %v5057 = vmax.f32 %v5056, %v3440
        %v5058 = vmax.f32 %v5057, %v3631
        %v5059 = vmax.f32 %v5058, %v3633
        %v5060 = vmax.f32 %v5059, %v3824
        %v5061 = vmax.f32 %v5060, %v3826
        %5062 = vmax.xlane.f32.xlu0 %v5061
        %v5063 = vpop.xlane.xlu0 %5062
        %v5064 = vmax.f32 %v3251, %v3253
        %v5065 = vmax.f32 %v5064, %v3444
        %v5066 = vmax.f32 %v5065, %v3446
        %v5067 = vmax.f32 %v5066, %v3637
        %v5068 = vmax.f32 %v5067, %v3639
        %v5069 = vmax.f32 %v5068, %v3830
        %v5070 = vmax.f32 %v5069, %v3832
        %5071 = vmax.xlane.f32.xlu0 %v5070
        %v5072 = vpop.xlane.xlu0 %5071
        %v5073 = vmax.f32 %v3255, %v3257
        %v5074 = vmax.f32 %v5073, %v3448
        %v5075 = vmax.f32 %v5074, %v3450
        %v5076 = vmax.f32 %v5075, %v3641
        %v5077 = vmax.f32 %v5076, %v3643
        %v5078 = vmax.f32 %v5077, %v3834
        %v5079 = vmax.f32 %v5078, %v3836
        %5080 = vmax.xlane.f32.xlu0 %v5079
        %v5081 = vpop.xlane.xlu0 %5080
        %v5082 = vmax.f32 %v3261, %v3263
        %v5083 = vmax.f32 %v5082, %v3454
        %v5084 = vmax.f32 %v5083, %v3456
        %v5085 = vmax.f32 %v5084, %v3647
        %v5086 = vmax.f32 %v5085, %v3649
        %v5087 = vmax.f32 %v5086, %v3840
        %v5088 = vmax.f32 %v5087, %v3842
        %5089 = vmax.xlane.f32.xlu0 %v5088
        %v5090 = vpop.xlane.xlu0 %5089
        %v5091 = vmax.f32 %v3265, %v3267
        %v5092 = vmax.f32 %v5091, %v3458
        %v5093 = vmax.f32 %v5092, %v3460
        %v5094 = vmax.f32 %v5093, %v3651
        %v5095 = vmax.f32 %v5094, %v3653
        %v5096 = vmax.f32 %v5095, %v3844
        %v5097 = vmax.f32 %v5096, %v3846
        %5098 = vmax.xlane.f32.xlu0 %v5097
        %v5099 = vpop.xlane.xlu0 %5098
        %v5100 = vmax.f32 %v3271, %v3273
        %v5101 = vmax.f32 %v5100, %v3464
        %v5102 = vmax.f32 %v5101, %v3466
        %v5103 = vmax.f32 %v5102, %v3657
        %v5104 = vmax.f32 %v5103, %v3659
        %v5105 = vmax.f32 %v5104, %v3850
        %v5106 = vmax.f32 %v5105, %v3852
        %5107 = vmax.xlane.f32.xlu0 %v5106
        %v5108 = vpop.xlane.xlu0 %5107
        %v5109 = vmax.f32 %v3275, %v3277
        %v5110 = vmax.f32 %v5109, %v3468
        %v5111 = vmax.f32 %v5110, %v3470
        %v5112 = vmax.f32 %v5111, %v3661
        %v5113 = vmax.f32 %v5112, %v3663
        %v5114 = vmax.f32 %v5113, %v3854
        %v5115 = vmax.f32 %v5114, %v3856
        %5116 = vmax.xlane.f32.xlu0 %v5115
        %v5117 = vpop.xlane.xlu0 %5116
        %v5118 = vmax.f32 %v3281, %v3283
        %v5119 = vmax.f32 %v5118, %v3474
        %v5120 = vmax.f32 %v5119, %v3476
        %v5121 = vmax.f32 %v5120, %v3667
        %v5122 = vmax.f32 %v5121, %v3669
        %v5123 = vmax.f32 %v5122, %v3860
        %v5124 = vmax.f32 %v5123, %v3862
        %5125 = vmax.xlane.f32.xlu0 %v5124
        %v5126 = vpop.xlane.xlu0 %5125
        %v5127 = vmax.f32 %v3285, %v3287
        %v5128 = vmax.f32 %v5127, %v3478
        %v5129 = vmax.f32 %v5128, %v3480
        %v5130 = vmax.f32 %v5129, %v3671
        %v5131 = vmax.f32 %v5130, %v3673
        %v5132 = vmax.f32 %v5131, %v3864
        %v5133 = vmax.f32 %v5132, %v3866
        %5134 = vmax.xlane.f32.xlu0 %v5133
        %v5135 = vpop.xlane.xlu0 %5134
        %v5136 = vmax.f32 %v3291, %v3293
        %v5137 = vmax.f32 %v5136, %v3484
        %v5138 = vmax.f32 %v5137, %v3486
        %v5139 = vmax.f32 %v5138, %v3677
        %v5140 = vmax.f32 %v5139, %v3679
        %v5141 = vmax.f32 %v5140, %v3870
        %v5142 = vmax.f32 %v5141, %v3872
        %5143 = vmax.xlane.f32.xlu0 %v5142
        %v5144 = vpop.xlane.xlu0 %5143
        %v5145 = vmax.f32 %v3295, %v3297
        %v5146 = vmax.f32 %v5145, %v3488
        %v5147 = vmax.f32 %v5146, %v3490
        %v5148 = vmax.f32 %v5147, %v3681
        %v5149 = vmax.f32 %v5148, %v3683
        %v5150 = vmax.f32 %v5149, %v3874
        %v5151 = vmax.f32 %v5150, %v3876
        %5152 = vmax.xlane.f32.xlu0 %v5151
        %v5153 = vpop.xlane.xlu0 %5152
        %v5154 = vmax.f32 %v3301, %v3303
        %v5155 = vmax.f32 %v5154, %v3494
        %v5156 = vmax.f32 %v5155, %v3496
        %v5157 = vmax.f32 %v5156, %v3687
        %v5158 = vmax.f32 %v5157, %v3689
        %v5159 = vmax.f32 %v5158, %v3880
        %v5160 = vmax.f32 %v5159, %v3882
        %5161 = vmax.xlane.f32.xlu0 %v5160
        %v5162 = vpop.xlane.xlu0 %5161
        %v5163 = vmax.f32 %v3305, %v3307
        %v5164 = vmax.f32 %v5163, %v3498
        %v5165 = vmax.f32 %v5164, %v3500
        %v5166 = vmax.f32 %v5165, %v3691
        %v5167 = vmax.f32 %v5166, %v3693
        %v5168 = vmax.f32 %v5167, %v3884
        %v5169 = vmax.f32 %v5168, %v3886
        %5170 = vmax.xlane.f32.xlu0 %v5169
        %v5171 = vpop.xlane.xlu0 %5170
        %v5172 = vmax.f32 %v3311, %v3313
        %v5173 = vmax.f32 %v5172, %v3504
        %v5174 = vmax.f32 %v5173, %v3506
        %v5175 = vmax.f32 %v5174, %v3697
        %v5176 = vmax.f32 %v5175, %v3699
        %v5177 = vmax.f32 %v5176, %v3890
        %v5178 = vmax.f32 %v5177, %v3892
        %5179 = vmax.xlane.f32.xlu0 %v5178
        %v5180 = vpop.xlane.xlu0 %5179
        %v5181 = vmax.f32 %v3315, %v3317
        %v5182 = vmax.f32 %v5181, %v3508
        %v5183 = vmax.f32 %v5182, %v3510
        %v5184 = vmax.f32 %v5183, %v3701
        %v5185 = vmax.f32 %v5184, %v3703
        %v5186 = vmax.f32 %v5185, %v3894
        %v5187 = vmax.f32 %v5186, %v3896
        %5188 = vmax.xlane.f32.xlu0 %v5187
        %v5189 = vpop.xlane.xlu0 %5188
        %v5190 = vmax.f32 %v3321, %v3323
        %v5191 = vmax.f32 %v5190, %v3514
        %v5192 = vmax.f32 %v5191, %v3516
        %v5193 = vmax.f32 %v5192, %v3707
        %v5194 = vmax.f32 %v5193, %v3709
        %v5195 = vmax.f32 %v5194, %v3900
        %v5196 = vmax.f32 %v5195, %v3902
        %5197 = vmax.xlane.f32.xlu0 %v5196
        %v5198 = vpop.xlane.xlu0 %5197
        %v5199 = vmax.f32 %v3325, %v3327
        %v5200 = vmax.f32 %v5199, %v3518
        %v5201 = vmax.f32 %v5200, %v3520
        %v5202 = vmax.f32 %v5201, %v3711
        %v5203 = vmax.f32 %v5202, %v3713
        %v5204 = vmax.f32 %v5203, %v3904
        %v5205 = vmax.f32 %v5204, %v3906
        %5206 = vmax.xlane.f32.xlu0 %v5205
        %v5207 = vpop.xlane.xlu0 %5206
        %v5208 = vmax.f32 %v3331, %v3333
        %v5209 = vmax.f32 %v5208, %v3524
        %v5210 = vmax.f32 %v5209, %v3526
        %v5211 = vmax.f32 %v5210, %v3717
        %v5212 = vmax.f32 %v5211, %v3719
        %v5213 = vmax.f32 %v5212, %v3910
        %v5214 = vmax.f32 %v5213, %v3912
        %5215 = vmax.xlane.f32.xlu0 %v5214
        %v5216 = vpop.xlane.xlu0 %5215
        %v5217 = vmax.f32 %v3335, %v3337
        %v5218 = vmax.f32 %v5217, %v3528
        %v5219 = vmax.f32 %v5218, %v3530
        %v5220 = vmax.f32 %v5219, %v3721
        %v5221 = vmax.f32 %v5220, %v3723
        %v5222 = vmax.f32 %v5221, %v3914
        %v5223 = vmax.f32 %v5222, %v3916
        %5224 = vmax.xlane.f32.xlu0 %v5223
        %v5225 = vpop.xlane.xlu0 %5224
        %v5226 = vmax.f32 %v3341, %v3343
        %v5227 = vmax.f32 %v5226, %v3534
        %v5228 = vmax.f32 %v5227, %v3536
        %v5229 = vmax.f32 %v5228, %v3727
        %v5230 = vmax.f32 %v5229, %v3729
        %v5231 = vmax.f32 %v5230, %v3920
        %v5232 = vmax.f32 %v5231, %v3922
        %5233 = vmax.xlane.f32.xlu0 %v5232
        %v5234 = vpop.xlane.xlu0 %5233
        %v5235 = vmax.f32 %v3345, %v3347
        %v5236 = vmax.f32 %v5235, %v3538
        %v5237 = vmax.f32 %v5236, %v3540
        %v5238 = vmax.f32 %v5237, %v3731
        %v5239 = vmax.f32 %v5238, %v3733
        %v5240 = vmax.f32 %v5239, %v3924
        %v5241 = vmax.f32 %v5240, %v3926
        %5242 = vmax.xlane.f32.xlu0 %v5241
        %v5243 = vpop.xlane.xlu0 %5242
        %v5244 = vmax.f32 %v3351, %v3353
        %v5245 = vmax.f32 %v5244, %v3544
        %v5246 = vmax.f32 %v5245, %v3546
        %v5247 = vmax.f32 %v5246, %v3737
        %v5248 = vmax.f32 %v5247, %v3739
        %v5249 = vmax.f32 %v5248, %v3930
        %v5250 = vmax.f32 %v5249, %v3932
        %5251 = vmax.xlane.f32.xlu0 %v5250
        %v5252 = vpop.xlane.xlu0 %5251
        %v5253 = vmax.f32 %v3355, %v3357
        %v5254 = vmax.f32 %v5253, %v3548
        %v5255 = vmax.f32 %v5254, %v3550
        %v5256 = vmax.f32 %v5255, %v3741
        %v5257 = vmax.f32 %v5256, %v3743
        %v5258 = vmax.f32 %v5257, %v3934
        %v5259 = vmax.f32 %v5258, %v3936
        %5260 = vmax.xlane.f32.xlu0 %v5259
        %v5261 = vpop.xlane.xlu0 %5260
        %v5262 = vmax.f32 %v3361, %v3363
        %v5263 = vmax.f32 %v5262, %v3554
        %v5264 = vmax.f32 %v5263, %v3556
        %v5265 = vmax.f32 %v5264, %v3747
        %v5266 = vmax.f32 %v5265, %v3749
        %v5267 = vmax.f32 %v5266, %v3940
        %v5268 = vmax.f32 %v5267, %v3942
        %5269 = vmax.xlane.f32.xlu0 %v5268
        %v5270 = vpop.xlane.xlu0 %5269
        %v5271 = vmax.f32 %v3365, %v3367
        %v5272 = vmax.f32 %v5271, %v3558
        %v5273 = vmax.f32 %v5272, %v3560
        %v5274 = vmax.f32 %v5273, %v3751
        %v5275 = vmax.f32 %v5274, %v3753
        %v5276 = vmax.f32 %v5275, %v3944
        %v5277 = vmax.f32 %v5276, %v3946
        %5278 = vmax.xlane.f32.xlu0 %v5277
        %v5279 = vpop.xlane.xlu0 %5278
        %v5280 = vmax.f32 %v3371, %v3373
        %v5281 = vmax.f32 %v5280, %v3564
        %v5282 = vmax.f32 %v5281, %v3566
        %v5283 = vmax.f32 %v5282, %v3757
        %v5284 = vmax.f32 %v5283, %v3759
        %v5285 = vmax.f32 %v5284, %v3950
        %v5286 = vmax.f32 %v5285, %v3952
        %5287 = vmax.xlane.f32.xlu0 %v5286
        %v5288 = vpop.xlane.xlu0 %5287
        %v5289 = vmax.f32 %v3375, %v3377
        %v5290 = vmax.f32 %v5289, %v3568
        %v5291 = vmax.f32 %v5290, %v3570
        %v5292 = vmax.f32 %v5291, %v3761
        %v5293 = vmax.f32 %v5292, %v3763
        %v5294 = vmax.f32 %v5293, %v3954
        %v5295 = vmax.f32 %v5294, %v3956
        %5296 = vmax.xlane.f32.xlu0 %v5295
        %v5297 = vpop.xlane.xlu0 %5296
        %v5298 = vmax.f32 %v3381, %v3383
        %v5299 = vmax.f32 %v5298, %v3574
        %v5300 = vmax.f32 %v5299, %v3576
        %v5301 = vmax.f32 %v5300, %v3767
        %v5302 = vmax.f32 %v5301, %v3769
        %v5303 = vmax.f32 %v5302, %v3960
        %v5304 = vmax.f32 %v5303, %v3962
        %5305 = vmax.xlane.f32.xlu0 %v5304
        %v5306 = vpop.xlane.xlu0 %5305
        %v5307 = vmax.f32 %v3385, %v3387
        %v5308 = vmax.f32 %v5307, %v3578
        %v5309 = vmax.f32 %v5308, %v3580
        %v5310 = vmax.f32 %v5309, %v3771
        %v5311 = vmax.f32 %v5310, %v3773
        %v5312 = vmax.f32 %v5311, %v3964
        %v5313 = vmax.f32 %v5312, %v3966
        %5314 = vmax.xlane.f32.xlu0 %v5313
        %v5315 = vpop.xlane.xlu0 %5314
        %v5316 = vmax.f32 %v3391, %v3393
        %v5317 = vmax.f32 %v5316, %v3584
        %v5318 = vmax.f32 %v5317, %v3586
        %v5319 = vmax.f32 %v5318, %v3777
        %v5320 = vmax.f32 %v5319, %v3779
        %v5321 = vmax.f32 %v5320, %v3970
        %v5322 = vmax.f32 %v5321, %v3972
        %5323 = vmax.xlane.f32.xlu0 %v5322
        %v5324 = vpop.xlane.xlu0 %5323
        %v5325 = vmax.f32 %v3395, %v3397
        %v5326 = vmax.f32 %v5325, %v3588
        %v5327 = vmax.f32 %v5326, %v3590
        %v5328 = vmax.f32 %v5327, %v3781
        %v5329 = vmax.f32 %v5328, %v3783
        %v5330 = vmax.f32 %v5329, %v3974
        %v5331 = vmax.f32 %v5330, %v3976
        %5332 = vmax.xlane.f32.xlu0 %v5331
        %v5333 = vpop.xlane.xlu0 %5332
        %v5334 = vld [vmem:[#allocation3] sm:$0xff]
        %v5335 = vld [vmem:[#allocation3 + $0x8] sm:$0xff]
        %v5336 = vld [vmem:[#allocation3 + $0x10] sm:$0xff]
        %v5337 = vld [vmem:[#allocation3 + $0x18] sm:$0xff]
        %v5338 = vld [vmem:[#allocation3 + $0x20] sm:$0xff]
        %v5339 = vld [vmem:[#allocation3 + $0x28] sm:$0xff]
        %v5340 = vld [vmem:[#allocation3 + $0x30] sm:$0xff]
        %v5341 = vld [vmem:[#allocation3 + $0x38] sm:$0xff]
        %v5342 = vld [vmem:[#allocation3 + $0x40] sm:$0xff]
        %v5343 = vld [vmem:[#allocation3 + $0x48] sm:$0xff]
        %v5344 = vld [vmem:[#allocation3 + $0x50] sm:$0xff]
        %v5345 = vld [vmem:[#allocation3 + $0x58] sm:$0xff]
        %v5346 = vld [vmem:[#allocation3 + $0x60] sm:$0xff]
        %v5347 = vld [vmem:[#allocation3 + $0x68] sm:$0xff]
        %v5348 = vld [vmem:[#allocation3 + $0x70] sm:$0xff]
        %v5349 = vld [vmem:[#allocation3 + $0x78] sm:$0xff]
        %v5350 = vld [vmem:[#allocation3 + $0x80] sm:$0xff]
        %v5351 = vld [vmem:[#allocation3 + $0x88] sm:$0xff]
        %v5352 = vld [vmem:[#allocation3 + $0x90] sm:$0xff]
        %v5353 = vld [vmem:[#allocation3 + $0x98] sm:$0xff]
        %v5354 = vld [vmem:[#allocation3 + $0xa0] sm:$0xff]
        %v5355 = vld [vmem:[#allocation3 + $0xa8] sm:$0xff]
        %v5356 = vld [vmem:[#allocation3 + $0xb0] sm:$0xff]
        %v5357 = vld [vmem:[#allocation3 + $0xb8] sm:$0xff]
        %v5358 = vld [vmem:[#allocation3 + $0xc0] sm:$0xff]
        %v5359 = vld [vmem:[#allocation3 + $0xc8] sm:$0xff]
        %v5360 = vld [vmem:[#allocation3 + $0xd0] sm:$0xff]
        %v5361 = vld [vmem:[#allocation3 + $0xd8] sm:$0xff]
        %v5362 = vld [vmem:[#allocation3 + $0xe0] sm:$0xff]
        %v5363 = vld [vmem:[#allocation3 + $0xe8] sm:$0xff]
        %v5364 = vld [vmem:[#allocation3 + $0xf0] sm:$0xff]
        %v5365 = vld [vmem:[#allocation3 + $0xf8] sm:$0xff]
        %v5366 = vmax.f32 %v5334, %v5054
        %v5367 = vmax.f32 %v5335, %v5063
        %v5368 = vmax.f32 %v5336, %v5072
        %v5369 = vmax.f32 %v5337, %v5081
        %v5370 = vmax.f32 %v5338, %v5090
        %v5371 = vmax.f32 %v5339, %v5099
        %v5372 = vmax.f32 %v5340, %v5108
        %v5373 = vmax.f32 %v5341, %v5117
        %v5374 = vmax.f32 %v5342, %v5126
        %v5375 = vmax.f32 %v5343, %v5135
        %v5376 = vmax.f32 %v5344, %v5144
        %v5377 = vmax.f32 %v5345, %v5153
        %v5378 = vmax.f32 %v5346, %v5162
        %v5379 = vmax.f32 %v5347, %v5171
        %v5380 = vmax.f32 %v5348, %v5180
        %v5381 = vmax.f32 %v5349, %v5189
        %v5382 = vmax.f32 %v5350, %v5198
        %v5383 = vmax.f32 %v5351, %v5207
        %v5384 = vmax.f32 %v5352, %v5216
        %v5385 = vmax.f32 %v5353, %v5225
        %v5386 = vmax.f32 %v5354, %v5234
        %v5387 = vmax.f32 %v5355, %v5243
        %v5388 = vmax.f32 %v5356, %v5252
        %v5389 = vmax.f32 %v5357, %v5261
        %v5390 = vmax.f32 %v5358, %v5270
        %v5391 = vmax.f32 %v5359, %v5279
        %v5392 = vmax.f32 %v5360, %v5288
        %v5393 = vmax.f32 %v5361, %v5297
        %v5394 = vmax.f32 %v5362, %v5306
        %v5395 = vmax.f32 %v5363, %v5315
        %v5396 = vmax.f32 %v5364, %v5324
        %v5397 = vmax.f32 %v5365, %v5333
        %v5398 = vld [vmem:[#allocation4] sm:$0xff]
        %v5399 = vld [vmem:[#allocation4 + $0x8] sm:$0xff]
        %v5400 = vld [vmem:[#allocation4 + $0x10] sm:$0xff]
        %v5401 = vld [vmem:[#allocation4 + $0x18] sm:$0xff]
        %v5402 = vld [vmem:[#allocation4 + $0x20] sm:$0xff]
        %v5403 = vld [vmem:[#allocation4 + $0x28] sm:$0xff]
        %v5404 = vld [vmem:[#allocation4 + $0x30] sm:$0xff]
        %v5405 = vld [vmem:[#allocation4 + $0x38] sm:$0xff]
        %v5406 = vld [vmem:[#allocation4 + $0x40] sm:$0xff]
        %v5407 = vld [vmem:[#allocation4 + $0x48] sm:$0xff]
        %v5408 = vld [vmem:[#allocation4 + $0x50] sm:$0xff]
        %v5409 = vld [vmem:[#allocation4 + $0x58] sm:$0xff]
        %v5410 = vld [vmem:[#allocation4 + $0x60] sm:$0xff]
        %v5411 = vld [vmem:[#allocation4 + $0x68] sm:$0xff]
        %v5412 = vld [vmem:[#allocation4 + $0x70] sm:$0xff]
        %v5413 = vld [vmem:[#allocation4 + $0x78] sm:$0xff]
        %v5414 = vld [vmem:[#allocation4 + $0x80] sm:$0xff]
        %v5415 = vld [vmem:[#allocation4 + $0x88] sm:$0xff]
        %v5416 = vld [vmem:[#allocation4 + $0x90] sm:$0xff]
        %v5417 = vld [vmem:[#allocation4 + $0x98] sm:$0xff]
        %v5418 = vld [vmem:[#allocation4 + $0xa0] sm:$0xff]
        %v5419 = vld [vmem:[#allocation4 + $0xa8] sm:$0xff]
        %v5420 = vld [vmem:[#allocation4 + $0xb0] sm:$0xff]
        %v5421 = vld [vmem:[#allocation4 + $0xb8] sm:$0xff]
        %v5422 = vld [vmem:[#allocation4 + $0xc0] sm:$0xff]
        %v5423 = vld [vmem:[#allocation4 + $0xc8] sm:$0xff]
        %v5424 = vld [vmem:[#allocation4 + $0xd0] sm:$0xff]
        %v5425 = vld [vmem:[#allocation4 + $0xd8] sm:$0xff]
        %v5426 = vld [vmem:[#allocation4 + $0xe0] sm:$0xff]
        %v5427 = vld [vmem:[#allocation4 + $0xe8] sm:$0xff]
        %v5428 = vld [vmem:[#allocation4 + $0xf0] sm:$0xff]
        %v5429 = vld [vmem:[#allocation4 + $0xf8] sm:$0xff]
        %v5430 = vsub.f32 %v5334, %v5366
        %v5431 = vsub.f32 %v5335, %v5367
        %v5432 = vsub.f32 %v5336, %v5368
        %v5433 = vsub.f32 %v5337, %v5369
        %v5434 = vsub.f32 %v5338, %v5370
        %v5435 = vsub.f32 %v5339, %v5371
        %v5436 = vsub.f32 %v5340, %v5372
        %v5437 = vsub.f32 %v5341, %v5373
        %v5438 = vsub.f32 %v5342, %v5374
        %v5439 = vsub.f32 %v5343, %v5375
        %v5440 = vsub.f32 %v5344, %v5376
        %v5441 = vsub.f32 %v5345, %v5377
        %v5442 = vsub.f32 %v5346, %v5378
        %v5443 = vsub.f32 %v5347, %v5379
        %v5444 = vsub.f32 %v5348, %v5380
        %v5445 = vsub.f32 %v5349, %v5381
        %v5446 = vsub.f32 %v5350, %v5382
        %v5447 = vsub.f32 %v5351, %v5383
        %v5448 = vsub.f32 %v5352, %v5384
        %v5449 = vsub.f32 %v5353, %v5385
        %v5450 = vsub.f32 %v5354, %v5386
        %v5451 = vsub.f32 %v5355, %v5387
        %v5452 = vsub.f32 %v5356, %v5388
        %v5453 = vsub.f32 %v5357, %v5389
        %v5454 = vsub.f32 %v5358, %v5390
        %v5455 = vsub.f32 %v5359, %v5391
        %v5456 = vsub.f32 %v5360, %v5392
        %v5457 = vsub.f32 %v5361, %v5393
        %v5458 = vsub.f32 %v5362, %v5394
        %v5459 = vsub.f32 %v5363, %v5395
        %v5460 = vsub.f32 %v5364, %v5396
        %v5461 = vsub.f32 %v5365, %v5397
        %v5462 = vmul.f32 %v5430, 1.442695
        %v5463 = vpow.pop %v5462
        %v5464 = vmul.f32 %v5431, 1.442695
        %v5465 = vpow.pop %v5464
        %v5466 = vmul.f32 %v5432, 1.442695
        %v5467 = vpow.pop %v5466
        %v5468 = vmul.f32 %v5433, 1.442695
        %v5469 = vpow.pop %v5468
        %v5470 = vmul.f32 %v5434, 1.442695
        %v5471 = vpow.pop %v5470
        %v5472 = vmul.f32 %v5435, 1.442695
        %v5473 = vpow.pop %v5472
        %v5474 = vmul.f32 %v5436, 1.442695
        %v5475 = vpow.pop %v5474
        %v5476 = vmul.f32 %v5437, 1.442695
        %v5477 = vpow.pop %v5476
        %v5478 = vmul.f32 %v5438, 1.442695
        %v5479 = vpow.pop %v5478
        %v5480 = vmul.f32 %v5439, 1.442695
        %v5481 = vpow.pop %v5480
        %v5482 = vmul.f32 %v5440, 1.442695
        %v5483 = vpow.pop %v5482
        %v5484 = vmul.f32 %v5441, 1.442695
        %v5485 = vpow.pop %v5484
        %v5486 = vmul.f32 %v5442, 1.442695
        %v5487 = vpow.pop %v5486
        %v5488 = vmul.f32 %v5443, 1.442695
        %v5489 = vpow.pop %v5488
        %v5490 = vmul.f32 %v5444, 1.442695
        %v5491 = vpow.pop %v5490
        %v5492 = vmul.f32 %v5445, 1.442695
        %v5493 = vpow.pop %v5492
        %v5494 = vmul.f32 %v5446, 1.442695
        %v5495 = vpow.pop %v5494
        %v5496 = vmul.f32 %v5447, 1.442695
        %v5497 = vpow.pop %v5496
        %v5498 = vmul.f32 %v5448, 1.442695
        %v5499 = vpow.pop %v5498
        %v5500 = vmul.f32 %v5449, 1.442695
        %v5501 = vpow.pop %v5500
        %v5502 = vmul.f32 %v5450, 1.442695
        %v5503 = vpow.pop %v5502
        %v5504 = vmul.f32 %v5451, 1.442695
        %v5505 = vpow.pop %v5504
        %v5506 = vmul.f32 %v5452, 1.442695
        %v5507 = vpow.pop %v5506
        %v5508 = vmul.f32 %v5453, 1.442695
        %v5509 = vpow.pop %v5508
        %v5510 = vmul.f32 %v5454, 1.442695
        %v5511 = vpow.pop %v5510
        %v5512 = vmul.f32 %v5455, 1.442695
        %v5513 = vpow.pop %v5512
        %v5514 = vmul.f32 %v5456, 1.442695
        %v5515 = vpow.pop %v5514
        %v5516 = vmul.f32 %v5457, 1.442695
        %v5517 = vpow.pop %v5516
        %v5518 = vmul.f32 %v5458, 1.442695
        %v5519 = vpow.pop %v5518
        %v5520 = vmul.f32 %v5459, 1.442695
        %v5521 = vpow.pop %v5520
        %v5522 = vmul.f32 %v5460, 1.442695
        %v5523 = vpow.pop %v5522
        %v5524 = vmul.f32 %v5461, 1.442695
        %v5525 = vpow.pop %v5524
        %v5526 = vmul.f32 %v5398, %v5463
        %v5527 = vmul.f32 %v5399, %v5465
        %v5528 = vmul.f32 %v5400, %v5467
        %v5529 = vmul.f32 %v5401, %v5469
        %v5530 = vmul.f32 %v5402, %v5471
        %v5531 = vmul.f32 %v5403, %v5473
        %v5532 = vmul.f32 %v5404, %v5475
        %v5533 = vmul.f32 %v5405, %v5477
        %v5534 = vmul.f32 %v5406, %v5479
        %v5535 = vmul.f32 %v5407, %v5481
        %v5536 = vmul.f32 %v5408, %v5483
        %v5537 = vmul.f32 %v5409, %v5485
        %v5538 = vmul.f32 %v5410, %v5487
        %v5539 = vmul.f32 %v5411, %v5489
        %v5540 = vmul.f32 %v5412, %v5491
        %v5541 = vmul.f32 %v5413, %v5493
        %v5542 = vmul.f32 %v5414, %v5495
        %v5543 = vmul.f32 %v5415, %v5497
        %v5544 = vmul.f32 %v5416, %v5499
        %v5545 = vmul.f32 %v5417, %v5501
        %v5546 = vmul.f32 %v5418, %v5503
        %v5547 = vmul.f32 %v5419, %v5505
        %v5548 = vmul.f32 %v5420, %v5507
        %v5549 = vmul.f32 %v5421, %v5509
        %v5550 = vmul.f32 %v5422, %v5511
        %v5551 = vmul.f32 %v5423, %v5513
        %v5552 = vmul.f32 %v5424, %v5515
        %v5553 = vmul.f32 %v5425, %v5517
        %v5554 = vmul.f32 %v5426, %v5519
        %v5555 = vmul.f32 %v5427, %v5521
        %v5556 = vmul.f32 %v5428, %v5523
        %v5557 = vmul.f32 %v5429, %v5525
        %5559 = vset.pattern.permute.xlu0 0
        %5560 = vperm.xlu0 %5559, %v5366
        %v5561 = vpop.permute.xlu0 %5560
        %5564 = vset.pattern.permute.xlu0 0
        %5565 = vperm.xlu0 %5564, %v5367
        %v5566 = vpop.permute.xlu0 %5565
        %5569 = vset.pattern.permute.xlu0 0
        %5570 = vperm.xlu0 %5569, %v5368
        %v5571 = vpop.permute.xlu0 %5570
        %5574 = vset.pattern.permute.xlu0 0
        %5575 = vperm.xlu0 %5574, %v5369
        %v5576 = vpop.permute.xlu0 %5575
        %5579 = vset.pattern.permute.xlu0 0
        %5580 = vperm.xlu0 %5579, %v5370
        %v5581 = vpop.permute.xlu0 %5580
        %5584 = vset.pattern.permute.xlu0 0
        %5585 = vperm.xlu0 %5584, %v5371
        %v5586 = vpop.permute.xlu0 %5585
        %5589 = vset.pattern.permute.xlu0 0
        %5590 = vperm.xlu0 %5589, %v5372
        %v5591 = vpop.permute.xlu0 %5590
        %5594 = vset.pattern.permute.xlu0 0
        %5595 = vperm.xlu0 %5594, %v5373
        %v5596 = vpop.permute.xlu0 %5595
        %5599 = vset.pattern.permute.xlu0 0
        %5600 = vperm.xlu0 %5599, %v5374
        %v5601 = vpop.permute.xlu0 %5600
        %5604 = vset.pattern.permute.xlu0 0
        %5605 = vperm.xlu0 %5604, %v5375
        %v5606 = vpop.permute.xlu0 %5605
        %5609 = vset.pattern.permute.xlu0 0
        %5610 = vperm.xlu0 %5609, %v5376
        %v5611 = vpop.permute.xlu0 %5610
        %5614 = vset.pattern.permute.xlu0 0
        %5615 = vperm.xlu0 %5614, %v5377
        %v5616 = vpop.permute.xlu0 %5615
        %5619 = vset.pattern.permute.xlu0 0
        %5620 = vperm.xlu0 %5619, %v5378
        %v5621 = vpop.permute.xlu0 %5620
        %5624 = vset.pattern.permute.xlu0 0
        %5625 = vperm.xlu0 %5624, %v5379
        %v5626 = vpop.permute.xlu0 %5625
        %5629 = vset.pattern.permute.xlu0 0
        %5630 = vperm.xlu0 %5629, %v5380
        %v5631 = vpop.permute.xlu0 %5630
        %5634 = vset.pattern.permute.xlu0 0
        %5635 = vperm.xlu0 %5634, %v5381
        %v5636 = vpop.permute.xlu0 %5635
        %5639 = vset.pattern.permute.xlu0 0
        %5640 = vperm.xlu0 %5639, %v5382
        %v5641 = vpop.permute.xlu0 %5640
        %5644 = vset.pattern.permute.xlu0 0
        %5645 = vperm.xlu0 %5644, %v5383
        %v5646 = vpop.permute.xlu0 %5645
        %5649 = vset.pattern.permute.xlu0 0
        %5650 = vperm.xlu0 %5649, %v5384
        %v5651 = vpop.permute.xlu0 %5650
        %5654 = vset.pattern.permute.xlu0 0
        %5655 = vperm.xlu0 %5654, %v5385
        %v5656 = vpop.permute.xlu0 %5655
        %5659 = vset.pattern.permute.xlu0 0
        %5660 = vperm.xlu0 %5659, %v5386
        %v5661 = vpop.permute.xlu0 %5660
        %5664 = vset.pattern.permute.xlu0 0
        %5665 = vperm.xlu0 %5664, %v5387
        %v5666 = vpop.permute.xlu0 %5665
        %5669 = vset.pattern.permute.xlu0 0
        %5670 = vperm.xlu0 %5669, %v5388
        %v5671 = vpop.permute.xlu0 %5670
        %5674 = vset.pattern.permute.xlu0 0
        %5675 = vperm.xlu0 %5674, %v5389
        %v5676 = vpop.permute.xlu0 %5675
        %5679 = vset.pattern.permute.xlu0 0
        %5680 = vperm.xlu0 %5679, %v5390
        %v5681 = vpop.permute.xlu0 %5680
        %5684 = vset.pattern.permute.xlu0 0
        %5685 = vperm.xlu0 %5684, %v5391
        %v5686 = vpop.permute.xlu0 %5685
        %5689 = vset.pattern.permute.xlu0 0
        %5690 = vperm.xlu0 %5689, %v5392
        %v5691 = vpop.permute.xlu0 %5690
        %5694 = vset.pattern.permute.xlu0 0
        %5695 = vperm.xlu0 %5694, %v5393
        %v5696 = vpop.permute.xlu0 %5695
        %5699 = vset.pattern.permute.xlu0 0
        %5700 = vperm.xlu0 %5699, %v5394
        %v5701 = vpop.permute.xlu0 %5700
        %5704 = vset.pattern.permute.xlu0 0
        %5705 = vperm.xlu0 %5704, %v5395
        %v5706 = vpop.permute.xlu0 %5705
        %5709 = vset.pattern.permute.xlu0 0
        %5710 = vperm.xlu0 %5709, %v5396
        %v5711 = vpop.permute.xlu0 %5710
        %5714 = vset.pattern.permute.xlu0 0
        %5715 = vperm.xlu0 %5714, %v5397
        %v5716 = vpop.permute.xlu0 %5715
        %v5718 = vsub.f32 %v3241, %v5561
        %v5719 = vsub.f32 %v3243, %v5561
        %v5720 = vsub.f32 %v3434, %v5561
        %v5721 = vsub.f32 %v3436, %v5561
        %v5722 = vsub.f32 %v3627, %v5561
        %v5723 = vsub.f32 %v3629, %v5561
        %v5724 = vsub.f32 %v3820, %v5561
        %v5725 = vsub.f32 %v3822, %v5561
        %v5726 = vsub.f32 %v3245, %v5566
        %v5727 = vsub.f32 %v3247, %v5566
        %v5728 = vsub.f32 %v3438, %v5566
        %v5729 = vsub.f32 %v3440, %v5566
        %v5730 = vsub.f32 %v3631, %v5566
        %v5731 = vsub.f32 %v3633, %v5566
        %v5732 = vsub.f32 %v3824, %v5566
        %v5733 = vsub.f32 %v3826, %v5566
        %v5734 = vsub.f32 %v3251, %v5571
        %v5735 = vsub.f32 %v3253, %v5571
        %v5736 = vsub.f32 %v3444, %v5571
        %v5737 = vsub.f32 %v3446, %v5571
        %v5738 = vsub.f32 %v3637, %v5571
        %v5739 = vsub.f32 %v3639, %v5571
        %v5740 = vsub.f32 %v3830, %v5571
        %v5741 = vsub.f32 %v3832, %v5571
        %v5742 = vsub.f32 %v3255, %v5576
        %v5743 = vsub.f32 %v3257, %v5576
        %v5744 = vsub.f32 %v3448, %v5576
        %v5745 = vsub.f32 %v3450, %v5576
        %v5746 = vsub.f32 %v3641, %v5576
        %v5747 = vsub.f32 %v3643, %v5576
        %v5748 = vsub.f32 %v3834, %v5576
        %v5749 = vsub.f32 %v3836, %v5576
        %v5750 = vsub.f32 %v3261, %v5581
        %v5751 = vsub.f32 %v3263, %v5581
        %v5752 = vsub.f32 %v3454, %v5581
        %v5753 = vsub.f32 %v3456, %v5581
        %v5754 = vsub.f32 %v3647, %v5581
        %v5755 = vsub.f32 %v3649, %v5581
        %v5756 = vsub.f32 %v3840, %v5581
        %v5757 = vsub.f32 %v3842, %v5581
        %v5758 = vsub.f32 %v3265, %v5586
        %v5759 = vsub.f32 %v3267, %v5586
        %v5760 = vsub.f32 %v3458, %v5586
        %v5761 = vsub.f32 %v3460, %v5586
        %v5762 = vsub.f32 %v3651, %v5586
        %v5763 = vsub.f32 %v3653, %v5586
        %v5764 = vsub.f32 %v3844, %v5586
        %v5765 = vsub.f32 %v3846, %v5586
        %v5766 = vsub.f32 %v3271, %v5591
        %v5767 = vsub.f32 %v3273, %v5591
        %v5768 = vsub.f32 %v3464, %v5591
        %v5769 = vsub.f32 %v3466, %v5591
        %v5770 = vsub.f32 %v3657, %v5591
        %v5771 = vsub.f32 %v3659, %v5591
        %v5772 = vsub.f32 %v3850, %v5591
        %v5773 = vsub.f32 %v3852, %v5591
        %v5774 = vsub.f32 %v3275, %v5596
        %v5775 = vsub.f32 %v3277, %v5596
        %v5776 = vsub.f32 %v3468, %v5596
        %v5777 = vsub.f32 %v3470, %v5596
        %v5778 = vsub.f32 %v3661, %v5596
        %v5779 = vsub.f32 %v3663, %v5596
        %v5780 = vsub.f32 %v3854, %v5596
        %v5781 = vsub.f32 %v3856, %v5596
        %v5782 = vsub.f32 %v3281, %v5601
        %v5783 = vsub.f32 %v3283, %v5601
        %v5784 = vsub.f32 %v3474, %v5601
        %v5785 = vsub.f32 %v3476, %v5601
        %v5786 = vsub.f32 %v3667, %v5601
        %v5787 = vsub.f32 %v3669, %v5601
        %v5788 = vsub.f32 %v3860, %v5601
        %v5789 = vsub.f32 %v3862, %v5601
        %v5790 = vsub.f32 %v3285, %v5606
        %v5791 = vsub.f32 %v3287, %v5606
        %v5792 = vsub.f32 %v3478, %v5606
        %v5793 = vsub.f32 %v3480, %v5606
        %v5794 = vsub.f32 %v3671, %v5606
        %v5795 = vsub.f32 %v3673, %v5606
        %v5796 = vsub.f32 %v3864, %v5606
        %v5797 = vsub.f32 %v3866, %v5606
        %v5798 = vsub.f32 %v3291, %v5611
        %v5799 = vsub.f32 %v3293, %v5611
        %v5800 = vsub.f32 %v3484, %v5611
        %v5801 = vsub.f32 %v3486, %v5611
        %v5802 = vsub.f32 %v3677, %v5611
        %v5803 = vsub.f32 %v3679, %v5611
        %v5804 = vsub.f32 %v3870, %v5611
        %v5805 = vsub.f32 %v3872, %v5611
        %v5806 = vsub.f32 %v3295, %v5616
        %v5807 = vsub.f32 %v3297, %v5616
        %v5808 = vsub.f32 %v3488, %v5616
        %v5809 = vsub.f32 %v3490, %v5616
        %v5810 = vsub.f32 %v3681, %v5616
        %v5811 = vsub.f32 %v3683, %v5616
        %v5812 = vsub.f32 %v3874, %v5616
        %v5813 = vsub.f32 %v3876, %v5616
        %v5814 = vsub.f32 %v3301, %v5621
        %v5815 = vsub.f32 %v3303, %v5621
        %v5816 = vsub.f32 %v3494, %v5621
        %v5817 = vsub.f32 %v3496, %v5621
        %v5818 = vsub.f32 %v3687, %v5621
        %v5819 = vsub.f32 %v3689, %v5621
        %v5820 = vsub.f32 %v3880, %v5621
        %v5821 = vsub.f32 %v3882, %v5621
        %v5822 = vsub.f32 %v3305, %v5626
        %v5823 = vsub.f32 %v3307, %v5626
        %v5824 = vsub.f32 %v3498, %v5626
        %v5825 = vsub.f32 %v3500, %v5626
        %v5826 = vsub.f32 %v3691, %v5626
        %v5827 = vsub.f32 %v3693, %v5626
        %v5828 = vsub.f32 %v3884, %v5626
        %v5829 = vsub.f32 %v3886, %v5626
        %v5830 = vsub.f32 %v3311, %v5631
        %v5831 = vsub.f32 %v3313, %v5631
        %v5832 = vsub.f32 %v3504, %v5631
        %v5833 = vsub.f32 %v3506, %v5631
        %v5834 = vsub.f32 %v3697, %v5631
        %v5835 = vsub.f32 %v3699, %v5631
        %v5836 = vsub.f32 %v3890, %v5631
        %v5837 = vsub.f32 %v3892, %v5631
        %v5838 = vsub.f32 %v3315, %v5636
        %v5839 = vsub.f32 %v3317, %v5636
        %v5840 = vsub.f32 %v3508, %v5636
        %v5841 = vsub.f32 %v3510, %v5636
        %v5842 = vsub.f32 %v3701, %v5636
        %v5843 = vsub.f32 %v3703, %v5636
        %v5844 = vsub.f32 %v3894, %v5636
        %v5845 = vsub.f32 %v3896, %v5636
        %v5846 = vsub.f32 %v3321, %v5641
        %v5847 = vsub.f32 %v3323, %v5641
        %v5848 = vsub.f32 %v3514, %v5641
        %v5849 = vsub.f32 %v3516, %v5641
        %v5850 = vsub.f32 %v3707, %v5641
        %v5851 = vsub.f32 %v3709, %v5641
        %v5852 = vsub.f32 %v3900, %v5641
        %v5853 = vsub.f32 %v3902, %v5641
        %v5854 = vsub.f32 %v3325, %v5646
        %v5855 = vsub.f32 %v3327, %v5646
        %v5856 = vsub.f32 %v3518, %v5646
        %v5857 = vsub.f32 %v3520, %v5646
        %v5858 = vsub.f32 %v3711, %v5646
        %v5859 = vsub.f32 %v3713, %v5646
        %v5860 = vsub.f32 %v3904, %v5646
        %v5861 = vsub.f32 %v3906, %v5646
        %v5862 = vsub.f32 %v3331, %v5651
        %v5863 = vsub.f32 %v3333, %v5651
        %v5864 = vsub.f32 %v3524, %v5651
        %v5865 = vsub.f32 %v3526, %v5651
        %v5866 = vsub.f32 %v3717, %v5651
        %v5867 = vsub.f32 %v3719, %v5651
        %v5868 = vsub.f32 %v3910, %v5651
        %v5869 = vsub.f32 %v3912, %v5651
        %v5870 = vsub.f32 %v3335, %v5656
        %v5871 = vsub.f32 %v3337, %v5656
        %v5872 = vsub.f32 %v3528, %v5656
        %v5873 = vsub.f32 %v3530, %v5656
        %v5874 = vsub.f32 %v3721, %v5656
        %v5875 = vsub.f32 %v3723, %v5656
        %v5876 = vsub.f32 %v3914, %v5656
        %v5877 = vsub.f32 %v3916, %v5656
        %v5878 = vsub.f32 %v3341, %v5661
        %v5879 = vsub.f32 %v3343, %v5661
        %v5880 = vsub.f32 %v3534, %v5661
        %v5881 = vsub.f32 %v3536, %v5661
        %v5882 = vsub.f32 %v3727, %v5661
        %v5883 = vsub.f32 %v3729, %v5661
        %v5884 = vsub.f32 %v3920, %v5661
        %v5885 = vsub.f32 %v3922, %v5661
        %v5886 = vsub.f32 %v3345, %v5666
        %v5887 = vsub.f32 %v3347, %v5666
        %v5888 = vsub.f32 %v3538, %v5666
        %v5889 = vsub.f32 %v3540, %v5666
        %v5890 = vsub.f32 %v3731, %v5666
        %v5891 = vsub.f32 %v3733, %v5666
        %v5892 = vsub.f32 %v3924, %v5666
        %v5893 = vsub.f32 %v3926, %v5666
        %v5894 = vsub.f32 %v3351, %v5671
        %v5895 = vsub.f32 %v3353, %v5671
        %v5896 = vsub.f32 %v3544, %v5671
        %v5897 = vsub.f32 %v3546, %v5671
        %v5898 = vsub.f32 %v3737, %v5671
        %v5899 = vsub.f32 %v3739, %v5671
        %v5900 = vsub.f32 %v3930, %v5671
        %v5901 = vsub.f32 %v3932, %v5671
        %v5902 = vsub.f32 %v3355, %v5676
        %v5903 = vsub.f32 %v3357, %v5676
        %v5904 = vsub.f32 %v3548, %v5676
        %v5905 = vsub.f32 %v3550, %v5676
        %v5906 = vsub.f32 %v3741, %v5676
        %v5907 = vsub.f32 %v3743, %v5676
        %v5908 = vsub.f32 %v3934, %v5676
        %v5909 = vsub.f32 %v3936, %v5676
        %v5910 = vsub.f32 %v3361, %v5681
        %v5911 = vsub.f32 %v3363, %v5681
        %v5912 = vsub.f32 %v3554, %v5681
        %v5913 = vsub.f32 %v3556, %v5681
        %v5914 = vsub.f32 %v3747, %v5681
        %v5915 = vsub.f32 %v3749, %v5681
        %v5916 = vsub.f32 %v3940, %v5681
        %v5917 = vsub.f32 %v3942, %v5681
        %v5918 = vsub.f32 %v3365, %v5686
        %v5919 = vsub.f32 %v3367, %v5686
        %v5920 = vsub.f32 %v3558, %v5686
        %v5921 = vsub.f32 %v3560, %v5686
        %v5922 = vsub.f32 %v3751, %v5686
        %v5923 = vsub.f32 %v3753, %v5686
        %v5924 = vsub.f32 %v3944, %v5686
        %v5925 = vsub.f32 %v3946, %v5686
        %v5926 = vsub.f32 %v3371, %v5691
        %v5927 = vsub.f32 %v3373, %v5691
        %v5928 = vsub.f32 %v3564, %v5691
        %v5929 = vsub.f32 %v3566, %v5691
        %v5930 = vsub.f32 %v3757, %v5691
        %v5931 = vsub.f32 %v3759, %v5691
        %v5932 = vsub.f32 %v3950, %v5691
        %v5933 = vsub.f32 %v3952, %v5691
        %v5934 = vsub.f32 %v3375, %v5696
        %v5935 = vsub.f32 %v3377, %v5696
        %v5936 = vsub.f32 %v3568, %v5696
        %v5937 = vsub.f32 %v3570, %v5696
        %v5938 = vsub.f32 %v3761, %v5696
        %v5939 = vsub.f32 %v3763, %v5696
        %v5940 = vsub.f32 %v3954, %v5696
        %v5941 = vsub.f32 %v3956, %v5696
        %v5942 = vsub.f32 %v3381, %v5701
        %v5943 = vsub.f32 %v3383, %v5701
        %v5944 = vsub.f32 %v3574, %v5701
        %v5945 = vsub.f32 %v3576, %v5701
        %v5946 = vsub.f32 %v3767, %v5701
        %v5947 = vsub.f32 %v3769, %v5701
        %v5948 = vsub.f32 %v3960, %v5701
        %v5949 = vsub.f32 %v3962, %v5701
        %v5950 = vsub.f32 %v3385, %v5706
        %v5951 = vsub.f32 %v3387, %v5706
        %v5952 = vsub.f32 %v3578, %v5706
        %v5953 = vsub.f32 %v3580, %v5706
        %v5954 = vsub.f32 %v3771, %v5706
        %v5955 = vsub.f32 %v3773, %v5706
        %v5956 = vsub.f32 %v3964, %v5706
        %v5957 = vsub.f32 %v3966, %v5706
        %v5958 = vsub.f32 %v3391, %v5711
        %v5959 = vsub.f32 %v3393, %v5711
        %v5960 = vsub.f32 %v3584, %v5711
        %v5961 = vsub.f32 %v3586, %v5711
        %v5962 = vsub.f32 %v3777, %v5711
        %v5963 = vsub.f32 %v3779, %v5711
        %v5964 = vsub.f32 %v3970, %v5711
        %v5965 = vsub.f32 %v3972, %v5711
        %v5966 = vsub.f32 %v3395, %v5716
        %v5967 = vsub.f32 %v3397, %v5716
        %v5968 = vsub.f32 %v3588, %v5716
        %v5969 = vsub.f32 %v3590, %v5716
        %v5970 = vsub.f32 %v3781, %v5716
        %v5971 = vsub.f32 %v3783, %v5716
        %v5972 = vsub.f32 %v3974, %v5716
        %v5973 = vsub.f32 %v3976, %v5716
        %v5974 = vmul.f32 %v5718, 1.442695
        %v5975 = vpow.pop %v5974
        %v5976 = vmul.f32 %v5719, 1.442695
        %v5977 = vpow.pop %v5976
        %v5978 = vmul.f32 %v5720, 1.442695
        %v5979 = vpow.pop %v5978
        %v5980 = vmul.f32 %v5721, 1.442695
        %v5981 = vpow.pop %v5980
        %v5982 = vmul.f32 %v5722, 1.442695
        %v5983 = vpow.pop %v5982
        %v5984 = vmul.f32 %v5723, 1.442695
        %v5985 = vpow.pop %v5984
        %v5986 = vmul.f32 %v5724, 1.442695
        %v5987 = vpow.pop %v5986
        %v5988 = vmul.f32 %v5725, 1.442695
        %v5989 = vpow.pop %v5988
        %v5990 = vmul.f32 %v5726, 1.442695
        %v5991 = vpow.pop %v5990
        %v5992 = vmul.f32 %v5727, 1.442695
        %v5993 = vpow.pop %v5992
        %v5994 = vmul.f32 %v5728, 1.442695
        %v5995 = vpow.pop %v5994
        %v5996 = vmul.f32 %v5729, 1.442695
        %v5997 = vpow.pop %v5996
        %v5998 = vmul.f32 %v5730, 1.442695
        %v5999 = vpow.pop %v5998
        %v6000 = vmul.f32 %v5731, 1.442695
        %v6001 = vpow.pop %v6000
        %v6002 = vmul.f32 %v5732, 1.442695
        %v6003 = vpow.pop %v6002
        %v6004 = vmul.f32 %v5733, 1.442695
        %v6005 = vpow.pop %v6004
        %v6006 = vmul.f32 %v5734, 1.442695
        %v6007 = vpow.pop %v6006
        %v6008 = vmul.f32 %v5735, 1.442695
        %v6009 = vpow.pop %v6008
        %v6010 = vmul.f32 %v5736, 1.442695
        %v6011 = vpow.pop %v6010
        %v6012 = vmul.f32 %v5737, 1.442695
        %v6013 = vpow.pop %v6012
        %v6014 = vmul.f32 %v5738, 1.442695
        %v6015 = vpow.pop %v6014
        %v6016 = vmul.f32 %v5739, 1.442695
        %v6017 = vpow.pop %v6016
        %v6018 = vmul.f32 %v5740, 1.442695
        %v6019 = vpow.pop %v6018
        %v6020 = vmul.f32 %v5741, 1.442695
        %v6021 = vpow.pop %v6020
        %v6022 = vmul.f32 %v5742, 1.442695
        %v6023 = vpow.pop %v6022
        %v6024 = vmul.f32 %v5743, 1.442695
        %v6025 = vpow.pop %v6024
        %v6026 = vmul.f32 %v5744, 1.442695
        %v6027 = vpow.pop %v6026
        %v6028 = vmul.f32 %v5745, 1.442695
        %v6029 = vpow.pop %v6028
        %v6030 = vmul.f32 %v5746, 1.442695
        %v6031 = vpow.pop %v6030
        %v6032 = vmul.f32 %v5747, 1.442695
        %v6033 = vpow.pop %v6032
        %v6034 = vmul.f32 %v5748, 1.442695
        %v6035 = vpow.pop %v6034
        %v6036 = vmul.f32 %v5749, 1.442695
        %v6037 = vpow.pop %v6036
        %v6038 = vmul.f32 %v5750, 1.442695
        %v6039 = vpow.pop %v6038
        %v6040 = vmul.f32 %v5751, 1.442695
        %v6041 = vpow.pop %v6040
        %v6042 = vmul.f32 %v5752, 1.442695
        %v6043 = vpow.pop %v6042
        %v6044 = vmul.f32 %v5753, 1.442695
        %v6045 = vpow.pop %v6044
        %v6046 = vmul.f32 %v5754, 1.442695
        %v6047 = vpow.pop %v6046
        %v6048 = vmul.f32 %v5755, 1.442695
        %v6049 = vpow.pop %v6048
        %v6050 = vmul.f32 %v5756, 1.442695
        %v6051 = vpow.pop %v6050
        %v6052 = vmul.f32 %v5757, 1.442695
        %v6053 = vpow.pop %v6052
        %v6054 = vmul.f32 %v5758, 1.442695
        %v6055 = vpow.pop %v6054
        %v6056 = vmul.f32 %v5759, 1.442695
        %v6057 = vpow.pop %v6056
        %v6058 = vmul.f32 %v5760, 1.442695
        %v6059 = vpow.pop %v6058
        %v6060 = vmul.f32 %v5761, 1.442695
        %v6061 = vpow.pop %v6060
        %v6062 = vmul.f32 %v5762, 1.442695
        %v6063 = vpow.pop %v6062
        %v6064 = vmul.f32 %v5763, 1.442695
        %v6065 = vpow.pop %v6064
        %v6066 = vmul.f32 %v5764, 1.442695
        %v6067 = vpow.pop %v6066
        %v6068 = vmul.f32 %v5765, 1.442695
        %v6069 = vpow.pop %v6068
        %v6070 = vmul.f32 %v5766, 1.442695
        %v6071 = vpow.pop %v6070
        %v6072 = vmul.f32 %v5767, 1.442695
        %v6073 = vpow.pop %v6072
        %v6074 = vmul.f32 %v5768, 1.442695
        %v6075 = vpow.pop %v6074
        %v6076 = vmul.f32 %v5769, 1.442695
        %v6077 = vpow.pop %v6076
        %v6078 = vmul.f32 %v5770, 1.442695
        %v6079 = vpow.pop %v6078
        %v6080 = vmul.f32 %v5771, 1.442695
        %v6081 = vpow.pop %v6080
        %v6082 = vmul.f32 %v5772, 1.442695
        %v6083 = vpow.pop %v6082
        %v6084 = vmul.f32 %v5773, 1.442695
        %v6085 = vpow.pop %v6084
        %v6086 = vmul.f32 %v5774, 1.442695
        %v6087 = vpow.pop %v6086
        %v6088 = vmul.f32 %v5775, 1.442695
        %v6089 = vpow.pop %v6088
        %v6090 = vmul.f32 %v5776, 1.442695
        %v6091 = vpow.pop %v6090
        %v6092 = vmul.f32 %v5777, 1.442695
        %v6093 = vpow.pop %v6092
        %v6094 = vmul.f32 %v5778, 1.442695
        %v6095 = vpow.pop %v6094
        %v6096 = vmul.f32 %v5779, 1.442695
        %v6097 = vpow.pop %v6096
        %v6098 = vmul.f32 %v5780, 1.442695
        %v6099 = vpow.pop %v6098
        %v6100 = vmul.f32 %v5781, 1.442695
        %v6101 = vpow.pop %v6100
        %v6102 = vmul.f32 %v5782, 1.442695
        %v6103 = vpow.pop %v6102
        %v6104 = vmul.f32 %v5783, 1.442695
        %v6105 = vpow.pop %v6104
        %v6106 = vmul.f32 %v5784, 1.442695
        %v6107 = vpow.pop %v6106
        %v6108 = vmul.f32 %v5785, 1.442695
        %v6109 = vpow.pop %v6108
        %v6110 = vmul.f32 %v5786, 1.442695
        %v6111 = vpow.pop %v6110
        %v6112 = vmul.f32 %v5787, 1.442695
        %v6113 = vpow.pop %v6112
        %v6114 = vmul.f32 %v5788, 1.442695
        %v6115 = vpow.pop %v6114
        %v6116 = vmul.f32 %v5789, 1.442695
        %v6117 = vpow.pop %v6116
        %v6118 = vmul.f32 %v5790, 1.442695
        %v6119 = vpow.pop %v6118
        %v6120 = vmul.f32 %v5791, 1.442695
        %v6121 = vpow.pop %v6120
        %v6122 = vmul.f32 %v5792, 1.442695
        %v6123 = vpow.pop %v6122
        %v6124 = vmul.f32 %v5793, 1.442695
        %v6125 = vpow.pop %v6124
        %v6126 = vmul.f32 %v5794, 1.442695
        %v6127 = vpow.pop %v6126
        %v6128 = vmul.f32 %v5795, 1.442695
        %v6129 = vpow.pop %v6128
        %v6130 = vmul.f32 %v5796, 1.442695
        %v6131 = vpow.pop %v6130
        %v6132 = vmul.f32 %v5797, 1.442695
        %v6133 = vpow.pop %v6132
        %v6134 = vmul.f32 %v5798, 1.442695
        %v6135 = vpow.pop %v6134
        %v6136 = vmul.f32 %v5799, 1.442695
        %v6137 = vpow.pop %v6136
        %v6138 = vmul.f32 %v5800, 1.442695
        %v6139 = vpow.pop %v6138
        %v6140 = vmul.f32 %v5801, 1.442695
        %v6141 = vpow.pop %v6140
        %v6142 = vmul.f32 %v5802, 1.442695
        %v6143 = vpow.pop %v6142
        %v6144 = vmul.f32 %v5803, 1.442695
        %v6145 = vpow.pop %v6144
        %v6146 = vmul.f32 %v5804, 1.442695
        %v6147 = vpow.pop %v6146
        %v6148 = vmul.f32 %v5805, 1.442695
        %v6149 = vpow.pop %v6148
        %v6150 = vmul.f32 %v5806, 1.442695
        %v6151 = vpow.pop %v6150
        %v6152 = vmul.f32 %v5807, 1.442695
        %v6153 = vpow.pop %v6152
        %v6154 = vmul.f32 %v5808, 1.442695
        %v6155 = vpow.pop %v6154
        %v6156 = vmul.f32 %v5809, 1.442695
        %v6157 = vpow.pop %v6156
        %v6158 = vmul.f32 %v5810, 1.442695
        %v6159 = vpow.pop %v6158
        %v6160 = vmul.f32 %v5811, 1.442695
        %v6161 = vpow.pop %v6160
        %v6162 = vmul.f32 %v5812, 1.442695
        %v6163 = vpow.pop %v6162
        %v6164 = vmul.f32 %v5813, 1.442695
        %v6165 = vpow.pop %v6164
        %v6166 = vmul.f32 %v5814, 1.442695
        %v6167 = vpow.pop %v6166
        %v6168 = vmul.f32 %v5815, 1.442695
        %v6169 = vpow.pop %v6168
        %v6170 = vmul.f32 %v5816, 1.442695
        %v6171 = vpow.pop %v6170
        %v6172 = vmul.f32 %v5817, 1.442695
        %v6173 = vpow.pop %v6172
        %v6174 = vmul.f32 %v5818, 1.442695
        %v6175 = vpow.pop %v6174
        %v6176 = vmul.f32 %v5819, 1.442695
        %v6177 = vpow.pop %v6176
        %v6178 = vmul.f32 %v5820, 1.442695
        %v6179 = vpow.pop %v6178
        %v6180 = vmul.f32 %v5821, 1.442695
        %v6181 = vpow.pop %v6180
        %v6182 = vmul.f32 %v5822, 1.442695
        %v6183 = vpow.pop %v6182
        %v6184 = vmul.f32 %v5823, 1.442695
        %v6185 = vpow.pop %v6184
        %v6186 = vmul.f32 %v5824, 1.442695
        %v6187 = vpow.pop %v6186
        %v6188 = vmul.f32 %v5825, 1.442695
        %v6189 = vpow.pop %v6188
        %v6190 = vmul.f32 %v5826, 1.442695
        %v6191 = vpow.pop %v6190
        %v6192 = vmul.f32 %v5827, 1.442695
        %v6193 = vpow.pop %v6192
        %v6194 = vmul.f32 %v5828, 1.442695
        %v6195 = vpow.pop %v6194
        %v6196 = vmul.f32 %v5829, 1.442695
        %v6197 = vpow.pop %v6196
        %v6198 = vmul.f32 %v5830, 1.442695
        %v6199 = vpow.pop %v6198
        %v6200 = vmul.f32 %v5831, 1.442695
        %v6201 = vpow.pop %v6200
        %v6202 = vmul.f32 %v5832, 1.442695
        %v6203 = vpow.pop %v6202
        %v6204 = vmul.f32 %v5833, 1.442695
        %v6205 = vpow.pop %v6204
        %v6206 = vmul.f32 %v5834, 1.442695
        %v6207 = vpow.pop %v6206
        %v6208 = vmul.f32 %v5835, 1.442695
        %v6209 = vpow.pop %v6208
        %v6210 = vmul.f32 %v5836, 1.442695
        %v6211 = vpow.pop %v6210
        %v6212 = vmul.f32 %v5837, 1.442695
        %v6213 = vpow.pop %v6212
        %v6214 = vmul.f32 %v5838, 1.442695
        %v6215 = vpow.pop %v6214
        %v6216 = vmul.f32 %v5839, 1.442695
        %v6217 = vpow.pop %v6216
        %v6218 = vmul.f32 %v5840, 1.442695
        %v6219 = vpow.pop %v6218
        %v6220 = vmul.f32 %v5841, 1.442695
        %v6221 = vpow.pop %v6220
        %v6222 = vmul.f32 %v5842, 1.442695
        %v6223 = vpow.pop %v6222
        %v6224 = vmul.f32 %v5843, 1.442695
        %v6225 = vpow.pop %v6224
        %v6226 = vmul.f32 %v5844, 1.442695
        %v6227 = vpow.pop %v6226
        %v6228 = vmul.f32 %v5845, 1.442695
        %v6229 = vpow.pop %v6228
        %v6230 = vmul.f32 %v5846, 1.442695
        %v6231 = vpow.pop %v6230
        %v6232 = vmul.f32 %v5847, 1.442695
        %v6233 = vpow.pop %v6232
        %v6234 = vmul.f32 %v5848, 1.442695
        %v6235 = vpow.pop %v6234
        %v6236 = vmul.f32 %v5849, 1.442695
        %v6237 = vpow.pop %v6236
        %v6238 = vmul.f32 %v5850, 1.442695
        %v6239 = vpow.pop %v6238
        %v6240 = vmul.f32 %v5851, 1.442695
        %v6241 = vpow.pop %v6240
        %v6242 = vmul.f32 %v5852, 1.442695
        %v6243 = vpow.pop %v6242
        %v6244 = vmul.f32 %v5853, 1.442695
        %v6245 = vpow.pop %v6244
        %v6246 = vmul.f32 %v5854, 1.442695
        %v6247 = vpow.pop %v6246
        %v6248 = vmul.f32 %v5855, 1.442695
        %v6249 = vpow.pop %v6248
        %v6250 = vmul.f32 %v5856, 1.442695
        %v6251 = vpow.pop %v6250
        %v6252 = vmul.f32 %v5857, 1.442695
        %v6253 = vpow.pop %v6252
        %v6254 = vmul.f32 %v5858, 1.442695
        %v6255 = vpow.pop %v6254
        %v6256 = vmul.f32 %v5859, 1.442695
        %v6257 = vpow.pop %v6256
        %v6258 = vmul.f32 %v5860, 1.442695
        %v6259 = vpow.pop %v6258
        %v6260 = vmul.f32 %v5861, 1.442695
        %v6261 = vpow.pop %v6260
        %v6262 = vmul.f32 %v5862, 1.442695
        %v6263 = vpow.pop %v6262
        %v6264 = vmul.f32 %v5863, 1.442695
        %v6265 = vpow.pop %v6264
        %v6266 = vmul.f32 %v5864, 1.442695
        %v6267 = vpow.pop %v6266
        %v6268 = vmul.f32 %v5865, 1.442695
        %v6269 = vpow.pop %v6268
        %v6270 = vmul.f32 %v5866, 1.442695
        %v6271 = vpow.pop %v6270
        %v6272 = vmul.f32 %v5867, 1.442695
        %v6273 = vpow.pop %v6272
        %v6274 = vmul.f32 %v5868, 1.442695
        %v6275 = vpow.pop %v6274
        %v6276 = vmul.f32 %v5869, 1.442695
        %v6277 = vpow.pop %v6276
        %v6278 = vmul.f32 %v5870, 1.442695
        %v6279 = vpow.pop %v6278
        %v6280 = vmul.f32 %v5871, 1.442695
        %v6281 = vpow.pop %v6280
        %v6282 = vmul.f32 %v5872, 1.442695
        %v6283 = vpow.pop %v6282
        %v6284 = vmul.f32 %v5873, 1.442695
        %v6285 = vpow.pop %v6284
        %v6286 = vmul.f32 %v5874, 1.442695
        %v6287 = vpow.pop %v6286
        %v6288 = vmul.f32 %v5875, 1.442695
        %v6289 = vpow.pop %v6288
        %v6290 = vmul.f32 %v5876, 1.442695
        %v6291 = vpow.pop %v6290
        %v6292 = vmul.f32 %v5877, 1.442695
        %v6293 = vpow.pop %v6292
        %v6294 = vmul.f32 %v5878, 1.442695
        %v6295 = vpow.pop %v6294
        %v6296 = vmul.f32 %v5879, 1.442695
        %v6297 = vpow.pop %v6296
        %v6298 = vmul.f32 %v5880, 1.442695
        %v6299 = vpow.pop %v6298
        %v6300 = vmul.f32 %v5881, 1.442695
        %v6301 = vpow.pop %v6300
        %v6302 = vmul.f32 %v5882, 1.442695
        %v6303 = vpow.pop %v6302
        %v6304 = vmul.f32 %v5883, 1.442695
        %v6305 = vpow.pop %v6304
        %v6306 = vmul.f32 %v5884, 1.442695
        %v6307 = vpow.pop %v6306
        %v6308 = vmul.f32 %v5885, 1.442695
        %v6309 = vpow.pop %v6308
        %v6310 = vmul.f32 %v5886, 1.442695
        %v6311 = vpow.pop %v6310
        %v6312 = vmul.f32 %v5887, 1.442695
        %v6313 = vpow.pop %v6312
        %v6314 = vmul.f32 %v5888, 1.442695
        %v6315 = vpow.pop %v6314
        %v6316 = vmul.f32 %v5889, 1.442695
        %v6317 = vpow.pop %v6316
        %v6318 = vmul.f32 %v5890, 1.442695
        %v6319 = vpow.pop %v6318
        %v6320 = vmul.f32 %v5891, 1.442695
        %v6321 = vpow.pop %v6320
        %v6322 = vmul.f32 %v5892, 1.442695
        %v6323 = vpow.pop %v6322
        %v6324 = vmul.f32 %v5893, 1.442695
        %v6325 = vpow.pop %v6324
        %v6326 = vmul.f32 %v5894, 1.442695
        %v6327 = vpow.pop %v6326
        %v6328 = vmul.f32 %v5895, 1.442695
        %v6329 = vpow.pop %v6328
        %v6330 = vmul.f32 %v5896, 1.442695
        %v6331 = vpow.pop %v6330
        %v6332 = vmul.f32 %v5897, 1.442695
        %v6333 = vpow.pop %v6332
        %v6334 = vmul.f32 %v5898, 1.442695
        %v6335 = vpow.pop %v6334
        %v6336 = vmul.f32 %v5899, 1.442695
        %v6337 = vpow.pop %v6336
        %v6338 = vmul.f32 %v5900, 1.442695
        %v6339 = vpow.pop %v6338
        %v6340 = vmul.f32 %v5901, 1.442695
        %v6341 = vpow.pop %v6340
        %v6342 = vmul.f32 %v5902, 1.442695
        %v6343 = vpow.pop %v6342
        %v6344 = vmul.f32 %v5903, 1.442695
        %v6345 = vpow.pop %v6344
        %v6346 = vmul.f32 %v5904, 1.442695
        %v6347 = vpow.pop %v6346
        %v6348 = vmul.f32 %v5905, 1.442695
        %v6349 = vpow.pop %v6348
        %v6350 = vmul.f32 %v5906, 1.442695
        %v6351 = vpow.pop %v6350
        %v6352 = vmul.f32 %v5907, 1.442695
        %v6353 = vpow.pop %v6352
        %v6354 = vmul.f32 %v5908, 1.442695
        %v6355 = vpow.pop %v6354
        %v6356 = vmul.f32 %v5909, 1.442695
        %v6357 = vpow.pop %v6356
        %v6358 = vmul.f32 %v5910, 1.442695
        %v6359 = vpow.pop %v6358
        %v6360 = vmul.f32 %v5911, 1.442695
        %v6361 = vpow.pop %v6360
        %v6362 = vmul.f32 %v5912, 1.442695
        %v6363 = vpow.pop %v6362
        %v6364 = vmul.f32 %v5913, 1.442695
        %v6365 = vpow.pop %v6364
        %v6366 = vmul.f32 %v5914, 1.442695
        %v6367 = vpow.pop %v6366
        %v6368 = vmul.f32 %v5915, 1.442695
        %v6369 = vpow.pop %v6368
        %v6370 = vmul.f32 %v5916, 1.442695
        %v6371 = vpow.pop %v6370
        %v6372 = vmul.f32 %v5917, 1.442695
        %v6373 = vpow.pop %v6372
        %v6374 = vmul.f32 %v5918, 1.442695
        %v6375 = vpow.pop %v6374
        %v6376 = vmul.f32 %v5919, 1.442695
        %v6377 = vpow.pop %v6376
        %v6378 = vmul.f32 %v5920, 1.442695
        %v6379 = vpow.pop %v6378
        %v6380 = vmul.f32 %v5921, 1.442695
        %v6381 = vpow.pop %v6380
        %v6382 = vmul.f32 %v5922, 1.442695
        %v6383 = vpow.pop %v6382
        %v6384 = vmul.f32 %v5923, 1.442695
        %v6385 = vpow.pop %v6384
        %v6386 = vmul.f32 %v5924, 1.442695
        %v6387 = vpow.pop %v6386
        %v6388 = vmul.f32 %v5925, 1.442695
        %v6389 = vpow.pop %v6388
        %v6390 = vmul.f32 %v5926, 1.442695
        %v6391 = vpow.pop %v6390
        %v6392 = vmul.f32 %v5927, 1.442695
        %v6393 = vpow.pop %v6392
        %v6394 = vmul.f32 %v5928, 1.442695
        %v6395 = vpow.pop %v6394
        %v6396 = vmul.f32 %v5929, 1.442695
        %v6397 = vpow.pop %v6396
        %v6398 = vmul.f32 %v5930, 1.442695
        %v6399 = vpow.pop %v6398
        %v6400 = vmul.f32 %v5931, 1.442695
        %v6401 = vpow.pop %v6400
        %v6402 = vmul.f32 %v5932, 1.442695
        %v6403 = vpow.pop %v6402
        %v6404 = vmul.f32 %v5933, 1.442695
        %v6405 = vpow.pop %v6404
        %v6406 = vmul.f32 %v5934, 1.442695
        %v6407 = vpow.pop %v6406
        %v6408 = vmul.f32 %v5935, 1.442695
        %v6409 = vpow.pop %v6408
        %v6410 = vmul.f32 %v5936, 1.442695
        %v6411 = vpow.pop %v6410
        %v6412 = vmul.f32 %v5937, 1.442695
        %v6413 = vpow.pop %v6412
        %v6414 = vmul.f32 %v5938, 1.442695
        %v6415 = vpow.pop %v6414
        %v6416 = vmul.f32 %v5939, 1.442695
        %v6417 = vpow.pop %v6416
        %v6418 = vmul.f32 %v5940, 1.442695
        %v6419 = vpow.pop %v6418
        %v6420 = vmul.f32 %v5941, 1.442695
        %v6421 = vpow.pop %v6420
        %v6422 = vmul.f32 %v5942, 1.442695
        %v6423 = vpow.pop %v6422
        %v6424 = vmul.f32 %v5943, 1.442695
        %v6425 = vpow.pop %v6424
        %v6426 = vmul.f32 %v5944, 1.442695
        %v6427 = vpow.pop %v6426
        %v6428 = vmul.f32 %v5945, 1.442695
        %v6429 = vpow.pop %v6428
        %v6430 = vmul.f32 %v5946, 1.442695
        %v6431 = vpow.pop %v6430
        %v6432 = vmul.f32 %v5947, 1.442695
        %v6433 = vpow.pop %v6432
        %v6434 = vmul.f32 %v5948, 1.442695
        %v6435 = vpow.pop %v6434
        %v6436 = vmul.f32 %v5949, 1.442695
        %v6437 = vpow.pop %v6436
        %v6438 = vmul.f32 %v5950, 1.442695
        %v6439 = vpow.pop %v6438
        %v6440 = vmul.f32 %v5951, 1.442695
        %v6441 = vpow.pop %v6440
        %v6442 = vmul.f32 %v5952, 1.442695
        %v6443 = vpow.pop %v6442
        %v6444 = vmul.f32 %v5953, 1.442695
        %v6445 = vpow.pop %v6444
        %v6446 = vmul.f32 %v5954, 1.442695
        %v6447 = vpow.pop %v6446
        %v6448 = vmul.f32 %v5955, 1.442695
        %v6449 = vpow.pop %v6448
        %v6450 = vmul.f32 %v5956, 1.442695
        %v6451 = vpow.pop %v6450
        %v6452 = vmul.f32 %v5957, 1.442695
        %v6453 = vpow.pop %v6452
        %v6454 = vmul.f32 %v5958, 1.442695
        %v6455 = vpow.pop %v6454
        %v6456 = vmul.f32 %v5959, 1.442695
        %v6457 = vpow.pop %v6456
        %v6458 = vmul.f32 %v5960, 1.442695
        %v6459 = vpow.pop %v6458
        %v6460 = vmul.f32 %v5961, 1.442695
        %v6461 = vpow.pop %v6460
        %v6462 = vmul.f32 %v5962, 1.442695
        %v6463 = vpow.pop %v6462
        %v6464 = vmul.f32 %v5963, 1.442695
        %v6465 = vpow.pop %v6464
        %v6466 = vmul.f32 %v5964, 1.442695
        %v6467 = vpow.pop %v6466
        %v6468 = vmul.f32 %v5965, 1.442695
        %v6469 = vpow.pop %v6468
        %v6470 = vmul.f32 %v5966, 1.442695
        %v6471 = vpow.pop %v6470
        %v6472 = vmul.f32 %v5967, 1.442695
        %v6473 = vpow.pop %v6472
        %v6474 = vmul.f32 %v5968, 1.442695
        %v6475 = vpow.pop %v6474
        %v6476 = vmul.f32 %v5969, 1.442695
        %v6477 = vpow.pop %v6476
        %v6478 = vmul.f32 %v5970, 1.442695
        %v6479 = vpow.pop %v6478
        %v6480 = vmul.f32 %v5971, 1.442695
        %v6481 = vpow.pop %v6480
        %v6482 = vmul.f32 %v5972, 1.442695
        %v6483 = vpow.pop %v6482
        %v6484 = vmul.f32 %v5973, 1.442695
        %v6485 = vpow.pop %v6484
        %v6486 = vadd.f32 %v5975, %v5977
        %v6487 = vadd.f32 %v6486, %v5979
        %v6488 = vadd.f32 %v6487, %v5981
        %v6489 = vadd.f32 %v6488, %v5983
        %v6490 = vadd.f32 %v6489, %v5985
        %v6491 = vadd.f32 %v6490, %v5987
        %v6492 = vadd.f32 %v6491, %v5989
        %6493 = vadd.xlane.f32.xlu0 %v6492
        %v6494 = vpop.xlane.xlu0 %6493
        %v6495 = vadd.f32 %v5991, %v5993
        %v6496 = vadd.f32 %v6495, %v5995
        %v6497 = vadd.f32 %v6496, %v5997
        %v6498 = vadd.f32 %v6497, %v5999
        %v6499 = vadd.f32 %v6498, %v6001
        %v6500 = vadd.f32 %v6499, %v6003
        %v6501 = vadd.f32 %v6500, %v6005
        %6502 = vadd.xlane.f32.xlu0 %v6501
        %v6503 = vpop.xlane.xlu0 %6502
        %v6504 = vadd.f32 %v6007, %v6009
        %v6505 = vadd.f32 %v6504, %v6011
        %v6506 = vadd.f32 %v6505, %v6013
        %v6507 = vadd.f32 %v6506, %v6015
        %v6508 = vadd.f32 %v6507, %v6017
        %v6509 = vadd.f32 %v6508, %v6019
        %v6510 = vadd.f32 %v6509, %v6021
        %6511 = vadd.xlane.f32.xlu0 %v6510
        %v6512 = vpop.xlane.xlu0 %6511
        %v6513 = vadd.f32 %v6023, %v6025
        %v6514 = vadd.f32 %v6513, %v6027
        %v6515 = vadd.f32 %v6514, %v6029
        %v6516 = vadd.f32 %v6515, %v6031
        %v6517 = vadd.f32 %v6516, %v6033
        %v6518 = vadd.f32 %v6517, %v6035
        %v6519 = vadd.f32 %v6518, %v6037
        %6520 = vadd.xlane.f32.xlu0 %v6519
        %v6521 = vpop.xlane.xlu0 %6520
        %v6522 = vadd.f32 %v6039, %v6041
        %v6523 = vadd.f32 %v6522, %v6043
        %v6524 = vadd.f32 %v6523, %v6045
        %v6525 = vadd.f32 %v6524, %v6047
        %v6526 = vadd.f32 %v6525, %v6049
        %v6527 = vadd.f32 %v6526, %v6051
        %v6528 = vadd.f32 %v6527, %v6053
        %6529 = vadd.xlane.f32.xlu0 %v6528
        %v6530 = vpop.xlane.xlu0 %6529
        %v6531 = vadd.f32 %v6055, %v6057
        %v6532 = vadd.f32 %v6531, %v6059
        %v6533 = vadd.f32 %v6532, %v6061
        %v6534 = vadd.f32 %v6533, %v6063
        %v6535 = vadd.f32 %v6534, %v6065
        %v6536 = vadd.f32 %v6535, %v6067
        %v6537 = vadd.f32 %v6536, %v6069
        %6538 = vadd.xlane.f32.xlu0 %v6537
        %v6539 = vpop.xlane.xlu0 %6538
        %v6540 = vadd.f32 %v6071, %v6073
        %v6541 = vadd.f32 %v6540, %v6075
        %v6542 = vadd.f32 %v6541, %v6077
        %v6543 = vadd.f32 %v6542, %v6079
        %v6544 = vadd.f32 %v6543, %v6081
        %v6545 = vadd.f32 %v6544, %v6083
        %v6546 = vadd.f32 %v6545, %v6085
        %6547 = vadd.xlane.f32.xlu0 %v6546
        %v6548 = vpop.xlane.xlu0 %6547
        %v6549 = vadd.f32 %v6087, %v6089
        %v6550 = vadd.f32 %v6549, %v6091
        %v6551 = vadd.f32 %v6550, %v6093
        %v6552 = vadd.f32 %v6551, %v6095
        %v6553 = vadd.f32 %v6552, %v6097
        %v6554 = vadd.f32 %v6553, %v6099
        %v6555 = vadd.f32 %v6554, %v6101
        %6556 = vadd.xlane.f32.xlu0 %v6555
        %v6557 = vpop.xlane.xlu0 %6556
        %v6558 = vadd.f32 %v6103, %v6105
        %v6559 = vadd.f32 %v6558, %v6107
        %v6560 = vadd.f32 %v6559, %v6109
        %v6561 = vadd.f32 %v6560, %v6111
        %v6562 = vadd.f32 %v6561, %v6113
        %v6563 = vadd.f32 %v6562, %v6115
        %v6564 = vadd.f32 %v6563, %v6117
        %6565 = vadd.xlane.f32.xlu0 %v6564
        %v6566 = vpop.xlane.xlu0 %6565
        %v6567 = vadd.f32 %v6119, %v6121
        %v6568 = vadd.f32 %v6567, %v6123
        %v6569 = vadd.f32 %v6568, %v6125
        %v6570 = vadd.f32 %v6569, %v6127
        %v6571 = vadd.f32 %v6570, %v6129
        %v6572 = vadd.f32 %v6571, %v6131
        %v6573 = vadd.f32 %v6572, %v6133
        %6574 = vadd.xlane.f32.xlu0 %v6573
        %v6575 = vpop.xlane.xlu0 %6574
        %v6576 = vadd.f32 %v6135, %v6137
        %v6577 = vadd.f32 %v6576, %v6139
        %v6578 = vadd.f32 %v6577, %v6141
        %v6579 = vadd.f32 %v6578, %v6143
        %v6580 = vadd.f32 %v6579, %v6145
        %v6581 = vadd.f32 %v6580, %v6147
        %v6582 = vadd.f32 %v6581, %v6149
        %6583 = vadd.xlane.f32.xlu0 %v6582
        %v6584 = vpop.xlane.xlu0 %6583
        %v6585 = vadd.f32 %v6151, %v6153
        %v6586 = vadd.f32 %v6585, %v6155
        %v6587 = vadd.f32 %v6586, %v6157
        %v6588 = vadd.f32 %v6587, %v6159
        %v6589 = vadd.f32 %v6588, %v6161
        %v6590 = vadd.f32 %v6589, %v6163
        %v6591 = vadd.f32 %v6590, %v6165
        %6592 = vadd.xlane.f32.xlu0 %v6591
        %v6593 = vpop.xlane.xlu0 %6592
        %v6594 = vadd.f32 %v6167, %v6169
        %v6595 = vadd.f32 %v6594, %v6171
        %v6596 = vadd.f32 %v6595, %v6173
        %v6597 = vadd.f32 %v6596, %v6175
        %v6598 = vadd.f32 %v6597, %v6177
        %v6599 = vadd.f32 %v6598, %v6179
        %v6600 = vadd.f32 %v6599, %v6181
        %6601 = vadd.xlane.f32.xlu0 %v6600
        %v6602 = vpop.xlane.xlu0 %6601
        %v6603 = vadd.f32 %v6183, %v6185
        %v6604 = vadd.f32 %v6603, %v6187
        %v6605 = vadd.f32 %v6604, %v6189
        %v6606 = vadd.f32 %v6605, %v6191
        %v6607 = vadd.f32 %v6606, %v6193
        %v6608 = vadd.f32 %v6607, %v6195
        %v6609 = vadd.f32 %v6608, %v6197
        %6610 = vadd.xlane.f32.xlu0 %v6609
        %v6611 = vpop.xlane.xlu0 %6610
        %v6612 = vadd.f32 %v6199, %v6201
        %v6613 = vadd.f32 %v6612, %v6203
        %v6614 = vadd.f32 %v6613, %v6205
        %v6615 = vadd.f32 %v6614, %v6207
        %v6616 = vadd.f32 %v6615, %v6209
        %v6617 = vadd.f32 %v6616, %v6211
        %v6618 = vadd.f32 %v6617, %v6213
        %6619 = vadd.xlane.f32.xlu0 %v6618
        %v6620 = vpop.xlane.xlu0 %6619
        %v6621 = vadd.f32 %v6215, %v6217
        %v6622 = vadd.f32 %v6621, %v6219
        %v6623 = vadd.f32 %v6622, %v6221
        %v6624 = vadd.f32 %v6623, %v6223
        %v6625 = vadd.f32 %v6624, %v6225
        %v6626 = vadd.f32 %v6625, %v6227
        %v6627 = vadd.f32 %v6626, %v6229
        %6628 = vadd.xlane.f32.xlu0 %v6627
        %v6629 = vpop.xlane.xlu0 %6628
        %v6630 = vadd.f32 %v6231, %v6233
        %v6631 = vadd.f32 %v6630, %v6235
        %v6632 = vadd.f32 %v6631, %v6237
        %v6633 = vadd.f32 %v6632, %v6239
        %v6634 = vadd.f32 %v6633, %v6241
        %v6635 = vadd.f32 %v6634, %v6243
        %v6636 = vadd.f32 %v6635, %v6245
        %6637 = vadd.xlane.f32.xlu0 %v6636
        %v6638 = vpop.xlane.xlu0 %6637
        %v6639 = vadd.f32 %v6247, %v6249
        %v6640 = vadd.f32 %v6639, %v6251
        %v6641 = vadd.f32 %v6640, %v6253
        %v6642 = vadd.f32 %v6641, %v6255
        %v6643 = vadd.f32 %v6642, %v6257
        %v6644 = vadd.f32 %v6643, %v6259
        %v6645 = vadd.f32 %v6644, %v6261
        %6646 = vadd.xlane.f32.xlu0 %v6645
        %v6647 = vpop.xlane.xlu0 %6646
        %v6648 = vadd.f32 %v6263, %v6265
        %v6649 = vadd.f32 %v6648, %v6267
        %v6650 = vadd.f32 %v6649, %v6269
        %v6651 = vadd.f32 %v6650, %v6271
        %v6652 = vadd.f32 %v6651, %v6273
        %v6653 = vadd.f32 %v6652, %v6275
        %v6654 = vadd.f32 %v6653, %v6277
        %6655 = vadd.xlane.f32.xlu0 %v6654
        %v6656 = vpop.xlane.xlu0 %6655
        %v6657 = vadd.f32 %v6279, %v6281
        %v6658 = vadd.f32 %v6657, %v6283
        %v6659 = vadd.f32 %v6658, %v6285
        %v6660 = vadd.f32 %v6659, %v6287
        %v6661 = vadd.f32 %v6660, %v6289
        %v6662 = vadd.f32 %v6661, %v6291
        %v6663 = vadd.f32 %v6662, %v6293
        %6664 = vadd.xlane.f32.xlu0 %v6663
        %v6665 = vpop.xlane.xlu0 %6664
        %v6666 = vadd.f32 %v6295, %v6297
        %v6667 = vadd.f32 %v6666, %v6299
        %v6668 = vadd.f32 %v6667, %v6301
        %v6669 = vadd.f32 %v6668, %v6303
        %v6670 = vadd.f32 %v6669, %v6305
        %v6671 = vadd.f32 %v6670, %v6307
        %v6672 = vadd.f32 %v6671, %v6309
        %6673 = vadd.xlane.f32.xlu0 %v6672
        %v6674 = vpop.xlane.xlu0 %6673
        %v6675 = vadd.f32 %v6311, %v6313
        %v6676 = vadd.f32 %v6675, %v6315
        %v6677 = vadd.f32 %v6676, %v6317
        %v6678 = vadd.f32 %v6677, %v6319
        %v6679 = vadd.f32 %v6678, %v6321
        %v6680 = vadd.f32 %v6679, %v6323
        %v6681 = vadd.f32 %v6680, %v6325
        %6682 = vadd.xlane.f32.xlu0 %v6681
        %v6683 = vpop.xlane.xlu0 %6682
        %v6684 = vadd.f32 %v6327, %v6329
        %v6685 = vadd.f32 %v6684, %v6331
        %v6686 = vadd.f32 %v6685, %v6333
        %v6687 = vadd.f32 %v6686, %v6335
        %v6688 = vadd.f32 %v6687, %v6337
        %v6689 = vadd.f32 %v6688, %v6339
        %v6690 = vadd.f32 %v6689, %v6341
        %6691 = vadd.xlane.f32.xlu0 %v6690
        %v6692 = vpop.xlane.xlu0 %6691
        %v6693 = vadd.f32 %v6343, %v6345
        %v6694 = vadd.f32 %v6693, %v6347
        %v6695 = vadd.f32 %v6694, %v6349
        %v6696 = vadd.f32 %v6695, %v6351
        %v6697 = vadd.f32 %v6696, %v6353
        %v6698 = vadd.f32 %v6697, %v6355
        %v6699 = vadd.f32 %v6698, %v6357
        %6700 = vadd.xlane.f32.xlu0 %v6699
        %v6701 = vpop.xlane.xlu0 %6700
        %v6702 = vadd.f32 %v6359, %v6361
        %v6703 = vadd.f32 %v6702, %v6363
        %v6704 = vadd.f32 %v6703, %v6365
        %v6705 = vadd.f32 %v6704, %v6367
        %v6706 = vadd.f32 %v6705, %v6369
        %v6707 = vadd.f32 %v6706, %v6371
        %v6708 = vadd.f32 %v6707, %v6373
        %6709 = vadd.xlane.f32.xlu0 %v6708
        %v6710 = vpop.xlane.xlu0 %6709
        %v6711 = vadd.f32 %v6375, %v6377
        %v6712 = vadd.f32 %v6711, %v6379
        %v6713 = vadd.f32 %v6712, %v6381
        %v6714 = vadd.f32 %v6713, %v6383
        %v6715 = vadd.f32 %v6714, %v6385
        %v6716 = vadd.f32 %v6715, %v6387
        %v6717 = vadd.f32 %v6716, %v6389
        %6718 = vadd.xlane.f32.xlu0 %v6717
        %v6719 = vpop.xlane.xlu0 %6718
        %v6720 = vadd.f32 %v6391, %v6393
        %v6721 = vadd.f32 %v6720, %v6395
        %v6722 = vadd.f32 %v6721, %v6397
        %v6723 = vadd.f32 %v6722, %v6399
        %v6724 = vadd.f32 %v6723, %v6401
        %v6725 = vadd.f32 %v6724, %v6403
        %v6726 = vadd.f32 %v6725, %v6405
        %6727 = vadd.xlane.f32.xlu0 %v6726
        %v6728 = vpop.xlane.xlu0 %6727
        %v6729 = vadd.f32 %v6407, %v6409
        %v6730 = vadd.f32 %v6729, %v6411
        %v6731 = vadd.f32 %v6730, %v6413
        %v6732 = vadd.f32 %v6731, %v6415
        %v6733 = vadd.f32 %v6732, %v6417
        %v6734 = vadd.f32 %v6733, %v6419
        %v6735 = vadd.f32 %v6734, %v6421
        %6736 = vadd.xlane.f32.xlu0 %v6735
        %v6737 = vpop.xlane.xlu0 %6736
        %v6738 = vadd.f32 %v6423, %v6425
        %v6739 = vadd.f32 %v6738, %v6427
        %v6740 = vadd.f32 %v6739, %v6429
        %v6741 = vadd.f32 %v6740, %v6431
        %v6742 = vadd.f32 %v6741, %v6433
        %v6743 = vadd.f32 %v6742, %v6435
        %v6744 = vadd.f32 %v6743, %v6437
        %6745 = vadd.xlane.f32.xlu0 %v6744
        %v6746 = vpop.xlane.xlu0 %6745
        %v6747 = vadd.f32 %v6439, %v6441
        %v6748 = vadd.f32 %v6747, %v6443
        %v6749 = vadd.f32 %v6748, %v6445
        %v6750 = vadd.f32 %v6749, %v6447
        %v6751 = vadd.f32 %v6750, %v6449
        %v6752 = vadd.f32 %v6751, %v6451
        %v6753 = vadd.f32 %v6752, %v6453
        %6754 = vadd.xlane.f32.xlu0 %v6753
        %v6755 = vpop.xlane.xlu0 %6754
        %v6756 = vadd.f32 %v6455, %v6457
        %v6757 = vadd.f32 %v6756, %v6459
        %v6758 = vadd.f32 %v6757, %v6461
        %v6759 = vadd.f32 %v6758, %v6463
        %v6760 = vadd.f32 %v6759, %v6465
        %v6761 = vadd.f32 %v6760, %v6467
        %v6762 = vadd.f32 %v6761, %v6469
        %6763 = vadd.xlane.f32.xlu0 %v6762
        %v6764 = vpop.xlane.xlu0 %6763
        %v6765 = vadd.f32 %v6471, %v6473
        %v6766 = vadd.f32 %v6765, %v6475
        %v6767 = vadd.f32 %v6766, %v6477
        %v6768 = vadd.f32 %v6767, %v6479
        %v6769 = vadd.f32 %v6768, %v6481
        %v6770 = vadd.f32 %v6769, %v6483
        %v6771 = vadd.f32 %v6770, %v6485
        %6772 = vadd.xlane.f32.xlu0 %v6771
        %v6773 = vpop.xlane.xlu0 %6772
        %v6774 = vadd.f32 %v5526, %v6494
        %v6775 = vadd.f32 %v5527, %v6503
        %v6776 = vadd.f32 %v5528, %v6512
        %v6777 = vadd.f32 %v5529, %v6521
        %v6778 = vadd.f32 %v5530, %v6530
        %v6779 = vadd.f32 %v5531, %v6539
        %v6780 = vadd.f32 %v5532, %v6548
        %v6781 = vadd.f32 %v5533, %v6557
        %v6782 = vadd.f32 %v5534, %v6566
        %v6783 = vadd.f32 %v5535, %v6575
        %v6784 = vadd.f32 %v5536, %v6584
        %v6785 = vadd.f32 %v5537, %v6593
        %v6786 = vadd.f32 %v5538, %v6602
        %v6787 = vadd.f32 %v5539, %v6611
        %v6788 = vadd.f32 %v5540, %v6620
        %v6789 = vadd.f32 %v5541, %v6629
        %v6790 = vadd.f32 %v5542, %v6638
        %v6791 = vadd.f32 %v5543, %v6647
        %v6792 = vadd.f32 %v5544, %v6656
        %v6793 = vadd.f32 %v5545, %v6665
        %v6794 = vadd.f32 %v5546, %v6674
        %v6795 = vadd.f32 %v5547, %v6683
        %v6796 = vadd.f32 %v5548, %v6692
        %v6797 = vadd.f32 %v5549, %v6701
        %v6798 = vadd.f32 %v5550, %v6710
        %v6799 = vadd.f32 %v5551, %v6719
        %v6800 = vadd.f32 %v5552, %v6728
        %v6801 = vadd.f32 %v5553, %v6737
        %v6802 = vadd.f32 %v5554, %v6746
        %v6803 = vadd.f32 %v5555, %v6755
        %v6804 = vadd.f32 %v5556, %v6764
        %v6805 = vadd.f32 %v5557, %v6773
        %6806 = vst.msk [vmem:[#allocation4] sm:$0xff] %vm5013, %v6774
        %6807 = vst.msk [vmem:[#allocation4 + $0x8] sm:$0xff] %vm5013, %v6775
        %6808 = vst.msk [vmem:[#allocation4 + $0x10] sm:$0xff] %vm5013, %v6776
        %6809 = vst.msk [vmem:[#allocation4 + $0x18] sm:$0xff] %vm5013, %v6777
        %6810 = vst.msk [vmem:[#allocation4 + $0x20] sm:$0xff] %vm5013, %v6778
        %6811 = vst.msk [vmem:[#allocation4 + $0x28] sm:$0xff] %vm5013, %v6779
        %6812 = vst.msk [vmem:[#allocation4 + $0x30] sm:$0xff] %vm5013, %v6780
        %6813 = vst.msk [vmem:[#allocation4 + $0x38] sm:$0xff] %vm5013, %v6781
        %6814 = vst.msk [vmem:[#allocation4 + $0x40] sm:$0xff] %vm5013, %v6782
        %6815 = vst.msk [vmem:[#allocation4 + $0x48] sm:$0xff] %vm5013, %v6783
        %6816 = vst.msk [vmem:[#allocation4 + $0x50] sm:$0xff] %vm5013, %v6784
        %6817 = vst.msk [vmem:[#allocation4 + $0x58] sm:$0xff] %vm5013, %v6785
        %6818 = vst.msk [vmem:[#allocation4 + $0x60] sm:$0xff] %vm5013, %v6786
        %6819 = vst.msk [vmem:[#allocation4 + $0x68] sm:$0xff] %vm5013, %v6787
        %6820 = vst.msk [vmem:[#allocation4 + $0x70] sm:$0xff] %vm5013, %v6788
        %6821 = vst.msk [vmem:[#allocation4 + $0x78] sm:$0xff] %vm5013, %v6789
        %6822 = vst.msk [vmem:[#allocation4 + $0x80] sm:$0xff] %vm5013, %v6790
        %6823 = vst.msk [vmem:[#allocation4 + $0x88] sm:$0xff] %vm5013, %v6791
        %6824 = vst.msk [vmem:[#allocation4 + $0x90] sm:$0xff] %vm5013, %v6792
        %6825 = vst.msk [vmem:[#allocation4 + $0x98] sm:$0xff] %vm5013, %v6793
        %6826 = vst.msk [vmem:[#allocation4 + $0xa0] sm:$0xff] %vm5013, %v6794
        %6827 = vst.msk [vmem:[#allocation4 + $0xa8] sm:$0xff] %vm5013, %v6795
        %6828 = vst.msk [vmem:[#allocation4 + $0xb0] sm:$0xff] %vm5013, %v6796
        %6829 = vst.msk [vmem:[#allocation4 + $0xb8] sm:$0xff] %vm5013, %v6797
        %6830 = vst.msk [vmem:[#allocation4 + $0xc0] sm:$0xff] %vm5013, %v6798
        %6831 = vst.msk [vmem:[#allocation4 + $0xc8] sm:$0xff] %vm5013, %v6799
        %6832 = vst.msk [vmem:[#allocation4 + $0xd0] sm:$0xff] %vm5013, %v6800
        %6833 = vst.msk [vmem:[#allocation4 + $0xd8] sm:$0xff] %vm5013, %v6801
        %6834 = vst.msk [vmem:[#allocation4 + $0xe0] sm:$0xff] %vm5013, %v6802
        %6835 = vst.msk [vmem:[#allocation4 + $0xe8] sm:$0xff] %vm5013, %v6803
        %6836 = vst.msk [vmem:[#allocation4 + $0xf0] sm:$0xff] %vm5013, %v6804
        %6837 = vst.msk [vmem:[#allocation4 + $0xf8] sm:$0xff] %vm5013, %v6805
        %6838 = vst.msk [vmem:[#allocation3] sm:$0xff] %vm5013, %v5366
        %6839 = vst.msk [vmem:[#allocation3 + $0x8] sm:$0xff] %vm5013, %v5367
        %6840 = vst.msk [vmem:[#allocation3 + $0x10] sm:$0xff] %vm5013, %v5368
        %6841 = vst.msk [vmem:[#allocation3 + $0x18] sm:$0xff] %vm5013, %v5369
        %6842 = vst.msk [vmem:[#allocation3 + $0x20] sm:$0xff] %vm5013, %v5370
        %6843 = vst.msk [vmem:[#allocation3 + $0x28] sm:$0xff] %vm5013, %v5371
        %6844 = vst.msk [vmem:[#allocation3 + $0x30] sm:$0xff] %vm5013, %v5372
        %6845 = vst.msk [vmem:[#allocation3 + $0x38] sm:$0xff] %vm5013, %v5373
        %6846 = vst.msk [vmem:[#allocation3 + $0x40] sm:$0xff] %vm5013, %v5374
        %6847 = vst.msk [vmem:[#allocation3 + $0x48] sm:$0xff] %vm5013, %v5375
        %6848 = vst.msk [vmem:[#allocation3 + $0x50] sm:$0xff] %vm5013, %v5376
        %6849 = vst.msk [vmem:[#allocation3 + $0x58] sm:$0xff] %vm5013, %v5377
        %6850 = vst.msk [vmem:[#allocation3 + $0x60] sm:$0xff] %vm5013, %v5378
        %6851 = vst.msk [vmem:[#allocation3 + $0x68] sm:$0xff] %vm5013, %v5379
        %6852 = vst.msk [vmem:[#allocation3 + $0x70] sm:$0xff] %vm5013, %v5380
        %6853 = vst.msk [vmem:[#allocation3 + $0x78] sm:$0xff] %vm5013, %v5381
        %6854 = vst.msk [vmem:[#allocation3 + $0x80] sm:$0xff] %vm5013, %v5382
        %6855 = vst.msk [vmem:[#allocation3 + $0x88] sm:$0xff] %vm5013, %v5383
        %6856 = vst.msk [vmem:[#allocation3 + $0x90] sm:$0xff] %vm5013, %v5384
        %6857 = vst.msk [vmem:[#allocation3 + $0x98] sm:$0xff] %vm5013, %v5385
        %6858 = vst.msk [vmem:[#allocation3 + $0xa0] sm:$0xff] %vm5013, %v5386
        %6859 = vst.msk [vmem:[#allocation3 + $0xa8] sm:$0xff] %vm5013, %v5387
        %6860 = vst.msk [vmem:[#allocation3 + $0xb0] sm:$0xff] %vm5013, %v5388
        %6861 = vst.msk [vmem:[#allocation3 + $0xb8] sm:$0xff] %vm5013, %v5389
        %6862 = vst.msk [vmem:[#allocation3 + $0xc0] sm:$0xff] %vm5013, %v5390
        %6863 = vst.msk [vmem:[#allocation3 + $0xc8] sm:$0xff] %vm5013, %v5391
        %6864 = vst.msk [vmem:[#allocation3 + $0xd0] sm:$0xff] %vm5013, %v5392
        %6865 = vst.msk [vmem:[#allocation3 + $0xd8] sm:$0xff] %vm5013, %v5393
        %6866 = vst.msk [vmem:[#allocation3 + $0xe0] sm:$0xff] %vm5013, %v5394
        %6867 = vst.msk [vmem:[#allocation3 + $0xe8] sm:$0xff] %vm5013, %v5395
        %6868 = vst.msk [vmem:[#allocation3 + $0xf0] sm:$0xff] %vm5013, %v5396
        %6869 = vst.msk [vmem:[#allocation3 + $0xf8] sm:$0xff] %vm5013, %v5397
        %p6870 = scmp.eq.s32.totalorder %s39, 1
        // Predicated region
        $region93: #{tpu_custom_call.1} parent=67 // pred_check
          %p6871 = pneg %p6870
        $region94: #{tpu_custom_call.1} parent=67 // pred_check_branch
          %6873 = sbr.rel (%p6871) target = $region96
        $region95: #{tpu_custom_call.1} parent=67 // pred_region
          %v6874 = vld [vmem:[#allocation3] sm:$0xff]
          %v6875 = vld [vmem:[#allocation3 + $0x8] sm:$0xff]
          %v6876 = vld [vmem:[#allocation3 + $0x10] sm:$0xff]
          %v6877 = vld [vmem:[#allocation3 + $0x18] sm:$0xff]
          %v6878 = vld [vmem:[#allocation3 + $0x20] sm:$0xff]
          %v6879 = vld [vmem:[#allocation3 + $0x28] sm:$0xff]
          %v6880 = vld [vmem:[#allocation3 + $0x30] sm:$0xff]
          %v6881 = vld [vmem:[#allocation3 + $0x38] sm:$0xff]
          %v6882 = vld [vmem:[#allocation3 + $0x40] sm:$0xff]
          %v6883 = vld [vmem:[#allocation3 + $0x48] sm:$0xff]
          %v6884 = vld [vmem:[#allocation3 + $0x50] sm:$0xff]
          %v6885 = vld [vmem:[#allocation3 + $0x58] sm:$0xff]
          %v6886 = vld [vmem:[#allocation3 + $0x60] sm:$0xff]
          %v6887 = vld [vmem:[#allocation3 + $0x68] sm:$0xff]
          %v6888 = vld [vmem:[#allocation3 + $0x70] sm:$0xff]
          %v6889 = vld [vmem:[#allocation3 + $0x78] sm:$0xff]
          %v6890 = vld [vmem:[#allocation3 + $0x80] sm:$0xff]
          %v6891 = vld [vmem:[#allocation3 + $0x88] sm:$0xff]
          %v6892 = vld [vmem:[#allocation3 + $0x90] sm:$0xff]
          %v6893 = vld [vmem:[#allocation3 + $0x98] sm:$0xff]
          %v6894 = vld [vmem:[#allocation3 + $0xa0] sm:$0xff]
          %v6895 = vld [vmem:[#allocation3 + $0xa8] sm:$0xff]
          %v6896 = vld [vmem:[#allocation3 + $0xb0] sm:$0xff]
          %v6897 = vld [vmem:[#allocation3 + $0xb8] sm:$0xff]
          %v6898 = vld [vmem:[#allocation3 + $0xc0] sm:$0xff]
          %v6899 = vld [vmem:[#allocation3 + $0xc8] sm:$0xff]
          %v6900 = vld [vmem:[#allocation3 + $0xd0] sm:$0xff]
          %v6901 = vld [vmem:[#allocation3 + $0xd8] sm:$0xff]
          %v6902 = vld [vmem:[#allocation3 + $0xe0] sm:$0xff]
          %v6903 = vld [vmem:[#allocation3 + $0xe8] sm:$0xff]
          %v6904 = vld [vmem:[#allocation3 + $0xf0] sm:$0xff]
          %v6905 = vld [vmem:[#allocation3 + $0xf8] sm:$0xff]
          %v6906 = vld [vmem:[#allocation4] sm:$0xff]
          %v6907 = vld [vmem:[#allocation4 + $0x8] sm:$0xff]
          %v6908 = vld [vmem:[#allocation4 + $0x10] sm:$0xff]
          %v6909 = vld [vmem:[#allocation4 + $0x18] sm:$0xff]
          %v6910 = vld [vmem:[#allocation4 + $0x20] sm:$0xff]
          %v6911 = vld [vmem:[#allocation4 + $0x28] sm:$0xff]
          %v6912 = vld [vmem:[#allocation4 + $0x30] sm:$0xff]
          %v6913 = vld [vmem:[#allocation4 + $0x38] sm:$0xff]
          %v6914 = vld [vmem:[#allocation4 + $0x40] sm:$0xff]
          %v6915 = vld [vmem:[#allocation4 + $0x48] sm:$0xff]
          %v6916 = vld [vmem:[#allocation4 + $0x50] sm:$0xff]
          %v6917 = vld [vmem:[#allocation4 + $0x58] sm:$0xff]
          %v6918 = vld [vmem:[#allocation4 + $0x60] sm:$0xff]
          %v6919 = vld [vmem:[#allocation4 + $0x68] sm:$0xff]
          %v6920 = vld [vmem:[#allocation4 + $0x70] sm:$0xff]
          %v6921 = vld [vmem:[#allocation4 + $0x78] sm:$0xff]
          %v6922 = vld [vmem:[#allocation4 + $0x80] sm:$0xff]
          %v6923 = vld [vmem:[#allocation4 + $0x88] sm:$0xff]
          %v6924 = vld [vmem:[#allocation4 + $0x90] sm:$0xff]
          %v6925 = vld [vmem:[#allocation4 + $0x98] sm:$0xff]
          %v6926 = vld [vmem:[#allocation4 + $0xa0] sm:$0xff]
          %v6927 = vld [vmem:[#allocation4 + $0xa8] sm:$0xff]
          %v6928 = vld [vmem:[#allocation4 + $0xb0] sm:$0xff]
          %v6929 = vld [vmem:[#allocation4 + $0xb8] sm:$0xff]
          %v6930 = vld [vmem:[#allocation4 + $0xc0] sm:$0xff]
          %v6931 = vld [vmem:[#allocation4 + $0xc8] sm:$0xff]
          %v6932 = vld [vmem:[#allocation4 + $0xd0] sm:$0xff]
          %v6933 = vld [vmem:[#allocation4 + $0xd8] sm:$0xff]
          %v6934 = vld [vmem:[#allocation4 + $0xe0] sm:$0xff]
          %v6935 = vld [vmem:[#allocation4 + $0xe8] sm:$0xff]
          %v6936 = vld [vmem:[#allocation4 + $0xf0] sm:$0xff]
          %v6937 = vld [vmem:[#allocation4 + $0xf8] sm:$0xff]
          %v6938 = vlog2.pop %v6906
          %v6939 = vmul.f32 %v6938, 0.6931472
          %v6940 = vlog2.pop %v6907
          %v6941 = vmul.f32 %v6940, 0.6931472
          %v6942 = vlog2.pop %v6908
          %v6943 = vmul.f32 %v6942, 0.6931472
          %v6944 = vlog2.pop %v6909
          %v6945 = vmul.f32 %v6944, 0.6931472
          %v6946 = vlog2.pop %v6910
          %v6947 = vmul.f32 %v6946, 0.6931472
          %v6948 = vlog2.pop %v6911
          %v6949 = vmul.f32 %v6948, 0.6931472
          %v6950 = vlog2.pop %v6912
          %v6951 = vmul.f32 %v6950, 0.6931472
          %v6952 = vlog2.pop %v6913
          %v6953 = vmul.f32 %v6952, 0.6931472
          %v6954 = vlog2.pop %v6914
          %v6955 = vmul.f32 %v6954, 0.6931472
          %v6956 = vlog2.pop %v6915
          %v6957 = vmul.f32 %v6956, 0.6931472
          %v6958 = vlog2.pop %v6916
          %v6959 = vmul.f32 %v6958, 0.6931472
          %v6960 = vlog2.pop %v6917
          %v6961 = vmul.f32 %v6960, 0.6931472
          %v6962 = vlog2.pop %v6918
          %v6963 = vmul.f32 %v6962, 0.6931472
          %v6964 = vlog2.pop %v6919
          %v6965 = vmul.f32 %v6964, 0.6931472
          %v6966 = vlog2.pop %v6920
          %v6967 = vmul.f32 %v6966, 0.6931472
          %v6968 = vlog2.pop %v6921
          %v6969 = vmul.f32 %v6968, 0.6931472
          %v6970 = vlog2.pop %v6922
          %v6971 = vmul.f32 %v6970, 0.6931472
          %v6972 = vlog2.pop %v6923
          %v6973 = vmul.f32 %v6972, 0.6931472
          %v6974 = vlog2.pop %v6924
          %v6975 = vmul.f32 %v6974, 0.6931472
          %v6976 = vlog2.pop %v6925
          %v6977 = vmul.f32 %v6976, 0.6931472
          %v6978 = vlog2.pop %v6926
          %v6979 = vmul.f32 %v6978, 0.6931472
          %v6980 = vlog2.pop %v6927
          %v6981 = vmul.f32 %v6980, 0.6931472
          %v6982 = vlog2.pop %v6928
          %v6983 = vmul.f32 %v6982, 0.6931472
          %v6984 = vlog2.pop %v6929
          %v6985 = vmul.f32 %v6984, 0.6931472
          %v6986 = vlog2.pop %v6930
          %v6987 = vmul.f32 %v6986, 0.6931472
          %v6988 = vlog2.pop %v6931
          %v6989 = vmul.f32 %v6988, 0.6931472
          %v6990 = vlog2.pop %v6932
          %v6991 = vmul.f32 %v6990, 0.6931472
          %v6992 = vlog2.pop %v6933
          %v6993 = vmul.f32 %v6992, 0.6931472
          %v6994 = vlog2.pop %v6934
          %v6995 = vmul.f32 %v6994, 0.6931472
          %v6996 = vlog2.pop %v6935
          %v6997 = vmul.f32 %v6996, 0.6931472
          %v6998 = vlog2.pop %v6936
          %v6999 = vmul.f32 %v6998, 0.6931472
          %v7000 = vlog2.pop %v6937
          %v7001 = vmul.f32 %v7000, 0.6931472
          %v7002 = vadd.f32 %v6874, %v6939
          %v7003 = vadd.f32 %v6875, %v6941
          %v7004 = vadd.f32 %v6876, %v6943
          %v7005 = vadd.f32 %v6877, %v6945
          %v7006 = vadd.f32 %v6878, %v6947
          %v7007 = vadd.f32 %v6879, %v6949
          %v7008 = vadd.f32 %v6880, %v6951
          %v7009 = vadd.f32 %v6881, %v6953
          %v7010 = vadd.f32 %v6882, %v6955
          %v7011 = vadd.f32 %v6883, %v6957
          %v7012 = vadd.f32 %v6884, %v6959
          %v7013 = vadd.f32 %v6885, %v6961
          %v7014 = vadd.f32 %v6886, %v6963
          %v7015 = vadd.f32 %v6887, %v6965
          %v7016 = vadd.f32 %v6888, %v6967
          %v7017 = vadd.f32 %v6889, %v6969
          %v7018 = vadd.f32 %v6890, %v6971
          %v7019 = vadd.f32 %v6891, %v6973
          %v7020 = vadd.f32 %v6892, %v6975
          %v7021 = vadd.f32 %v6893, %v6977
          %v7022 = vadd.f32 %v6894, %v6979
          %v7023 = vadd.f32 %v6895, %v6981
          %v7024 = vadd.f32 %v6896, %v6983
          %v7025 = vadd.f32 %v6897, %v6985
          %v7026 = vadd.f32 %v6898, %v6987
          %v7027 = vadd.f32 %v6899, %v6989
          %v7028 = vadd.f32 %v6900, %v6991
          %v7029 = vadd.f32 %v6901, %v6993
          %v7030 = vadd.f32 %v6902, %v6995
          %v7031 = vadd.f32 %v6903, %v6997
          %v7032 = vadd.f32 %v6904, %v6999
          %v7033 = vadd.f32 %v6905, %v7001
          %v7034 = vld [vmem:[%s681] sm:$0xff]
          %v7035 = vld [vmem:[%s681 + $0x8] sm:$0xff]
          %v7036 = vld [vmem:[%s681 + $0x10] sm:$0xff]
          %v7037 = vld [vmem:[%s681 + $0x18] sm:$0xff]
          %v7038 = vld [vmem:[%s681 + $0x20] sm:$0xff]
          %v7039 = vld [vmem:[%s681 + $0x28] sm:$0xff]
          %v7040 = vld [vmem:[%s681 + $0x30] sm:$0xff]
          %v7041 = vld [vmem:[%s681 + $0x38] sm:$0xff]
          %v7042 = vld [vmem:[%s681 + $0x40] sm:$0xff]
          %v7043 = vld [vmem:[%s681 + $0x48] sm:$0xff]
          %v7044 = vld [vmem:[%s681 + $0x50] sm:$0xff]
          %v7045 = vld [vmem:[%s681 + $0x58] sm:$0xff]
          %v7046 = vld [vmem:[%s681 + $0x60] sm:$0xff]
          %v7047 = vld [vmem:[%s681 + $0x68] sm:$0xff]
          %v7048 = vld [vmem:[%s681 + $0x70] sm:$0xff]
          %v7049 = vld [vmem:[%s681 + $0x78] sm:$0xff]
          %v7050 = vld [vmem:[%s681 + $0x80] sm:$0xff]
          %v7051 = vld [vmem:[%s681 + $0x88] sm:$0xff]
          %v7052 = vld [vmem:[%s681 + $0x90] sm:$0xff]
          %v7053 = vld [vmem:[%s681 + $0x98] sm:$0xff]
          %v7054 = vld [vmem:[%s681 + $0xa0] sm:$0xff]
          %v7055 = vld [vmem:[%s681 + $0xa8] sm:$0xff]
          %v7056 = vld [vmem:[%s681 + $0xb0] sm:$0xff]
          %v7057 = vld [vmem:[%s681 + $0xb8] sm:$0xff]
          %v7058 = vld [vmem:[%s681 + $0xc0] sm:$0xff]
          %v7059 = vld [vmem:[%s681 + $0xc8] sm:$0xff]
          %v7060 = vld [vmem:[%s681 + $0xd0] sm:$0xff]
          %v7061 = vld [vmem:[%s681 + $0xd8] sm:$0xff]
          %v7062 = vld [vmem:[%s681 + $0xe0] sm:$0xff]
          %v7063 = vld [vmem:[%s681 + $0xe8] sm:$0xff]
          %v7064 = vld [vmem:[%s681 + $0xf0] sm:$0xff]
          %v7065 = vld [vmem:[%s681 + $0xf8] sm:$0xff]
          %vm7066 = vcmp.ne.s32.totalorder %v7034, 0
          %vm7067 = vcmp.ne.s32.totalorder %v7035, 0
          %vm7068 = vcmp.ne.s32.totalorder %v7036, 0
          %vm7069 = vcmp.ne.s32.totalorder %v7037, 0
          %vm7070 = vcmp.ne.s32.totalorder %v7038, 0
          %vm7071 = vcmp.ne.s32.totalorder %v7039, 0
          %vm7072 = vcmp.ne.s32.totalorder %v7040, 0
          %vm7073 = vcmp.ne.s32.totalorder %v7041, 0
          %vm7074 = vcmp.ne.s32.totalorder %v7042, 0
          %vm7075 = vcmp.ne.s32.totalorder %v7043, 0
          %vm7076 = vcmp.ne.s32.totalorder %v7044, 0
          %vm7077 = vcmp.ne.s32.totalorder %v7045, 0
          %vm7078 = vcmp.ne.s32.totalorder %v7046, 0
          %vm7079 = vcmp.ne.s32.totalorder %v7047, 0
          %vm7080 = vcmp.ne.s32.totalorder %v7048, 0
          %vm7081 = vcmp.ne.s32.totalorder %v7049, 0
          %vm7082 = vcmp.ne.s32.totalorder %v7050, 0
          %vm7083 = vcmp.ne.s32.totalorder %v7051, 0
          %vm7084 = vcmp.ne.s32.totalorder %v7052, 0
          %vm7085 = vcmp.ne.s32.totalorder %v7053, 0
          %vm7086 = vcmp.ne.s32.totalorder %v7054, 0
          %vm7087 = vcmp.ne.s32.totalorder %v7055, 0
          %vm7088 = vcmp.ne.s32.totalorder %v7056, 0
          %vm7089 = vcmp.ne.s32.totalorder %v7057, 0
          %vm7090 = vcmp.ne.s32.totalorder %v7058, 0
          %vm7091 = vcmp.ne.s32.totalorder %v7059, 0
          %vm7092 = vcmp.ne.s32.totalorder %v7060, 0
          %vm7093 = vcmp.ne.s32.totalorder %v7061, 0
          %vm7094 = vcmp.ne.s32.totalorder %v7062, 0
          %vm7095 = vcmp.ne.s32.totalorder %v7063, 0
          %vm7096 = vcmp.ne.s32.totalorder %v7064, 0
          %vm7097 = vcmp.ne.s32.totalorder %v7065, 0
          %v7098 = vsel %vm7066, 1, 0
          %v7099 = vsel %vm7067, 1, 0
          %v7100 = vsel %vm7068, 1, 0
          %v7101 = vsel %vm7069, 1, 0
          %v7102 = vsel %vm7070, 1, 0
          %v7103 = vsel %vm7071, 1, 0
          %v7104 = vsel %vm7072, 1, 0
          %v7105 = vsel %vm7073, 1, 0
          %v7106 = vsel %vm7074, 1, 0
          %v7107 = vsel %vm7075, 1, 0
          %v7108 = vsel %vm7076, 1, 0
          %v7109 = vsel %vm7077, 1, 0
          %v7110 = vsel %vm7078, 1, 0
          %v7111 = vsel %vm7079, 1, 0
          %v7112 = vsel %vm7080, 1, 0
          %v7113 = vsel %vm7081, 1, 0
          %v7114 = vsel %vm7082, 1, 0
          %v7115 = vsel %vm7083, 1, 0
          %v7116 = vsel %vm7084, 1, 0
          %v7117 = vsel %vm7085, 1, 0
          %v7118 = vsel %vm7086, 1, 0
          %v7119 = vsel %vm7087, 1, 0
          %v7120 = vsel %vm7088, 1, 0
          %v7121 = vsel %vm7089, 1, 0
          %v7122 = vsel %vm7090, 1, 0
          %v7123 = vsel %vm7091, 1, 0
          %v7124 = vsel %vm7092, 1, 0
          %v7125 = vsel %vm7093, 1, 0
          %v7126 = vsel %vm7094, 1, 0
          %v7127 = vsel %vm7095, 1, 0
          %v7128 = vsel %vm7096, 1, 0
          %v7129 = vsel %vm7097, 1, 0
          %v7130 = vcvt.s32.f32 %v7098
          %v7131 = vcvt.s32.f32 %v7099
          %v7132 = vcvt.s32.f32 %v7100
          %v7133 = vcvt.s32.f32 %v7101
          %v7134 = vcvt.s32.f32 %v7102
          %v7135 = vcvt.s32.f32 %v7103
          %v7136 = vcvt.s32.f32 %v7104
          %v7137 = vcvt.s32.f32 %v7105
          %v7138 = vcvt.s32.f32 %v7106
          %v7139 = vcvt.s32.f32 %v7107
          %v7140 = vcvt.s32.f32 %v7108
          %v7141 = vcvt.s32.f32 %v7109
          %v7142 = vcvt.s32.f32 %v7110
          %v7143 = vcvt.s32.f32 %v7111
          %v7144 = vcvt.s32.f32 %v7112
          %v7145 = vcvt.s32.f32 %v7113
          %v7146 = vcvt.s32.f32 %v7114
          %v7147 = vcvt.s32.f32 %v7115
          %v7148 = vcvt.s32.f32 %v7116
          %v7149 = vcvt.s32.f32 %v7117
          %v7150 = vcvt.s32.f32 %v7118
          %v7151 = vcvt.s32.f32 %v7119
          %v7152 = vcvt.s32.f32 %v7120
          %v7153 = vcvt.s32.f32 %v7121
          %v7154 = vcvt.s32.f32 %v7122
          %v7155 = vcvt.s32.f32 %v7123
          %v7156 = vcvt.s32.f32 %v7124
          %v7157 = vcvt.s32.f32 %v7125
          %v7158 = vcvt.s32.f32 %v7126
          %v7159 = vcvt.s32.f32 %v7127
          %v7160 = vcvt.s32.f32 %v7128
          %v7161 = vcvt.s32.f32 %v7129
          %v7162 = vld [vmem:[#allocation5] sm:$0xff]
          %v7163 = vld [vmem:[#allocation5 + $0x8] sm:$0xff]
          %v7164 = vld [vmem:[#allocation5 + $0x10] sm:$0xff]
          %v7165 = vld [vmem:[#allocation5 + $0x18] sm:$0xff]
          %v7166 = vld [vmem:[#allocation5 + $0x20] sm:$0xff]
          %v7167 = vld [vmem:[#allocation5 + $0x28] sm:$0xff]
          %v7168 = vld [vmem:[#allocation5 + $0x30] sm:$0xff]
          %v7169 = vld [vmem:[#allocation5 + $0x38] sm:$0xff]
          %v7170 = vld [vmem:[#allocation5 + $0x40] sm:$0xff]
          %v7171 = vld [vmem:[#allocation5 + $0x48] sm:$0xff]
          %v7172 = vld [vmem:[#allocation5 + $0x50] sm:$0xff]
          %v7173 = vld [vmem:[#allocation5 + $0x58] sm:$0xff]
          %v7174 = vld [vmem:[#allocation5 + $0x60] sm:$0xff]
          %v7175 = vld [vmem:[#allocation5 + $0x68] sm:$0xff]
          %v7176 = vld [vmem:[#allocation5 + $0x70] sm:$0xff]
          %v7177 = vld [vmem:[#allocation5 + $0x78] sm:$0xff]
          %v7178 = vld [vmem:[#allocation5 + $0x80] sm:$0xff]
          %v7179 = vld [vmem:[#allocation5 + $0x88] sm:$0xff]
          %v7180 = vld [vmem:[#allocation5 + $0x90] sm:$0xff]
          %v7181 = vld [vmem:[#allocation5 + $0x98] sm:$0xff]
          %v7182 = vld [vmem:[#allocation5 + $0xa0] sm:$0xff]
          %v7183 = vld [vmem:[#allocation5 + $0xa8] sm:$0xff]
          %v7184 = vld [vmem:[#allocation5 + $0xb0] sm:$0xff]
          %v7185 = vld [vmem:[#allocation5 + $0xb8] sm:$0xff]
          %v7186 = vld [vmem:[#allocation5 + $0xc0] sm:$0xff]
          %v7187 = vld [vmem:[#allocation5 + $0xc8] sm:$0xff]
          %v7188 = vld [vmem:[#allocation5 + $0xd0] sm:$0xff]
          %v7189 = vld [vmem:[#allocation5 + $0xd8] sm:$0xff]
          %v7190 = vld [vmem:[#allocation5 + $0xe0] sm:$0xff]
          %v7191 = vld [vmem:[#allocation5 + $0xe8] sm:$0xff]
          %v7192 = vld [vmem:[#allocation5 + $0xf0] sm:$0xff]
          %v7193 = vld [vmem:[#allocation5 + $0xf8] sm:$0xff]
          %v7194 = vsub.f32 %v7002, %v7162
          %v7195 = vsub.f32 %v7003, %v7163
          %v7196 = vsub.f32 %v7004, %v7164
          %v7197 = vsub.f32 %v7005, %v7165
          %v7198 = vsub.f32 %v7006, %v7166
          %v7199 = vsub.f32 %v7007, %v7167
          %v7200 = vsub.f32 %v7008, %v7168
          %v7201 = vsub.f32 %v7009, %v7169
          %v7202 = vsub.f32 %v7010, %v7170
          %v7203 = vsub.f32 %v7011, %v7171
          %v7204 = vsub.f32 %v7012, %v7172
          %v7205 = vsub.f32 %v7013, %v7173
          %v7206 = vsub.f32 %v7014, %v7174
          %v7207 = vsub.f32 %v7015, %v7175
          %v7208 = vsub.f32 %v7016, %v7176
          %v7209 = vsub.f32 %v7017, %v7177
          %v7210 = vsub.f32 %v7018, %v7178
          %v7211 = vsub.f32 %v7019, %v7179
          %v7212 = vsub.f32 %v7020, %v7180
          %v7213 = vsub.f32 %v7021, %v7181
          %v7214 = vsub.f32 %v7022, %v7182
          %v7215 = vsub.f32 %v7023, %v7183
          %v7216 = vsub.f32 %v7024, %v7184
          %v7217 = vsub.f32 %v7025, %v7185
          %v7218 = vsub.f32 %v7026, %v7186
          %v7219 = vsub.f32 %v7027, %v7187
          %v7220 = vsub.f32 %v7028, %v7188
          %v7221 = vsub.f32 %v7029, %v7189
          %v7222 = vsub.f32 %v7030, %v7190
          %v7223 = vsub.f32 %v7031, %v7191
          %v7224 = vsub.f32 %v7032, %v7192
          %v7225 = vsub.f32 %v7033, %v7193
          %v7226 = vmul.f32 %v7194, %v7130
          %v7227 = vmul.f32 %v7195, %v7131
          %v7228 = vmul.f32 %v7196, %v7132
          %v7229 = vmul.f32 %v7197, %v7133
          %v7230 = vmul.f32 %v7198, %v7134
          %v7231 = vmul.f32 %v7199, %v7135
          %v7232 = vmul.f32 %v7200, %v7136
          %v7233 = vmul.f32 %v7201, %v7137
          %v7234 = vmul.f32 %v7202, %v7138
          %v7235 = vmul.f32 %v7203, %v7139
          %v7236 = vmul.f32 %v7204, %v7140
          %v7237 = vmul.f32 %v7205, %v7141
          %v7238 = vmul.f32 %v7206, %v7142
          %v7239 = vmul.f32 %v7207, %v7143
          %v7240 = vmul.f32 %v7208, %v7144
          %v7241 = vmul.f32 %v7209, %v7145
          %v7242 = vmul.f32 %v7210, %v7146
          %v7243 = vmul.f32 %v7211, %v7147
          %v7244 = vmul.f32 %v7212, %v7148
          %v7245 = vmul.f32 %v7213, %v7149
          %v7246 = vmul.f32 %v7214, %v7150
          %v7247 = vmul.f32 %v7215, %v7151
          %v7248 = vmul.f32 %v7216, %v7152
          %v7249 = vmul.f32 %v7217, %v7153
          %v7250 = vmul.f32 %v7218, %v7154
          %v7251 = vmul.f32 %v7219, %v7155
          %v7252 = vmul.f32 %v7220, %v7156
          %v7253 = vmul.f32 %v7221, %v7157
          %v7254 = vmul.f32 %v7222, %v7158
          %v7255 = vmul.f32 %v7223, %v7159
          %v7256 = vmul.f32 %v7224, %v7160
          %v7257 = vmul.f32 %v7225, %v7161
          %7290 = vset.pattern.permute.xlu0 0
          %7291 = vperm.xlu0 %7290, %v7226
          %v7292 = vpop.permute.xlu0 %7291
          %7293 = vset.pattern.permute.xlu0 0
          %7294 = vperm.xlu0 %7293, %v7227
          %v7295 = vpop.permute.xlu0 %7294
          %7296 = vset.pattern.permute.xlu0 0
          %7297 = vperm.xlu0 %7296, %v7228
          %v7298 = vpop.permute.xlu0 %7297
          %7299 = vset.pattern.permute.xlu0 0
          %7300 = vperm.xlu0 %7299, %v7229
          %v7301 = vpop.permute.xlu0 %7300
          %7302 = vset.pattern.permute.xlu0 0
          %7303 = vperm.xlu0 %7302, %v7230
          %v7304 = vpop.permute.xlu0 %7303
          %7305 = vset.pattern.permute.xlu0 0
          %7306 = vperm.xlu0 %7305, %v7231
          %v7307 = vpop.permute.xlu0 %7306
          %7308 = vset.pattern.permute.xlu0 0
          %7309 = vperm.xlu0 %7308, %v7232
          %v7310 = vpop.permute.xlu0 %7309
          %7311 = vset.pattern.permute.xlu0 0
          %7312 = vperm.xlu0 %7311, %v7233
          %v7313 = vpop.permute.xlu0 %7312
          %7314 = vset.pattern.permute.xlu0 0
          %7315 = vperm.xlu0 %7314, %v7234
          %v7316 = vpop.permute.xlu0 %7315
          %7317 = vset.pattern.permute.xlu0 0
          %7318 = vperm.xlu0 %7317, %v7235
          %v7319 = vpop.permute.xlu0 %7318
          %7320 = vset.pattern.permute.xlu0 0
          %7321 = vperm.xlu0 %7320, %v7236
          %v7322 = vpop.permute.xlu0 %7321
          %7323 = vset.pattern.permute.xlu0 0
          %7324 = vperm.xlu0 %7323, %v7237
          %v7325 = vpop.permute.xlu0 %7324
          %7326 = vset.pattern.permute.xlu0 0
          %7327 = vperm.xlu0 %7326, %v7238
          %v7328 = vpop.permute.xlu0 %7327
          %7329 = vset.pattern.permute.xlu0 0
          %7330 = vperm.xlu0 %7329, %v7239
          %v7331 = vpop.permute.xlu0 %7330
          %7332 = vset.pattern.permute.xlu0 0
          %7333 = vperm.xlu0 %7332, %v7240
          %v7334 = vpop.permute.xlu0 %7333
          %7335 = vset.pattern.permute.xlu0 0
          %7336 = vperm.xlu0 %7335, %v7241
          %v7337 = vpop.permute.xlu0 %7336
          %7338 = vset.pattern.permute.xlu0 0
          %7339 = vperm.xlu0 %7338, %v7242
          %v7340 = vpop.permute.xlu0 %7339
          %7341 = vset.pattern.permute.xlu0 0
          %7342 = vperm.xlu0 %7341, %v7243
          %v7343 = vpop.permute.xlu0 %7342
          %7344 = vset.pattern.permute.xlu0 0
          %7345 = vperm.xlu0 %7344, %v7244
          %v7346 = vpop.permute.xlu0 %7345
          %7347 = vset.pattern.permute.xlu0 0
          %7348 = vperm.xlu0 %7347, %v7245
          %v7349 = vpop.permute.xlu0 %7348
          %7350 = vset.pattern.permute.xlu0 0
          %7351 = vperm.xlu0 %7350, %v7246
          %v7352 = vpop.permute.xlu0 %7351
          %7353 = vset.pattern.permute.xlu0 0
          %7354 = vperm.xlu0 %7353, %v7247
          %v7355 = vpop.permute.xlu0 %7354
          %7356 = vset.pattern.permute.xlu0 0
          %7357 = vperm.xlu0 %7356, %v7248
          %v7358 = vpop.permute.xlu0 %7357
          %7359 = vset.pattern.permute.xlu0 0
          %7360 = vperm.xlu0 %7359, %v7249
          %v7361 = vpop.permute.xlu0 %7360
          %7362 = vset.pattern.permute.xlu0 0
          %7363 = vperm.xlu0 %7362, %v7250
          %v7364 = vpop.permute.xlu0 %7363
          %7365 = vset.pattern.permute.xlu0 0
          %7366 = vperm.xlu0 %7365, %v7251
          %v7367 = vpop.permute.xlu0 %7366
          %7368 = vset.pattern.permute.xlu0 0
          %7369 = vperm.xlu0 %7368, %v7252
          %v7370 = vpop.permute.xlu0 %7369
          %7371 = vset.pattern.permute.xlu0 0
          %7372 = vperm.xlu0 %7371, %v7253
          %v7373 = vpop.permute.xlu0 %7372
          %7374 = vset.pattern.permute.xlu0 0
          %7375 = vperm.xlu0 %7374, %v7254
          %v7376 = vpop.permute.xlu0 %7375
          %7377 = vset.pattern.permute.xlu0 0
          %7378 = vperm.xlu0 %7377, %v7255
          %v7379 = vpop.permute.xlu0 %7378
          %7380 = vset.pattern.permute.xlu0 0
          %7381 = vperm.xlu0 %7380, %v7256
          %v7382 = vpop.permute.xlu0 %7381
          %7383 = vset.pattern.permute.xlu0 0
          %7384 = vperm.xlu0 %7383, %v7257
          %v7385 = vpop.permute.xlu0 %7384
          %v7386 = vlaneseq
          %v7387 = vshrl.u32 %v7386, 7
          %v7388 = vsub.s32 %v4045, %v7387
          %v7389 = vrot.slane %v7292, %v7388
          %v7390 = vlaneseq
          %v7391 = vshrl.u32 %v7390, 7
          %v7392 = vsub.s32 %v4045, %v7391
          %v7393 = vrot.slane %v7295, %v7392
          %v7394 = vlaneseq
          %v7395 = vshrl.u32 %v7394, 7
          %v7396 = vsub.s32 %v4045, %v7395
          %v7397 = vrot.slane %v7298, %v7396
          %v7398 = vlaneseq
          %v7399 = vshrl.u32 %v7398, 7
          %v7400 = vsub.s32 %v4045, %v7399
          %v7401 = vrot.slane %v7301, %v7400
          %v7402 = vlaneseq
          %v7403 = vshrl.u32 %v7402, 7
          %v7404 = vsub.s32 %v4045, %v7403
          %v7405 = vrot.slane %v7304, %v7404
          %v7406 = vlaneseq
          %v7407 = vshrl.u32 %v7406, 7
          %v7408 = vsub.s32 %v4045, %v7407
          %v7409 = vrot.slane %v7307, %v7408
          %v7410 = vlaneseq
          %v7411 = vshrl.u32 %v7410, 7
          %v7412 = vsub.s32 %v4045, %v7411
          %v7413 = vrot.slane %v7310, %v7412
          %v7414 = vlaneseq
          %v7415 = vshrl.u32 %v7414, 7
          %v7416 = vsub.s32 %v4045, %v7415
          %v7417 = vrot.slane %v7313, %v7416
          %v7418 = vlaneseq
          %v7419 = vshrl.u32 %v7418, 7
          %v7420 = vsub.s32 %v4045, %v7419
          %v7421 = vrot.slane %v7316, %v7420
          %v7422 = vlaneseq
          %v7423 = vshrl.u32 %v7422, 7
          %v7424 = vsub.s32 %v4045, %v7423
          %v7425 = vrot.slane %v7319, %v7424
          %v7426 = vlaneseq
          %v7427 = vshrl.u32 %v7426, 7
          %v7428 = vsub.s32 %v4045, %v7427
          %v7429 = vrot.slane %v7322, %v7428
          %v7430 = vlaneseq
          %v7431 = vshrl.u32 %v7430, 7
          %v7432 = vsub.s32 %v4045, %v7431
          %v7433 = vrot.slane %v7325, %v7432
          %v7434 = vlaneseq
          %v7435 = vshrl.u32 %v7434, 7
          %v7436 = vsub.s32 %v4045, %v7435
          %v7437 = vrot.slane %v7328, %v7436
          %v7438 = vlaneseq
          %v7439 = vshrl.u32 %v7438, 7
          %v7440 = vsub.s32 %v4045, %v7439
          %v7441 = vrot.slane %v7331, %v7440
          %v7442 = vlaneseq
          %v7443 = vshrl.u32 %v7442, 7
          %v7444 = vsub.s32 %v4045, %v7443
          %v7445 = vrot.slane %v7334, %v7444
          %v7446 = vlaneseq
          %v7447 = vshrl.u32 %v7446, 7
          %v7448 = vsub.s32 %v4045, %v7447
          %v7449 = vrot.slane %v7337, %v7448
          %v7450 = vlaneseq
          %v7451 = vshrl.u32 %v7450, 7
          %v7452 = vsub.s32 %v4045, %v7451
          %v7453 = vrot.slane %v7340, %v7452
          %v7454 = vlaneseq
          %v7455 = vshrl.u32 %v7454, 7
          %v7456 = vsub.s32 %v4045, %v7455
          %v7457 = vrot.slane %v7343, %v7456
          %v7458 = vlaneseq
          %v7459 = vshrl.u32 %v7458, 7
          %v7460 = vsub.s32 %v4045, %v7459
          %v7461 = vrot.slane %v7346, %v7460
          %v7462 = vlaneseq
          %v7463 = vshrl.u32 %v7462, 7
          %v7464 = vsub.s32 %v4045, %v7463
          %v7465 = vrot.slane %v7349, %v7464
          %v7466 = vlaneseq
          %v7467 = vshrl.u32 %v7466, 7
          %v7468 = vsub.s32 %v4045, %v7467
          %v7469 = vrot.slane %v7352, %v7468
          %v7470 = vlaneseq
          %v7471 = vshrl.u32 %v7470, 7
          %v7472 = vsub.s32 %v4045, %v7471
          %v7473 = vrot.slane %v7355, %v7472
          %v7474 = vlaneseq
          %v7475 = vshrl.u32 %v7474, 7
          %v7476 = vsub.s32 %v4045, %v7475
          %v7477 = vrot.slane %v7358, %v7476
          %v7478 = vlaneseq
          %v7479 = vshrl.u32 %v7478, 7
          %v7480 = vsub.s32 %v4045, %v7479
          %v7481 = vrot.slane %v7361, %v7480
          %v7482 = vlaneseq
          %v7483 = vshrl.u32 %v7482, 7
          %v7484 = vsub.s32 %v4045, %v7483
          %v7485 = vrot.slane %v7364, %v7484
          %v7486 = vlaneseq
          %v7487 = vshrl.u32 %v7486, 7
          %v7488 = vsub.s32 %v4045, %v7487
          %v7489 = vrot.slane %v7367, %v7488
          %v7490 = vlaneseq
          %v7491 = vshrl.u32 %v7490, 7
          %v7492 = vsub.s32 %v4045, %v7491
          %v7493 = vrot.slane %v7370, %v7492
          %v7494 = vlaneseq
          %v7495 = vshrl.u32 %v7494, 7
          %v7496 = vsub.s32 %v4045, %v7495
          %v7497 = vrot.slane %v7373, %v7496
          %v7498 = vlaneseq
          %v7499 = vshrl.u32 %v7498, 7
          %v7500 = vsub.s32 %v4045, %v7499
          %v7501 = vrot.slane %v7376, %v7500
          %v7502 = vlaneseq
          %v7503 = vshrl.u32 %v7502, 7
          %v7504 = vsub.s32 %v4045, %v7503
          %v7505 = vrot.slane %v7379, %v7504
          %v7506 = vlaneseq
          %v7507 = vshrl.u32 %v7506, 7
          %v7508 = vsub.s32 %v4045, %v7507
          %v7509 = vrot.slane %v7382, %v7508
          %v7510 = vlaneseq
          %v7511 = vshrl.u32 %v7510, 7
          %v7512 = vsub.s32 %v4045, %v7511
          %v7513 = vrot.slane %v7385, %v7512
          %vm7514 = vcmask 1041409
          %v7515 = vsel %vm7514, %v7393, %v7389
          %vm7516 = vcmask 1042434
          %v7517 = vsel %vm7516, %v7397, %v7515
          %vm7518 = vcmask 1043459
          %v7519 = vsel %vm7518, %v7401, %v7517
          %vm7520 = vcmask 1044484
          %v7521 = vsel %vm7520, %v7405, %v7519
          %vm7522 = vcmask 1045509
          %v7523 = vsel %vm7522, %v7409, %v7521
          %vm7524 = vcmask 1046534
          %v7525 = vsel %vm7524, %v7413, %v7523
          %vm7526 = vcmask 1047559
          %v7527 = vsel %vm7526, %v7417, %v7525
          %v7528 = vsel %vm7514, %v7425, %v7421
          %v7529 = vsel %vm7516, %v7429, %v7528
          %v7530 = vsel %vm7518, %v7433, %v7529
          %v7531 = vsel %vm7520, %v7437, %v7530
          %v7532 = vsel %vm7522, %v7441, %v7531
          %v7533 = vsel %vm7524, %v7445, %v7532
          %v7534 = vsel %vm7526, %v7449, %v7533
          %v7535 = vsel %vm7514, %v7457, %v7453
          %v7536 = vsel %vm7516, %v7461, %v7535
          %v7537 = vsel %vm7518, %v7465, %v7536
          %v7538 = vsel %vm7520, %v7469, %v7537
          %v7539 = vsel %vm7522, %v7473, %v7538
          %v7540 = vsel %vm7524, %v7477, %v7539
          %v7541 = vsel %vm7526, %v7481, %v7540
          %v7542 = vsel %vm7514, %v7489, %v7485
          %v7543 = vsel %vm7516, %v7493, %v7542
          %v7544 = vsel %vm7518, %v7497, %v7543
          %v7545 = vsel %vm7520, %v7501, %v7544
          %v7546 = vsel %vm7522, %v7505, %v7545
          %v7547 = vsel %vm7524, %v7509, %v7546
          %v7548 = vsel %vm7526, %v7513, %v7547
          %vm7553 = vcmask 64512
          %v7554 = vsel %vm7553, %v7527, 0.0
          %7555 = vadd.xlane.f32.xlu0 %v7554
          %v7556 = vpop.xlane.xlu0 %7555
          %v7557 = vsel %vm7553, %v7534, 0.0
          %7558 = vadd.xlane.f32.xlu0 %v7557
          %v7559 = vpop.xlane.xlu0 %7558
          %v7560 = vsel %vm7553, %v7541, 0.0
          %7561 = vadd.xlane.f32.xlu0 %v7560
          %v7562 = vpop.xlane.xlu0 %7561
          %v7563 = vsel %vm7553, %v7548, 0.0
          %7564 = vadd.xlane.f32.xlu0 %v7563
          %v7565 = vpop.xlane.xlu0 %7564
          %7566 = vst.msk [vmem:[%s695] sm:$0xff] %vm5013, %v7556
          %7567 = vst.msk [vmem:[%s695 + $0x8] sm:$0xff] %vm5013, %v7559
          %7568 = vst.msk [vmem:[%s695 + $0x10] sm:$0xff] %vm5013, %v7562
          %7569 = vst.msk [vmem:[%s695 + $0x18] sm:$0xff] %vm5013, %v7565
        $region96: #{tpu_custom_call.1} parent=67 // pred_fallthru
          _
        %s7570 = sand.u32 %s336, 1
        %s7571 = scalar_lea.sflag [#allocation8], %s7570
        %s7572 = sand.u32 %s336, 1
        %s7573 = smul.addr %s7572, 32
        %s7574 = scalar_lea.vmem [#allocation15], %s7573
        %s7575 = smul.u32 4, %s38
        %p7576 = scmp.lt.s32.totalorder %s7575, 7
        %s7577 = scalar_select %p7576, %s7575, 7
        %s7578 = smul.addr %s7577, 8
        %s7579 = scalar_lea.vmem %s13, %s7578
        %s7580 = smul.u32 4, %s38
        %p7581 = scmp.lt.s32.totalorder %s7580, 7
        %s7582 = scalar_select %p7581, %s7580, 7
        %s7583 = smul.addr %s7582, 8
        %s7584 = scalar_lea.vmem %s14, %s7583
        // Predicated region
        $region97: #{tpu_custom_call.1} parent=67 // pred_check
          %p7585 = pneg %p346
        $region98: #{tpu_custom_call.1} parent=67 // pred_check_branch
          %7587 = sbr.rel (%p7585) target = $region100
        $region99: #{tpu_custom_call.1} parent=67 // pred_region
          %s7588 = smul.u32 4, %s38
          %s7590 = ssub.s32 512, 512
          %7591 = vsyncadd %s7571, %s7590
          %s7592 = smul.addr %s7588, 128
          %s7593 = scalar_lea.hbm %s12, %s7592
          %s7594 = sshll.u32 %s7574, 4
          %s7595 = int_to_ptr.vmem [resolvable:$true] %s7594
          %7600 = dma.vmem_to_hbm [thread:$0]  %s7595, 512, %s7593, %s7571, 128, 128, 8
        $region100: #{tpu_custom_call.1} parent=67 // pred_fallthru
          _
        // Predicated region
        $region101: #{tpu_custom_call.1} parent=67 // pred_check
          %p7601 = pneg %p372
        $region102: #{tpu_custom_call.1} parent=67 // pred_check_branch
          %7603 = sbr.rel (%p7601) target = $region104
        $region103: #{tpu_custom_call.1} parent=67 // pred_region
          %s7604 = smul.u32 4, %s38
        $region104: #{tpu_custom_call.1} parent=67 // pred_fallthru
          _
        // Predicated region
        $region105: #{tpu_custom_call.1} parent=67 // pred_check
          %p7605 = pneg %p398
        $region106: #{tpu_custom_call.1} parent=67 // pred_check_branch
          %7607 = sbr.rel (%p7605) target = $region108
        $region107: #{tpu_custom_call.1} parent=67 // pred_region
          %s7608 = smul.u32 4, %s38
        $region108: #{tpu_custom_call.1} parent=67 // pred_fallthru
          _
      $region68: #{tpu_custom_call.1} parent=5 // pred_fallthru
        _
      %p7609 = scmp.le.s32.totalorder 2, %s29
      // Predicated region
      $region109: #{tpu_custom_call.1} parent=5 // pred_check
        %p7610 = pneg %p7609
      $region110: #{tpu_custom_call.1} parent=5 // pred_check_branch
        %7612 = sbr.rel (%p7610) target = $region112
      $region111: #{tpu_custom_call.1} parent=5 // pred_region
        %s7613 = ssub.s32 %s29, 2
        // Predicated region
        $region113: #{tpu_custom_call.1} parent=111 // pred_check
          %p7614 = pneg %p352
        $region114: #{tpu_custom_call.1} parent=111 // pred_check_branch
          %7616 = sbr.rel (%p7614) target = $region116
        $region115: #{tpu_custom_call.1} parent=111 // pred_region
          %s7617 = sand.u32 %s337, 1
          %s7618 = scalar_lea.sflag [#allocation8], %s7617
          %s7619 = sand.u32 %s337, 1
          %s7620 = smul.addr %s7619, 32
          %s7621 = scalar_lea.vmem [#allocation15], %s7620
          %7622 = dma.done %s7618, 512
        $region116: #{tpu_custom_call.1} parent=111 // pred_fallthru
          _
        // Predicated region
        $region117: #{tpu_custom_call.1} parent=111 // pred_check
          %p7623 = pneg %p378
        $region118: #{tpu_custom_call.1} parent=111 // pred_check_branch
          %7625 = sbr.rel (%p7623) target = $region120
        $region119: #{tpu_custom_call.1} parent=111 // pred_region
          %s7626 = smul.u32 4, %s40
          %p7627 = scmp.lt.s32.totalorder %s7626, 7
          %s7628 = scalar_select %p7627, %s7626, 7
          %s7629 = smul.addr %s7628, 8
          %s7630 = scalar_lea.vmem %s13, %s7629
        $region120: #{tpu_custom_call.1} parent=111 // pred_fallthru
          _
        // Predicated region
        $region121: #{tpu_custom_call.1} parent=111 // pred_check
          %p7631 = pneg %p404
        $region122: #{tpu_custom_call.1} parent=111 // pred_check_branch
          %7633 = sbr.rel (%p7631) target = $region124
        $region123: #{tpu_custom_call.1} parent=111 // pred_region
          %s7634 = smul.u32 4, %s40
          %p7635 = scmp.lt.s32.totalorder %s7634, 7
          %s7636 = scalar_select %p7635, %s7634, 7
          %s7637 = smul.addr %s7636, 8
          %s7638 = scalar_lea.vmem %s14, %s7637
        $region124: #{tpu_custom_call.1} parent=111 // pred_fallthru
          _
      $region112: #{tpu_custom_call.1} parent=5 // pred_fallthru
        _
    $region6: #{tpu_custom_call.1} parent=1 // loop_footer
      %s33 = sadd.s32 1, %s29
    $region7: #{tpu_custom_call.1} parent=1 // loop_footer_branch
      %28 = sbr.rel target = $region3
    $region8: #{tpu_custom_call.1} parent=1 // loop_exit
      _
    %7639 = vsyncpa [#allocation7], 1
    %s7640 = scalar_lea.sflag [#allocation7], 1
    %7641 = vsyncpa %s7640, 1
    %7642 = vsyncpa [#allocation10], 1
    %7643 = vsyncpa [#allocation13], 1
    %7644 = vsyncpa [#allocation8], 1
    %s7645 = scalar_lea.sflag [#allocation8], 1
    %7646 = vsyncpa %s7645, 1

</llo_original>
